<compile_context>
chip_gen: v7x
topology: tpu7x:2x2x1
jax: 0.10.0
libtpu: 0.0.40
codegen_flags: <defaults>
</compile_context>

<pallas_src>
import functools

import jax
import jax.numpy as jnp
from jax.experimental import pallas as pl
from jax.experimental.pallas import tpu as pltpu

EPS = 1e-5
LANE = 128


def _round_up(x, m):
    return -(-x // m) * m


def _compute_vmem_limit():
    # v5e/v6e: 128 MiB physical, v7x: 64 MiB -> take ~75% as the scoped limit.
    try:
        cap = getattr(pltpu.get_tpu_info(), "vmem_capacity_bytes", None)
        if cap:
            return (int(cap) * 3) // 4
    except Exception:
        pass
    return 64 * 1024 * 1024


_VMEM_LIMIT_BYTES = _compute_vmem_limit()


def _mosaic(semantics):
    return pltpu.CompilerParams(dimension_semantics=semantics,
                                vmem_limit_bytes=_VMEM_LIMIT_BYTES)


def _pick_m_tile(m, row_bytes, budget=6 * 1024 * 1024):
    for t in (1024, 512, 256, 128, 64, 32, 16, 8):
        if m % t == 0 and t * row_bytes <= budget:
            return t
    return m


# ----------------------------------------------------------------------------
# Kernels
# ----------------------------------------------------------------------------
def conv1x1_stats_kernel(x_ref, w_ref, y_ref, stats_ref):
    """y = x @ w (full-K, weight VMEM-resident) + per-M-tile BN partial stats."""
    y = jnp.dot(x_ref[...], w_ref[...], preferred_element_type=jnp.float32)
    y_ref[...] = y.astype(y_ref.dtype)
    psum = jnp.sum(y, axis=0, keepdims=True)
    psq = jnp.sum(y * y, axis=0, keepdims=True)
    stats_ref[...] = jnp.concatenate([psum, psq], axis=0)[None]


def conv1x1_bnin_stats_kernel(x_ref, sc_ref, sh_ref, w_ref, y_ref, stats_ref):
    """Same as above, with BN+ReLU of the *input* fused (x is a raw conv out)."""
    xin = x_ref[...].astype(jnp.float32) * sc_ref[...] + sh_ref[...]
    xin = jnp.maximum(xin, 0.0).astype(jnp.bfloat16)
    y = jnp.dot(xin, w_ref[...], preferred_element_type=jnp.float32)
    y_ref[...] = y.astype(y_ref.dtype)
    psum = jnp.sum(y, axis=0, keepdims=True)
    psq = jnp.sum(y * y, axis=0, keepdims=True)
    stats_ref[...] = jnp.concatenate([psum, psq], axis=0)[None]


def conv3x3_stats_kernel(x_ref, w_ref, y_ref, stats_ref, *, stride, out_h, out_w):
    """3x3 conv (pad=1, stride) as ONE wide dot over the 9 concatenated taps.

    x_ref: (stride*stride, Hp/stride, Wp/stride, Cin) phase-decomposed padded
           post-activation image for one batch element (bf16).
    w_ref: (9*Cin, Cout) bf16 weights (row order = (dh, dw, cin)).
    """
    s = stride
    taps = []
    for dh in range(3):
        for dw in range(3):
            phase = (dh % s) * s + (dw % s)
            patch = x_ref[phase,
                          pl.ds(dh // s, out_h),
                          pl.ds(dw // s, out_w), :]            # (Ho, Wo, Cin)
            cin = patch.shape[-1]
            taps.append(patch.reshape(out_h * out_w, cin))
    xk = jnp.concatenate(taps, axis=1)                          # (Ho*Wo, 9*Cin)
    y = jnp.dot(xk, w_ref[...], preferred_element_type=jnp.float32)
    y_ref[...] = y.astype(y_ref.dtype)
    psum = jnp.sum(y, axis=0, keepdims=True)
    psq = jnp.sum(y * y, axis=0, keepdims=True)
    stats_ref[...] = jnp.concatenate([psum, psq], axis=0)[None]


def bn_residual_relu_kernel(y_ref, sc_ref, sh_ref, id_ref, isc_ref, ish_ref, o_ref):
    """out = relu(y*scale + shift + (identity*id_scale + id_shift))."""
    out = y_ref[...].astype(jnp.float32) * sc_ref[...] + sh_ref[...]
    out = out + (id_ref[...].astype(jnp.float32) * isc_ref[...] + ish_ref[...])
    o_ref[...] = jnp.maximum(out, 0.0).astype(o_ref.dtype)


# ----------------------------------------------------------------------------
# pallas_call wrappers
# ----------------------------------------------------------------------------
def conv1x1_stats(x2d, w, sc=None, sh=None):
    m, k = x2d.shape
    c = w.shape[1]
    # streamed bytes per M row (double-buffered bf16 x in + bf16 y out)
    row_bytes = 4 * (k + c)
    tm = _pick_m_tile(m, row_bytes)
    grid_m = m // tm
    fused = sc is not None

    in_specs = [pl.BlockSpec((tm, k), lambda i: (i, 0))]
    args = [x2d]
    if fused:
        in_specs += [pl.BlockSpec((1, k), lambda i: (0, 0)),
                     pl.BlockSpec((1, k), lambda i: (0, 0))]
        args += [sc, sh]
    in_specs += [pl.BlockSpec((k, c), lambda i: (0, 0))]   # weight: resident
    args += [w]

    kernel = conv1x1_bnin_stats_kernel if fused else conv1x1_stats_kernel
    y, stats = pl.pallas_call(
        kernel,
        out_shape=(jax.ShapeDtypeStruct((m, c), jnp.bfloat16),
                   jax.ShapeDtypeStruct((grid_m, 2, c), jnp.float32)),
        grid=(grid_m,),
        in_specs=in_specs,
        out_specs=(pl.BlockSpec((tm, c), lambda i: (i, 0)),
                   pl.BlockSpec((1, 2, c), lambda i: (i, 0, 0))),
        compiler_params=_mosaic(("parallel",)),
    )(*args)
    return y, stats


def conv3x3_bnin_stats(y1_nhwc, sc, sh, w_flat, stride):
    """relu(y1*sc+sh) fused (XLA) into the pad/phase relayout, then 3x3 conv."""
    n, h, w, cin = y1_nhwc.shape
    cout = w_flat.shape[-1]
    s = stride
    ho = (h + 2 - 3) // s + 1
    wo = (w + 2 - 3) // s + 1

    # BN1 + ReLU + zero-pad + phase decomposition fuse into one XLA pass.
    act = jnp.maximum(y1_nhwc.astype(jnp.float32) * sc.reshape(1, 1, 1, -1)
                      + sh.reshape(1, 1, 1, -1), 0.0).astype(jnp.bfloat16)
    hp = -(-max(h + 2, 2 + s * (ho - 1) + 1) // s) * s
    wp = -(-max(w + 2, 2 + s * (wo - 1) + 1) // s) * s
    xp = jnp.pad(act, ((0, 0), (1, hp - h - 1), (1, wp - w - 1), (0, 0)))
    hps, wps = hp // s, wp // s
    xph = xp.reshape(n, hps, s, wps, s, cin).transpose(0, 2, 4, 1, 3, 5)
    xph = xph.reshape(n * s * s, hps, wps, cin)

    m = n * ho * wo
    kernel = functools.partial(conv3x3_stats_kernel,
                               stride=s, out_h=ho, out_w=wo)
    y, stats = pl.pallas_call(
        kernel,
        out_shape=(jax.ShapeDtypeStruct((m, cout), jnp.bfloat16),
                   jax.ShapeDtypeStruct((n, 2, cout), jnp.float32)),
        grid=(n,),
        in_specs=[pl.BlockSpec((s * s, hps, wps, cin),
                               lambda i: (i, 0, 0, 0)),
                  pl.BlockSpec((9 * cin, cout), lambda i: (0, 0))],
        out_specs=(pl.BlockSpec((ho * wo, cout), lambda i: (i, 0)),
                   pl.BlockSpec((1, 2, cout), lambda i: (i, 0, 0))),
        compiler_params=_mosaic(("parallel",)),
    )(xph, w_flat)
    return y, stats, ho, wo


def fold_bn(stats, m_rows, gamma, beta):
    """Fold train-mode BN (batch stats, biased var) into per-channel scale/shift."""
    total = jnp.sum(stats[:, 0, :], axis=0)
    total_sq = jnp.sum(stats[:, 1, :], axis=0)
    mean = total / m_rows
    var = jnp.maximum(total_sq / m_rows - mean * mean, 0.0)
    scale = gamma * jax.lax.rsqrt(var + EPS)
    shift = beta - mean * scale
    return (scale.reshape(1, -1).astype(jnp.float32),
            shift.reshape(1, -1).astype(jnp.float32))


def bn_residual_relu(y, sc, sh, ident, isc, ish, out_dtype=jnp.float32):
    m, c = y.shape
    row_bytes = 16 * c            # 2 bf16 streams in + 1 f32 out, double-buffered
    tm = _pick_m_tile(m, row_bytes)
    return pl.pallas_call(
        bn_residual_relu_kernel,
        out_shape=jax.ShapeDtypeStruct((m, c), out_dtype),
        grid=(m // tm,),
        in_specs=[pl.BlockSpec((tm, c), lambda i: (i, 0)),
                  pl.BlockSpec((1, c), lambda i: (0, 0)),
                  pl.BlockSpec((1, c), lambda i: (0, 0)),
                  pl.BlockSpec((tm, c), lambda i: (i, 0)),
                  pl.BlockSpec((1, c), lambda i: (0, 0)),
                  pl.BlockSpec((1, c), lambda i: (0, 0))],
        out_specs=pl.BlockSpec((tm, c), lambda i: (i, 0)),
        compiler_params=_mosaic(("parallel",)),
    )(y, sc, sh, ident, isc, ish)


# ----------------------------------------------------------------------------
# Bottleneck forward (Pallas)
# ----------------------------------------------------------------------------
def bottleneck_forward_nhwc(x_nhwc, params, stride=1):
    n, h, w, cin_p = x_nhwc.shape
    planes_p = params["w1"].shape[1]
    cout_p = params["w3"].shape[1]
    x2d = x_nhwc.reshape(n * h * w, cin_p)

    # conv1 (1x1) + BN1 stats
    y1, st1 = conv1x1_stats(x2d, params["w1"])
    sc1, sh1 = fold_bn(st1, y1.shape[0], params["g1"], params["b1"])

    # BN1+ReLU fused into the relayout; conv2 (3x3, pad=1, stride) + BN2 stats
    y2, st2, ho, wo = conv3x3_bnin_stats(y1.reshape(n, h, w, planes_p),
                                         sc1, sh1, params["w2"], stride)
    sc2, sh2 = fold_bn(st2, y2.shape[0], params["g2"], params["b2"])

    # conv3 (1x1) with BN2+ReLU fused in-kernel + BN3 stats
    y3, st3 = conv1x1_stats(y2, params["w3"], sc=sc2, sh=sh2)
    sc3, sh3 = fold_bn(st3, y3.shape[0], params["g3"], params["b3"])

    if "w_ds" in params:
        # Downsample branch: 1x1 stride-s conv + BN (folded into the residual
        # kernel so the normalised identity never hits HBM).
        # TODO(synk): fuse the stride-s subsample into a kernel index_map.
        x_ds = x_nhwc[:, ::stride, ::stride, :][:, :ho, :wo, :]
        y_id, st_id = conv1x1_stats(x_ds.reshape(n * ho * wo, cin_p),
                                    params["w_ds"])
        sc_id, sh_id = fold_bn(st_id, y_id.shape[0],
                               params["g_ds"], params["b_ds"])
    else:
        assert stride == 1 and cin_p == cout_p, "identity path needs matching shapes"
        y_id = x2d
        sc_id = jnp.ones((1, cout_p), jnp.float32)
        sh_id = jnp.zeros((1, cout_p), jnp.float32)

    out3 = bn_residual_relu(y3, sc3, sh3, y_id, sc_id, sh_id)
    return out3.reshape(n, ho, wo, cout_p)


@functools.partial(jax.jit, static_argnames=("stride", "out_channels"))
def bottleneck_forward(x_nchw, params, stride=1, out_channels=None):
    n, cin, h, w = x_nchw.shape
    cin_p = params["w1"].shape[0]
    cout_p = params["w3"].shape[1]
    cout = out_channels if out_channels is not None else cout_p
    x = jnp.transpose(x_nchw, (0, 2, 3, 1)).astype(jnp.bfloat16)
    if cin_p > cin:
        x = jnp.pad(x, ((0, 0), (0, 0), (0, 0), (0, cin_p - cin)))
    out = bottleneck_forward_nhwc(x, params, stride)
    out = out[..., :cout]
    return jnp.transpose(out, (0, 3, 1, 2))


# ----------------------------------------------------------------------------
# Plain-JAX (XLA, f32) reference for correctness checking
# ----------------------------------------------------------------------------
def reference_bottleneck(x, tp, stride):
    def bn_train(y, g, b):
        mean = y.mean(axis=(0, 2, 3), keepdims=True)
        var = ((y - mean) ** 2).mean(axis=(0, 2, 3), keepdims=True)
        return ((y - mean) * jax.lax.rsqrt(var + EPS) * g.reshape(1, -1, 1, 1)
                + b.reshape(1, -1, 1, 1))

    def conv(z, wt, s, pad):
        return jax.lax.conv_general_dilated(
            z, wt, (s, s), pad, dimension_numbers=("NCHW", "OIHW", "NCHW"),
            precision=jax.lax.Precision.HIGHEST)

    out = jax.nn.relu(bn_train(conv(x, tp["w1"], 1, "VALID"), tp["g1"], tp["b1"]))
    out = jax.nn.relu(bn_train(conv(out, tp["w2"], stride, [(1, 1), (1, 1)]),
                               tp["g2"], tp["b2"]))
    out = bn_train(conv(out, tp["w3"], 1, "VALID"), tp["g3"], tp["b3"])
    if "w_ds" in tp:
        identity = bn_train(conv(x, tp["w_ds"], stride, "VALID"),
                            tp["g_ds"], tp["b_ds"])
    else:
        identity = x
    return jax.nn.relu(out + identity)


# ----------------------------------------------------------------------------
def make_params(key, in_planes, planes, with_downsample):
    expansion = 4
    ks = jax.random.split(key, 12)

    def wn(k, shape, scale=0.1):
        return (scale * jax.random.normal(k, shape)).astype(jnp.float32)

    tp = {
        "w1": wn(ks[0], (planes, in_planes, 1, 1)),
        "w2": wn(ks[1], (planes, planes, 3, 3)),
        "w3": wn(ks[2], (planes * expansion, planes, 1, 1)),
        "g1": (1.0 + 0.1 * jax.random.normal(ks[3], (planes,))).astype(jnp.float32),
        "b1": wn(ks[4], (planes,)),
        "g2": (1.0 + 0.1 * jax.random.normal(ks[5], (planes,))).astype(jnp.float32),
        "b2": wn(ks[6], (planes,)),
        "g3": (1.0 + 0.1 * jax.random.normal(ks[7], (planes * expansion,))).astype(jnp.float32),
        "b3": wn(ks[8], (planes * expansion,)),
    }
    if with_downsample:
        tp["w_ds"] = wn(ks[9], (planes * expansion, in_planes, 1, 1))
        tp["g_ds"] = (1.0 + 0.1 * jax.random.normal(
            ks[10], (planes * expansion,))).astype(jnp.float32)
        tp["b_ds"] = wn(ks[11], (planes * expansion,))

    # Pallas-layout, lane-padded, bf16 weights (zero-padded channels stay
    # exactly zero through conv / BN / ReLU).
    cin_p = _round_up(in_planes, LANE)
    p_p = _round_up(planes, LANE)
    cout_p = _round_up(planes * expansion, LANE)

    def pad2(a, r, c):
        return jnp.pad(a, ((0, r - a.shape[0]), (0, c - a.shape[1])))

    def pad_vec(v, c, fill=0.0):
        return jnp.pad(v, (0, c - v.shape[0]), constant_values=fill)

    w2_hwio = jnp.transpose(tp["w2"], (2, 3, 1, 0))           # OIHW -> HWIO
    w2_hwio = jnp.pad(w2_hwio, ((0, 0), (0, 0),
                                (0, p_p - planes), (0, p_p - planes)))
    pp = {
        "w1": pad2(tp["w1"][:, :, 0, 0].T, cin_p, p_p).astype(jnp.bfloat16),
        "w2": w2_hwio.reshape(9 * p_p, p_p).astype(jnp.bfloat16),
        "w3": pad2(tp["w3"][:, :, 0, 0].T, p_p, cout_p).astype(jnp.bfloat16),
        "g1": pad_vec(tp["g1"], p_p, 1.0), "b1": pad_vec(tp["b1"], p_p),
        "g2": pad_vec(tp["g2"], p_p, 1.0), "b2": pad_vec(tp["b2"], p_p),
        "g3": pad_vec(tp["g3"], cout_p, 1.0), "b3": pad_vec(tp["b3"], cout_p),
    }
    if with_downsample:
        pp["w_ds"] = pad2(tp["w_ds"][:, :, 0, 0].T, cin_p, cout_p).astype(jnp.bfloat16)
        pp["g_ds"] = pad_vec(tp["g_ds"], cout_p, 1.0)
        pp["b_ds"] = pad_vec(tp["b_ds"], cout_p)
    return tp, pp


if __name__ == "__main__":
    key = jax.random.PRNGKey(0)
    k_blk1, k_blk2, k_x1, k_x2 = jax.random.split(key, 4)

    n, h, w = 2, 16, 16

    # Case 1: identity residual (stride=1, in_planes == planes*4).
    in_planes1, planes1 = 256, 64
    tp1, pp1 = make_params(k_blk1, in_planes1, planes1, with_downsample=False)
    x1 = jax.random.normal(k_x1, (n, in_planes1, h, w), dtype=jnp.float32)
    out1 = jax.block_until_ready(
        bottleneck_forward(x1, pp1, stride=1, out_channels=planes1 * 4))
    ref1 = jax.block_until_ready(reference_bottleneck(x1, tp1, 1))
    assert out1.shape == (n, planes1 * 4, h, w)
    err1 = float(jnp.max(jnp.abs(out1 - ref1)))
    mae1 = float(jnp.mean(jnp.abs(out1 - ref1)))
    assert err1 < 1.0e-1 and mae1 < 1.0e-2, \
        f"block1 err max={err1} mean={mae1}"

    # Case 2: strided block with downsample branch (first block of a stage).
    in_planes2, planes2, stride2 = 256, 32, 2
    tp2, pp2 = make_params(k_blk2, in_planes2, planes2, with_downsample=True)
    x2 = jax.random.normal(k_x2, (n, in_planes2, h, w), dtype=jnp.float32)
    out2 = jax.block_until_ready(
        bottleneck_forward(x2, pp2, stride=stride2, out_channels=planes2 * 4))
    ref2 = jax.block_until_ready(reference_bottleneck(x2, tp2, stride2))
    assert out2.shape == (n, planes2 * 4, h // 2, w // 2)
    err2 = float(jnp.max(jnp.abs(out2 - ref2)))
    mae2 = float(jnp.mean(jnp.abs(out2 - ref2)))
    assert err2 < 1.0e-1 and mae2 < 1.0e-2, \
        f"block2 err max={err2} mean={mae2}"

    print("KERNEL_OK")
</pallas_src>

<mosaic_0001>
module attributes {stable_mosaic.version = 11 : i64} {
  func.func @conv1x1_stats_kernel(%arg0: i32, %arg1: memref<512x256xbf16, #tpu.memory_space<vmem>>, %arg2: memref<256x128xbf16, #tpu.memory_space<vmem>>, %arg3: memref<512x128xbf16, #tpu.memory_space<vmem>>, %arg4: memref<1x2x128xf32, #tpu.memory_space<vmem>>) attributes {dimension_semantics = [#tpu.dimension_semantics<parallel>], iteration_bounds = array<i64: 1>, scalar_prefetch = 0 : i64, scratch_operands = 0 : i64, tpu.core_type = #tpu.core_type<tc>, window_params = [{transform_indices = @transform_0, window_bounds = array<i64: 512, 256>}, {pipeline_mode = #tpu.pipeline_mode<synchronous>, transform_indices = @transform_1, window_bounds = array<i64: 256, 128>}, {transform_indices = @transform_2, window_bounds = array<i64: 512, 128>}, {transform_indices = @transform_3, window_bounds = array<i64: 1, 2, 128>}]} {
    %c0 = arith.constant 0 : index
    %c0_0 = arith.constant 0 : index
    %0 = vector.load %arg1[%c0, %c0_0] : memref<512x256xbf16, #tpu.memory_space<vmem>>, vector<512x256xbf16>
    %c0_1 = arith.constant 0 : index
    %c0_2 = arith.constant 0 : index
    %1 = vector.load %arg2[%c0_1, %c0_2] : memref<256x128xbf16, #tpu.memory_space<vmem>>, vector<256x128xbf16>
    %cst = arith.constant dense<0.000000e+00> : vector<512x128xf32>
    %2 = tpu.matmul %0, %1, %cst {dimension_numbers = #tpu.dot_dimension_numbers<[1], [0], [0], [1], [0, 0, 1, 1], [], []>} : vector<512x256xbf16>, vector<256x128xbf16>, vector<512x128xf32> -> vector<512x128xf32>
    %3 = arith.truncf %2 : vector<512x128xf32> to vector<512x128xbf16>
    %c0_3 = arith.constant 0 : index
    %c0_4 = arith.constant 0 : index
    %4 = vector.load %arg3[%c0_3, %c0_4] : memref<512x128xbf16, #tpu.memory_space<vmem>>, vector<512x128xbf16>
    tpu.vector_store %arg3[%c0_3, %c0_4], %3 {strides = array<i32>} : memref<512x128xbf16, #tpu.memory_space<vmem>>, vector<512x128xbf16>,
    %cst_5 = arith.constant dense<0.000000e+00> : vector<128xf32>
    %5 = vector.multi_reduction <add>, %2, %cst_5 [0] : vector<512x128xf32> to vector<128xf32>
    %6 = vector.shape_cast %5 : vector<128xf32> to vector<1x128xf32>
    %7 = arith.mulf %2, %2 : vector<512x128xf32>
    %cst_6 = arith.constant dense<0.000000e+00> : vector<128xf32>
    %8 = vector.multi_reduction <add>, %7, %cst_6 [0] : vector<512x128xf32> to vector<128xf32>
    %9 = vector.shape_cast %8 : vector<128xf32> to vector<1x128xf32>
    %10 = tpu.concatenate %6, %9 in 0 : vector<1x128xf32>, vector<1x128xf32> -> vector<2x128xf32>
    %11 = vector.shape_cast %10 : vector<2x128xf32> to vector<1x2x128xf32>
    %c0_7 = arith.constant 0 : index
    %c0_8 = arith.constant 0 : index
    %c0_9 = arith.constant 0 : index
    %12 = vector.load %arg4[%c0_7, %c0_8, %c0_9] : memref<1x2x128xf32, #tpu.memory_space<vmem>>, vector<1x2x128xf32>
    tpu.vector_store %arg4[%c0_7, %c0_8, %c0_9], %11 {strides = array<i32>} : memref<1x2x128xf32, #tpu.memory_space<vmem>>, vector<1x2x128xf32>,
    return
  }
  func.func @transform_0(%arg0: i32) -> (i32, i32) {
    %c0_i32 = arith.constant 0 : i32
    %c0_i32_0 = arith.constant 0 : i32
    return %arg0, %c0_i32 : i32, i32
  }
  func.func @transform_1(%arg0: i32) -> (i32, i32) {
    %c0_i32 = arith.constant 0 : i32
    %c0_i32_0 = arith.constant 0 : i32
    %c0_i32_1 = arith.constant 0 : i32
    return %c0_i32, %c0_i32_0 : i32, i32
  }
  func.func @transform_2(%arg0: i32) -> (i32, i32) {
    %c0_i32 = arith.constant 0 : i32
    %c0_i32_0 = arith.constant 0 : i32
    return %arg0, %c0_i32 : i32, i32
  }
  func.func @transform_3(%arg0: i32) -> (i32, i32, i32) {
    %c0_i32 = arith.constant 0 : i32
    %c0_i32_0 = arith.constant 0 : i32
    %c0_i32_1 = arith.constant 0 : i32
    return %arg0, %c0_i32, %c0_i32_0 : i32, i32, i32
  }
}

module attributes {stable_mosaic.version = 11 : i64} {
  func.func @conv3x3_stats_kernel(%arg0: i32, %arg1: memref<1x18x18x128xbf16, #tpu.memory_space<vmem>>, %arg2: memref<1152x128xbf16, #tpu.memory_space<vmem>>, %arg3: memref<256x128xbf16, #tpu.memory_space<vmem>>, %arg4: memref<1x2x128xf32, #tpu.memory_space<vmem>>) attributes {dimension_semantics = [#tpu.dimension_semantics<parallel>], iteration_bounds = array<i64: 2>, scalar_prefetch = 0 : i64, scratch_operands = 0 : i64, tpu.core_type = #tpu.core_type<tc>, window_params = [{transform_indices = @transform_0, window_bounds = array<i64: 1, 18, 18, 128>}, {pipeline_mode = #tpu.pipeline_mode<synchronous>, transform_indices = @transform_1, window_bounds = array<i64: 1152, 128>}, {transform_indices = @transform_2, window_bounds = array<i64: 256, 128>}, {transform_indices = @transform_3, window_bounds = array<i64: 1, 2, 128>}]} {
    %c0 = arith.constant 0 : index
    %c0_0 = arith.constant 0 : index
    %c0_1 = arith.constant 0 : index
    %c0_2 = arith.constant 0 : index
    %0 = vector.load %arg1[%c0, %c0_0, %c0_1, %c0_2] : memref<1x18x18x128xbf16, #tpu.memory_space<vmem>>, vector<1x16x16x128xbf16>
    %1 = vector.shape_cast %0 : vector<1x16x16x128xbf16> to vector<16x16x128xbf16>
    %2 = vector.shape_cast %1 : vector<16x16x128xbf16> to vector<256x128xbf16>
    %c0_3 = arith.constant 0 : index
    %c0_4 = arith.constant 0 : index
    %c1 = arith.constant 1 : index
    %c0_5 = arith.constant 0 : index
    %3 = vector.load %arg1[%c0_3, %c0_4, %c1, %c0_5] : memref<1x18x18x128xbf16, #tpu.memory_space<vmem>>, vector<1x16x16x128xbf16>
    %4 = vector.shape_cast %3 : vector<1x16x16x128xbf16> to vector<16x16x128xbf16>
    %5 = vector.shape_cast %4 : vector<16x16x128xbf16> to vector<256x128xbf16>
    %c0_6 = arith.constant 0 : index
    %c0_7 = arith.constant 0 : index
    %c2 = arith.constant 2 : index
    %c0_8 = arith.constant 0 : index
    %6 = vector.load %arg1[%c0_6, %c0_7, %c2, %c0_8] : memref<1x18x18x128xbf16, #tpu.memory_space<vmem>>, vector<1x16x16x128xbf16>
    %7 = vector.shape_cast %6 : vector<1x16x16x128xbf16> to vector<16x16x128xbf16>
    %8 = vector.shape_cast %7 : vector<16x16x128xbf16> to vector<256x128xbf16>
    %c0_9 = arith.constant 0 : index
    %c1_10 = arith.constant 1 : index
    %c0_11 = arith.constant 0 : index
    %c0_12 = arith.constant 0 : index
    %9 = vector.load %arg1[%c0_9, %c1_10, %c0_11, %c0_12] : memref<1x18x18x128xbf16, #tpu.memory_space<vmem>>, vector<1x16x16x128xbf16>
    %10 = vector.shape_cast %9 : vector<1x16x16x128xbf16> to vector<16x16x128xbf16>
    %11 = vector.shape_cast %10 : vector<16x16x128xbf16> to vector<256x128xbf16>
    %c0_13 = arith.constant 0 : index
    %c1_14 = arith.constant 1 : index
    %c1_15 = arith.constant 1 : index
    %c0_16 = arith.constant 0 : index
    %12 = vector.load %arg1[%c0_13, %c1_14, %c1_15, %c0_16] : memref<1x18x18x128xbf16, #tpu.memory_space<vmem>>, vector<1x16x16x128xbf16>
    %13 = vector.shape_cast %12 : vector<1x16x16x128xbf16> to vector<16x16x128xbf16>
    %14 = vector.shape_cast %13 : vector<16x16x128xbf16> to vector<256x128xbf16>
    %c0_17 = arith.constant 0 : index
    %c1_18 = arith.constant 1 : index
    %c2_19 = arith.constant 2 : index
    %c0_20 = arith.constant 0 : index
    %15 = vector.load %arg1[%c0_17, %c1_18, %c2_19, %c0_20] : memref<1x18x18x128xbf16, #tpu.memory_space<vmem>>, vector<1x16x16x128xbf16>
    %16 = vector.shape_cast %15 : vector<1x16x16x128xbf16> to vector<16x16x128xbf16>
    %17 = vector.shape_cast %16 : vector<16x16x128xbf16> to vector<256x128xbf16>
    %c0_21 = arith.constant 0 : index
    %c2_22 = arith.constant 2 : index
    %c0_23 = arith.constant 0 : index
    %c0_24 = arith.constant 0 : index
    %18 = vector.load %arg1[%c0_21, %c2_22, %c0_23, %c0_24] : memref<1x18x18x128xbf16, #tpu.memory_space<vmem>>, vector<1x16x16x128xbf16>
    %19 = vector.shape_cast %18 : vector<1x16x16x128xbf16> to vector<16x16x128xbf16>
    %20 = vector.shape_cast %19 : vector<16x16x128xbf16> to vector<256x128xbf16>
    %c0_25 = arith.constant 0 : index
    %c2_26 = arith.constant 2 : index
    %c1_27 = arith.constant 1 : index
    %c0_28 = arith.constant 0 : index
    %21 = vector.load %arg1[%c0_25, %c2_26, %c1_27, %c0_28] : memref<1x18x18x128xbf16, #tpu.memory_space<vmem>>, vector<1x16x16x128xbf16>
    %22 = vector.shape_cast %21 : vector<1x16x16x128xbf16> to vector<16x16x128xbf16>
    %23 = vector.shape_cast %22 : vector<16x16x128xbf16> to vector<256x128xbf16>
    %c0_29 = arith.constant 0 : index
    %c2_30 = arith.constant 2 : index
    %c2_31 = arith.constant 2 : index
    %c0_32 = arith.constant 0 : index
    %24 = vector.load %arg1[%c0_29, %c2_30, %c2_31, %c0_32] : memref<1x18x18x128xbf16, #tpu.memory_space<vmem>>, vector<1x16x16x128xbf16>
    %25 = vector.shape_cast %24 : vector<1x16x16x128xbf16> to vector<16x16x128xbf16>
    %26 = vector.shape_cast %25 : vector<16x16x128xbf16> to vector<256x128xbf16>
    %27 = tpu.concatenate %2, %5, %8, %11, %14, %17, %20, %23, %26 in 1 : vector<256x128xbf16>, vector<256x128xbf16>, vector<256x128xbf16>, vector<256x128xbf16>, vector<256x128xbf16>, vector<256x128xbf16>, vector<256x128xbf16>, vector<256x128xbf16>, vector<256x128xbf16> -> vector<256x1152xbf16>
    %c0_33 = arith.constant 0 : index
    %c0_34 = arith.constant 0 : index
    %28 = vector.load %arg2[%c0_33, %c0_34] : memref<1152x128xbf16, #tpu.memory_space<vmem>>, vector<1152x128xbf16>
    %cst = arith.constant dense<0.000000e+00> : vector<256x128xf32>
    %29 = tpu.matmul %27, %28, %cst {dimension_numbers = #tpu.dot_dimension_numbers<[1], [0], [0], [1], [0, 0, 1, 1], [], []>} : vector<256x1152xbf16>, vector<1152x128xbf16>, vector<256x128xf32> -> vector<256x128xf32>
    %30 = arith.truncf %29 : vector<256x128xf32> to vector<256x128xbf16>
    %c0_35 = arith.constant 0 : index
    %c0_36 = arith.constant 0 : index
    %31 = vector.load %arg3[%c0_35, %c0_36] : memref<256x128xbf16, #tpu.memory_space<vmem>>, vector<256x128xbf16>
    tpu.vector_store %arg3[%c0_35, %c0_36], %30 {strides = array<i32>} : memref<256x128xbf16, #tpu.memory_space<vmem>>, vector<256x128xbf16>,
    %cst_37 = arith.constant dense<0.000000e+00> : vector<128xf32>
    %32 = vector.multi_reduction <add>, %29, %cst_37 [0] : vector<256x128xf32> to vector<128xf32>
    %33 = vector.shape_cast %32 : vector<128xf32> to vector<1x128xf32>
    %34 = arith.mulf %29, %29 : vector<256x128xf32>
    %cst_38 = arith.constant dense<0.000000e+00> : vector<128xf32>
    %35 = vector.multi_reduction <add>, %34, %cst_38 [0] : vector<256x128xf32> to vector<128xf32>
    %36 = vector.shape_cast %35 : vector<128xf32> to vector<1x128xf32>
    %37 = tpu.concatenate %33, %36 in 0 : vector<1x128xf32>, vector<1x128xf32> -> vector<2x128xf32>
    %38 = vector.shape_cast %37 : vector<2x128xf32> to vector<1x2x128xf32>
    %c0_39 = arith.constant 0 : index
    %c0_40 = arith.constant 0 : index
    %c0_41 = arith.constant 0 : index
    %39 = vector.load %arg4[%c0_39, %c0_40, %c0_41] : memref<1x2x128xf32, #tpu.memory_space<vmem>>, vector<1x2x128xf32>
    tpu.vector_store %arg4[%c0_39, %c0_40, %c0_41], %38 {strides = array<i32>} : memref<1x2x128xf32, #tpu.memory_space<vmem>>, vector<1x2x128xf32>,
    return
  }
  func.func @transform_0(%arg0: i32) -> (i32, i32, i32, i32) {
    %c0_i32 = arith.constant 0 : i32
    %c0_i32_0 = arith.constant 0 : i32
    %c0_i32_1 = arith.constant 0 : i32
    %c0_i32_2 = arith.constant 0 : i32
    return %arg0, %c0_i32, %c0_i32_0, %c0_i32_1 : i32, i32, i32, i32
  }
  func.func @transform_1(%arg0: i32) -> (i32, i32) {
    %c0_i32 = arith.constant 0 : i32
    %c0_i32_0 = arith.constant 0 : i32
    %c0_i32_1 = arith.constant 0 : i32
    return %c0_i32, %c0_i32_0 : i32, i32
  }
  func.func @transform_2(%arg0: i32) -> (i32, i32) {
    %c0_i32 = arith.constant 0 : i32
    %c0_i32_0 = arith.constant 0 : i32
    return %arg0, %c0_i32 : i32, i32
  }
  func.func @transform_3(%arg0: i32) -> (i32, i32, i32) {
    %c0_i32 = arith.constant 0 : i32
    %c0_i32_0 = arith.constant 0 : i32
    %c0_i32_1 = arith.constant 0 : i32
    return %arg0, %c0_i32, %c0_i32_0 : i32, i32, i32
  }
}

module attributes {stable_mosaic.version = 11 : i64} {
  func.func @conv1x1_bnin_stats_kernel(%arg0: i32, %arg1: memref<512x128xbf16, #tpu.memory_space<vmem>>, %arg2: memref<1x128xf32, #tpu.memory_space<vmem>>, %arg3: memref<1x128xf32, #tpu.memory_space<vmem>>, %arg4: memref<128x256xbf16, #tpu.memory_space<vmem>>, %arg5: memref<512x256xbf16, #tpu.memory_space<vmem>>, %arg6: memref<1x2x256xf32, #tpu.memory_space<vmem>>) attributes {dimension_semantics = [#tpu.dimension_semantics<parallel>], iteration_bounds = array<i64: 1>, scalar_prefetch = 0 : i64, scratch_operands = 0 : i64, tpu.core_type = #tpu.core_type<tc>, window_params = [{transform_indices = @transform_0, window_bounds = array<i64: 512, 128>}, {pipeline_mode = #tpu.pipeline_mode<synchronous>, transform_indices = @transform_1, window_bounds = array<i64: 1, 128>}, {pipeline_mode = #tpu.pipeline_mode<synchronous>, transform_indices = @transform_2, window_bounds = array<i64: 1, 128>}, {pipeline_mode = #tpu.pipeline_mode<synchronous>, transform_indices = @transform_3, window_bounds = array<i64: 128, 256>}, {transform_indices = @transform_4, window_bounds = array<i64: 512, 256>}, {transform_indices = @transform_5, window_bounds = array<i64: 1, 2, 256>}]} {
    %c0 = arith.constant 0 : index
    %c0_0 = arith.constant 0 : index
    %0 = vector.load %arg1[%c0, %c0_0] : memref<512x128xbf16, #tpu.memory_space<vmem>>, vector<512x128xbf16>
    %1 = arith.extf %0 : vector<512x128xbf16> to vector<512x128xf32>
    %c0_1 = arith.constant 0 : index
    %c0_2 = arith.constant 0 : index
    %2 = vector.load %arg2[%c0_1, %c0_2] : memref<1x128xf32, #tpu.memory_space<vmem>>, vector<1x128xf32>
    %3 = vector.broadcast %2 : vector<1x128xf32> to vector<512x128xf32>
    %4 = arith.mulf %1, %3 : vector<512x128xf32>
    %c0_3 = arith.constant 0 : index
    %c0_4 = arith.constant 0 : index
    %5 = vector.load %arg3[%c0_3, %c0_4] : memref<1x128xf32, #tpu.memory_space<vmem>>, vector<1x128xf32>
    %6 = vector.broadcast %5 : vector<1x128xf32> to vector<512x128xf32>
    %7 = arith.addf %4, %6 : vector<512x128xf32>
    %cst = arith.constant 0.000000e+00 : f32
    %8 = vector.broadcast %cst : f32 to vector<512x128xf32>
    %9 = arith.maximumf %7, %8 : vector<512x128xf32>
    %10 = arith.truncf %9 : vector<512x128xf32> to vector<512x128xbf16>
    %c0_5 = arith.constant 0 : index
    %c0_6 = arith.constant 0 : index
    %11 = vector.load %arg4[%c0_5, %c0_6] : memref<128x256xbf16, #tpu.memory_space<vmem>>, vector<128x256xbf16>
    %cst_7 = arith.constant dense<0.000000e+00> : vector<512x256xf32>
    %12 = tpu.matmul %10, %11, %cst_7 {dimension_numbers = #tpu.dot_dimension_numbers<[1], [0], [0], [1], [0, 0, 1, 1], [], []>} : vector<512x128xbf16>, vector<128x256xbf16>, vector<512x256xf32> -> vector<512x256xf32>
    %13 = arith.truncf %12 : vector<512x256xf32> to vector<512x256xbf16>
    %c0_8 = arith.constant 0 : index
    %c0_9 = arith.constant 0 : index
    %14 = vector.load %arg5[%c0_8, %c0_9] : memref<512x256xbf16, #tpu.memory_space<vmem>>, vector<512x256xbf16>
    tpu.vector_store %arg5[%c0_8, %c0_9], %13 {strides = array<i32>} : memref<512x256xbf16, #tpu.memory_space<vmem>>, vector<512x256xbf16>,
    %cst_10 = arith.constant dense<0.000000e+00> : vector<256xf32>
    %15 = vector.multi_reduction <add>, %12, %cst_10 [0] : vector<512x256xf32> to vector<256xf32>
    %16 = vector.shape_cast %15 : vector<256xf32> to vector<1x256xf32>
    %17 = arith.mulf %12, %12 : vector<512x256xf32>
    %cst_11 = arith.constant dense<0.000000e+00> : vector<256xf32>
    %18 = vector.multi_reduction <add>, %17, %cst_11 [0] : vector<512x256xf32> to vector<256xf32>
    %19 = vector.shape_cast %18 : vector<256xf32> to vector<1x256xf32>
    %20 = tpu.concatenate %16, %19 in 0 : vector<1x256xf32>, vector<1x256xf32> -> vector<2x256xf32>
    %21 = vector.shape_cast %20 : vector<2x256xf32> to vector<1x2x256xf32>
    %c0_12 = arith.constant 0 : index
    %c0_13 = arith.constant 0 : index
    %c0_14 = arith.constant 0 : index
    %22 = vector.load %arg6[%c0_12, %c0_13, %c0_14] : memref<1x2x256xf32, #tpu.memory_space<vmem>>, vector<1x2x256xf32>
    tpu.vector_store %arg6[%c0_12, %c0_13, %c0_14], %21 {strides = array<i32>} : memref<1x2x256xf32, #tpu.memory_space<vmem>>, vector<1x2x256xf32>,
    return
  }
  func.func @transform_0(%arg0: i32) -> (i32, i32) {
    %c0_i32 = arith.constant 0 : i32
    %c0_i32_0 = arith.constant 0 : i32
    return %arg0, %c0_i32 : i32, i32
  }
  func.func @transform_1(%arg0: i32) -> (i32, i32) {
    %c0_i32 = arith.constant 0 : i32
    %c0_i32_0 = arith.constant 0 : i32
    %c0_i32_1 = arith.constant 0 : i32
    return %c0_i32, %c0_i32_0 : i32, i32
  }
  func.func @transform_2(%arg0: i32) -> (i32, i32) {
    %c0_i32 = arith.constant 0 : i32
    %c0_i32_0 = arith.constant 0 : i32
    %c0_i32_1 = arith.constant 0 : i32
    return %c0_i32, %c0_i32_0 : i32, i32
  }
  func.func @transform_3(%arg0: i32) -> (i32, i32) {
    %c0_i32 = arith.constant 0 : i32
    %c0_i32_0 = arith.constant 0 : i32
    %c0_i32_1 = arith.constant 0 : i32
    return %c0_i32, %c0_i32_0 : i32, i32
  }
  func.func @transform_4(%arg0: i32) -> (i32, i32) {
    %c0_i32 = arith.constant 0 : i32
    %c0_i32_0 = arith.constant 0 : i32
    return %arg0, %c0_i32 : i32, i32
  }
  func.func @transform_5(%arg0: i32) -> (i32, i32, i32) {
    %c0_i32 = arith.constant 0 : i32
    %c0_i32_0 = arith.constant 0 : i32
    %c0_i32_1 = arith.constant 0 : i32
    return %arg0, %c0_i32, %c0_i32_0 : i32, i32, i32
  }
}

module attributes {stable_mosaic.version = 11 : i64} {
  func.func @bn_residual_relu_kernel(%arg0: i32, %arg1: memref<512x256xbf16, #tpu.memory_space<vmem>>, %arg2: memref<1x256xf32, #tpu.memory_space<vmem>>, %arg3: memref<1x256xf32, #tpu.memory_space<vmem>>, %arg4: memref<512x256xbf16, #tpu.memory_space<vmem>>, %arg5: memref<1x256xf32, #tpu.memory_space<vmem>>, %arg6: memref<1x256xf32, #tpu.memory_space<vmem>>, %arg7: memref<512x256xf32, #tpu.memory_space<vmem>>) attributes {dimension_semantics = [#tpu.dimension_semantics<parallel>], iteration_bounds = array<i64: 1>, scalar_prefetch = 0 : i64, scratch_operands = 0 : i64, tpu.core_type = #tpu.core_type<tc>, window_params = [{transform_indices = @transform_0, window_bounds = array<i64: 512, 256>}, {pipeline_mode = #tpu.pipeline_mode<synchronous>, transform_indices = @transform_1, window_bounds = array<i64: 1, 256>}, {pipeline_mode = #tpu.pipeline_mode<synchronous>, transform_indices = @transform_2, window_bounds = array<i64: 1, 256>}, {transform_indices = @transform_3, window_bounds = array<i64: 512, 256>}, {pipeline_mode = #tpu.pipeline_mode<synchronous>, transform_indices = @transform_4, window_bounds = array<i64: 1, 256>}, {pipeline_mode = #tpu.pipeline_mode<synchronous>, transform_indices = @transform_5, window_bounds = array<i64: 1, 256>}, {transform_indices = @transform_6, window_bounds = array<i64: 512, 256>}]} {
    %c0 = arith.constant 0 : index
    %c0_0 = arith.constant 0 : index
    %0 = vector.load %arg1[%c0, %c0_0] : memref<512x256xbf16, #tpu.memory_space<vmem>>, vector<512x256xbf16>
    %1 = arith.extf %0 : vector<512x256xbf16> to vector<512x256xf32>
    %c0_1 = arith.constant 0 : index
    %c0_2 = arith.constant 0 : index
    %2 = vector.load %arg2[%c0_1, %c0_2] : memref<1x256xf32, #tpu.memory_space<vmem>>, vector<1x256xf32>
    %3 = vector.broadcast %2 : vector<1x256xf32> to vector<512x256xf32>
    %4 = arith.mulf %1, %3 : vector<512x256xf32>
    %c0_3 = arith.constant 0 : index
    %c0_4 = arith.constant 0 : index
    %5 = vector.load %arg3[%c0_3, %c0_4] : memref<1x256xf32, #tpu.memory_space<vmem>>, vector<1x256xf32>
    %6 = vector.broadcast %5 : vector<1x256xf32> to vector<512x256xf32>
    %7 = arith.addf %4, %6 : vector<512x256xf32>
    %c0_5 = arith.constant 0 : index
    %c0_6 = arith.constant 0 : index
    %8 = vector.load %arg4[%c0_5, %c0_6] : memref<512x256xbf16, #tpu.memory_space<vmem>>, vector<512x256xbf16>
    %9 = arith.extf %8 : vector<512x256xbf16> to vector<512x256xf32>
    %c0_7 = arith.constant 0 : index
    %c0_8 = arith.constant 0 : index
    %10 = vector.load %arg5[%c0_7, %c0_8] : memref<1x256xf32, #tpu.memory_space<vmem>>, vector<1x256xf32>
    %11 = vector.broadcast %10 : vector<1x256xf32> to vector<512x256xf32>
    %12 = arith.mulf %9, %11 : vector<512x256xf32>
    %c0_9 = arith.constant 0 : index
    %c0_10 = arith.constant 0 : index
    %13 = vector.load %arg6[%c0_9, %c0_10] : memref<1x256xf32, #tpu.memory_space<vmem>>, vector<1x256xf32>
    %14 = vector.broadcast %13 : vector<1x256xf32> to vector<512x256xf32>
    %15 = arith.addf %12, %14 : vector<512x256xf32>
    %16 = arith.addf %7, %15 : vector<512x256xf32>
    %cst = arith.constant 0.000000e+00 : f32
    %17 = vector.broadcast %cst : f32 to vector<512x256xf32>
    %18 = arith.maximumf %16, %17 : vector<512x256xf32>
    %c0_11 = arith.constant 0 : index
    %c0_12 = arith.constant 0 : index
    %19 = vector.load %arg7[%c0_11, %c0_12] : memref<512x256xf32, #tpu.memory_space<vmem>>, vector<512x256xf32>
    tpu.vector_store %arg7[%c0_11, %c0_12], %18 {strides = array<i32>} : memref<512x256xf32, #tpu.memory_space<vmem>>, vector<512x256xf32>,
    return
  }
  func.func @transform_0(%arg0: i32) -> (i32, i32) {
    %c0_i32 = arith.constant 0 : i32
    %c0_i32_0 = arith.constant 0 : i32
    return %arg0, %c0_i32 : i32, i32
  }
  func.func @transform_1(%arg0: i32) -> (i32, i32) {
    %c0_i32 = arith.constant 0 : i32
    %c0_i32_0 = arith.constant 0 : i32
    %c0_i32_1 = arith.constant 0 : i32
    return %c0_i32, %c0_i32_0 : i32, i32
  }
  func.func @transform_2(%arg0: i32) -> (i32, i32) {
    %c0_i32 = arith.constant 0 : i32
    %c0_i32_0 = arith.constant 0 : i32
    %c0_i32_1 = arith.constant 0 : i32
    return %c0_i32, %c0_i32_0 : i32, i32
  }
  func.func @transform_3(%arg0: i32) -> (i32, i32) {
    %c0_i32 = arith.constant 0 : i32
    %c0_i32_0 = arith.constant 0 : i32
    return %arg0, %c0_i32 : i32, i32
  }
  func.func @transform_4(%arg0: i32) -> (i32, i32) {
    %c0_i32 = arith.constant 0 : i32
    %c0_i32_0 = arith.constant 0 : i32
    %c0_i32_1 = arith.constant 0 : i32
    return %c0_i32, %c0_i32_0 : i32, i32
  }
  func.func @transform_5(%arg0: i32) -> (i32, i32) {
    %c0_i32 = arith.constant 0 : i32
    %c0_i32_0 = arith.constant 0 : i32
    %c0_i32_1 = arith.constant 0 : i32
    return %c0_i32, %c0_i32_0 : i32, i32
  }
  func.func @transform_6(%arg0: i32) -> (i32, i32) {
    %c0_i32 = arith.constant 0 : i32
    %c0_i32_0 = arith.constant 0 : i32
    return %arg0, %c0_i32 : i32, i32
  }
}

</mosaic_0001>

<llo_original>
// kernel: bottleneck_forward.4
$region0: #{bottleneck_forward.4}
  #allocation0 [shape = 'u32[]', space=smem, size = 0x4, offset = 0x4, fixed_abs, tag = 'smem constant byte address 0x4 - core index']
  #allocation1 [shape = 'u32[144,128]{1,0:T(1,128)}', space=vmem, size = 0x12000, scoped, tag = 'internal scratch']
  %s0 = inlined_call_operand.hbm [shape: bf16[512,256], index: 0, kind: input, shape index: {}]
  %s1 = inlined_call_operand.hbm [shape: bf16[256,128], index: 1, kind: input, shape index: {}]
  %s2 = inlined_call_operand.hbm [shape: bf16[512,128], index: 2, kind: output, shape index: {0}]
  %s3 = inlined_call_operand.hbm [shape: f32[1,2,128], index: 3, kind: output, shape index: {1}]
  %4 = xla_tuple %s2, %s3
  %s5 = sld [smem:[#allocation0]]
  $region34: #{bottleneck_forward.4} parent=0
    _
  %s7 = ssub.s32 1, %s5
  %s8 = scalar_select 0, %s7, %s5
  $region1: #{bottleneck_forward.4} parent=0
    #allocation2 [shape = 'u8[262144]{0}', space=vmem, size = 0x40000, scoped, tag = 'input window, operand 0, single buffered']
    #allocation3 [shape = 's32[1]{0}', space=sflag, size = 0x4, scoped, tag = 'scoped memory for bottleneck_forward.4']
    #allocation4 [shape = 's32[1]{0}', space=sflag, size = 0x4, scoped, tag = 'scoped memory for bottleneck_forward.4']
    #allocation5 [shape = 'u8[65536]{0}', space=vmem, size = 0x10000, scoped, tag = 'input window, operand 1, single buffered']
    #allocation6 [shape = 's32[1]{0}', space=sflag, size = 0x4, scoped, tag = 'scoped memory for bottleneck_forward.4']
    #allocation7 [shape = 'u8[131072]{0}', space=vmem, size = 0x20000, scoped, tag = 'output window, operand 0, single buffered']
    #allocation8 [shape = 'u8[1024]{0}', space=vmem, size = 0x400, scoped, tag = 'output window, operand 1, single buffered']
    #allocation9 [shape = 's32[1]{0}', space=sflag, size = 0x4, scoped, tag = 'scoped memory for bottleneck_forward.4']
    %9 = vsyncpa [#allocation3], 0
    %10 = vsyncpa [#allocation6], 0
    %11 = vsyncpa [#allocation4], 0
    %12 = vsyncpa [#allocation9], 0
    // Predicated region
    $region2: #{bottleneck_forward.4} parent=1 // pred_check
      _
    $region3: #{bottleneck_forward.4} parent=1 // pred_check_branch
      %14 = sbr.rel (0) target = $region5
    $region4: #{bottleneck_forward.4} parent=1 // pred_region
      %s16 = ssub.s32 8192, 8192
      %17 = vsyncadd [#allocation3], %s16
      %s18 = sshll.u32 [#allocation2], 4
      %s19 = int_to_ptr.vmem [resolvable:$true] %s18
      %24 = dma.hbm_to_vmem [thread:$0]  %s0, 8192, %s19, [#allocation3], 128, 128, 8
    $region5: #{bottleneck_forward.4} parent=1 // pred_fallthru
      _
    // Predicated region
    $region6: #{bottleneck_forward.4} parent=1 // pred_check
      _
    $region7: #{bottleneck_forward.4} parent=1 // pred_check_branch
      %26 = sbr.rel (0) target = $region9
    $region8: #{bottleneck_forward.4} parent=1 // pred_region
      %s28 = ssub.s32 2048, 2048
      %29 = vsyncadd [#allocation6], %s28
      %s30 = sshll.u32 [#allocation5], 4
      %s31 = int_to_ptr.vmem [resolvable:$true] %s30
      %36 = dma.hbm_to_vmem [thread:$0]  %s1, 2048, %s31, [#allocation6], 64, 64, 4
    $region9: #{bottleneck_forward.4} parent=1 // pred_fallthru
      _
    // Predicated region
    $region10: #{bottleneck_forward.4} parent=1 // pred_check
      _
    $region11: #{bottleneck_forward.4} parent=1 // pred_check_branch
      %38 = sbr.rel (0) target = $region13
    $region12: #{bottleneck_forward.4} parent=1 // pred_region
      %39 = dma.done [#allocation3], 8192
    $region13: #{bottleneck_forward.4} parent=1 // pred_fallthru
      _
    // Predicated region
    $region14: #{bottleneck_forward.4} parent=1 // pred_check
      _
    $region15: #{bottleneck_forward.4} parent=1 // pred_check_branch
      %41 = sbr.rel (0) target = $region17
    $region16: #{bottleneck_forward.4} parent=1 // pred_region
      %42 = dma.done [#allocation6], 2048
    $region17: #{bottleneck_forward.4} parent=1 // pred_fallthru
      _
    %v44 = vld [vmem:[#allocation2] sm:$0xff]
    %v45 = vld [vmem:[#allocation2 + $0x8] sm:$0xff]
    %v46 = vld [vmem:[#allocation2 + $0x10] sm:$0xff]
    %v47 = vld [vmem:[#allocation2 + $0x18] sm:$0xff]
    %v48 = vld [vmem:[#allocation2 + $0x20] sm:$0xff]
    %v49 = vld [vmem:[#allocation2 + $0x28] sm:$0xff]
    %v50 = vld [vmem:[#allocation2 + $0x30] sm:$0xff]
    %v51 = vld [vmem:[#allocation2 + $0x38] sm:$0xff]
    %v52 = vld [vmem:[#allocation2 + $0x40] sm:$0xff]
    %v53 = vld [vmem:[#allocation2 + $0x48] sm:$0xff]
    %v54 = vld [vmem:[#allocation2 + $0x50] sm:$0xff]
    %v55 = vld [vmem:[#allocation2 + $0x58] sm:$0xff]
    %v56 = vld [vmem:[#allocation2 + $0x60] sm:$0xff]
    %v57 = vld [vmem:[#allocation2 + $0x68] sm:$0xff]
    %v58 = vld [vmem:[#allocation2 + $0x70] sm:$0xff]
    %v59 = vld [vmem:[#allocation2 + $0x78] sm:$0xff]
    %v60 = vld [vmem:[#allocation2 + $0x80] sm:$0xff]
    %v61 = vld [vmem:[#allocation2 + $0x88] sm:$0xff]
    %v62 = vld [vmem:[#allocation2 + $0x90] sm:$0xff]
    %v63 = vld [vmem:[#allocation2 + $0x98] sm:$0xff]
    %v64 = vld [vmem:[#allocation2 + $0xa0] sm:$0xff]
    %v65 = vld [vmem:[#allocation2 + $0xa8] sm:$0xff]
    %v66 = vld [vmem:[#allocation2 + $0xb0] sm:$0xff]
    %v67 = vld [vmem:[#allocation2 + $0xb8] sm:$0xff]
    %v68 = vld [vmem:[#allocation2 + $0xc0] sm:$0xff]
    %v69 = vld [vmem:[#allocation2 + $0xc8] sm:$0xff]
    %v70 = vld [vmem:[#allocation2 + $0xd0] sm:$0xff]
    %v71 = vld [vmem:[#allocation2 + $0xd8] sm:$0xff]
    %v72 = vld [vmem:[#allocation2 + $0xe0] sm:$0xff]
    %v73 = vld [vmem:[#allocation2 + $0xe8] sm:$0xff]
    %v74 = vld [vmem:[#allocation2 + $0xf0] sm:$0xff]
    %v75 = vld [vmem:[#allocation2 + $0xf8] sm:$0xff]
    %v76 = vld [vmem:[#allocation2 + $0x100] sm:$0xff]
    %v77 = vld [vmem:[#allocation2 + $0x108] sm:$0xff]
    %v78 = vld [vmem:[#allocation2 + $0x110] sm:$0xff]
    %v79 = vld [vmem:[#allocation2 + $0x118] sm:$0xff]
    %v80 = vld [vmem:[#allocation2 + $0x120] sm:$0xff]
    %v81 = vld [vmem:[#allocation2 + $0x128] sm:$0xff]
    %v82 = vld [vmem:[#allocation2 + $0x130] sm:$0xff]
    %v83 = vld [vmem:[#allocation2 + $0x138] sm:$0xff]
    %v84 = vld [vmem:[#allocation2 + $0x140] sm:$0xff]
    %v85 = vld [vmem:[#allocation2 + $0x148] sm:$0xff]
    %v86 = vld [vmem:[#allocation2 + $0x150] sm:$0xff]
    %v87 = vld [vmem:[#allocation2 + $0x158] sm:$0xff]
    %v88 = vld [vmem:[#allocation2 + $0x160] sm:$0xff]
    %v89 = vld [vmem:[#allocation2 + $0x168] sm:$0xff]
    %v90 = vld [vmem:[#allocation2 + $0x170] sm:$0xff]
    %v91 = vld [vmem:[#allocation2 + $0x178] sm:$0xff]
    %v92 = vld [vmem:[#allocation2 + $0x180] sm:$0xff]
    %v93 = vld [vmem:[#allocation2 + $0x188] sm:$0xff]
    %v94 = vld [vmem:[#allocation2 + $0x190] sm:$0xff]
    %v95 = vld [vmem:[#allocation2 + $0x198] sm:$0xff]
    %v96 = vld [vmem:[#allocation2 + $0x1a0] sm:$0xff]
    %v97 = vld [vmem:[#allocation2 + $0x1a8] sm:$0xff]
    %v98 = vld [vmem:[#allocation2 + $0x1b0] sm:$0xff]
    %v99 = vld [vmem:[#allocation2 + $0x1b8] sm:$0xff]
    %v100 = vld [vmem:[#allocation2 + $0x1c0] sm:$0xff]
    %v101 = vld [vmem:[#allocation2 + $0x1c8] sm:$0xff]
    %v102 = vld [vmem:[#allocation2 + $0x1d0] sm:$0xff]
    %v103 = vld [vmem:[#allocation2 + $0x1d8] sm:$0xff]
    %v104 = vld [vmem:[#allocation2 + $0x1e0] sm:$0xff]
    %v105 = vld [vmem:[#allocation2 + $0x1e8] sm:$0xff]
    %v106 = vld [vmem:[#allocation2 + $0x1f0] sm:$0xff]
    %v107 = vld [vmem:[#allocation2 + $0x1f8] sm:$0xff]
    %v108 = vld [vmem:[#allocation5] sm:$0xf]
    %v109 = vld [vmem:[#allocation5 + $0x4] sm:$0xf]
    %v110 = vld [vmem:[#allocation5 + $0x8] sm:$0xf]
    %v111 = vld [vmem:[#allocation5 + $0xc] sm:$0xf]
    %v112 = vld [vmem:[#allocation5 + $0x10] sm:$0xf]
    %v113 = vld [vmem:[#allocation5 + $0x14] sm:$0xf]
    %v114 = vld [vmem:[#allocation5 + $0x18] sm:$0xf]
    %v115 = vld [vmem:[#allocation5 + $0x1c] sm:$0xf]
    %v116 = vld [vmem:[#allocation5 + $0x20] sm:$0xf]
    %v117 = vld [vmem:[#allocation5 + $0x24] sm:$0xf]
    %v118 = vld [vmem:[#allocation5 + $0x28] sm:$0xf]
    %v119 = vld [vmem:[#allocation5 + $0x2c] sm:$0xf]
    %v120 = vld [vmem:[#allocation5 + $0x30] sm:$0xf]
    %v121 = vld [vmem:[#allocation5 + $0x34] sm:$0xf]
    %v122 = vld [vmem:[#allocation5 + $0x38] sm:$0xf]
    %v123 = vld [vmem:[#allocation5 + $0x3c] sm:$0xf]
    %v124 = vld [vmem:[#allocation5 + $0x40] sm:$0xf]
    %v125 = vld [vmem:[#allocation5 + $0x44] sm:$0xf]
    %v126 = vld [vmem:[#allocation5 + $0x48] sm:$0xf]
    %v127 = vld [vmem:[#allocation5 + $0x4c] sm:$0xf]
    %v128 = vld [vmem:[#allocation5 + $0x50] sm:$0xf]
    %v129 = vld [vmem:[#allocation5 + $0x54] sm:$0xf]
    %v130 = vld [vmem:[#allocation5 + $0x58] sm:$0xf]
    %v131 = vld [vmem:[#allocation5 + $0x5c] sm:$0xf]
    %v132 = vld [vmem:[#allocation5 + $0x60] sm:$0xf]
    %v133 = vld [vmem:[#allocation5 + $0x64] sm:$0xf]
    %v134 = vld [vmem:[#allocation5 + $0x68] sm:$0xf]
    %v135 = vld [vmem:[#allocation5 + $0x6c] sm:$0xf]
    %v136 = vld [vmem:[#allocation5 + $0x70] sm:$0xf]
    %v137 = vld [vmem:[#allocation5 + $0x74] sm:$0xf]
    %v138 = vld [vmem:[#allocation5 + $0x78] sm:$0xf]
    %v139 = vld [vmem:[#allocation5 + $0x7c] sm:$0xf]
    %v204 = vunpack.c.l.b16 %v44
    %v205 = vunpack.c.h.b16 %v44
    %v206 = vunpack.c.l.b16 %v45
    %v207 = vunpack.c.h.b16 %v45
    %v208 = vunpack.c.l.b16 %v46
    %v209 = vunpack.c.h.b16 %v46
    %v210 = vunpack.c.l.b16 %v47
    %v211 = vunpack.c.h.b16 %v47
    %v212 = vunpack.c.l.b16 %v48
    %v213 = vunpack.c.h.b16 %v48
    %v214 = vunpack.c.l.b16 %v49
    %v215 = vunpack.c.h.b16 %v49
    %v216 = vunpack.c.l.b16 %v50
    %v217 = vunpack.c.h.b16 %v50
    %v218 = vunpack.c.l.b16 %v51
    %v219 = vunpack.c.h.b16 %v51
    %v220 = vunpack.c.l.b16 %v52
    %v221 = vunpack.c.h.b16 %v52
    %v222 = vunpack.c.l.b16 %v53
    %v223 = vunpack.c.h.b16 %v53
    %v224 = vunpack.c.l.b16 %v54
    %v225 = vunpack.c.h.b16 %v54
    %v226 = vunpack.c.l.b16 %v55
    %v227 = vunpack.c.h.b16 %v55
    %v228 = vunpack.c.l.b16 %v56
    %v229 = vunpack.c.h.b16 %v56
    %v230 = vunpack.c.l.b16 %v57
    %v231 = vunpack.c.h.b16 %v57
    %v232 = vunpack.c.l.b16 %v58
    %v233 = vunpack.c.h.b16 %v58
    %v234 = vunpack.c.l.b16 %v59
    %v235 = vunpack.c.h.b16 %v59
    %v236 = vunpack.c.l.b16 %v60
    %v237 = vunpack.c.h.b16 %v60
    %v238 = vunpack.c.l.b16 %v61
    %v239 = vunpack.c.h.b16 %v61
    %v240 = vunpack.c.l.b16 %v62
    %v241 = vunpack.c.h.b16 %v62
    %v242 = vunpack.c.l.b16 %v63
    %v243 = vunpack.c.h.b16 %v63
    %v244 = vunpack.c.l.b16 %v64
    %v245 = vunpack.c.h.b16 %v64
    %v246 = vunpack.c.l.b16 %v65
    %v247 = vunpack.c.h.b16 %v65
    %v248 = vunpack.c.l.b16 %v66
    %v249 = vunpack.c.h.b16 %v66
    %v250 = vunpack.c.l.b16 %v67
    %v251 = vunpack.c.h.b16 %v67
    %v252 = vunpack.c.l.b16 %v68
    %v253 = vunpack.c.h.b16 %v68
    %v254 = vunpack.c.l.b16 %v69
    %v255 = vunpack.c.h.b16 %v69
    %v256 = vunpack.c.l.b16 %v70
    %v257 = vunpack.c.h.b16 %v70
    %v258 = vunpack.c.l.b16 %v71
    %v259 = vunpack.c.h.b16 %v71
    %v260 = vunpack.c.l.b16 %v72
    %v261 = vunpack.c.h.b16 %v72
    %v262 = vunpack.c.l.b16 %v73
    %v263 = vunpack.c.h.b16 %v73
    %v264 = vunpack.c.l.b16 %v74
    %v265 = vunpack.c.h.b16 %v74
    %v266 = vunpack.c.l.b16 %v75
    %v267 = vunpack.c.h.b16 %v75
    %v268 = vunpack.c.l.b16 %v76
    %v269 = vunpack.c.h.b16 %v76
    %v270 = vunpack.c.l.b16 %v77
    %v271 = vunpack.c.h.b16 %v77
    %v272 = vunpack.c.l.b16 %v78
    %v273 = vunpack.c.h.b16 %v78
    %v274 = vunpack.c.l.b16 %v79
    %v275 = vunpack.c.h.b16 %v79
    %v276 = vunpack.c.l.b16 %v80
    %v277 = vunpack.c.h.b16 %v80
    %v278 = vunpack.c.l.b16 %v81
    %v279 = vunpack.c.h.b16 %v81
    %v280 = vunpack.c.l.b16 %v82
    %v281 = vunpack.c.h.b16 %v82
    %v282 = vunpack.c.l.b16 %v83
    %v283 = vunpack.c.h.b16 %v83
    %v284 = vunpack.c.l.b16 %v84
    %v285 = vunpack.c.h.b16 %v84
    %v286 = vunpack.c.l.b16 %v85
    %v287 = vunpack.c.h.b16 %v85
    %v288 = vunpack.c.l.b16 %v86
    %v289 = vunpack.c.h.b16 %v86
    %v290 = vunpack.c.l.b16 %v87
    %v291 = vunpack.c.h.b16 %v87
    %v292 = vunpack.c.l.b16 %v88
    %v293 = vunpack.c.h.b16 %v88
    %v294 = vunpack.c.l.b16 %v89
    %v295 = vunpack.c.h.b16 %v89
    %v296 = vunpack.c.l.b16 %v90
    %v297 = vunpack.c.h.b16 %v90
    %v298 = vunpack.c.l.b16 %v91
    %v299 = vunpack.c.h.b16 %v91
    %v300 = vunpack.c.l.b16 %v92
    %v301 = vunpack.c.h.b16 %v92
    %v302 = vunpack.c.l.b16 %v93
    %v303 = vunpack.c.h.b16 %v93
    %v304 = vunpack.c.l.b16 %v94
    %v305 = vunpack.c.h.b16 %v94
    %v306 = vunpack.c.l.b16 %v95
    %v307 = vunpack.c.h.b16 %v95
    %v308 = vunpack.c.l.b16 %v96
    %v309 = vunpack.c.h.b16 %v96
    %v310 = vunpack.c.l.b16 %v97
    %v311 = vunpack.c.h.b16 %v97
    %v312 = vunpack.c.l.b16 %v98
    %v313 = vunpack.c.h.b16 %v98
    %v314 = vunpack.c.l.b16 %v99
    %v315 = vunpack.c.h.b16 %v99
    %v316 = vunpack.c.l.b16 %v100
    %v317 = vunpack.c.h.b16 %v100
    %v318 = vunpack.c.l.b16 %v101
    %v319 = vunpack.c.h.b16 %v101
    %v320 = vunpack.c.l.b16 %v102
    %v321 = vunpack.c.h.b16 %v102
    %v322 = vunpack.c.l.b16 %v103
    %v323 = vunpack.c.h.b16 %v103
    %v324 = vunpack.c.l.b16 %v104
    %v325 = vunpack.c.h.b16 %v104
    %v326 = vunpack.c.l.b16 %v105
    %v327 = vunpack.c.h.b16 %v105
    %v328 = vunpack.c.l.b16 %v106
    %v329 = vunpack.c.h.b16 %v106
    %v330 = vunpack.c.l.b16 %v107
    %v331 = vunpack.c.h.b16 %v107
    %v332 = vpack.c.b16 %v206, %v204
    %v333 = vpack.c.b16 %v207, %v205
    %v334 = vpack.c.b16 %v210, %v208
    %v335 = vpack.c.b16 %v211, %v209
    %v336 = vpack.c.b16 %v214, %v212
    %v337 = vpack.c.b16 %v215, %v213
    %v338 = vpack.c.b16 %v218, %v216
    %v339 = vpack.c.b16 %v219, %v217
    %v340 = vpack.c.b16 %v222, %v220
    %v341 = vpack.c.b16 %v223, %v221
    %v342 = vpack.c.b16 %v226, %v224
    %v343 = vpack.c.b16 %v227, %v225
    %v344 = vpack.c.b16 %v230, %v228
    %v345 = vpack.c.b16 %v231, %v229
    %v346 = vpack.c.b16 %v234, %v232
    %v347 = vpack.c.b16 %v235, %v233
    %v348 = vpack.c.b16 %v238, %v236
    %v349 = vpack.c.b16 %v239, %v237
    %v350 = vpack.c.b16 %v242, %v240
    %v351 = vpack.c.b16 %v243, %v241
    %v352 = vpack.c.b16 %v246, %v244
    %v353 = vpack.c.b16 %v247, %v245
    %v354 = vpack.c.b16 %v250, %v248
    %v355 = vpack.c.b16 %v251, %v249
    %v356 = vpack.c.b16 %v254, %v252
    %v357 = vpack.c.b16 %v255, %v253
    %v358 = vpack.c.b16 %v258, %v256
    %v359 = vpack.c.b16 %v259, %v257
    %v360 = vpack.c.b16 %v262, %v260
    %v361 = vpack.c.b16 %v263, %v261
    %v362 = vpack.c.b16 %v266, %v264
    %v363 = vpack.c.b16 %v267, %v265
    %v364 = vpack.c.b16 %v270, %v268
    %v365 = vpack.c.b16 %v271, %v269
    %v366 = vpack.c.b16 %v274, %v272
    %v367 = vpack.c.b16 %v275, %v273
    %v368 = vpack.c.b16 %v278, %v276
    %v369 = vpack.c.b16 %v279, %v277
    %v370 = vpack.c.b16 %v282, %v280
    %v371 = vpack.c.b16 %v283, %v281
    %v372 = vpack.c.b16 %v286, %v284
    %v373 = vpack.c.b16 %v287, %v285
    %v374 = vpack.c.b16 %v290, %v288
    %v375 = vpack.c.b16 %v291, %v289
    %v376 = vpack.c.b16 %v294, %v292
    %v377 = vpack.c.b16 %v295, %v293
    %v378 = vpack.c.b16 %v298, %v296
    %v379 = vpack.c.b16 %v299, %v297
    %v380 = vpack.c.b16 %v302, %v300
    %v381 = vpack.c.b16 %v303, %v301
    %v382 = vpack.c.b16 %v306, %v304
    %v383 = vpack.c.b16 %v307, %v305
    %v384 = vpack.c.b16 %v310, %v308
    %v385 = vpack.c.b16 %v311, %v309
    %v386 = vpack.c.b16 %v314, %v312
    %v387 = vpack.c.b16 %v315, %v313
    %v388 = vpack.c.b16 %v318, %v316
    %v389 = vpack.c.b16 %v319, %v317
    %v390 = vpack.c.b16 %v322, %v320
    %v391 = vpack.c.b16 %v323, %v321
    %v392 = vpack.c.b16 %v326, %v324
    %v393 = vpack.c.b16 %v327, %v325
    %v394 = vpack.c.b16 %v330, %v328
    %v395 = vpack.c.b16 %v331, %v329
    %v492 = vunpack.c.l.b16 %v108
    %v493 = vunpack.c.l.b16 %v109
    %v494 = vunpack.c.l.b16 %v110
    %v495 = vunpack.c.l.b16 %v111
    %v496 = vunpack.c.l.b16 %v112
    %v497 = vunpack.c.l.b16 %v113
    %v498 = vunpack.c.l.b16 %v114
    %v499 = vunpack.c.l.b16 %v115
    %v500 = vunpack.c.l.b16 %v116
    %v501 = vunpack.c.l.b16 %v117
    %v502 = vunpack.c.l.b16 %v118
    %v503 = vunpack.c.l.b16 %v119
    %v504 = vunpack.c.l.b16 %v120
    %v505 = vunpack.c.l.b16 %v121
    %v506 = vunpack.c.l.b16 %v122
    %v507 = vunpack.c.l.b16 %v123
    %v508 = vunpack.c.l.b16 %v124
    %v509 = vunpack.c.l.b16 %v125
    %v510 = vunpack.c.l.b16 %v126
    %v511 = vunpack.c.l.b16 %v127
    %v512 = vunpack.c.l.b16 %v128
    %v513 = vunpack.c.l.b16 %v129
    %v514 = vunpack.c.l.b16 %v130
    %v515 = vunpack.c.l.b16 %v131
    %v516 = vunpack.c.l.b16 %v132
    %v517 = vunpack.c.l.b16 %v133
    %v518 = vunpack.c.l.b16 %v134
    %v519 = vunpack.c.l.b16 %v135
    %v520 = vunpack.c.l.b16 %v136
    %v521 = vunpack.c.l.b16 %v137
    %v522 = vunpack.c.l.b16 %v138
    %v523 = vunpack.c.l.b16 %v139
    %v524 = vpack.c.b16 %v493, %v492
    %v525 = vpack.c.b16 %v495, %v494
    %v526 = vpack.c.b16 %v497, %v496
    %v527 = vpack.c.b16 %v499, %v498
    %v528 = vpack.c.b16 %v501, %v500
    %v529 = vpack.c.b16 %v503, %v502
    %v530 = vpack.c.b16 %v505, %v504
    %v531 = vpack.c.b16 %v507, %v506
    %v532 = vpack.c.b16 %v509, %v508
    %v533 = vpack.c.b16 %v511, %v510
    %v534 = vpack.c.b16 %v513, %v512
    %v535 = vpack.c.b16 %v515, %v514
    %v536 = vpack.c.b16 %v517, %v516
    %v537 = vpack.c.b16 %v519, %v518
    %v538 = vpack.c.b16 %v521, %v520
    %v539 = vpack.c.b16 %v523, %v522
    %556 = vmatprep.subr.bf16.mxu0 0
    %557 = vmatpush1.bf16.msra.mxu0 %v524
    %558 = vmatprep.subr.bf16.mxu0 0
    %559 = vmatpush1.bf16.msra.mxu0 %v525
    %560 = vmatprep.subr.bf16.mxu0 0
    %561 = vmatpush1.bf16.msra.mxu0 %v526
    %562 = vmatprep.subr.bf16.mxu0 0
    %563 = vmatpush1.bf16.msra.mxu0 %v527
    %564 = vmatprep.subr.bf16.mxu0 0
    %565 = vmatpush1.bf16.msra.mxu0 %v528
    %566 = vmatprep.subr.bf16.mxu0 0
    %567 = vmatpush1.bf16.msra.mxu0 %v529
    %568 = vmatprep.subr.bf16.mxu0 0
    %569 = vmatpush1.bf16.msra.mxu0 %v530
    %570 = vmatprep.subr.bf16.mxu0 0
    %571 = vmatpush1.bf16.msra.mxu0 %v531
    %572 = vmatprep.subr.bf16.mxu0 0
    %573 = vmatpush1.bf16.msra.mxu0 %v532
    %574 = vmatprep.subr.bf16.mxu0 0
    %575 = vmatpush1.bf16.msra.mxu0 %v533
    %576 = vmatprep.subr.bf16.mxu0 0
    %577 = vmatpush1.bf16.msra.mxu0 %v534
    %578 = vmatprep.subr.bf16.mxu0 0
    %579 = vmatpush1.bf16.msra.mxu0 %v535
    %580 = vmatprep.subr.bf16.mxu0 0
    %581 = vmatpush1.bf16.msra.mxu0 %v536
    %582 = vmatprep.subr.bf16.mxu0 0
    %583 = vmatpush1.bf16.msra.mxu0 %v537
    %584 = vmatprep.subr.bf16.mxu0 0
    %585 = vmatpush1.bf16.msra.mxu0 %v538
    %586 = vmatprep.subr.bf16.mxu0 0
    %587 = vmatpush1.bf16.msra.mxu0 %v539
    %588 = vmatprep.mubr.bf16.mxu0 %v333
    %589 = vmatmul.mubr.bf16.gmra.mrb[0].mxu0 %v332
    %v590 = vpop.f32.mrb[0].mxu0
    %v591 = vadd.f32 0.0, %v590
    %v592 = vpop.f32.mrb[0].mxu0
    %v593 = vpop.f32.mrb[0].mxu0
    %v594 = vadd.f32 0.0, %v593
    %v595 = vpop.f32.mrb[0].mxu0
    %596 = vmatprep.mubr.bf16.mxu0 %v335
    %597 = vmatmul.mubr.bf16.gmra.mrb[0].mxu0 %v334
    %v598 = vpop.f32.mrb[0].mxu0
    %v599 = vadd.f32 0.0, %v598
    %v600 = vpop.f32.mrb[0].mxu0
    %v601 = vpop.f32.mrb[0].mxu0
    %v602 = vadd.f32 0.0, %v601
    %v603 = vpop.f32.mrb[0].mxu0
    %604 = vmatprep.mubr.bf16.mxu0 %v337
    %605 = vmatmul.mubr.bf16.gmra.mrb[0].mxu0 %v336
    %v606 = vpop.f32.mrb[0].mxu0
    %v607 = vadd.f32 0.0, %v606
    %v608 = vpop.f32.mrb[0].mxu0
    %v609 = vpop.f32.mrb[0].mxu0
    %v610 = vadd.f32 0.0, %v609
    %v611 = vpop.f32.mrb[0].mxu0
    %612 = vmatprep.mubr.bf16.mxu0 %v339
    %613 = vmatmul.mubr.bf16.gmra.mrb[0].mxu0 %v338
    %v614 = vpop.f32.mrb[0].mxu0
    %v615 = vadd.f32 0.0, %v614
    %v616 = vpop.f32.mrb[0].mxu0
    %v617 = vpop.f32.mrb[0].mxu0
    %v618 = vadd.f32 0.0, %v617
    %v619 = vpop.f32.mrb[0].mxu0
    %620 = vmatprep.mubr.bf16.mxu0 %v341
    %621 = vmatmul.mubr.bf16.gmra.mrb[0].mxu0 %v340
    %v622 = vpop.f32.mrb[0].mxu0
    %v623 = vadd.f32 0.0, %v622
    %v624 = vpop.f32.mrb[0].mxu0
    %v625 = vpop.f32.mrb[0].mxu0
    %v626 = vadd.f32 0.0, %v625
    %v627 = vpop.f32.mrb[0].mxu0
    %628 = vmatprep.mubr.bf16.mxu0 %v343
    %629 = vmatmul.mubr.bf16.gmra.mrb[0].mxu0 %v342
    %v630 = vpop.f32.mrb[0].mxu0
    %v631 = vadd.f32 0.0, %v630
    %v632 = vpop.f32.mrb[0].mxu0
    %v633 = vpop.f32.mrb[0].mxu0
    %v634 = vadd.f32 0.0, %v633
    %v635 = vpop.f32.mrb[0].mxu0
    %636 = vmatprep.mubr.bf16.mxu0 %v345
    %637 = vmatmul.mubr.bf16.gmra.mrb[0].mxu0 %v344
    %v638 = vpop.f32.mrb[0].mxu0
    %v639 = vadd.f32 0.0, %v638
    %v640 = vpop.f32.mrb[0].mxu0
    %v641 = vpop.f32.mrb[0].mxu0
    %v642 = vadd.f32 0.0, %v641
    %v643 = vpop.f32.mrb[0].mxu0
    %644 = vmatprep.mubr.bf16.mxu0 %v347
    %645 = vmatmul.mubr.bf16.gmra.mrb[0].mxu0 %v346
    %v646 = vpop.f32.mrb[0].mxu0
    %v647 = vadd.f32 0.0, %v646
    %v648 = vpop.f32.mrb[0].mxu0
    %v649 = vpop.f32.mrb[0].mxu0
    %v650 = vadd.f32 0.0, %v649
    %v651 = vpop.f32.mrb[0].mxu0
    %652 = vmatprep.mubr.bf16.mxu0 %v349
    %653 = vmatmul.mubr.bf16.gmra.mrb[0].mxu0 %v348
    %v654 = vpop.f32.mrb[0].mxu0
    %v655 = vadd.f32 0.0, %v654
    %v656 = vpop.f32.mrb[0].mxu0
    %v657 = vpop.f32.mrb[0].mxu0
    %v658 = vadd.f32 0.0, %v657
    %v659 = vpop.f32.mrb[0].mxu0
    %660 = vmatprep.mubr.bf16.mxu0 %v351
    %661 = vmatmul.mubr.bf16.gmra.mrb[0].mxu0 %v350
    %v662 = vpop.f32.mrb[0].mxu0
    %v663 = vadd.f32 0.0, %v662
    %v664 = vpop.f32.mrb[0].mxu0
    %v665 = vpop.f32.mrb[0].mxu0
    %v666 = vadd.f32 0.0, %v665
    %v667 = vpop.f32.mrb[0].mxu0
    %668 = vmatprep.mubr.bf16.mxu0 %v353
    %669 = vmatmul.mubr.bf16.gmra.mrb[0].mxu0 %v352
    %v670 = vpop.f32.mrb[0].mxu0
    %v671 = vadd.f32 0.0, %v670
    %v672 = vpop.f32.mrb[0].mxu0
    %v673 = vpop.f32.mrb[0].mxu0
    %v674 = vadd.f32 0.0, %v673
    %v675 = vpop.f32.mrb[0].mxu0
    %676 = vmatprep.mubr.bf16.mxu0 %v355
    %677 = vmatmul.mubr.bf16.gmra.mrb[0].mxu0 %v354
    %v678 = vpop.f32.mrb[0].mxu0
    %v679 = vadd.f32 0.0, %v678
    %v680 = vpop.f32.mrb[0].mxu0
    %v681 = vpop.f32.mrb[0].mxu0
    %v682 = vadd.f32 0.0, %v681
    %v683 = vpop.f32.mrb[0].mxu0
    %684 = vmatprep.mubr.bf16.mxu0 %v357
    %685 = vmatmul.mubr.bf16.gmra.mrb[0].mxu0 %v356
    %v686 = vpop.f32.mrb[0].mxu0
    %v687 = vadd.f32 0.0, %v686
    %v688 = vpop.f32.mrb[0].mxu0
    %v689 = vpop.f32.mrb[0].mxu0
    %v690 = vadd.f32 0.0, %v689
    %v691 = vpop.f32.mrb[0].mxu0
    %692 = vmatprep.mubr.bf16.mxu0 %v359
    %693 = vmatmul.mubr.bf16.gmra.mrb[0].mxu0 %v358
    %v694 = vpop.f32.mrb[0].mxu0
    %v695 = vadd.f32 0.0, %v694
    %v696 = vpop.f32.mrb[0].mxu0
    %v697 = vpop.f32.mrb[0].mxu0
    %v698 = vadd.f32 0.0, %v697
    %v699 = vpop.f32.mrb[0].mxu0
    %700 = vmatprep.mubr.bf16.mxu0 %v361
    %701 = vmatmul.mubr.bf16.gmra.mrb[0].mxu0 %v360
    %v702 = vpop.f32.mrb[0].mxu0
    %v703 = vadd.f32 0.0, %v702
    %v704 = vpop.f32.mrb[0].mxu0
    %v705 = vpop.f32.mrb[0].mxu0
    %v706 = vadd.f32 0.0, %v705
    %v707 = vpop.f32.mrb[0].mxu0
    %708 = vmatprep.mubr.bf16.mxu0 %v363
    %709 = vmatmul.mubr.bf16.gmra.mrb[0].mxu0 %v362
    %v710 = vpop.f32.mrb[0].mxu0
    %v711 = vadd.f32 0.0, %v710
    %v712 = vpop.f32.mrb[0].mxu0
    %v713 = vpop.f32.mrb[0].mxu0
    %v714 = vadd.f32 0.0, %v713
    %v715 = vpop.f32.mrb[0].mxu0
    %716 = vmatprep.mubr.bf16.mxu0 %v365
    %717 = vmatmul.mubr.bf16.gmra.mrb[0].mxu0 %v364
    %v718 = vpop.f32.mrb[0].mxu0
    %v719 = vadd.f32 0.0, %v718
    %v720 = vpop.f32.mrb[0].mxu0
    %v721 = vpop.f32.mrb[0].mxu0
    %v722 = vadd.f32 0.0, %v721
    %v723 = vpop.f32.mrb[0].mxu0
    %724 = vmatprep.mubr.bf16.mxu0 %v367
    %725 = vmatmul.mubr.bf16.gmra.mrb[0].mxu0 %v366
    %v726 = vpop.f32.mrb[0].mxu0
    %v727 = vadd.f32 0.0, %v726
    %v728 = vpop.f32.mrb[0].mxu0
    %v729 = vpop.f32.mrb[0].mxu0
    %v730 = vadd.f32 0.0, %v729
    %v731 = vpop.f32.mrb[0].mxu0
    %732 = vmatprep.mubr.bf16.mxu0 %v369
    %733 = vmatmul.mubr.bf16.gmra.mrb[0].mxu0 %v368
    %v734 = vpop.f32.mrb[0].mxu0
    %v735 = vadd.f32 0.0, %v734
    %v736 = vpop.f32.mrb[0].mxu0
    %v737 = vpop.f32.mrb[0].mxu0
    %v738 = vadd.f32 0.0, %v737
    %v739 = vpop.f32.mrb[0].mxu0
    %740 = vmatprep.mubr.bf16.mxu0 %v371
    %741 = vmatmul.mubr.bf16.gmra.mrb[0].mxu0 %v370
    %v742 = vpop.f32.mrb[0].mxu0
    %v743 = vadd.f32 0.0, %v742
    %v744 = vpop.f32.mrb[0].mxu0
    %v745 = vpop.f32.mrb[0].mxu0
    %v746 = vadd.f32 0.0, %v745
    %v747 = vpop.f32.mrb[0].mxu0
    %748 = vmatprep.mubr.bf16.mxu0 %v373
    %749 = vmatmul.mubr.bf16.gmra.mrb[0].mxu0 %v372
    %v750 = vpop.f32.mrb[0].mxu0
    %v751 = vadd.f32 0.0, %v750
    %v752 = vpop.f32.mrb[0].mxu0
    %v753 = vpop.f32.mrb[0].mxu0
    %v754 = vadd.f32 0.0, %v753
    %v755 = vpop.f32.mrb[0].mxu0
    %756 = vmatprep.mubr.bf16.mxu0 %v375
    %757 = vmatmul.mubr.bf16.gmra.mrb[0].mxu0 %v374
    %v758 = vpop.f32.mrb[0].mxu0
    %v759 = vadd.f32 0.0, %v758
    %v760 = vpop.f32.mrb[0].mxu0
    %v761 = vpop.f32.mrb[0].mxu0
    %v762 = vadd.f32 0.0, %v761
    %v763 = vpop.f32.mrb[0].mxu0
    %764 = vmatprep.mubr.bf16.mxu0 %v377
    %765 = vmatmul.mubr.bf16.gmra.mrb[0].mxu0 %v376
    %v766 = vpop.f32.mrb[0].mxu0
    %v767 = vadd.f32 0.0, %v766
    %v768 = vpop.f32.mrb[0].mxu0
    %v769 = vpop.f32.mrb[0].mxu0
    %v770 = vadd.f32 0.0, %v769
    %v771 = vpop.f32.mrb[0].mxu0
    %772 = vmatprep.mubr.bf16.mxu0 %v379
    %773 = vmatmul.mubr.bf16.gmra.mrb[0].mxu0 %v378
    %v774 = vpop.f32.mrb[0].mxu0
    %v775 = vadd.f32 0.0, %v774
    %v776 = vpop.f32.mrb[0].mxu0
    %v777 = vpop.f32.mrb[0].mxu0
    %v778 = vadd.f32 0.0, %v777
    %v779 = vpop.f32.mrb[0].mxu0
    %780 = vmatprep.mubr.bf16.mxu0 %v381
    %781 = vmatmul.mubr.bf16.gmra.mrb[0].mxu0 %v380
    %v782 = vpop.f32.mrb[0].mxu0
    %v783 = vadd.f32 0.0, %v782
    %v784 = vpop.f32.mrb[0].mxu0
    %v785 = vpop.f32.mrb[0].mxu0
    %v786 = vadd.f32 0.0, %v785
    %v787 = vpop.f32.mrb[0].mxu0
    %788 = vmatprep.mubr.bf16.mxu0 %v383
    %789 = vmatmul.mubr.bf16.gmra.mrb[0].mxu0 %v382
    %v790 = vpop.f32.mrb[0].mxu0
    %v791 = vadd.f32 0.0, %v790
    %v792 = vpop.f32.mrb[0].mxu0
    %v793 = vpop.f32.mrb[0].mxu0
    %v794 = vadd.f32 0.0, %v793
    %v795 = vpop.f32.mrb[0].mxu0
    %796 = vmatprep.mubr.bf16.mxu0 %v385
    %797 = vmatmul.mubr.bf16.gmra.mrb[0].mxu0 %v384
    %v798 = vpop.f32.mrb[0].mxu0
    %v799 = vadd.f32 0.0, %v798
    %v800 = vpop.f32.mrb[0].mxu0
    %v801 = vpop.f32.mrb[0].mxu0
    %v802 = vadd.f32 0.0, %v801
    %v803 = vpop.f32.mrb[0].mxu0
    %804 = vmatprep.mubr.bf16.mxu0 %v387
    %805 = vmatmul.mubr.bf16.gmra.mrb[0].mxu0 %v386
    %v806 = vpop.f32.mrb[0].mxu0
    %v807 = vadd.f32 0.0, %v806
    %v808 = vpop.f32.mrb[0].mxu0
    %v809 = vpop.f32.mrb[0].mxu0
    %v810 = vadd.f32 0.0, %v809
    %v811 = vpop.f32.mrb[0].mxu0
    %812 = vmatprep.mubr.bf16.mxu0 %v389
    %813 = vmatmul.mubr.bf16.gmra.mrb[0].mxu0 %v388
    %v814 = vpop.f32.mrb[0].mxu0
    %v815 = vadd.f32 0.0, %v814
    %v816 = vpop.f32.mrb[0].mxu0
    %v817 = vpop.f32.mrb[0].mxu0
    %v818 = vadd.f32 0.0, %v817
    %v819 = vpop.f32.mrb[0].mxu0
    %820 = vmatprep.mubr.bf16.mxu0 %v391
    %821 = vmatmul.mubr.bf16.gmra.mrb[0].mxu0 %v390
    %v822 = vpop.f32.mrb[0].mxu0
    %v823 = vadd.f32 0.0, %v822
    %v824 = vpop.f32.mrb[0].mxu0
    %v825 = vpop.f32.mrb[0].mxu0
    %v826 = vadd.f32 0.0, %v825
    %v827 = vpop.f32.mrb[0].mxu0
    %828 = vmatprep.mubr.bf16.mxu0 %v393
    %829 = vmatmul.mubr.bf16.gmra.mrb[0].mxu0 %v392
    %v830 = vpop.f32.mrb[0].mxu0
    %v831 = vadd.f32 0.0, %v830
    %v832 = vpop.f32.mrb[0].mxu0
    %v833 = vpop.f32.mrb[0].mxu0
    %v834 = vadd.f32 0.0, %v833
    %v835 = vpop.f32.mrb[0].mxu0
    %836 = vmatprep.mubr.bf16.mxu0 %v395
    %837 = vmatmul.mubr.bf16.gmra.mrb[0].mxu0 %v394
    %v838 = vpop.f32.mrb[0].mxu0
    %v839 = vadd.f32 0.0, %v838
    %v840 = vpop.f32.mrb[0].mxu0
    %v841 = vpop.f32.mrb[0].mxu0
    %v842 = vadd.f32 0.0, %v841
    %v843 = vpop.f32.mrb[0].mxu0
    %844 = vdwg.mxu0
    %v845 = vpack.c.bf16 %v594, %v591
    %v846 = vpack.c.bf16 %v602, %v599
    %v847 = vpack.c.bf16 %v610, %v607
    %v848 = vpack.c.bf16 %v618, %v615
    %v849 = vpack.c.bf16 %v626, %v623
    %v850 = vpack.c.bf16 %v634, %v631
    %v851 = vpack.c.bf16 %v642, %v639
    %v852 = vpack.c.bf16 %v650, %v647
    %v853 = vpack.c.bf16 %v658, %v655
    %v854 = vpack.c.bf16 %v666, %v663
    %v855 = vpack.c.bf16 %v674, %v671
    %v856 = vpack.c.bf16 %v682, %v679
    %v857 = vpack.c.bf16 %v690, %v687
    %v858 = vpack.c.bf16 %v698, %v695
    %v859 = vpack.c.bf16 %v706, %v703
    %v860 = vpack.c.bf16 %v714, %v711
    %v861 = vpack.c.bf16 %v722, %v719
    %v862 = vpack.c.bf16 %v730, %v727
    %v863 = vpack.c.bf16 %v738, %v735
    %v864 = vpack.c.bf16 %v746, %v743
    %v865 = vpack.c.bf16 %v754, %v751
    %v866 = vpack.c.bf16 %v762, %v759
    %v867 = vpack.c.bf16 %v770, %v767
    %v868 = vpack.c.bf16 %v778, %v775
    %v869 = vpack.c.bf16 %v786, %v783
    %v870 = vpack.c.bf16 %v794, %v791
    %v871 = vpack.c.bf16 %v802, %v799
    %v872 = vpack.c.bf16 %v810, %v807
    %v873 = vpack.c.bf16 %v818, %v815
    %v874 = vpack.c.bf16 %v826, %v823
    %v875 = vpack.c.bf16 %v834, %v831
    %v876 = vpack.c.bf16 %v842, %v839
    %v909 = vunpack.c.l.b16 %v845
    %v910 = vunpack.c.h.b16 %v845
    %v911 = vunpack.c.l.b16 %v846
    %v912 = vunpack.c.h.b16 %v846
    %v913 = vunpack.c.l.b16 %v847
    %v914 = vunpack.c.h.b16 %v847
    %v915 = vunpack.c.l.b16 %v848
    %v916 = vunpack.c.h.b16 %v848
    %v917 = vunpack.c.l.b16 %v849
    %v918 = vunpack.c.h.b16 %v849
    %v919 = vunpack.c.l.b16 %v850
    %v920 = vunpack.c.h.b16 %v850
    %v921 = vunpack.c.l.b16 %v851
    %v922 = vunpack.c.h.b16 %v851
    %v923 = vunpack.c.l.b16 %v852
    %v924 = vunpack.c.h.b16 %v852
    %v925 = vunpack.c.l.b16 %v853
    %v926 = vunpack.c.h.b16 %v853
    %v927 = vunpack.c.l.b16 %v854
    %v928 = vunpack.c.h.b16 %v854
    %v929 = vunpack.c.l.b16 %v855
    %v930 = vunpack.c.h.b16 %v855
    %v931 = vunpack.c.l.b16 %v856
    %v932 = vunpack.c.h.b16 %v856
    %v933 = vunpack.c.l.b16 %v857
    %v934 = vunpack.c.h.b16 %v857
    %v935 = vunpack.c.l.b16 %v858
    %v936 = vunpack.c.h.b16 %v858
    %v937 = vunpack.c.l.b16 %v859
    %v938 = vunpack.c.h.b16 %v859
    %v939 = vunpack.c.l.b16 %v860
    %v940 = vunpack.c.h.b16 %v860
    %v941 = vunpack.c.l.b16 %v861
    %v942 = vunpack.c.h.b16 %v861
    %v943 = vunpack.c.l.b16 %v862
    %v944 = vunpack.c.h.b16 %v862
    %v945 = vunpack.c.l.b16 %v863
    %v946 = vunpack.c.h.b16 %v863
    %v947 = vunpack.c.l.b16 %v864
    %v948 = vunpack.c.h.b16 %v864
    %v949 = vunpack.c.l.b16 %v865
    %v950 = vunpack.c.h.b16 %v865
    %v951 = vunpack.c.l.b16 %v866
    %v952 = vunpack.c.h.b16 %v866
    %v953 = vunpack.c.l.b16 %v867
    %v954 = vunpack.c.h.b16 %v867
    %v955 = vunpack.c.l.b16 %v868
    %v956 = vunpack.c.h.b16 %v868
    %v957 = vunpack.c.l.b16 %v869
    %v958 = vunpack.c.h.b16 %v869
    %v959 = vunpack.c.l.b16 %v870
    %v960 = vunpack.c.h.b16 %v870
    %v961 = vunpack.c.l.b16 %v871
    %v962 = vunpack.c.h.b16 %v871
    %v963 = vunpack.c.l.b16 %v872
    %v964 = vunpack.c.h.b16 %v872
    %v965 = vunpack.c.l.b16 %v873
    %v966 = vunpack.c.h.b16 %v873
    %v967 = vunpack.c.l.b16 %v874
    %v968 = vunpack.c.h.b16 %v874
    %v969 = vunpack.c.l.b16 %v875
    %v970 = vunpack.c.h.b16 %v875
    %v971 = vunpack.c.l.b16 %v876
    %v972 = vunpack.c.h.b16 %v876
    %v973 = vpack.c.b16 %v909, %v909
    %v974 = vpack.c.b16 %v910, %v910
    %v975 = vpack.c.b16 %v911, %v911
    %v976 = vpack.c.b16 %v912, %v912
    %v977 = vpack.c.b16 %v913, %v913
    %v978 = vpack.c.b16 %v914, %v914
    %v979 = vpack.c.b16 %v915, %v915
    %v980 = vpack.c.b16 %v916, %v916
    %v981 = vpack.c.b16 %v917, %v917
    %v982 = vpack.c.b16 %v918, %v918
    %v983 = vpack.c.b16 %v919, %v919
    %v984 = vpack.c.b16 %v920, %v920
    %v985 = vpack.c.b16 %v921, %v921
    %v986 = vpack.c.b16 %v922, %v922
    %v987 = vpack.c.b16 %v923, %v923
    %v988 = vpack.c.b16 %v924, %v924
    %v989 = vpack.c.b16 %v925, %v925
    %v990 = vpack.c.b16 %v926, %v926
    %v991 = vpack.c.b16 %v927, %v927
    %v992 = vpack.c.b16 %v928, %v928
    %v993 = vpack.c.b16 %v929, %v929
    %v994 = vpack.c.b16 %v930, %v930
    %v995 = vpack.c.b16 %v931, %v931
    %v996 = vpack.c.b16 %v932, %v932
    %v997 = vpack.c.b16 %v933, %v933
    %v998 = vpack.c.b16 %v934, %v934
    %v999 = vpack.c.b16 %v935, %v935
    %v1000 = vpack.c.b16 %v936, %v936
    %v1001 = vpack.c.b16 %v937, %v937
    %v1002 = vpack.c.b16 %v938, %v938
    %v1003 = vpack.c.b16 %v939, %v939
    %v1004 = vpack.c.b16 %v940, %v940
    %v1005 = vpack.c.b16 %v941, %v941
    %v1006 = vpack.c.b16 %v942, %v942
    %v1007 = vpack.c.b16 %v943, %v943
    %v1008 = vpack.c.b16 %v944, %v944
    %v1009 = vpack.c.b16 %v945, %v945
    %v1010 = vpack.c.b16 %v946, %v946
    %v1011 = vpack.c.b16 %v947, %v947
    %v1012 = vpack.c.b16 %v948, %v948
    %v1013 = vpack.c.b16 %v949, %v949
    %v1014 = vpack.c.b16 %v950, %v950
    %v1015 = vpack.c.b16 %v951, %v951
    %v1016 = vpack.c.b16 %v952, %v952
    %v1017 = vpack.c.b16 %v953, %v953
    %v1018 = vpack.c.b16 %v954, %v954
    %v1019 = vpack.c.b16 %v955, %v955
    %v1020 = vpack.c.b16 %v956, %v956
    %v1021 = vpack.c.b16 %v957, %v957
    %v1022 = vpack.c.b16 %v958, %v958
    %v1023 = vpack.c.b16 %v959, %v959
    %v1024 = vpack.c.b16 %v960, %v960
    %v1025 = vpack.c.b16 %v961, %v961
    %v1026 = vpack.c.b16 %v962, %v962
    %v1027 = vpack.c.b16 %v963, %v963
    %v1028 = vpack.c.b16 %v964, %v964
    %v1029 = vpack.c.b16 %v965, %v965
    %v1030 = vpack.c.b16 %v966, %v966
    %v1031 = vpack.c.b16 %v967, %v967
    %v1032 = vpack.c.b16 %v968, %v968
    %v1033 = vpack.c.b16 %v969, %v969
    %v1034 = vpack.c.b16 %v970, %v970
    %v1035 = vpack.c.b16 %v971, %v971
    %v1036 = vpack.c.b16 %v972, %v972
    %1101 = vst [vmem:[#allocation7] sm:$0xf] %v973
    %1102 = vst [vmem:[#allocation7 + $0x4] sm:$0xf] %v974
    %1103 = vst [vmem:[#allocation7 + $0x8] sm:$0xf] %v975
    %1104 = vst [vmem:[#allocation7 + $0xc] sm:$0xf] %v976
    %1105 = vst [vmem:[#allocation7 + $0x10] sm:$0xf] %v977
    %1106 = vst [vmem:[#allocation7 + $0x14] sm:$0xf] %v978
    %1107 = vst [vmem:[#allocation7 + $0x18] sm:$0xf] %v979
    %1108 = vst [vmem:[#allocation7 + $0x1c] sm:$0xf] %v980
    %1109 = vst [vmem:[#allocation7 + $0x20] sm:$0xf] %v981
    %1110 = vst [vmem:[#allocation7 + $0x24] sm:$0xf] %v982
    %1111 = vst [vmem:[#allocation7 + $0x28] sm:$0xf] %v983
    %1112 = vst [vmem:[#allocation7 + $0x2c] sm:$0xf] %v984
    %1113 = vst [vmem:[#allocation7 + $0x30] sm:$0xf] %v985
    %1114 = vst [vmem:[#allocation7 + $0x34] sm:$0xf] %v986
    %1115 = vst [vmem:[#allocation7 + $0x38] sm:$0xf] %v987
    %1116 = vst [vmem:[#allocation7 + $0x3c] sm:$0xf] %v988
    %1117 = vst [vmem:[#allocation7 + $0x40] sm:$0xf] %v989
    %1118 = vst [vmem:[#allocation7 + $0x44] sm:$0xf] %v990
    %1119 = vst [vmem:[#allocation7 + $0x48] sm:$0xf] %v991
    %1120 = vst [vmem:[#allocation7 + $0x4c] sm:$0xf] %v992
    %1121 = vst [vmem:[#allocation7 + $0x50] sm:$0xf] %v993
    %1122 = vst [vmem:[#allocation7 + $0x54] sm:$0xf] %v994
    %1123 = vst [vmem:[#allocation7 + $0x58] sm:$0xf] %v995
    %1124 = vst [vmem:[#allocation7 + $0x5c] sm:$0xf] %v996
    %1125 = vst [vmem:[#allocation7 + $0x60] sm:$0xf] %v997
    %1126 = vst [vmem:[#allocation7 + $0x64] sm:$0xf] %v998
    %1127 = vst [vmem:[#allocation7 + $0x68] sm:$0xf] %v999
    %1128 = vst [vmem:[#allocation7 + $0x6c] sm:$0xf] %v1000
    %1129 = vst [vmem:[#allocation7 + $0x70] sm:$0xf] %v1001
    %1130 = vst [vmem:[#allocation7 + $0x74] sm:$0xf] %v1002
    %1131 = vst [vmem:[#allocation7 + $0x78] sm:$0xf] %v1003
    %1132 = vst [vmem:[#allocation7 + $0x7c] sm:$0xf] %v1004
    %1133 = vst [vmem:[#allocation7 + $0x80] sm:$0xf] %v1005
    %1134 = vst [vmem:[#allocation7 + $0x84] sm:$0xf] %v1006
    %1135 = vst [vmem:[#allocation7 + $0x88] sm:$0xf] %v1007
    %1136 = vst [vmem:[#allocation7 + $0x8c] sm:$0xf] %v1008
    %1137 = vst [vmem:[#allocation7 + $0x90] sm:$0xf] %v1009
    %1138 = vst [vmem:[#allocation7 + $0x94] sm:$0xf] %v1010
    %1139 = vst [vmem:[#allocation7 + $0x98] sm:$0xf] %v1011
    %1140 = vst [vmem:[#allocation7 + $0x9c] sm:$0xf] %v1012
    %1141 = vst [vmem:[#allocation7 + $0xa0] sm:$0xf] %v1013
    %1142 = vst [vmem:[#allocation7 + $0xa4] sm:$0xf] %v1014
    %1143 = vst [vmem:[#allocation7 + $0xa8] sm:$0xf] %v1015
    %1144 = vst [vmem:[#allocation7 + $0xac] sm:$0xf] %v1016
    %1145 = vst [vmem:[#allocation7 + $0xb0] sm:$0xf] %v1017
    %1146 = vst [vmem:[#allocation7 + $0xb4] sm:$0xf] %v1018
    %1147 = vst [vmem:[#allocation7 + $0xb8] sm:$0xf] %v1019
    %1148 = vst [vmem:[#allocation7 + $0xbc] sm:$0xf] %v1020
    %1149 = vst [vmem:[#allocation7 + $0xc0] sm:$0xf] %v1021
    %1150 = vst [vmem:[#allocation7 + $0xc4] sm:$0xf] %v1022
    %1151 = vst [vmem:[#allocation7 + $0xc8] sm:$0xf] %v1023
    %1152 = vst [vmem:[#allocation7 + $0xcc] sm:$0xf] %v1024
    %1153 = vst [vmem:[#allocation7 + $0xd0] sm:$0xf] %v1025
    %1154 = vst [vmem:[#allocation7 + $0xd4] sm:$0xf] %v1026
    %1155 = vst [vmem:[#allocation7 + $0xd8] sm:$0xf] %v1027
    %1156 = vst [vmem:[#allocation7 + $0xdc] sm:$0xf] %v1028
    %1157 = vst [vmem:[#allocation7 + $0xe0] sm:$0xf] %v1029
    %1158 = vst [vmem:[#allocation7 + $0xe4] sm:$0xf] %v1030
    %1159 = vst [vmem:[#allocation7 + $0xe8] sm:$0xf] %v1031
    %1160 = vst [vmem:[#allocation7 + $0xec] sm:$0xf] %v1032
    %1161 = vst [vmem:[#allocation7 + $0xf0] sm:$0xf] %v1033
    %1162 = vst [vmem:[#allocation7 + $0xf4] sm:$0xf] %v1034
    %1163 = vst [vmem:[#allocation7 + $0xf8] sm:$0xf] %v1035
    %1164 = vst [vmem:[#allocation7 + $0xfc] sm:$0xf] %v1036
    %v1165 = vadd.f32 %v591, %v594
    %v1166 = vadd.f32 %v1165, %v599
    %v1167 = vadd.f32 %v1166, %v602
    %v1168 = vadd.f32 %v1167, %v607
    %v1169 = vadd.f32 %v1168, %v610
    %v1170 = vadd.f32 %v1169, %v615
    %v1171 = vadd.f32 %v1170, %v618
    %v1172 = vadd.f32 %v1171, %v623
    %v1173 = vadd.f32 %v1172, %v626
    %v1174 = vadd.f32 %v1173, %v631
    %v1175 = vadd.f32 %v1174, %v634
    %v1176 = vadd.f32 %v1175, %v639
    %v1177 = vadd.f32 %v1176, %v642
    %v1178 = vadd.f32 %v1177, %v647
    %v1179 = vadd.f32 %v1178, %v650
    %v1180 = vadd.f32 %v1179, %v655
    %v1181 = vadd.f32 %v1180, %v658
    %v1182 = vadd.f32 %v1181, %v663
    %v1183 = vadd.f32 %v1182, %v666
    %v1184 = vadd.f32 %v1183, %v671
    %v1185 = vadd.f32 %v1184, %v674
    %v1186 = vadd.f32 %v1185, %v679
    %v1187 = vadd.f32 %v1186, %v682
    %v1188 = vadd.f32 %v1187, %v687
    %v1189 = vadd.f32 %v1188, %v690
    %v1190 = vadd.f32 %v1189, %v695
    %v1191 = vadd.f32 %v1190, %v698
    %v1192 = vadd.f32 %v1191, %v703
    %v1193 = vadd.f32 %v1192, %v706
    %v1194 = vadd.f32 %v1193, %v711
    %v1195 = vadd.f32 %v1194, %v714
    %v1196 = vadd.f32 %v1195, %v719
    %v1197 = vadd.f32 %v1196, %v722
    %v1198 = vadd.f32 %v1197, %v727
    %v1199 = vadd.f32 %v1198, %v730
    %v1200 = vadd.f32 %v1199, %v735
    %v1201 = vadd.f32 %v1200, %v738
    %v1202 = vadd.f32 %v1201, %v743
    %v1203 = vadd.f32 %v1202, %v746
    %v1204 = vadd.f32 %v1203, %v751
    %v1205 = vadd.f32 %v1204, %v754
    %v1206 = vadd.f32 %v1205, %v759
    %v1207 = vadd.f32 %v1206, %v762
    %v1208 = vadd.f32 %v1207, %v767
    %v1209 = vadd.f32 %v1208, %v770
    %v1210 = vadd.f32 %v1209, %v775
    %v1211 = vadd.f32 %v1210, %v778
    %v1212 = vadd.f32 %v1211, %v783
    %v1213 = vadd.f32 %v1212, %v786
    %v1214 = vadd.f32 %v1213, %v791
    %v1215 = vadd.f32 %v1214, %v794
    %v1216 = vadd.f32 %v1215, %v799
    %v1217 = vadd.f32 %v1216, %v802
    %v1218 = vadd.f32 %v1217, %v807
    %v1219 = vadd.f32 %v1218, %v810
    %v1220 = vadd.f32 %v1219, %v815
    %v1221 = vadd.f32 %v1220, %v818
    %v1222 = vadd.f32 %v1221, %v823
    %v1223 = vadd.f32 %v1222, %v826
    %v1224 = vadd.f32 %v1223, %v831
    %v1225 = vadd.f32 %v1224, %v834
    %v1226 = vadd.f32 %v1225, %v839
    %v1227 = vadd.f32 %v1226, %v842
    %v1228 = vrot.slane %v1227, 4
    %v1229 = vadd.f32 %v1227, %v1228
    %v1230 = vrot.slane %v1229, 2
    %v1231 = vadd.f32 %v1229, %v1230
    %v1232 = vrot.slane %v1231, 1
    %v1233 = vadd.f32 %v1231, %v1232
    %v1234 = vmul.f32 %v591, %v591
    %v1235 = vmul.f32 %v594, %v594
    %v1236 = vmul.f32 %v599, %v599
    %v1237 = vmul.f32 %v602, %v602
    %v1238 = vmul.f32 %v607, %v607
    %v1239 = vmul.f32 %v610, %v610
    %v1240 = vmul.f32 %v615, %v615
    %v1241 = vmul.f32 %v618, %v618
    %v1242 = vmul.f32 %v623, %v623
    %v1243 = vmul.f32 %v626, %v626
    %v1244 = vmul.f32 %v631, %v631
    %v1245 = vmul.f32 %v634, %v634
    %v1246 = vmul.f32 %v639, %v639
    %v1247 = vmul.f32 %v642, %v642
    %v1248 = vmul.f32 %v647, %v647
    %v1249 = vmul.f32 %v650, %v650
    %v1250 = vmul.f32 %v655, %v655
    %v1251 = vmul.f32 %v658, %v658
    %v1252 = vmul.f32 %v663, %v663
    %v1253 = vmul.f32 %v666, %v666
    %v1254 = vmul.f32 %v671, %v671
    %v1255 = vmul.f32 %v674, %v674
    %v1256 = vmul.f32 %v679, %v679
    %v1257 = vmul.f32 %v682, %v682
    %v1258 = vmul.f32 %v687, %v687
    %v1259 = vmul.f32 %v690, %v690
    %v1260 = vmul.f32 %v695, %v695
    %v1261 = vmul.f32 %v698, %v698
    %v1262 = vmul.f32 %v703, %v703
    %v1263 = vmul.f32 %v706, %v706
    %v1264 = vmul.f32 %v711, %v711
    %v1265 = vmul.f32 %v714, %v714
    %v1266 = vmul.f32 %v719, %v719
    %v1267 = vmul.f32 %v722, %v722
    %v1268 = vmul.f32 %v727, %v727
    %v1269 = vmul.f32 %v730, %v730
    %v1270 = vmul.f32 %v735, %v735
    %v1271 = vmul.f32 %v738, %v738
    %v1272 = vmul.f32 %v743, %v743
    %v1273 = vmul.f32 %v746, %v746
    %v1274 = vmul.f32 %v751, %v751
    %v1275 = vmul.f32 %v754, %v754
    %v1276 = vmul.f32 %v759, %v759
    %v1277 = vmul.f32 %v762, %v762
    %v1278 = vmul.f32 %v767, %v767
    %v1279 = vmul.f32 %v770, %v770
    %v1280 = vmul.f32 %v775, %v775
    %v1281 = vmul.f32 %v778, %v778
    %v1282 = vmul.f32 %v783, %v783
    %v1283 = vmul.f32 %v786, %v786
    %v1284 = vmul.f32 %v791, %v791
    %v1285 = vmul.f32 %v794, %v794
    %v1286 = vmul.f32 %v799, %v799
    %v1287 = vmul.f32 %v802, %v802
    %v1288 = vmul.f32 %v807, %v807
    %v1289 = vmul.f32 %v810, %v810
    %v1290 = vmul.f32 %v815, %v815
    %v1291 = vmul.f32 %v818, %v818
    %v1292 = vmul.f32 %v823, %v823
    %v1293 = vmul.f32 %v826, %v826
    %v1294 = vmul.f32 %v831, %v831
    %v1295 = vmul.f32 %v834, %v834
    %v1296 = vmul.f32 %v839, %v839
    %v1297 = vmul.f32 %v842, %v842
    %v1298 = vadd.f32 %v1234, %v1235
    %v1299 = vadd.f32 %v1298, %v1236
    %v1300 = vadd.f32 %v1299, %v1237
    %v1301 = vadd.f32 %v1300, %v1238
    %v1302 = vadd.f32 %v1301, %v1239
    %v1303 = vadd.f32 %v1302, %v1240
    %v1304 = vadd.f32 %v1303, %v1241
    %v1305 = vadd.f32 %v1304, %v1242
    %v1306 = vadd.f32 %v1305, %v1243
    %v1307 = vadd.f32 %v1306, %v1244
    %v1308 = vadd.f32 %v1307, %v1245
    %v1309 = vadd.f32 %v1308, %v1246
    %v1310 = vadd.f32 %v1309, %v1247
    %v1311 = vadd.f32 %v1310, %v1248
    %v1312 = vadd.f32 %v1311, %v1249
    %v1313 = vadd.f32 %v1312, %v1250
    %v1314 = vadd.f32 %v1313, %v1251
    %v1315 = vadd.f32 %v1314, %v1252
    %v1316 = vadd.f32 %v1315, %v1253
    %v1317 = vadd.f32 %v1316, %v1254
    %v1318 = vadd.f32 %v1317, %v1255
    %v1319 = vadd.f32 %v1318, %v1256
    %v1320 = vadd.f32 %v1319, %v1257
    %v1321 = vadd.f32 %v1320, %v1258
    %v1322 = vadd.f32 %v1321, %v1259
    %v1323 = vadd.f32 %v1322, %v1260
    %v1324 = vadd.f32 %v1323, %v1261
    %v1325 = vadd.f32 %v1324, %v1262
    %v1326 = vadd.f32 %v1325, %v1263
    %v1327 = vadd.f32 %v1326, %v1264
    %v1328 = vadd.f32 %v1327, %v1265
    %v1329 = vadd.f32 %v1328, %v1266
    %v1330 = vadd.f32 %v1329, %v1267
    %v1331 = vadd.f32 %v1330, %v1268
    %v1332 = vadd.f32 %v1331, %v1269
    %v1333 = vadd.f32 %v1332, %v1270
    %v1334 = vadd.f32 %v1333, %v1271
    %v1335 = vadd.f32 %v1334, %v1272
    %v1336 = vadd.f32 %v1335, %v1273
    %v1337 = vadd.f32 %v1336, %v1274
    %v1338 = vadd.f32 %v1337, %v1275
    %v1339 = vadd.f32 %v1338, %v1276
    %v1340 = vadd.f32 %v1339, %v1277
    %v1341 = vadd.f32 %v1340, %v1278
    %v1342 = vadd.f32 %v1341, %v1279
    %v1343 = vadd.f32 %v1342, %v1280
    %v1344 = vadd.f32 %v1343, %v1281
    %v1345 = vadd.f32 %v1344, %v1282
    %v1346 = vadd.f32 %v1345, %v1283
    %v1347 = vadd.f32 %v1346, %v1284
    %v1348 = vadd.f32 %v1347, %v1285
    %v1349 = vadd.f32 %v1348, %v1286
    %v1350 = vadd.f32 %v1349, %v1287
    %v1351 = vadd.f32 %v1350, %v1288
    %v1352 = vadd.f32 %v1351, %v1289
    %v1353 = vadd.f32 %v1352, %v1290
    %v1354 = vadd.f32 %v1353, %v1291
    %v1355 = vadd.f32 %v1354, %v1292
    %v1356 = vadd.f32 %v1355, %v1293
    %v1357 = vadd.f32 %v1356, %v1294
    %v1358 = vadd.f32 %v1357, %v1295
    %v1359 = vadd.f32 %v1358, %v1296
    %v1360 = vadd.f32 %v1359, %v1297
    %v1361 = vrot.slane %v1360, 4
    %v1362 = vadd.f32 %v1360, %v1361
    %v1363 = vrot.slane %v1362, 2
    %v1364 = vadd.f32 %v1362, %v1363
    %v1365 = vrot.slane %v1364, 1
    %v1366 = vadd.f32 %v1364, %v1365
    %vm1367 = vcmask 1040384
    %v1368 = vsel %vm1367, %v1233, %v1366
    %1369 = vst [vmem:[#allocation8] sm:$0x3] %v1368
    // Predicated region
    $region18: #{bottleneck_forward.4} parent=1 // pred_check
      _
    $region19: #{bottleneck_forward.4} parent=1 // pred_check_branch
      %1371 = sbr.rel (0) target = $region21
    $region20: #{bottleneck_forward.4} parent=1 // pred_region
      %s1373 = ssub.s32 4096, 4096
      %1374 = vsyncadd [#allocation4], %s1373
      %s1375 = sshll.u32 [#allocation7], 4
      %s1376 = int_to_ptr.vmem [resolvable:$true] %s1375
      %1381 = dma.vmem_to_hbm [thread:$0]  %s1376, 4096, %s2, [#allocation4], 64, 64, 4
    $region21: #{bottleneck_forward.4} parent=1 // pred_fallthru
      _
    // Predicated region
    $region22: #{bottleneck_forward.4} parent=1 // pred_check
      _
    $region23: #{bottleneck_forward.4} parent=1 // pred_check_branch
      %1383 = sbr.rel (0) target = $region25
    $region24: #{bottleneck_forward.4} parent=1 // pred_region
      %s1385 = ssub.s32 32, 32
      %1386 = vsyncadd [#allocation9], %s1385
      %s1388 = sshll.u32 [#allocation8], 4
      %s1389 = int_to_ptr.vmem [resolvable:$true] %s1388
      %1391 = dma.vmem_to_hbm [thread:$0]  %s1389, 32, %s3, [#allocation9]
    $region25: #{bottleneck_forward.4} parent=1 // pred_fallthru
      _
    // Predicated region
    $region26: #{bottleneck_forward.4} parent=1 // pred_check
      _
    $region27: #{bottleneck_forward.4} parent=1 // pred_check_branch
      %1393 = sbr.rel (0) target = $region29
    $region28: #{bottleneck_forward.4} parent=1 // pred_region
      %1394 = dma.done [#allocation4], 4096
    $region29: #{bottleneck_forward.4} parent=1 // pred_fallthru
      _
    // Predicated region
    $region30: #{bottleneck_forward.4} parent=1 // pred_check
      _
    $region31: #{bottleneck_forward.4} parent=1 // pred_check_branch
      %1396 = sbr.rel (0) target = $region33
    $region32: #{bottleneck_forward.4} parent=1 // pred_region
      %1397 = dma.done [#allocation9], 32
    $region33: #{bottleneck_forward.4} parent=1 // pred_fallthru
      _
    %1398 = vsyncpa [#allocation3], 1
    %1399 = vsyncpa [#allocation6], 1
    %1400 = vsyncpa [#allocation4], 1
    %1401 = vsyncpa [#allocation9], 1

// kernel: bottleneck_forward.6
$region0: #{bottleneck_forward.6}
  #allocation0 [shape = 'u32[]', space=smem, size = 0x4, offset = 0x4, fixed_abs, tag = 'smem constant byte address 0x4 - core index']
  #allocation1 [shape = 'u32[144,128]{1,0:T(1,128)}', space=vmem, size = 0x12000, scoped, tag = 'internal scratch']
  %s0 = inlined_call_operand.hbm [shape: bf16[512,128], index: 0, kind: input, shape index: {}]
  %s1 = inlined_call_operand.hbm [shape: f32[1,128], index: 1, kind: input, shape index: {}]
  %s2 = inlined_call_operand.hbm [shape: f32[1,128], index: 2, kind: input, shape index: {}]
  %s3 = inlined_call_operand.hbm [shape: bf16[128,256], index: 3, kind: input, shape index: {}]
  %s4 = inlined_call_operand.hbm [shape: bf16[512,256], index: 4, kind: output, shape index: {0}]
  %s5 = inlined_call_operand.hbm [shape: f32[1,2,256], index: 5, kind: output, shape index: {1}]
  %6 = xla_tuple %s4, %s5
  %s7 = sld [smem:[#allocation0]]
  $region50: #{bottleneck_forward.6} parent=0
    _
  %s9 = ssub.s32 1, %s7
  %s10 = scalar_select 0, %s9, %s7
  $region1: #{bottleneck_forward.6} parent=0
    #allocation2 [shape = 'u8[131072]{0}', space=vmem, size = 0x20000, scoped, tag = 'input window, operand 0, single buffered']
    #allocation3 [shape = 's32[1]{0}', space=sflag, size = 0x4, scoped, tag = 'scoped memory for bottleneck_forward.6']
    #allocation4 [shape = 's32[1]{0}', space=sflag, size = 0x4, scoped, tag = 'scoped memory for bottleneck_forward.6']
    #allocation5 [shape = 'u8[512]{0}', space=vmem, size = 0x400, scoped, tag = 'input window, operand 1, single buffered']
    #allocation6 [shape = 's32[1]{0}', space=sflag, size = 0x4, scoped, tag = 'scoped memory for bottleneck_forward.6']
    #allocation7 [shape = 'u8[512]{0}', space=vmem, size = 0x400, scoped, tag = 'input window, operand 2, single buffered']
    #allocation8 [shape = 'u8[65536]{0}', space=vmem, size = 0x10000, scoped, tag = 'input window, operand 3, single buffered']
    #allocation9 [shape = 's32[1]{0}', space=sflag, size = 0x4, scoped, tag = 'scoped memory for bottleneck_forward.6']
    #allocation10 [shape = 'u8[262144]{0}', space=vmem, size = 0x40000, scoped, tag = 'output window, operand 0, single buffered']
    #allocation11 [shape = 'u8[2048]{0}', space=vmem, size = 0x800, scoped, tag = 'output window, operand 1, single buffered']
    #allocation12 [shape = 's32[1]{0}', space=sflag, size = 0x4, scoped, tag = 'scoped memory for bottleneck_forward.6']
    %11 = vsyncpa [#allocation3], 0
    %12 = vsyncpa [#allocation6], 0
    %13 = vsyncpa [#allocation9], 0
    %14 = vsyncpa [#allocation4], 0
    %15 = vsyncpa [#allocation12], 0
    // Predicated region
    $region2: #{bottleneck_forward.6} parent=1 // pred_check
      _
    $region3: #{bottleneck_forward.6} parent=1 // pred_check_branch
      %17 = sbr.rel (0) target = $region5
    $region4: #{bottleneck_forward.6} parent=1 // pred_region
      %s19 = ssub.s32 4096, 4096
      %20 = vsyncadd [#allocation3], %s19
      %s21 = sshll.u32 [#allocation2], 4
      %s22 = int_to_ptr.vmem [resolvable:$true] %s21
      %27 = dma.hbm_to_vmem [thread:$0]  %s0, 4096, %s22, [#allocation3], 64, 64, 4
    $region5: #{bottleneck_forward.6} parent=1 // pred_fallthru
      _
    // Predicated region
    $region6: #{bottleneck_forward.6} parent=1 // pred_check
      _
    $region7: #{bottleneck_forward.6} parent=1 // pred_check_branch
      %29 = sbr.rel (0) target = $region9
    $region8: #{bottleneck_forward.6} parent=1 // pred_region
      %s31 = ssub.s32 16, 16
      %32 = vsyncadd [#allocation6], %s31
      %s34 = sshll.u32 [#allocation5], 4
      %s35 = int_to_ptr.vmem [resolvable:$true] %s34
      %37 = dma.hbm_to_vmem [thread:$0]  %s1, 16, %s35, [#allocation6]
    $region9: #{bottleneck_forward.6} parent=1 // pred_fallthru
      _
    // Predicated region
    $region10: #{bottleneck_forward.6} parent=1 // pred_check
      _
    $region11: #{bottleneck_forward.6} parent=1 // pred_check_branch
      %39 = sbr.rel (0) target = $region13
    $region12: #{bottleneck_forward.6} parent=1 // pred_region
      %s41 = ssub.s32 16, 16
      %42 = vsyncadd [#allocation6], %s41
      %s44 = sshll.u32 [#allocation7], 4
      %s45 = int_to_ptr.vmem [resolvable:$true] %s44
      %47 = dma.hbm_to_vmem [thread:$0]  %s2, 16, %s45, [#allocation6]
    $region13: #{bottleneck_forward.6} parent=1 // pred_fallthru
      _
    // Predicated region
    $region14: #{bottleneck_forward.6} parent=1 // pred_check
      _
    $region15: #{bottleneck_forward.6} parent=1 // pred_check_branch
      %49 = sbr.rel (0) target = $region17
    $region16: #{bottleneck_forward.6} parent=1 // pred_region
      %s51 = ssub.s32 2048, 2048
      %52 = vsyncadd [#allocation9], %s51
      %s53 = sshll.u32 [#allocation8], 4
      %s54 = int_to_ptr.vmem [resolvable:$true] %s53
      %59 = dma.hbm_to_vmem [thread:$0]  %s3, 2048, %s54, [#allocation9], 128, 128, 8
    $region17: #{bottleneck_forward.6} parent=1 // pred_fallthru
      _
    // Predicated region
    $region18: #{bottleneck_forward.6} parent=1 // pred_check
      _
    $region19: #{bottleneck_forward.6} parent=1 // pred_check_branch
      %61 = sbr.rel (0) target = $region21
    $region20: #{bottleneck_forward.6} parent=1 // pred_region
      %62 = dma.done [#allocation3], 4096
    $region21: #{bottleneck_forward.6} parent=1 // pred_fallthru
      _
    // Predicated region
    $region22: #{bottleneck_forward.6} parent=1 // pred_check
      _
    $region23: #{bottleneck_forward.6} parent=1 // pred_check_branch
      %64 = sbr.rel (0) target = $region25
    $region24: #{bottleneck_forward.6} parent=1 // pred_region
      %65 = dma.done [#allocation6], 16
    $region25: #{bottleneck_forward.6} parent=1 // pred_fallthru
      _
    // Predicated region
    $region26: #{bottleneck_forward.6} parent=1 // pred_check
      _
    $region27: #{bottleneck_forward.6} parent=1 // pred_check_branch
      %67 = sbr.rel (0) target = $region29
    $region28: #{bottleneck_forward.6} parent=1 // pred_region
      %68 = dma.done [#allocation6], 16
    $region29: #{bottleneck_forward.6} parent=1 // pred_fallthru
      _
    // Predicated region
    $region30: #{bottleneck_forward.6} parent=1 // pred_check
      _
    $region31: #{bottleneck_forward.6} parent=1 // pred_check_branch
      %70 = sbr.rel (0) target = $region33
    $region32: #{bottleneck_forward.6} parent=1 // pred_region
      %71 = dma.done [#allocation9], 2048
    $region33: #{bottleneck_forward.6} parent=1 // pred_fallthru
      _
    %v73 = vld [vmem:[#allocation2] sm:$0xf]
    %v74 = vld [vmem:[#allocation2 + $0x4] sm:$0xf]
    %v75 = vld [vmem:[#allocation2 + $0x8] sm:$0xf]
    %v76 = vld [vmem:[#allocation2 + $0xc] sm:$0xf]
    %v77 = vld [vmem:[#allocation2 + $0x10] sm:$0xf]
    %v78 = vld [vmem:[#allocation2 + $0x14] sm:$0xf]
    %v79 = vld [vmem:[#allocation2 + $0x18] sm:$0xf]
    %v80 = vld [vmem:[#allocation2 + $0x1c] sm:$0xf]
    %v81 = vld [vmem:[#allocation2 + $0x20] sm:$0xf]
    %v82 = vld [vmem:[#allocation2 + $0x24] sm:$0xf]
    %v83 = vld [vmem:[#allocation2 + $0x28] sm:$0xf]
    %v84 = vld [vmem:[#allocation2 + $0x2c] sm:$0xf]
    %v85 = vld [vmem:[#allocation2 + $0x30] sm:$0xf]
    %v86 = vld [vmem:[#allocation2 + $0x34] sm:$0xf]
    %v87 = vld [vmem:[#allocation2 + $0x38] sm:$0xf]
    %v88 = vld [vmem:[#allocation2 + $0x3c] sm:$0xf]
    %v89 = vld [vmem:[#allocation2 + $0x40] sm:$0xf]
    %v90 = vld [vmem:[#allocation2 + $0x44] sm:$0xf]
    %v91 = vld [vmem:[#allocation2 + $0x48] sm:$0xf]
    %v92 = vld [vmem:[#allocation2 + $0x4c] sm:$0xf]
    %v93 = vld [vmem:[#allocation2 + $0x50] sm:$0xf]
    %v94 = vld [vmem:[#allocation2 + $0x54] sm:$0xf]
    %v95 = vld [vmem:[#allocation2 + $0x58] sm:$0xf]
    %v96 = vld [vmem:[#allocation2 + $0x5c] sm:$0xf]
    %v97 = vld [vmem:[#allocation2 + $0x60] sm:$0xf]
    %v98 = vld [vmem:[#allocation2 + $0x64] sm:$0xf]
    %v99 = vld [vmem:[#allocation2 + $0x68] sm:$0xf]
    %v100 = vld [vmem:[#allocation2 + $0x6c] sm:$0xf]
    %v101 = vld [vmem:[#allocation2 + $0x70] sm:$0xf]
    %v102 = vld [vmem:[#allocation2 + $0x74] sm:$0xf]
    %v103 = vld [vmem:[#allocation2 + $0x78] sm:$0xf]
    %v104 = vld [vmem:[#allocation2 + $0x7c] sm:$0xf]
    %v105 = vld [vmem:[#allocation2 + $0x80] sm:$0xf]
    %v106 = vld [vmem:[#allocation2 + $0x84] sm:$0xf]
    %v107 = vld [vmem:[#allocation2 + $0x88] sm:$0xf]
    %v108 = vld [vmem:[#allocation2 + $0x8c] sm:$0xf]
    %v109 = vld [vmem:[#allocation2 + $0x90] sm:$0xf]
    %v110 = vld [vmem:[#allocation2 + $0x94] sm:$0xf]
    %v111 = vld [vmem:[#allocation2 + $0x98] sm:$0xf]
    %v112 = vld [vmem:[#allocation2 + $0x9c] sm:$0xf]
    %v113 = vld [vmem:[#allocation2 + $0xa0] sm:$0xf]
    %v114 = vld [vmem:[#allocation2 + $0xa4] sm:$0xf]
    %v115 = vld [vmem:[#allocation2 + $0xa8] sm:$0xf]
    %v116 = vld [vmem:[#allocation2 + $0xac] sm:$0xf]
    %v117 = vld [vmem:[#allocation2 + $0xb0] sm:$0xf]
    %v118 = vld [vmem:[#allocation2 + $0xb4] sm:$0xf]
    %v119 = vld [vmem:[#allocation2 + $0xb8] sm:$0xf]
    %v120 = vld [vmem:[#allocation2 + $0xbc] sm:$0xf]
    %v121 = vld [vmem:[#allocation2 + $0xc0] sm:$0xf]
    %v122 = vld [vmem:[#allocation2 + $0xc4] sm:$0xf]
    %v123 = vld [vmem:[#allocation2 + $0xc8] sm:$0xf]
    %v124 = vld [vmem:[#allocation2 + $0xcc] sm:$0xf]
    %v125 = vld [vmem:[#allocation2 + $0xd0] sm:$0xf]
    %v126 = vld [vmem:[#allocation2 + $0xd4] sm:$0xf]
    %v127 = vld [vmem:[#allocation2 + $0xd8] sm:$0xf]
    %v128 = vld [vmem:[#allocation2 + $0xdc] sm:$0xf]
    %v129 = vld [vmem:[#allocation2 + $0xe0] sm:$0xf]
    %v130 = vld [vmem:[#allocation2 + $0xe4] sm:$0xf]
    %v131 = vld [vmem:[#allocation2 + $0xe8] sm:$0xf]
    %v132 = vld [vmem:[#allocation2 + $0xec] sm:$0xf]
    %v133 = vld [vmem:[#allocation2 + $0xf0] sm:$0xf]
    %v134 = vld [vmem:[#allocation2 + $0xf4] sm:$0xf]
    %v135 = vld [vmem:[#allocation2 + $0xf8] sm:$0xf]
    %v136 = vld [vmem:[#allocation2 + $0xfc] sm:$0xf]
    %v137 = vunpack.c.l.bf16 %v73
    %v138 = vunpack.c.l.bf16 %v74
    %v139 = vunpack.c.l.bf16 %v75
    %v140 = vunpack.c.l.bf16 %v76
    %v141 = vunpack.c.l.bf16 %v77
    %v142 = vunpack.c.l.bf16 %v78
    %v143 = vunpack.c.l.bf16 %v79
    %v144 = vunpack.c.l.bf16 %v80
    %v145 = vunpack.c.l.bf16 %v81
    %v146 = vunpack.c.l.bf16 %v82
    %v147 = vunpack.c.l.bf16 %v83
    %v148 = vunpack.c.l.bf16 %v84
    %v149 = vunpack.c.l.bf16 %v85
    %v150 = vunpack.c.l.bf16 %v86
    %v151 = vunpack.c.l.bf16 %v87
    %v152 = vunpack.c.l.bf16 %v88
    %v153 = vunpack.c.l.bf16 %v89
    %v154 = vunpack.c.l.bf16 %v90
    %v155 = vunpack.c.l.bf16 %v91
    %v156 = vunpack.c.l.bf16 %v92
    %v157 = vunpack.c.l.bf16 %v93
    %v158 = vunpack.c.l.bf16 %v94
    %v159 = vunpack.c.l.bf16 %v95
    %v160 = vunpack.c.l.bf16 %v96
    %v161 = vunpack.c.l.bf16 %v97
    %v162 = vunpack.c.l.bf16 %v98
    %v163 = vunpack.c.l.bf16 %v99
    %v164 = vunpack.c.l.bf16 %v100
    %v165 = vunpack.c.l.bf16 %v101
    %v166 = vunpack.c.l.bf16 %v102
    %v167 = vunpack.c.l.bf16 %v103
    %v168 = vunpack.c.l.bf16 %v104
    %v169 = vunpack.c.l.bf16 %v105
    %v170 = vunpack.c.l.bf16 %v106
    %v171 = vunpack.c.l.bf16 %v107
    %v172 = vunpack.c.l.bf16 %v108
    %v173 = vunpack.c.l.bf16 %v109
    %v174 = vunpack.c.l.bf16 %v110
    %v175 = vunpack.c.l.bf16 %v111
    %v176 = vunpack.c.l.bf16 %v112
    %v177 = vunpack.c.l.bf16 %v113
    %v178 = vunpack.c.l.bf16 %v114
    %v179 = vunpack.c.l.bf16 %v115
    %v180 = vunpack.c.l.bf16 %v116
    %v181 = vunpack.c.l.bf16 %v117
    %v182 = vunpack.c.l.bf16 %v118
    %v183 = vunpack.c.l.bf16 %v119
    %v184 = vunpack.c.l.bf16 %v120
    %v185 = vunpack.c.l.bf16 %v121
    %v186 = vunpack.c.l.bf16 %v122
    %v187 = vunpack.c.l.bf16 %v123
    %v188 = vunpack.c.l.bf16 %v124
    %v189 = vunpack.c.l.bf16 %v125
    %v190 = vunpack.c.l.bf16 %v126
    %v191 = vunpack.c.l.bf16 %v127
    %v192 = vunpack.c.l.bf16 %v128
    %v193 = vunpack.c.l.bf16 %v129
    %v194 = vunpack.c.l.bf16 %v130
    %v195 = vunpack.c.l.bf16 %v131
    %v196 = vunpack.c.l.bf16 %v132
    %v197 = vunpack.c.l.bf16 %v133
    %v198 = vunpack.c.l.bf16 %v134
    %v199 = vunpack.c.l.bf16 %v135
    %v200 = vunpack.c.l.bf16 %v136
    %v201 = vld [vmem:[#allocation5] sm:$0x1]
    %v203 = vlaneseq
    %v204 = vshrl.u32 %v203, 7
    %v205 = vsub.s32 0, %v204
    %v206 = vrot.slane %v201, %v205
    %v208 = vmul.f32 %v137, %v206
    %v209 = vmul.f32 %v138, %v206
    %v210 = vmul.f32 %v139, %v206
    %v211 = vmul.f32 %v140, %v206
    %v212 = vmul.f32 %v141, %v206
    %v213 = vmul.f32 %v142, %v206
    %v214 = vmul.f32 %v143, %v206
    %v215 = vmul.f32 %v144, %v206
    %v216 = vmul.f32 %v145, %v206
    %v217 = vmul.f32 %v146, %v206
    %v218 = vmul.f32 %v147, %v206
    %v219 = vmul.f32 %v148, %v206
    %v220 = vmul.f32 %v149, %v206
    %v221 = vmul.f32 %v150, %v206
    %v222 = vmul.f32 %v151, %v206
    %v223 = vmul.f32 %v152, %v206
    %v224 = vmul.f32 %v153, %v206
    %v225 = vmul.f32 %v154, %v206
    %v226 = vmul.f32 %v155, %v206
    %v227 = vmul.f32 %v156, %v206
    %v228 = vmul.f32 %v157, %v206
    %v229 = vmul.f32 %v158, %v206
    %v230 = vmul.f32 %v159, %v206
    %v231 = vmul.f32 %v160, %v206
    %v232 = vmul.f32 %v161, %v206
    %v233 = vmul.f32 %v162, %v206
    %v234 = vmul.f32 %v163, %v206
    %v235 = vmul.f32 %v164, %v206
    %v236 = vmul.f32 %v165, %v206
    %v237 = vmul.f32 %v166, %v206
    %v238 = vmul.f32 %v167, %v206
    %v239 = vmul.f32 %v168, %v206
    %v240 = vmul.f32 %v169, %v206
    %v241 = vmul.f32 %v170, %v206
    %v242 = vmul.f32 %v171, %v206
    %v243 = vmul.f32 %v172, %v206
    %v244 = vmul.f32 %v173, %v206
    %v245 = vmul.f32 %v174, %v206
    %v246 = vmul.f32 %v175, %v206
    %v247 = vmul.f32 %v176, %v206
    %v248 = vmul.f32 %v177, %v206
    %v249 = vmul.f32 %v178, %v206
    %v250 = vmul.f32 %v179, %v206
    %v251 = vmul.f32 %v180, %v206
    %v252 = vmul.f32 %v181, %v206
    %v253 = vmul.f32 %v182, %v206
    %v254 = vmul.f32 %v183, %v206
    %v255 = vmul.f32 %v184, %v206
    %v256 = vmul.f32 %v185, %v206
    %v257 = vmul.f32 %v186, %v206
    %v258 = vmul.f32 %v187, %v206
    %v259 = vmul.f32 %v188, %v206
    %v260 = vmul.f32 %v189, %v206
    %v261 = vmul.f32 %v190, %v206
    %v262 = vmul.f32 %v191, %v206
    %v263 = vmul.f32 %v192, %v206
    %v264 = vmul.f32 %v193, %v206
    %v265 = vmul.f32 %v194, %v206
    %v266 = vmul.f32 %v195, %v206
    %v267 = vmul.f32 %v196, %v206
    %v268 = vmul.f32 %v197, %v206
    %v269 = vmul.f32 %v198, %v206
    %v270 = vmul.f32 %v199, %v206
    %v271 = vmul.f32 %v200, %v206
    %v272 = vld [vmem:[#allocation7] sm:$0x1]
    %v274 = vlaneseq
    %v275 = vshrl.u32 %v274, 7
    %v276 = vsub.s32 0, %v275
    %v277 = vrot.slane %v272, %v276
    %v279 = vadd.f32 %v208, %v277
    %v280 = vadd.f32 %v209, %v277
    %v281 = vadd.f32 %v210, %v277
    %v282 = vadd.f32 %v211, %v277
    %v283 = vadd.f32 %v212, %v277
    %v284 = vadd.f32 %v213, %v277
    %v285 = vadd.f32 %v214, %v277
    %v286 = vadd.f32 %v215, %v277
    %v287 = vadd.f32 %v216, %v277
    %v288 = vadd.f32 %v217, %v277
    %v289 = vadd.f32 %v218, %v277
    %v290 = vadd.f32 %v219, %v277
    %v291 = vadd.f32 %v220, %v277
    %v292 = vadd.f32 %v221, %v277
    %v293 = vadd.f32 %v222, %v277
    %v294 = vadd.f32 %v223, %v277
    %v295 = vadd.f32 %v224, %v277
    %v296 = vadd.f32 %v225, %v277
    %v297 = vadd.f32 %v226, %v277
    %v298 = vadd.f32 %v227, %v277
    %v299 = vadd.f32 %v228, %v277
    %v300 = vadd.f32 %v229, %v277
    %v301 = vadd.f32 %v230, %v277
    %v302 = vadd.f32 %v231, %v277
    %v303 = vadd.f32 %v232, %v277
    %v304 = vadd.f32 %v233, %v277
    %v305 = vadd.f32 %v234, %v277
    %v306 = vadd.f32 %v235, %v277
    %v307 = vadd.f32 %v236, %v277
    %v308 = vadd.f32 %v237, %v277
    %v309 = vadd.f32 %v238, %v277
    %v310 = vadd.f32 %v239, %v277
    %v311 = vadd.f32 %v240, %v277
    %v312 = vadd.f32 %v241, %v277
    %v313 = vadd.f32 %v242, %v277
    %v314 = vadd.f32 %v243, %v277
    %v315 = vadd.f32 %v244, %v277
    %v316 = vadd.f32 %v245, %v277
    %v317 = vadd.f32 %v246, %v277
    %v318 = vadd.f32 %v247, %v277
    %v319 = vadd.f32 %v248, %v277
    %v320 = vadd.f32 %v249, %v277
    %v321 = vadd.f32 %v250, %v277
    %v322 = vadd.f32 %v251, %v277
    %v323 = vadd.f32 %v252, %v277
    %v324 = vadd.f32 %v253, %v277
    %v325 = vadd.f32 %v254, %v277
    %v326 = vadd.f32 %v255, %v277
    %v327 = vadd.f32 %v256, %v277
    %v328 = vadd.f32 %v257, %v277
    %v329 = vadd.f32 %v258, %v277
    %v330 = vadd.f32 %v259, %v277
    %v331 = vadd.f32 %v260, %v277
    %v332 = vadd.f32 %v261, %v277
    %v333 = vadd.f32 %v262, %v277
    %v334 = vadd.f32 %v263, %v277
    %v335 = vadd.f32 %v264, %v277
    %v336 = vadd.f32 %v265, %v277
    %v337 = vadd.f32 %v266, %v277
    %v338 = vadd.f32 %v267, %v277
    %v339 = vadd.f32 %v268, %v277
    %v340 = vadd.f32 %v269, %v277
    %v341 = vadd.f32 %v270, %v277
    %v342 = vadd.f32 %v271, %v277
    %v343 = vmax.f32 %v279, 0.0
    %v344 = vmax.f32 %v280, 0.0
    %v345 = vmax.f32 %v281, 0.0
    %v346 = vmax.f32 %v282, 0.0
    %v347 = vmax.f32 %v283, 0.0
    %v348 = vmax.f32 %v284, 0.0
    %v349 = vmax.f32 %v285, 0.0
    %v350 = vmax.f32 %v286, 0.0
    %v351 = vmax.f32 %v287, 0.0
    %v352 = vmax.f32 %v288, 0.0
    %v353 = vmax.f32 %v289, 0.0
    %v354 = vmax.f32 %v290, 0.0
    %v355 = vmax.f32 %v291, 0.0
    %v356 = vmax.f32 %v292, 0.0
    %v357 = vmax.f32 %v293, 0.0
    %v358 = vmax.f32 %v294, 0.0
    %v359 = vmax.f32 %v295, 0.0
    %v360 = vmax.f32 %v296, 0.0
    %v361 = vmax.f32 %v297, 0.0
    %v362 = vmax.f32 %v298, 0.0
    %v363 = vmax.f32 %v299, 0.0
    %v364 = vmax.f32 %v300, 0.0
    %v365 = vmax.f32 %v301, 0.0
    %v366 = vmax.f32 %v302, 0.0
    %v367 = vmax.f32 %v303, 0.0
    %v368 = vmax.f32 %v304, 0.0
    %v369 = vmax.f32 %v305, 0.0
    %v370 = vmax.f32 %v306, 0.0
    %v371 = vmax.f32 %v307, 0.0
    %v372 = vmax.f32 %v308, 0.0
    %v373 = vmax.f32 %v309, 0.0
    %v374 = vmax.f32 %v310, 0.0
    %v375 = vmax.f32 %v311, 0.0
    %v376 = vmax.f32 %v312, 0.0
    %v377 = vmax.f32 %v313, 0.0
    %v378 = vmax.f32 %v314, 0.0
    %v379 = vmax.f32 %v315, 0.0
    %v380 = vmax.f32 %v316, 0.0
    %v381 = vmax.f32 %v317, 0.0
    %v382 = vmax.f32 %v318, 0.0
    %v383 = vmax.f32 %v319, 0.0
    %v384 = vmax.f32 %v320, 0.0
    %v385 = vmax.f32 %v321, 0.0
    %v386 = vmax.f32 %v322, 0.0
    %v387 = vmax.f32 %v323, 0.0
    %v388 = vmax.f32 %v324, 0.0
    %v389 = vmax.f32 %v325, 0.0
    %v390 = vmax.f32 %v326, 0.0
    %v391 = vmax.f32 %v327, 0.0
    %v392 = vmax.f32 %v328, 0.0
    %v393 = vmax.f32 %v329, 0.0
    %v394 = vmax.f32 %v330, 0.0
    %v395 = vmax.f32 %v331, 0.0
    %v396 = vmax.f32 %v332, 0.0
    %v397 = vmax.f32 %v333, 0.0
    %v398 = vmax.f32 %v334, 0.0
    %v399 = vmax.f32 %v335, 0.0
    %v400 = vmax.f32 %v336, 0.0
    %v401 = vmax.f32 %v337, 0.0
    %v402 = vmax.f32 %v338, 0.0
    %v403 = vmax.f32 %v339, 0.0
    %v404 = vmax.f32 %v340, 0.0
    %v405 = vmax.f32 %v341, 0.0
    %v406 = vmax.f32 %v342, 0.0
    %v407 = vpack.c.bf16 %v344, %v343
    %v408 = vpack.c.bf16 %v346, %v345
    %v409 = vpack.c.bf16 %v348, %v347
    %v410 = vpack.c.bf16 %v350, %v349
    %v411 = vpack.c.bf16 %v352, %v351
    %v412 = vpack.c.bf16 %v354, %v353
    %v413 = vpack.c.bf16 %v356, %v355
    %v414 = vpack.c.bf16 %v358, %v357
    %v415 = vpack.c.bf16 %v360, %v359
    %v416 = vpack.c.bf16 %v362, %v361
    %v417 = vpack.c.bf16 %v364, %v363
    %v418 = vpack.c.bf16 %v366, %v365
    %v419 = vpack.c.bf16 %v368, %v367
    %v420 = vpack.c.bf16 %v370, %v369
    %v421 = vpack.c.bf16 %v372, %v371
    %v422 = vpack.c.bf16 %v374, %v373
    %v423 = vpack.c.bf16 %v376, %v375
    %v424 = vpack.c.bf16 %v378, %v377
    %v425 = vpack.c.bf16 %v380, %v379
    %v426 = vpack.c.bf16 %v382, %v381
    %v427 = vpack.c.bf16 %v384, %v383
    %v428 = vpack.c.bf16 %v386, %v385
    %v429 = vpack.c.bf16 %v388, %v387
    %v430 = vpack.c.bf16 %v390, %v389
    %v431 = vpack.c.bf16 %v392, %v391
    %v432 = vpack.c.bf16 %v394, %v393
    %v433 = vpack.c.bf16 %v396, %v395
    %v434 = vpack.c.bf16 %v398, %v397
    %v435 = vpack.c.bf16 %v400, %v399
    %v436 = vpack.c.bf16 %v402, %v401
    %v437 = vpack.c.bf16 %v404, %v403
    %v438 = vpack.c.bf16 %v406, %v405
    %v439 = vld [vmem:[#allocation8] sm:$0xff]
    %v440 = vld [vmem:[#allocation8 + $0x8] sm:$0xff]
    %v441 = vld [vmem:[#allocation8 + $0x10] sm:$0xff]
    %v442 = vld [vmem:[#allocation8 + $0x18] sm:$0xff]
    %v443 = vld [vmem:[#allocation8 + $0x20] sm:$0xff]
    %v444 = vld [vmem:[#allocation8 + $0x28] sm:$0xff]
    %v445 = vld [vmem:[#allocation8 + $0x30] sm:$0xff]
    %v446 = vld [vmem:[#allocation8 + $0x38] sm:$0xff]
    %v447 = vld [vmem:[#allocation8 + $0x40] sm:$0xff]
    %v448 = vld [vmem:[#allocation8 + $0x48] sm:$0xff]
    %v449 = vld [vmem:[#allocation8 + $0x50] sm:$0xff]
    %v450 = vld [vmem:[#allocation8 + $0x58] sm:$0xff]
    %v451 = vld [vmem:[#allocation8 + $0x60] sm:$0xff]
    %v452 = vld [vmem:[#allocation8 + $0x68] sm:$0xff]
    %v453 = vld [vmem:[#allocation8 + $0x70] sm:$0xff]
    %v454 = vld [vmem:[#allocation8 + $0x78] sm:$0xff]
    %v471 = vunpack.c.l.b16 %v439
    %v472 = vunpack.c.h.b16 %v439
    %v473 = vunpack.c.l.b16 %v440
    %v474 = vunpack.c.h.b16 %v440
    %v475 = vunpack.c.l.b16 %v441
    %v476 = vunpack.c.h.b16 %v441
    %v477 = vunpack.c.l.b16 %v442
    %v478 = vunpack.c.h.b16 %v442
    %v479 = vunpack.c.l.b16 %v443
    %v480 = vunpack.c.h.b16 %v443
    %v481 = vunpack.c.l.b16 %v444
    %v482 = vunpack.c.h.b16 %v444
    %v483 = vunpack.c.l.b16 %v445
    %v484 = vunpack.c.h.b16 %v445
    %v485 = vunpack.c.l.b16 %v446
    %v486 = vunpack.c.h.b16 %v446
    %v487 = vunpack.c.l.b16 %v447
    %v488 = vunpack.c.h.b16 %v447
    %v489 = vunpack.c.l.b16 %v448
    %v490 = vunpack.c.h.b16 %v448
    %v491 = vunpack.c.l.b16 %v449
    %v492 = vunpack.c.h.b16 %v449
    %v493 = vunpack.c.l.b16 %v450
    %v494 = vunpack.c.h.b16 %v450
    %v495 = vunpack.c.l.b16 %v451
    %v496 = vunpack.c.h.b16 %v451
    %v497 = vunpack.c.l.b16 %v452
    %v498 = vunpack.c.h.b16 %v452
    %v499 = vunpack.c.l.b16 %v453
    %v500 = vunpack.c.h.b16 %v453
    %v501 = vunpack.c.l.b16 %v454
    %v502 = vunpack.c.h.b16 %v454
    %v503 = vpack.c.b16 %v473, %v471
    %v504 = vpack.c.b16 %v474, %v472
    %v505 = vpack.c.b16 %v477, %v475
    %v506 = vpack.c.b16 %v478, %v476
    %v507 = vpack.c.b16 %v481, %v479
    %v508 = vpack.c.b16 %v482, %v480
    %v509 = vpack.c.b16 %v485, %v483
    %v510 = vpack.c.b16 %v486, %v484
    %v511 = vpack.c.b16 %v489, %v487
    %v512 = vpack.c.b16 %v490, %v488
    %v513 = vpack.c.b16 %v493, %v491
    %v514 = vpack.c.b16 %v494, %v492
    %v515 = vpack.c.b16 %v497, %v495
    %v516 = vpack.c.b16 %v498, %v496
    %v517 = vpack.c.b16 %v501, %v499
    %v518 = vpack.c.b16 %v502, %v500
    %535 = vmatprep.subr.bf16.mxu0 %v504
    %536 = vmatpush1.bf16.msra.mxu0 %v503
    %537 = vmatprep.subr.bf16.mxu0 %v506
    %538 = vmatpush1.bf16.msra.mxu0 %v505
    %539 = vmatprep.subr.bf16.mxu0 %v508
    %540 = vmatpush1.bf16.msra.mxu0 %v507
    %541 = vmatprep.subr.bf16.mxu0 %v510
    %542 = vmatpush1.bf16.msra.mxu0 %v509
    %543 = vmatprep.subr.bf16.mxu0 %v512
    %544 = vmatpush1.bf16.msra.mxu0 %v511
    %545 = vmatprep.subr.bf16.mxu0 %v514
    %546 = vmatpush1.bf16.msra.mxu0 %v513
    %547 = vmatprep.subr.bf16.mxu0 %v516
    %548 = vmatpush1.bf16.msra.mxu0 %v515
    %549 = vmatprep.subr.bf16.mxu0 %v518
    %550 = vmatpush1.bf16.msra.mxu0 %v517
    %551 = vmatprep.subr.bf16.mxu0 0
    %552 = vmatpush1.bf16.msra.mxu0 0
    %553 = vmatprep.subr.bf16.mxu0 0
    %554 = vmatpush1.bf16.msra.mxu0 0
    %555 = vmatprep.subr.bf16.mxu0 0
    %556 = vmatpush1.bf16.msra.mxu0 0
    %557 = vmatprep.subr.bf16.mxu0 0
    %558 = vmatpush1.bf16.msra.mxu0 0
    %559 = vmatprep.subr.bf16.mxu0 0
    %560 = vmatpush1.bf16.msra.mxu0 0
    %561 = vmatprep.subr.bf16.mxu0 0
    %562 = vmatpush1.bf16.msra.mxu0 0
    %563 = vmatprep.subr.bf16.mxu0 0
    %564 = vmatpush1.bf16.msra.mxu0 0
    %565 = vmatprep.subr.bf16.mxu0 0
    %566 = vmatpush1.bf16.msra.mxu0 0
    %567 = vmatprep.mubr.bf16.mxu0 0
    %568 = vmatmul.mubr.bf16.gmra.mrb[0].mxu0 %v407
    %v569 = vpop.f32.mrb[0].mxu0
    %v570 = vadd.f32 0.0, %v569
    %v571 = vpop.f32.mrb[0].mxu0
    %v572 = vadd.f32 0.0, %v571
    %v573 = vpop.f32.mrb[0].mxu0
    %v574 = vadd.f32 0.0, %v573
    %v575 = vpop.f32.mrb[0].mxu0
    %v576 = vadd.f32 0.0, %v575
    %577 = vmatprep.mubr.bf16.mxu0 0
    %578 = vmatmul.mubr.bf16.gmra.mrb[0].mxu0 %v408
    %v579 = vpop.f32.mrb[0].mxu0
    %v580 = vadd.f32 0.0, %v579
    %v581 = vpop.f32.mrb[0].mxu0
    %v582 = vadd.f32 0.0, %v581
    %v583 = vpop.f32.mrb[0].mxu0
    %v584 = vadd.f32 0.0, %v583
    %v585 = vpop.f32.mrb[0].mxu0
    %v586 = vadd.f32 0.0, %v585
    %587 = vmatprep.mubr.bf16.mxu0 0
    %588 = vmatmul.mubr.bf16.gmra.mrb[0].mxu0 %v409
    %v589 = vpop.f32.mrb[0].mxu0
    %v590 = vadd.f32 0.0, %v589
    %v591 = vpop.f32.mrb[0].mxu0
    %v592 = vadd.f32 0.0, %v591
    %v593 = vpop.f32.mrb[0].mxu0
    %v594 = vadd.f32 0.0, %v593
    %v595 = vpop.f32.mrb[0].mxu0
    %v596 = vadd.f32 0.0, %v595
    %597 = vmatprep.mubr.bf16.mxu0 0
    %598 = vmatmul.mubr.bf16.gmra.mrb[0].mxu0 %v410
    %v599 = vpop.f32.mrb[0].mxu0
    %v600 = vadd.f32 0.0, %v599
    %v601 = vpop.f32.mrb[0].mxu0
    %v602 = vadd.f32 0.0, %v601
    %v603 = vpop.f32.mrb[0].mxu0
    %v604 = vadd.f32 0.0, %v603
    %v605 = vpop.f32.mrb[0].mxu0
    %v606 = vadd.f32 0.0, %v605
    %607 = vmatprep.mubr.bf16.mxu0 0
    %608 = vmatmul.mubr.bf16.gmra.mrb[0].mxu0 %v411
    %v609 = vpop.f32.mrb[0].mxu0
    %v610 = vadd.f32 0.0, %v609
    %v611 = vpop.f32.mrb[0].mxu0
    %v612 = vadd.f32 0.0, %v611
    %v613 = vpop.f32.mrb[0].mxu0
    %v614 = vadd.f32 0.0, %v613
    %v615 = vpop.f32.mrb[0].mxu0
    %v616 = vadd.f32 0.0, %v615
    %617 = vmatprep.mubr.bf16.mxu0 0
    %618 = vmatmul.mubr.bf16.gmra.mrb[0].mxu0 %v412
    %v619 = vpop.f32.mrb[0].mxu0
    %v620 = vadd.f32 0.0, %v619
    %v621 = vpop.f32.mrb[0].mxu0
    %v622 = vadd.f32 0.0, %v621
    %v623 = vpop.f32.mrb[0].mxu0
    %v624 = vadd.f32 0.0, %v623
    %v625 = vpop.f32.mrb[0].mxu0
    %v626 = vadd.f32 0.0, %v625
    %627 = vmatprep.mubr.bf16.mxu0 0
    %628 = vmatmul.mubr.bf16.gmra.mrb[0].mxu0 %v413
    %v629 = vpop.f32.mrb[0].mxu0
    %v630 = vadd.f32 0.0, %v629
    %v631 = vpop.f32.mrb[0].mxu0
    %v632 = vadd.f32 0.0, %v631
    %v633 = vpop.f32.mrb[0].mxu0
    %v634 = vadd.f32 0.0, %v633
    %v635 = vpop.f32.mrb[0].mxu0
    %v636 = vadd.f32 0.0, %v635
    %637 = vmatprep.mubr.bf16.mxu0 0
    %638 = vmatmul.mubr.bf16.gmra.mrb[0].mxu0 %v414
    %v639 = vpop.f32.mrb[0].mxu0
    %v640 = vadd.f32 0.0, %v639
    %v641 = vpop.f32.mrb[0].mxu0
    %v642 = vadd.f32 0.0, %v641
    %v643 = vpop.f32.mrb[0].mxu0
    %v644 = vadd.f32 0.0, %v643
    %v645 = vpop.f32.mrb[0].mxu0
    %v646 = vadd.f32 0.0, %v645
    %647 = vmatprep.mubr.bf16.mxu0 0
    %648 = vmatmul.mubr.bf16.gmra.mrb[0].mxu0 %v415
    %v649 = vpop.f32.mrb[0].mxu0
    %v650 = vadd.f32 0.0, %v649
    %v651 = vpop.f32.mrb[0].mxu0
    %v652 = vadd.f32 0.0, %v651
    %v653 = vpop.f32.mrb[0].mxu0
    %v654 = vadd.f32 0.0, %v653
    %v655 = vpop.f32.mrb[0].mxu0
    %v656 = vadd.f32 0.0, %v655
    %657 = vmatprep.mubr.bf16.mxu0 0
    %658 = vmatmul.mubr.bf16.gmra.mrb[0].mxu0 %v416
    %v659 = vpop.f32.mrb[0].mxu0
    %v660 = vadd.f32 0.0, %v659
    %v661 = vpop.f32.mrb[0].mxu0
    %v662 = vadd.f32 0.0, %v661
    %v663 = vpop.f32.mrb[0].mxu0
    %v664 = vadd.f32 0.0, %v663
    %v665 = vpop.f32.mrb[0].mxu0
    %v666 = vadd.f32 0.0, %v665
    %667 = vmatprep.mubr.bf16.mxu0 0
    %668 = vmatmul.mubr.bf16.gmra.mrb[0].mxu0 %v417
    %v669 = vpop.f32.mrb[0].mxu0
    %v670 = vadd.f32 0.0, %v669
    %v671 = vpop.f32.mrb[0].mxu0
    %v672 = vadd.f32 0.0, %v671
    %v673 = vpop.f32.mrb[0].mxu0
    %v674 = vadd.f32 0.0, %v673
    %v675 = vpop.f32.mrb[0].mxu0
    %v676 = vadd.f32 0.0, %v675
    %677 = vmatprep.mubr.bf16.mxu0 0
    %678 = vmatmul.mubr.bf16.gmra.mrb[0].mxu0 %v418
    %v679 = vpop.f32.mrb[0].mxu0
    %v680 = vadd.f32 0.0, %v679
    %v681 = vpop.f32.mrb[0].mxu0
    %v682 = vadd.f32 0.0, %v681
    %v683 = vpop.f32.mrb[0].mxu0
    %v684 = vadd.f32 0.0, %v683
    %v685 = vpop.f32.mrb[0].mxu0
    %v686 = vadd.f32 0.0, %v685
    %687 = vmatprep.mubr.bf16.mxu0 0
    %688 = vmatmul.mubr.bf16.gmra.mrb[0].mxu0 %v419
    %v689 = vpop.f32.mrb[0].mxu0
    %v690 = vadd.f32 0.0, %v689
    %v691 = vpop.f32.mrb[0].mxu0
    %v692 = vadd.f32 0.0, %v691
    %v693 = vpop.f32.mrb[0].mxu0
    %v694 = vadd.f32 0.0, %v693
    %v695 = vpop.f32.mrb[0].mxu0
    %v696 = vadd.f32 0.0, %v695
    %697 = vmatprep.mubr.bf16.mxu0 0
    %698 = vmatmul.mubr.bf16.gmra.mrb[0].mxu0 %v420
    %v699 = vpop.f32.mrb[0].mxu0
    %v700 = vadd.f32 0.0, %v699
    %v701 = vpop.f32.mrb[0].mxu0
    %v702 = vadd.f32 0.0, %v701
    %v703 = vpop.f32.mrb[0].mxu0
    %v704 = vadd.f32 0.0, %v703
    %v705 = vpop.f32.mrb[0].mxu0
    %v706 = vadd.f32 0.0, %v705
    %707 = vmatprep.mubr.bf16.mxu0 0
    %708 = vmatmul.mubr.bf16.gmra.mrb[0].mxu0 %v421
    %v709 = vpop.f32.mrb[0].mxu0
    %v710 = vadd.f32 0.0, %v709
    %v711 = vpop.f32.mrb[0].mxu0
    %v712 = vadd.f32 0.0, %v711
    %v713 = vpop.f32.mrb[0].mxu0
    %v714 = vadd.f32 0.0, %v713
    %v715 = vpop.f32.mrb[0].mxu0
    %v716 = vadd.f32 0.0, %v715
    %717 = vmatprep.mubr.bf16.mxu0 0
    %718 = vmatmul.mubr.bf16.gmra.mrb[0].mxu0 %v422
    %v719 = vpop.f32.mrb[0].mxu0
    %v720 = vadd.f32 0.0, %v719
    %v721 = vpop.f32.mrb[0].mxu0
    %v722 = vadd.f32 0.0, %v721
    %v723 = vpop.f32.mrb[0].mxu0
    %v724 = vadd.f32 0.0, %v723
    %v725 = vpop.f32.mrb[0].mxu0
    %v726 = vadd.f32 0.0, %v725
    %727 = vmatprep.mubr.bf16.mxu0 0
    %728 = vmatmul.mubr.bf16.gmra.mrb[0].mxu0 %v423
    %v729 = vpop.f32.mrb[0].mxu0
    %v730 = vadd.f32 0.0, %v729
    %v731 = vpop.f32.mrb[0].mxu0
    %v732 = vadd.f32 0.0, %v731
    %v733 = vpop.f32.mrb[0].mxu0
    %v734 = vadd.f32 0.0, %v733
    %v735 = vpop.f32.mrb[0].mxu0
    %v736 = vadd.f32 0.0, %v735
    %737 = vmatprep.mubr.bf16.mxu0 0
    %738 = vmatmul.mubr.bf16.gmra.mrb[0].mxu0 %v424
    %v739 = vpop.f32.mrb[0].mxu0
    %v740 = vadd.f32 0.0, %v739
    %v741 = vpop.f32.mrb[0].mxu0
    %v742 = vadd.f32 0.0, %v741
    %v743 = vpop.f32.mrb[0].mxu0
    %v744 = vadd.f32 0.0, %v743
    %v745 = vpop.f32.mrb[0].mxu0
    %v746 = vadd.f32 0.0, %v745
    %747 = vmatprep.mubr.bf16.mxu0 0
    %748 = vmatmul.mubr.bf16.gmra.mrb[0].mxu0 %v425
    %v749 = vpop.f32.mrb[0].mxu0
    %v750 = vadd.f32 0.0, %v749
    %v751 = vpop.f32.mrb[0].mxu0
    %v752 = vadd.f32 0.0, %v751
    %v753 = vpop.f32.mrb[0].mxu0
    %v754 = vadd.f32 0.0, %v753
    %v755 = vpop.f32.mrb[0].mxu0
    %v756 = vadd.f32 0.0, %v755
    %757 = vmatprep.mubr.bf16.mxu0 0
    %758 = vmatmul.mubr.bf16.gmra.mrb[0].mxu0 %v426
    %v759 = vpop.f32.mrb[0].mxu0
    %v760 = vadd.f32 0.0, %v759
    %v761 = vpop.f32.mrb[0].mxu0
    %v762 = vadd.f32 0.0, %v761
    %v763 = vpop.f32.mrb[0].mxu0
    %v764 = vadd.f32 0.0, %v763
    %v765 = vpop.f32.mrb[0].mxu0
    %v766 = vadd.f32 0.0, %v765
    %767 = vmatprep.mubr.bf16.mxu0 0
    %768 = vmatmul.mubr.bf16.gmra.mrb[0].mxu0 %v427
    %v769 = vpop.f32.mrb[0].mxu0
    %v770 = vadd.f32 0.0, %v769
    %v771 = vpop.f32.mrb[0].mxu0
    %v772 = vadd.f32 0.0, %v771
    %v773 = vpop.f32.mrb[0].mxu0
    %v774 = vadd.f32 0.0, %v773
    %v775 = vpop.f32.mrb[0].mxu0
    %v776 = vadd.f32 0.0, %v775
    %777 = vmatprep.mubr.bf16.mxu0 0
    %778 = vmatmul.mubr.bf16.gmra.mrb[0].mxu0 %v428
    %v779 = vpop.f32.mrb[0].mxu0
    %v780 = vadd.f32 0.0, %v779
    %v781 = vpop.f32.mrb[0].mxu0
    %v782 = vadd.f32 0.0, %v781
    %v783 = vpop.f32.mrb[0].mxu0
    %v784 = vadd.f32 0.0, %v783
    %v785 = vpop.f32.mrb[0].mxu0
    %v786 = vadd.f32 0.0, %v785
    %787 = vmatprep.mubr.bf16.mxu0 0
    %788 = vmatmul.mubr.bf16.gmra.mrb[0].mxu0 %v429
    %v789 = vpop.f32.mrb[0].mxu0
    %v790 = vadd.f32 0.0, %v789
    %v791 = vpop.f32.mrb[0].mxu0
    %v792 = vadd.f32 0.0, %v791
    %v793 = vpop.f32.mrb[0].mxu0
    %v794 = vadd.f32 0.0, %v793
    %v795 = vpop.f32.mrb[0].mxu0
    %v796 = vadd.f32 0.0, %v795
    %797 = vmatprep.mubr.bf16.mxu0 0
    %798 = vmatmul.mubr.bf16.gmra.mrb[0].mxu0 %v430
    %v799 = vpop.f32.mrb[0].mxu0
    %v800 = vadd.f32 0.0, %v799
    %v801 = vpop.f32.mrb[0].mxu0
    %v802 = vadd.f32 0.0, %v801
    %v803 = vpop.f32.mrb[0].mxu0
    %v804 = vadd.f32 0.0, %v803
    %v805 = vpop.f32.mrb[0].mxu0
    %v806 = vadd.f32 0.0, %v805
    %807 = vmatprep.mubr.bf16.mxu0 0
    %808 = vmatmul.mubr.bf16.gmra.mrb[0].mxu0 %v431
    %v809 = vpop.f32.mrb[0].mxu0
    %v810 = vadd.f32 0.0, %v809
    %v811 = vpop.f32.mrb[0].mxu0
    %v812 = vadd.f32 0.0, %v811
    %v813 = vpop.f32.mrb[0].mxu0
    %v814 = vadd.f32 0.0, %v813
    %v815 = vpop.f32.mrb[0].mxu0
    %v816 = vadd.f32 0.0, %v815
    %817 = vmatprep.mubr.bf16.mxu0 0
    %818 = vmatmul.mubr.bf16.gmra.mrb[0].mxu0 %v432
    %v819 = vpop.f32.mrb[0].mxu0
    %v820 = vadd.f32 0.0, %v819
    %v821 = vpop.f32.mrb[0].mxu0
    %v822 = vadd.f32 0.0, %v821
    %v823 = vpop.f32.mrb[0].mxu0
    %v824 = vadd.f32 0.0, %v823
    %v825 = vpop.f32.mrb[0].mxu0
    %v826 = vadd.f32 0.0, %v825
    %827 = vmatprep.mubr.bf16.mxu0 0
    %828 = vmatmul.mubr.bf16.gmra.mrb[0].mxu0 %v433
    %v829 = vpop.f32.mrb[0].mxu0
    %v830 = vadd.f32 0.0, %v829
    %v831 = vpop.f32.mrb[0].mxu0
    %v832 = vadd.f32 0.0, %v831
    %v833 = vpop.f32.mrb[0].mxu0
    %v834 = vadd.f32 0.0, %v833
    %v835 = vpop.f32.mrb[0].mxu0
    %v836 = vadd.f32 0.0, %v835
    %837 = vmatprep.mubr.bf16.mxu0 0
    %838 = vmatmul.mubr.bf16.gmra.mrb[0].mxu0 %v434
    %v839 = vpop.f32.mrb[0].mxu0
    %v840 = vadd.f32 0.0, %v839
    %v841 = vpop.f32.mrb[0].mxu0
    %v842 = vadd.f32 0.0, %v841
    %v843 = vpop.f32.mrb[0].mxu0
    %v844 = vadd.f32 0.0, %v843
    %v845 = vpop.f32.mrb[0].mxu0
    %v846 = vadd.f32 0.0, %v845
    %847 = vmatprep.mubr.bf16.mxu0 0
    %848 = vmatmul.mubr.bf16.gmra.mrb[0].mxu0 %v435
    %v849 = vpop.f32.mrb[0].mxu0
    %v850 = vadd.f32 0.0, %v849
    %v851 = vpop.f32.mrb[0].mxu0
    %v852 = vadd.f32 0.0, %v851
    %v853 = vpop.f32.mrb[0].mxu0
    %v854 = vadd.f32 0.0, %v853
    %v855 = vpop.f32.mrb[0].mxu0
    %v856 = vadd.f32 0.0, %v855
    %857 = vmatprep.mubr.bf16.mxu0 0
    %858 = vmatmul.mubr.bf16.gmra.mrb[0].mxu0 %v436
    %v859 = vpop.f32.mrb[0].mxu0
    %v860 = vadd.f32 0.0, %v859
    %v861 = vpop.f32.mrb[0].mxu0
    %v862 = vadd.f32 0.0, %v861
    %v863 = vpop.f32.mrb[0].mxu0
    %v864 = vadd.f32 0.0, %v863
    %v865 = vpop.f32.mrb[0].mxu0
    %v866 = vadd.f32 0.0, %v865
    %867 = vmatprep.mubr.bf16.mxu0 0
    %868 = vmatmul.mubr.bf16.gmra.mrb[0].mxu0 %v437
    %v869 = vpop.f32.mrb[0].mxu0
    %v870 = vadd.f32 0.0, %v869
    %v871 = vpop.f32.mrb[0].mxu0
    %v872 = vadd.f32 0.0, %v871
    %v873 = vpop.f32.mrb[0].mxu0
    %v874 = vadd.f32 0.0, %v873
    %v875 = vpop.f32.mrb[0].mxu0
    %v876 = vadd.f32 0.0, %v875
    %877 = vmatprep.mubr.bf16.mxu0 0
    %878 = vmatmul.mubr.bf16.gmra.mrb[0].mxu0 %v438
    %v879 = vpop.f32.mrb[0].mxu0
    %v880 = vadd.f32 0.0, %v879
    %v881 = vpop.f32.mrb[0].mxu0
    %v882 = vadd.f32 0.0, %v881
    %v883 = vpop.f32.mrb[0].mxu0
    %v884 = vadd.f32 0.0, %v883
    %v885 = vpop.f32.mrb[0].mxu0
    %v886 = vadd.f32 0.0, %v885
    %887 = vdwg.mxu0
    %v888 = vpack.c.bf16 %v574, %v570
    %v889 = vpack.c.bf16 %v576, %v572
    %v890 = vpack.c.bf16 %v584, %v580
    %v891 = vpack.c.bf16 %v586, %v582
    %v892 = vpack.c.bf16 %v594, %v590
    %v893 = vpack.c.bf16 %v596, %v592
    %v894 = vpack.c.bf16 %v604, %v600
    %v895 = vpack.c.bf16 %v606, %v602
    %v896 = vpack.c.bf16 %v614, %v610
    %v897 = vpack.c.bf16 %v616, %v612
    %v898 = vpack.c.bf16 %v624, %v620
    %v899 = vpack.c.bf16 %v626, %v622
    %v900 = vpack.c.bf16 %v634, %v630
    %v901 = vpack.c.bf16 %v636, %v632
    %v902 = vpack.c.bf16 %v644, %v640
    %v903 = vpack.c.bf16 %v646, %v642
    %v904 = vpack.c.bf16 %v654, %v650
    %v905 = vpack.c.bf16 %v656, %v652
    %v906 = vpack.c.bf16 %v664, %v660
    %v907 = vpack.c.bf16 %v666, %v662
    %v908 = vpack.c.bf16 %v674, %v670
    %v909 = vpack.c.bf16 %v676, %v672
    %v910 = vpack.c.bf16 %v684, %v680
    %v911 = vpack.c.bf16 %v686, %v682
    %v912 = vpack.c.bf16 %v694, %v690
    %v913 = vpack.c.bf16 %v696, %v692
    %v914 = vpack.c.bf16 %v704, %v700
    %v915 = vpack.c.bf16 %v706, %v702
    %v916 = vpack.c.bf16 %v714, %v710
    %v917 = vpack.c.bf16 %v716, %v712
    %v918 = vpack.c.bf16 %v724, %v720
    %v919 = vpack.c.bf16 %v726, %v722
    %v920 = vpack.c.bf16 %v734, %v730
    %v921 = vpack.c.bf16 %v736, %v732
    %v922 = vpack.c.bf16 %v744, %v740
    %v923 = vpack.c.bf16 %v746, %v742
    %v924 = vpack.c.bf16 %v754, %v750
    %v925 = vpack.c.bf16 %v756, %v752
    %v926 = vpack.c.bf16 %v764, %v760
    %v927 = vpack.c.bf16 %v766, %v762
    %v928 = vpack.c.bf16 %v774, %v770
    %v929 = vpack.c.bf16 %v776, %v772
    %v930 = vpack.c.bf16 %v784, %v780
    %v931 = vpack.c.bf16 %v786, %v782
    %v932 = vpack.c.bf16 %v794, %v790
    %v933 = vpack.c.bf16 %v796, %v792
    %v934 = vpack.c.bf16 %v804, %v800
    %v935 = vpack.c.bf16 %v806, %v802
    %v936 = vpack.c.bf16 %v814, %v810
    %v937 = vpack.c.bf16 %v816, %v812
    %v938 = vpack.c.bf16 %v824, %v820
    %v939 = vpack.c.bf16 %v826, %v822
    %v940 = vpack.c.bf16 %v834, %v830
    %v941 = vpack.c.bf16 %v836, %v832
    %v942 = vpack.c.bf16 %v844, %v840
    %v943 = vpack.c.bf16 %v846, %v842
    %v944 = vpack.c.bf16 %v854, %v850
    %v945 = vpack.c.bf16 %v856, %v852
    %v946 = vpack.c.bf16 %v864, %v860
    %v947 = vpack.c.bf16 %v866, %v862
    %v948 = vpack.c.bf16 %v874, %v870
    %v949 = vpack.c.bf16 %v876, %v872
    %v950 = vpack.c.bf16 %v884, %v880
    %v951 = vpack.c.bf16 %v886, %v882
    %v1016 = vunpack.c.l.b16 %v888
    %v1017 = vunpack.c.l.b16 %v889
    %v1018 = vunpack.c.h.b16 %v888
    %v1019 = vunpack.c.h.b16 %v889
    %v1020 = vunpack.c.l.b16 %v890
    %v1021 = vunpack.c.l.b16 %v891
    %v1022 = vunpack.c.h.b16 %v890
    %v1023 = vunpack.c.h.b16 %v891
    %v1024 = vunpack.c.l.b16 %v892
    %v1025 = vunpack.c.l.b16 %v893
    %v1026 = vunpack.c.h.b16 %v892
    %v1027 = vunpack.c.h.b16 %v893
    %v1028 = vunpack.c.l.b16 %v894
    %v1029 = vunpack.c.l.b16 %v895
    %v1030 = vunpack.c.h.b16 %v894
    %v1031 = vunpack.c.h.b16 %v895
    %v1032 = vunpack.c.l.b16 %v896
    %v1033 = vunpack.c.l.b16 %v897
    %v1034 = vunpack.c.h.b16 %v896
    %v1035 = vunpack.c.h.b16 %v897
    %v1036 = vunpack.c.l.b16 %v898
    %v1037 = vunpack.c.l.b16 %v899
    %v1038 = vunpack.c.h.b16 %v898
    %v1039 = vunpack.c.h.b16 %v899
    %v1040 = vunpack.c.l.b16 %v900
    %v1041 = vunpack.c.l.b16 %v901
    %v1042 = vunpack.c.h.b16 %v900
    %v1043 = vunpack.c.h.b16 %v901
    %v1044 = vunpack.c.l.b16 %v902
    %v1045 = vunpack.c.l.b16 %v903
    %v1046 = vunpack.c.h.b16 %v902
    %v1047 = vunpack.c.h.b16 %v903
    %v1048 = vunpack.c.l.b16 %v904
    %v1049 = vunpack.c.l.b16 %v905
    %v1050 = vunpack.c.h.b16 %v904
    %v1051 = vunpack.c.h.b16 %v905
    %v1052 = vunpack.c.l.b16 %v906
    %v1053 = vunpack.c.l.b16 %v907
    %v1054 = vunpack.c.h.b16 %v906
    %v1055 = vunpack.c.h.b16 %v907
    %v1056 = vunpack.c.l.b16 %v908
    %v1057 = vunpack.c.l.b16 %v909
    %v1058 = vunpack.c.h.b16 %v908
    %v1059 = vunpack.c.h.b16 %v909
    %v1060 = vunpack.c.l.b16 %v910
    %v1061 = vunpack.c.l.b16 %v911
    %v1062 = vunpack.c.h.b16 %v910
    %v1063 = vunpack.c.h.b16 %v911
    %v1064 = vunpack.c.l.b16 %v912
    %v1065 = vunpack.c.l.b16 %v913
    %v1066 = vunpack.c.h.b16 %v912
    %v1067 = vunpack.c.h.b16 %v913
    %v1068 = vunpack.c.l.b16 %v914
    %v1069 = vunpack.c.l.b16 %v915
    %v1070 = vunpack.c.h.b16 %v914
    %v1071 = vunpack.c.h.b16 %v915
    %v1072 = vunpack.c.l.b16 %v916
    %v1073 = vunpack.c.l.b16 %v917
    %v1074 = vunpack.c.h.b16 %v916
    %v1075 = vunpack.c.h.b16 %v917
    %v1076 = vunpack.c.l.b16 %v918
    %v1077 = vunpack.c.l.b16 %v919
    %v1078 = vunpack.c.h.b16 %v918
    %v1079 = vunpack.c.h.b16 %v919
    %v1080 = vunpack.c.l.b16 %v920
    %v1081 = vunpack.c.l.b16 %v921
    %v1082 = vunpack.c.h.b16 %v920
    %v1083 = vunpack.c.h.b16 %v921
    %v1084 = vunpack.c.l.b16 %v922
    %v1085 = vunpack.c.l.b16 %v923
    %v1086 = vunpack.c.h.b16 %v922
    %v1087 = vunpack.c.h.b16 %v923
    %v1088 = vunpack.c.l.b16 %v924
    %v1089 = vunpack.c.l.b16 %v925
    %v1090 = vunpack.c.h.b16 %v924
    %v1091 = vunpack.c.h.b16 %v925
    %v1092 = vunpack.c.l.b16 %v926
    %v1093 = vunpack.c.l.b16 %v927
    %v1094 = vunpack.c.h.b16 %v926
    %v1095 = vunpack.c.h.b16 %v927
    %v1096 = vunpack.c.l.b16 %v928
    %v1097 = vunpack.c.l.b16 %v929
    %v1098 = vunpack.c.h.b16 %v928
    %v1099 = vunpack.c.h.b16 %v929
    %v1100 = vunpack.c.l.b16 %v930
    %v1101 = vunpack.c.l.b16 %v931
    %v1102 = vunpack.c.h.b16 %v930
    %v1103 = vunpack.c.h.b16 %v931
    %v1104 = vunpack.c.l.b16 %v932
    %v1105 = vunpack.c.l.b16 %v933
    %v1106 = vunpack.c.h.b16 %v932
    %v1107 = vunpack.c.h.b16 %v933
    %v1108 = vunpack.c.l.b16 %v934
    %v1109 = vunpack.c.l.b16 %v935
    %v1110 = vunpack.c.h.b16 %v934
    %v1111 = vunpack.c.h.b16 %v935
    %v1112 = vunpack.c.l.b16 %v936
    %v1113 = vunpack.c.l.b16 %v937
    %v1114 = vunpack.c.h.b16 %v936
    %v1115 = vunpack.c.h.b16 %v937
    %v1116 = vunpack.c.l.b16 %v938
    %v1117 = vunpack.c.l.b16 %v939
    %v1118 = vunpack.c.h.b16 %v938
    %v1119 = vunpack.c.h.b16 %v939
    %v1120 = vunpack.c.l.b16 %v940
    %v1121 = vunpack.c.l.b16 %v941
    %v1122 = vunpack.c.h.b16 %v940
    %v1123 = vunpack.c.h.b16 %v941
    %v1124 = vunpack.c.l.b16 %v942
    %v1125 = vunpack.c.l.b16 %v943
    %v1126 = vunpack.c.h.b16 %v942
    %v1127 = vunpack.c.h.b16 %v943
    %v1128 = vunpack.c.l.b16 %v944
    %v1129 = vunpack.c.l.b16 %v945
    %v1130 = vunpack.c.h.b16 %v944
    %v1131 = vunpack.c.h.b16 %v945
    %v1132 = vunpack.c.l.b16 %v946
    %v1133 = vunpack.c.l.b16 %v947
    %v1134 = vunpack.c.h.b16 %v946
    %v1135 = vunpack.c.h.b16 %v947
    %v1136 = vunpack.c.l.b16 %v948
    %v1137 = vunpack.c.l.b16 %v949
    %v1138 = vunpack.c.h.b16 %v948
    %v1139 = vunpack.c.h.b16 %v949
    %v1140 = vunpack.c.l.b16 %v950
    %v1141 = vunpack.c.l.b16 %v951
    %v1142 = vunpack.c.h.b16 %v950
    %v1143 = vunpack.c.h.b16 %v951
    %v1144 = vpack.c.b16 %v1017, %v1016
    %v1145 = vpack.c.b16 %v1019, %v1018
    %v1146 = vpack.c.b16 %v1021, %v1020
    %v1147 = vpack.c.b16 %v1023, %v1022
    %v1148 = vpack.c.b16 %v1025, %v1024
    %v1149 = vpack.c.b16 %v1027, %v1026
    %v1150 = vpack.c.b16 %v1029, %v1028
    %v1151 = vpack.c.b16 %v1031, %v1030
    %v1152 = vpack.c.b16 %v1033, %v1032
    %v1153 = vpack.c.b16 %v1035, %v1034
    %v1154 = vpack.c.b16 %v1037, %v1036
    %v1155 = vpack.c.b16 %v1039, %v1038
    %v1156 = vpack.c.b16 %v1041, %v1040
    %v1157 = vpack.c.b16 %v1043, %v1042
    %v1158 = vpack.c.b16 %v1045, %v1044
    %v1159 = vpack.c.b16 %v1047, %v1046
    %v1160 = vpack.c.b16 %v1049, %v1048
    %v1161 = vpack.c.b16 %v1051, %v1050
    %v1162 = vpack.c.b16 %v1053, %v1052
    %v1163 = vpack.c.b16 %v1055, %v1054
    %v1164 = vpack.c.b16 %v1057, %v1056
    %v1165 = vpack.c.b16 %v1059, %v1058
    %v1166 = vpack.c.b16 %v1061, %v1060
    %v1167 = vpack.c.b16 %v1063, %v1062
    %v1168 = vpack.c.b16 %v1065, %v1064
    %v1169 = vpack.c.b16 %v1067, %v1066
    %v1170 = vpack.c.b16 %v1069, %v1068
    %v1171 = vpack.c.b16 %v1071, %v1070
    %v1172 = vpack.c.b16 %v1073, %v1072
    %v1173 = vpack.c.b16 %v1075, %v1074
    %v1174 = vpack.c.b16 %v1077, %v1076
    %v1175 = vpack.c.b16 %v1079, %v1078
    %v1176 = vpack.c.b16 %v1081, %v1080
    %v1177 = vpack.c.b16 %v1083, %v1082
    %v1178 = vpack.c.b16 %v1085, %v1084
    %v1179 = vpack.c.b16 %v1087, %v1086
    %v1180 = vpack.c.b16 %v1089, %v1088
    %v1181 = vpack.c.b16 %v1091, %v1090
    %v1182 = vpack.c.b16 %v1093, %v1092
    %v1183 = vpack.c.b16 %v1095, %v1094
    %v1184 = vpack.c.b16 %v1097, %v1096
    %v1185 = vpack.c.b16 %v1099, %v1098
    %v1186 = vpack.c.b16 %v1101, %v1100
    %v1187 = vpack.c.b16 %v1103, %v1102
    %v1188 = vpack.c.b16 %v1105, %v1104
    %v1189 = vpack.c.b16 %v1107, %v1106
    %v1190 = vpack.c.b16 %v1109, %v1108
    %v1191 = vpack.c.b16 %v1111, %v1110
    %v1192 = vpack.c.b16 %v1113, %v1112
    %v1193 = vpack.c.b16 %v1115, %v1114
    %v1194 = vpack.c.b16 %v1117, %v1116
    %v1195 = vpack.c.b16 %v1119, %v1118
    %v1196 = vpack.c.b16 %v1121, %v1120
    %v1197 = vpack.c.b16 %v1123, %v1122
    %v1198 = vpack.c.b16 %v1125, %v1124
    %v1199 = vpack.c.b16 %v1127, %v1126
    %v1200 = vpack.c.b16 %v1129, %v1128
    %v1201 = vpack.c.b16 %v1131, %v1130
    %v1202 = vpack.c.b16 %v1133, %v1132
    %v1203 = vpack.c.b16 %v1135, %v1134
    %v1204 = vpack.c.b16 %v1137, %v1136
    %v1205 = vpack.c.b16 %v1139, %v1138
    %v1206 = vpack.c.b16 %v1141, %v1140
    %v1207 = vpack.c.b16 %v1143, %v1142
    %1272 = vst [vmem:[#allocation10] sm:$0xff] %v1144
    %1273 = vst [vmem:[#allocation10 + $0x8] sm:$0xff] %v1145
    %1274 = vst [vmem:[#allocation10 + $0x10] sm:$0xff] %v1146
    %1275 = vst [vmem:[#allocation10 + $0x18] sm:$0xff] %v1147
    %1276 = vst [vmem:[#allocation10 + $0x20] sm:$0xff] %v1148
    %1277 = vst [vmem:[#allocation10 + $0x28] sm:$0xff] %v1149
    %1278 = vst [vmem:[#allocation10 + $0x30] sm:$0xff] %v1150
    %1279 = vst [vmem:[#allocation10 + $0x38] sm:$0xff] %v1151
    %1280 = vst [vmem:[#allocation10 + $0x40] sm:$0xff] %v1152
    %1281 = vst [vmem:[#allocation10 + $0x48] sm:$0xff] %v1153
    %1282 = vst [vmem:[#allocation10 + $0x50] sm:$0xff] %v1154
    %1283 = vst [vmem:[#allocation10 + $0x58] sm:$0xff] %v1155
    %1284 = vst [vmem:[#allocation10 + $0x60] sm:$0xff] %v1156
    %1285 = vst [vmem:[#allocation10 + $0x68] sm:$0xff] %v1157
    %1286 = vst [vmem:[#allocation10 + $0x70] sm:$0xff] %v1158
    %1287 = vst [vmem:[#allocation10 + $0x78] sm:$0xff] %v1159
    %1288 = vst [vmem:[#allocation10 + $0x80] sm:$0xff] %v1160
    %1289 = vst [vmem:[#allocation10 + $0x88] sm:$0xff] %v1161
    %1290 = vst [vmem:[#allocation10 + $0x90] sm:$0xff] %v1162
    %1291 = vst [vmem:[#allocation10 + $0x98] sm:$0xff] %v1163
    %1292 = vst [vmem:[#allocation10 + $0xa0] sm:$0xff] %v1164
    %1293 = vst [vmem:[#allocation10 + $0xa8] sm:$0xff] %v1165
    %1294 = vst [vmem:[#allocation10 + $0xb0] sm:$0xff] %v1166
    %1295 = vst [vmem:[#allocation10 + $0xb8] sm:$0xff] %v1167
    %1296 = vst [vmem:[#allocation10 + $0xc0] sm:$0xff] %v1168
    %1297 = vst [vmem:[#allocation10 + $0xc8] sm:$0xff] %v1169
    %1298 = vst [vmem:[#allocation10 + $0xd0] sm:$0xff] %v1170
    %1299 = vst [vmem:[#allocation10 + $0xd8] sm:$0xff] %v1171
    %1300 = vst [vmem:[#allocation10 + $0xe0] sm:$0xff] %v1172
    %1301 = vst [vmem:[#allocation10 + $0xe8] sm:$0xff] %v1173
    %1302 = vst [vmem:[#allocation10 + $0xf0] sm:$0xff] %v1174
    %1303 = vst [vmem:[#allocation10 + $0xf8] sm:$0xff] %v1175
    %1304 = vst [vmem:[#allocation10 + $0x100] sm:$0xff] %v1176
    %1305 = vst [vmem:[#allocation10 + $0x108] sm:$0xff] %v1177
    %1306 = vst [vmem:[#allocation10 + $0x110] sm:$0xff] %v1178
    %1307 = vst [vmem:[#allocation10 + $0x118] sm:$0xff] %v1179
    %1308 = vst [vmem:[#allocation10 + $0x120] sm:$0xff] %v1180
    %1309 = vst [vmem:[#allocation10 + $0x128] sm:$0xff] %v1181
    %1310 = vst [vmem:[#allocation10 + $0x130] sm:$0xff] %v1182
    %1311 = vst [vmem:[#allocation10 + $0x138] sm:$0xff] %v1183
    %1312 = vst [vmem:[#allocation10 + $0x140] sm:$0xff] %v1184
    %1313 = vst [vmem:[#allocation10 + $0x148] sm:$0xff] %v1185
    %1314 = vst [vmem:[#allocation10 + $0x150] sm:$0xff] %v1186
    %1315 = vst [vmem:[#allocation10 + $0x158] sm:$0xff] %v1187
    %1316 = vst [vmem:[#allocation10 + $0x160] sm:$0xff] %v1188
    %1317 = vst [vmem:[#allocation10 + $0x168] sm:$0xff] %v1189
    %1318 = vst [vmem:[#allocation10 + $0x170] sm:$0xff] %v1190
    %1319 = vst [vmem:[#allocation10 + $0x178] sm:$0xff] %v1191
    %1320 = vst [vmem:[#allocation10 + $0x180] sm:$0xff] %v1192
    %1321 = vst [vmem:[#allocation10 + $0x188] sm:$0xff] %v1193
    %1322 = vst [vmem:[#allocation10 + $0x190] sm:$0xff] %v1194
    %1323 = vst [vmem:[#allocation10 + $0x198] sm:$0xff] %v1195
    %1324 = vst [vmem:[#allocation10 + $0x1a0] sm:$0xff] %v1196
    %1325 = vst [vmem:[#allocation10 + $0x1a8] sm:$0xff] %v1197
    %1326 = vst [vmem:[#allocation10 + $0x1b0] sm:$0xff] %v1198
    %1327 = vst [vmem:[#allocation10 + $0x1b8] sm:$0xff] %v1199
    %1328 = vst [vmem:[#allocation10 + $0x1c0] sm:$0xff] %v1200
    %1329 = vst [vmem:[#allocation10 + $0x1c8] sm:$0xff] %v1201
    %1330 = vst [vmem:[#allocation10 + $0x1d0] sm:$0xff] %v1202
    %1331 = vst [vmem:[#allocation10 + $0x1d8] sm:$0xff] %v1203
    %1332 = vst [vmem:[#allocation10 + $0x1e0] sm:$0xff] %v1204
    %1333 = vst [vmem:[#allocation10 + $0x1e8] sm:$0xff] %v1205
    %1334 = vst [vmem:[#allocation10 + $0x1f0] sm:$0xff] %v1206
    %1335 = vst [vmem:[#allocation10 + $0x1f8] sm:$0xff] %v1207
    %v1336 = vadd.f32 %v570, %v574
    %v1337 = vadd.f32 %v1336, %v580
    %v1338 = vadd.f32 %v1337, %v584
    %v1339 = vadd.f32 %v1338, %v590
    %v1340 = vadd.f32 %v1339, %v594
    %v1341 = vadd.f32 %v1340, %v600
    %v1342 = vadd.f32 %v1341, %v604
    %v1343 = vadd.f32 %v1342, %v610
    %v1344 = vadd.f32 %v1343, %v614
    %v1345 = vadd.f32 %v1344, %v620
    %v1346 = vadd.f32 %v1345, %v624
    %v1347 = vadd.f32 %v1346, %v630
    %v1348 = vadd.f32 %v1347, %v634
    %v1349 = vadd.f32 %v1348, %v640
    %v1350 = vadd.f32 %v1349, %v644
    %v1351 = vadd.f32 %v1350, %v650
    %v1352 = vadd.f32 %v1351, %v654
    %v1353 = vadd.f32 %v1352, %v660
    %v1354 = vadd.f32 %v1353, %v664
    %v1355 = vadd.f32 %v1354, %v670
    %v1356 = vadd.f32 %v1355, %v674
    %v1357 = vadd.f32 %v1356, %v680
    %v1358 = vadd.f32 %v1357, %v684
    %v1359 = vadd.f32 %v1358, %v690
    %v1360 = vadd.f32 %v1359, %v694
    %v1361 = vadd.f32 %v1360, %v700
    %v1362 = vadd.f32 %v1361, %v704
    %v1363 = vadd.f32 %v1362, %v710
    %v1364 = vadd.f32 %v1363, %v714
    %v1365 = vadd.f32 %v1364, %v720
    %v1366 = vadd.f32 %v1365, %v724
    %v1367 = vadd.f32 %v1366, %v730
    %v1368 = vadd.f32 %v1367, %v734
    %v1369 = vadd.f32 %v1368, %v740
    %v1370 = vadd.f32 %v1369, %v744
    %v1371 = vadd.f32 %v1370, %v750
    %v1372 = vadd.f32 %v1371, %v754
    %v1373 = vadd.f32 %v1372, %v760
    %v1374 = vadd.f32 %v1373, %v764
    %v1375 = vadd.f32 %v1374, %v770
    %v1376 = vadd.f32 %v1375, %v774
    %v1377 = vadd.f32 %v1376, %v780
    %v1378 = vadd.f32 %v1377, %v784
    %v1379 = vadd.f32 %v1378, %v790
    %v1380 = vadd.f32 %v1379, %v794
    %v1381 = vadd.f32 %v1380, %v800
    %v1382 = vadd.f32 %v1381, %v804
    %v1383 = vadd.f32 %v1382, %v810
    %v1384 = vadd.f32 %v1383, %v814
    %v1385 = vadd.f32 %v1384, %v820
    %v1386 = vadd.f32 %v1385, %v824
    %v1387 = vadd.f32 %v1386, %v830
    %v1388 = vadd.f32 %v1387, %v834
    %v1389 = vadd.f32 %v1388, %v840
    %v1390 = vadd.f32 %v1389, %v844
    %v1391 = vadd.f32 %v1390, %v850
    %v1392 = vadd.f32 %v1391, %v854
    %v1393 = vadd.f32 %v1392, %v860
    %v1394 = vadd.f32 %v1393, %v864
    %v1395 = vadd.f32 %v1394, %v870
    %v1396 = vadd.f32 %v1395, %v874
    %v1397 = vadd.f32 %v1396, %v880
    %v1398 = vadd.f32 %v1397, %v884
    %v1399 = vrot.slane %v1398, 4
    %v1400 = vadd.f32 %v1398, %v1399
    %v1401 = vrot.slane %v1400, 2
    %v1402 = vadd.f32 %v1400, %v1401
    %v1403 = vrot.slane %v1402, 1
    %v1404 = vadd.f32 %v1402, %v1403
    %v1405 = vadd.f32 %v572, %v576
    %v1406 = vadd.f32 %v1405, %v582
    %v1407 = vadd.f32 %v1406, %v586
    %v1408 = vadd.f32 %v1407, %v592
    %v1409 = vadd.f32 %v1408, %v596
    %v1410 = vadd.f32 %v1409, %v602
    %v1411 = vadd.f32 %v1410, %v606
    %v1412 = vadd.f32 %v1411, %v612
    %v1413 = vadd.f32 %v1412, %v616
    %v1414 = vadd.f32 %v1413, %v622
    %v1415 = vadd.f32 %v1414, %v626
    %v1416 = vadd.f32 %v1415, %v632
    %v1417 = vadd.f32 %v1416, %v636
    %v1418 = vadd.f32 %v1417, %v642
    %v1419 = vadd.f32 %v1418, %v646
    %v1420 = vadd.f32 %v1419, %v652
    %v1421 = vadd.f32 %v1420, %v656
    %v1422 = vadd.f32 %v1421, %v662
    %v1423 = vadd.f32 %v1422, %v666
    %v1424 = vadd.f32 %v1423, %v672
    %v1425 = vadd.f32 %v1424, %v676
    %v1426 = vadd.f32 %v1425, %v682
    %v1427 = vadd.f32 %v1426, %v686
    %v1428 = vadd.f32 %v1427, %v692
    %v1429 = vadd.f32 %v1428, %v696
    %v1430 = vadd.f32 %v1429, %v702
    %v1431 = vadd.f32 %v1430, %v706
    %v1432 = vadd.f32 %v1431, %v712
    %v1433 = vadd.f32 %v1432, %v716
    %v1434 = vadd.f32 %v1433, %v722
    %v1435 = vadd.f32 %v1434, %v726
    %v1436 = vadd.f32 %v1435, %v732
    %v1437 = vadd.f32 %v1436, %v736
    %v1438 = vadd.f32 %v1437, %v742
    %v1439 = vadd.f32 %v1438, %v746
    %v1440 = vadd.f32 %v1439, %v752
    %v1441 = vadd.f32 %v1440, %v756
    %v1442 = vadd.f32 %v1441, %v762
    %v1443 = vadd.f32 %v1442, %v766
    %v1444 = vadd.f32 %v1443, %v772
    %v1445 = vadd.f32 %v1444, %v776
    %v1446 = vadd.f32 %v1445, %v782
    %v1447 = vadd.f32 %v1446, %v786
    %v1448 = vadd.f32 %v1447, %v792
    %v1449 = vadd.f32 %v1448, %v796
    %v1450 = vadd.f32 %v1449, %v802
    %v1451 = vadd.f32 %v1450, %v806
    %v1452 = vadd.f32 %v1451, %v812
    %v1453 = vadd.f32 %v1452, %v816
    %v1454 = vadd.f32 %v1453, %v822
    %v1455 = vadd.f32 %v1454, %v826
    %v1456 = vadd.f32 %v1455, %v832
    %v1457 = vadd.f32 %v1456, %v836
    %v1458 = vadd.f32 %v1457, %v842
    %v1459 = vadd.f32 %v1458, %v846
    %v1460 = vadd.f32 %v1459, %v852
    %v1461 = vadd.f32 %v1460, %v856
    %v1462 = vadd.f32 %v1461, %v862
    %v1463 = vadd.f32 %v1462, %v866
    %v1464 = vadd.f32 %v1463, %v872
    %v1465 = vadd.f32 %v1464, %v876
    %v1466 = vadd.f32 %v1465, %v882
    %v1467 = vadd.f32 %v1466, %v886
    %v1468 = vrot.slane %v1467, 4
    %v1469 = vadd.f32 %v1467, %v1468
    %v1470 = vrot.slane %v1469, 2
    %v1471 = vadd.f32 %v1469, %v1470
    %v1472 = vrot.slane %v1471, 1
    %v1473 = vadd.f32 %v1471, %v1472
    %v1474 = vmul.f32 %v570, %v570
    %v1475 = vmul.f32 %v572, %v572
    %v1476 = vmul.f32 %v574, %v574
    %v1477 = vmul.f32 %v576, %v576
    %v1478 = vmul.f32 %v580, %v580
    %v1479 = vmul.f32 %v582, %v582
    %v1480 = vmul.f32 %v584, %v584
    %v1481 = vmul.f32 %v586, %v586
    %v1482 = vmul.f32 %v590, %v590
    %v1483 = vmul.f32 %v592, %v592
    %v1484 = vmul.f32 %v594, %v594
    %v1485 = vmul.f32 %v596, %v596
    %v1486 = vmul.f32 %v600, %v600
    %v1487 = vmul.f32 %v602, %v602
    %v1488 = vmul.f32 %v604, %v604
    %v1489 = vmul.f32 %v606, %v606
    %v1490 = vmul.f32 %v610, %v610
    %v1491 = vmul.f32 %v612, %v612
    %v1492 = vmul.f32 %v614, %v614
    %v1493 = vmul.f32 %v616, %v616
    %v1494 = vmul.f32 %v620, %v620
    %v1495 = vmul.f32 %v622, %v622
    %v1496 = vmul.f32 %v624, %v624
    %v1497 = vmul.f32 %v626, %v626
    %v1498 = vmul.f32 %v630, %v630
    %v1499 = vmul.f32 %v632, %v632
    %v1500 = vmul.f32 %v634, %v634
    %v1501 = vmul.f32 %v636, %v636
    %v1502 = vmul.f32 %v640, %v640
    %v1503 = vmul.f32 %v642, %v642
    %v1504 = vmul.f32 %v644, %v644
    %v1505 = vmul.f32 %v646, %v646
    %v1506 = vmul.f32 %v650, %v650
    %v1507 = vmul.f32 %v652, %v652
    %v1508 = vmul.f32 %v654, %v654
    %v1509 = vmul.f32 %v656, %v656
    %v1510 = vmul.f32 %v660, %v660
    %v1511 = vmul.f32 %v662, %v662
    %v1512 = vmul.f32 %v664, %v664
    %v1513 = vmul.f32 %v666, %v666
    %v1514 = vmul.f32 %v670, %v670
    %v1515 = vmul.f32 %v672, %v672
    %v1516 = vmul.f32 %v674, %v674
    %v1517 = vmul.f32 %v676, %v676
    %v1518 = vmul.f32 %v680, %v680
    %v1519 = vmul.f32 %v682, %v682
    %v1520 = vmul.f32 %v684, %v684
    %v1521 = vmul.f32 %v686, %v686
    %v1522 = vmul.f32 %v690, %v690
    %v1523 = vmul.f32 %v692, %v692
    %v1524 = vmul.f32 %v694, %v694
    %v1525 = vmul.f32 %v696, %v696
    %v1526 = vmul.f32 %v700, %v700
    %v1527 = vmul.f32 %v702, %v702
    %v1528 = vmul.f32 %v704, %v704
    %v1529 = vmul.f32 %v706, %v706
    %v1530 = vmul.f32 %v710, %v710
    %v1531 = vmul.f32 %v712, %v712
    %v1532 = vmul.f32 %v714, %v714
    %v1533 = vmul.f32 %v716, %v716
    %v1534 = vmul.f32 %v720, %v720
    %v1535 = vmul.f32 %v722, %v722
    %v1536 = vmul.f32 %v724, %v724
    %v1537 = vmul.f32 %v726, %v726
    %v1538 = vmul.f32 %v730, %v730
    %v1539 = vmul.f32 %v732, %v732
    %v1540 = vmul.f32 %v734, %v734
    %v1541 = vmul.f32 %v736, %v736
    %v1542 = vmul.f32 %v740, %v740
    %v1543 = vmul.f32 %v742, %v742
    %v1544 = vmul.f32 %v744, %v744
    %v1545 = vmul.f32 %v746, %v746
    %v1546 = vmul.f32 %v750, %v750
    %v1547 = vmul.f32 %v752, %v752
    %v1548 = vmul.f32 %v754, %v754
    %v1549 = vmul.f32 %v756, %v756
    %v1550 = vmul.f32 %v760, %v760
    %v1551 = vmul.f32 %v762, %v762
    %v1552 = vmul.f32 %v764, %v764
    %v1553 = vmul.f32 %v766, %v766
    %v1554 = vmul.f32 %v770, %v770
    %v1555 = vmul.f32 %v772, %v772
    %v1556 = vmul.f32 %v774, %v774
    %v1557 = vmul.f32 %v776, %v776
    %v1558 = vmul.f32 %v780, %v780
    %v1559 = vmul.f32 %v782, %v782
    %v1560 = vmul.f32 %v784, %v784
    %v1561 = vmul.f32 %v786, %v786
    %v1562 = vmul.f32 %v790, %v790
    %v1563 = vmul.f32 %v792, %v792
    %v1564 = vmul.f32 %v794, %v794
    %v1565 = vmul.f32 %v796, %v796
    %v1566 = vmul.f32 %v800, %v800
    %v1567 = vmul.f32 %v802, %v802
    %v1568 = vmul.f32 %v804, %v804
    %v1569 = vmul.f32 %v806, %v806
    %v1570 = vmul.f32 %v810, %v810
    %v1571 = vmul.f32 %v812, %v812
    %v1572 = vmul.f32 %v814, %v814
    %v1573 = vmul.f32 %v816, %v816
    %v1574 = vmul.f32 %v820, %v820
    %v1575 = vmul.f32 %v822, %v822
    %v1576 = vmul.f32 %v824, %v824
    %v1577 = vmul.f32 %v826, %v826
    %v1578 = vmul.f32 %v830, %v830
    %v1579 = vmul.f32 %v832, %v832
    %v1580 = vmul.f32 %v834, %v834
    %v1581 = vmul.f32 %v836, %v836
    %v1582 = vmul.f32 %v840, %v840
    %v1583 = vmul.f32 %v842, %v842
    %v1584 = vmul.f32 %v844, %v844
    %v1585 = vmul.f32 %v846, %v846
    %v1586 = vmul.f32 %v850, %v850
    %v1587 = vmul.f32 %v852, %v852
    %v1588 = vmul.f32 %v854, %v854
    %v1589 = vmul.f32 %v856, %v856
    %v1590 = vmul.f32 %v860, %v860
    %v1591 = vmul.f32 %v862, %v862
    %v1592 = vmul.f32 %v864, %v864
    %v1593 = vmul.f32 %v866, %v866
    %v1594 = vmul.f32 %v870, %v870
    %v1595 = vmul.f32 %v872, %v872
    %v1596 = vmul.f32 %v874, %v874
    %v1597 = vmul.f32 %v876, %v876
    %v1598 = vmul.f32 %v880, %v880
    %v1599 = vmul.f32 %v882, %v882
    %v1600 = vmul.f32 %v884, %v884
    %v1601 = vmul.f32 %v886, %v886
    %v1602 = vadd.f32 %v1474, %v1476
    %v1603 = vadd.f32 %v1602, %v1478
    %v1604 = vadd.f32 %v1603, %v1480
    %v1605 = vadd.f32 %v1604, %v1482
    %v1606 = vadd.f32 %v1605, %v1484
    %v1607 = vadd.f32 %v1606, %v1486
    %v1608 = vadd.f32 %v1607, %v1488
    %v1609 = vadd.f32 %v1608, %v1490
    %v1610 = vadd.f32 %v1609, %v1492
    %v1611 = vadd.f32 %v1610, %v1494
    %v1612 = vadd.f32 %v1611, %v1496
    %v1613 = vadd.f32 %v1612, %v1498
    %v1614 = vadd.f32 %v1613, %v1500
    %v1615 = vadd.f32 %v1614, %v1502
    %v1616 = vadd.f32 %v1615, %v1504
    %v1617 = vadd.f32 %v1616, %v1506
    %v1618 = vadd.f32 %v1617, %v1508
    %v1619 = vadd.f32 %v1618, %v1510
    %v1620 = vadd.f32 %v1619, %v1512
    %v1621 = vadd.f32 %v1620, %v1514
    %v1622 = vadd.f32 %v1621, %v1516
    %v1623 = vadd.f32 %v1622, %v1518
    %v1624 = vadd.f32 %v1623, %v1520
    %v1625 = vadd.f32 %v1624, %v1522
    %v1626 = vadd.f32 %v1625, %v1524
    %v1627 = vadd.f32 %v1626, %v1526
    %v1628 = vadd.f32 %v1627, %v1528
    %v1629 = vadd.f32 %v1628, %v1530
    %v1630 = vadd.f32 %v1629, %v1532
    %v1631 = vadd.f32 %v1630, %v1534
    %v1632 = vadd.f32 %v1631, %v1536
    %v1633 = vadd.f32 %v1632, %v1538
    %v1634 = vadd.f32 %v1633, %v1540
    %v1635 = vadd.f32 %v1634, %v1542
    %v1636 = vadd.f32 %v1635, %v1544
    %v1637 = vadd.f32 %v1636, %v1546
    %v1638 = vadd.f32 %v1637, %v1548
    %v1639 = vadd.f32 %v1638, %v1550
    %v1640 = vadd.f32 %v1639, %v1552
    %v1641 = vadd.f32 %v1640, %v1554
    %v1642 = vadd.f32 %v1641, %v1556
    %v1643 = vadd.f32 %v1642, %v1558
    %v1644 = vadd.f32 %v1643, %v1560
    %v1645 = vadd.f32 %v1644, %v1562
    %v1646 = vadd.f32 %v1645, %v1564
    %v1647 = vadd.f32 %v1646, %v1566
    %v1648 = vadd.f32 %v1647, %v1568
    %v1649 = vadd.f32 %v1648, %v1570
    %v1650 = vadd.f32 %v1649, %v1572
    %v1651 = vadd.f32 %v1650, %v1574
    %v1652 = vadd.f32 %v1651, %v1576
    %v1653 = vadd.f32 %v1652, %v1578
    %v1654 = vadd.f32 %v1653, %v1580
    %v1655 = vadd.f32 %v1654, %v1582
    %v1656 = vadd.f32 %v1655, %v1584
    %v1657 = vadd.f32 %v1656, %v1586
    %v1658 = vadd.f32 %v1657, %v1588
    %v1659 = vadd.f32 %v1658, %v1590
    %v1660 = vadd.f32 %v1659, %v1592
    %v1661 = vadd.f32 %v1660, %v1594
    %v1662 = vadd.f32 %v1661, %v1596
    %v1663 = vadd.f32 %v1662, %v1598
    %v1664 = vadd.f32 %v1663, %v1600
    %v1665 = vrot.slane %v1664, 4
    %v1666 = vadd.f32 %v1664, %v1665
    %v1667 = vrot.slane %v1666, 2
    %v1668 = vadd.f32 %v1666, %v1667
    %v1669 = vrot.slane %v1668, 1
    %v1670 = vadd.f32 %v1668, %v1669
    %v1671 = vadd.f32 %v1475, %v1477
    %v1672 = vadd.f32 %v1671, %v1479
    %v1673 = vadd.f32 %v1672, %v1481
    %v1674 = vadd.f32 %v1673, %v1483
    %v1675 = vadd.f32 %v1674, %v1485
    %v1676 = vadd.f32 %v1675, %v1487
    %v1677 = vadd.f32 %v1676, %v1489
    %v1678 = vadd.f32 %v1677, %v1491
    %v1679 = vadd.f32 %v1678, %v1493
    %v1680 = vadd.f32 %v1679, %v1495
    %v1681 = vadd.f32 %v1680, %v1497
    %v1682 = vadd.f32 %v1681, %v1499
    %v1683 = vadd.f32 %v1682, %v1501
    %v1684 = vadd.f32 %v1683, %v1503
    %v1685 = vadd.f32 %v1684, %v1505
    %v1686 = vadd.f32 %v1685, %v1507
    %v1687 = vadd.f32 %v1686, %v1509
    %v1688 = vadd.f32 %v1687, %v1511
    %v1689 = vadd.f32 %v1688, %v1513
    %v1690 = vadd.f32 %v1689, %v1515
    %v1691 = vadd.f32 %v1690, %v1517
    %v1692 = vadd.f32 %v1691, %v1519
    %v1693 = vadd.f32 %v1692, %v1521
    %v1694 = vadd.f32 %v1693, %v1523
    %v1695 = vadd.f32 %v1694, %v1525
    %v1696 = vadd.f32 %v1695, %v1527
    %v1697 = vadd.f32 %v1696, %v1529
    %v1698 = vadd.f32 %v1697, %v1531
    %v1699 = vadd.f32 %v1698, %v1533
    %v1700 = vadd.f32 %v1699, %v1535
    %v1701 = vadd.f32 %v1700, %v1537
    %v1702 = vadd.f32 %v1701, %v1539
    %v1703 = vadd.f32 %v1702, %v1541
    %v1704 = vadd.f32 %v1703, %v1543
    %v1705 = vadd.f32 %v1704, %v1545
    %v1706 = vadd.f32 %v1705, %v1547
    %v1707 = vadd.f32 %v1706, %v1549
    %v1708 = vadd.f32 %v1707, %v1551
    %v1709 = vadd.f32 %v1708, %v1553
    %v1710 = vadd.f32 %v1709, %v1555
    %v1711 = vadd.f32 %v1710, %v1557
    %v1712 = vadd.f32 %v1711, %v1559
    %v1713 = vadd.f32 %v1712, %v1561
    %v1714 = vadd.f32 %v1713, %v1563
    %v1715 = vadd.f32 %v1714, %v1565
    %v1716 = vadd.f32 %v1715, %v1567
    %v1717 = vadd.f32 %v1716, %v1569
    %v1718 = vadd.f32 %v1717, %v1571
    %v1719 = vadd.f32 %v1718, %v1573
    %v1720 = vadd.f32 %v1719, %v1575
    %v1721 = vadd.f32 %v1720, %v1577
    %v1722 = vadd.f32 %v1721, %v1579
    %v1723 = vadd.f32 %v1722, %v1581
    %v1724 = vadd.f32 %v1723, %v1583
    %v1725 = vadd.f32 %v1724, %v1585
    %v1726 = vadd.f32 %v1725, %v1587
    %v1727 = vadd.f32 %v1726, %v1589
    %v1728 = vadd.f32 %v1727, %v1591
    %v1729 = vadd.f32 %v1728, %v1593
    %v1730 = vadd.f32 %v1729, %v1595
    %v1731 = vadd.f32 %v1730, %v1597
    %v1732 = vadd.f32 %v1731, %v1599
    %v1733 = vadd.f32 %v1732, %v1601
    %v1734 = vrot.slane %v1733, 4
    %v1735 = vadd.f32 %v1733, %v1734
    %v1736 = vrot.slane %v1735, 2
    %v1737 = vadd.f32 %v1735, %v1736
    %v1738 = vrot.slane %v1737, 1
    %v1739 = vadd.f32 %v1737, %v1738
    %vm1740 = vcmask 1040384
    %v1741 = vsel %vm1740, %v1404, %v1670
    %v1742 = vsel %vm1740, %v1473, %v1739
    %v1745 = vcombine.low %v1741, %v1742
    %v1747 = vunpack.c.l.s4 1983009808
    %v1748 = vunpack.c.0.s8 %v1747
    %v1749 = vlaneseq
    %v1750 = vshrl.u32 %v1749, 7
    %v1751 = vsub.s32 %v1748, %v1750
    %v1752 = vrot.slane %v1745, %v1751
    %1754 = vst [vmem:[#allocation11] sm:$0xf] %v1752
    // Predicated region
    $region34: #{bottleneck_forward.6} parent=1 // pred_check
      _
    $region35: #{bottleneck_forward.6} parent=1 // pred_check_branch
      %1756 = sbr.rel (0) target = $region37
    $region36: #{bottleneck_forward.6} parent=1 // pred_region
      %s1758 = ssub.s32 8192, 8192
      %1759 = vsyncadd [#allocation4], %s1758
      %s1760 = sshll.u32 [#allocation10], 4
      %s1761 = int_to_ptr.vmem [resolvable:$true] %s1760
      %1766 = dma.vmem_to_hbm [thread:$0]  %s1761, 8192, %s4, [#allocation4], 128, 128, 8
    $region37: #{bottleneck_forward.6} parent=1 // pred_fallthru
      _
    // Predicated region
    $region38: #{bottleneck_forward.6} parent=1 // pred_check
      _
    $region39: #{bottleneck_forward.6} parent=1 // pred_check_branch
      %1768 = sbr.rel (0) target = $region41
    $region40: #{bottleneck_forward.6} parent=1 // pred_region
      %s1770 = ssub.s32 64, 64
      %1771 = vsyncadd [#allocation12], %s1770
      %s1773 = sshll.u32 [#allocation11], 4
      %s1774 = int_to_ptr.vmem [resolvable:$true] %s1773
      %1776 = dma.vmem_to_hbm [thread:$0]  %s1774, 64, %s5, [#allocation12]
    $region41: #{bottleneck_forward.6} parent=1 // pred_fallthru
      _
    // Predicated region
    $region42: #{bottleneck_forward.6} parent=1 // pred_check
      _
    $region43: #{bottleneck_forward.6} parent=1 // pred_check_branch
      %1778 = sbr.rel (0) target = $region45
    $region44: #{bottleneck_forward.6} parent=1 // pred_region
      %1779 = dma.done [#allocation4], 8192
    $region45: #{bottleneck_forward.6} parent=1 // pred_fallthru
      _
    // Predicated region
    $region46: #{bottleneck_forward.6} parent=1 // pred_check
      _
    $region47: #{bottleneck_forward.6} parent=1 // pred_check_branch
      %1781 = sbr.rel (0) target = $region49
    $region48: #{bottleneck_forward.6} parent=1 // pred_region
      %1782 = dma.done [#allocation12], 64
    $region49: #{bottleneck_forward.6} parent=1 // pred_fallthru
      _
    %1783 = vsyncpa [#allocation3], 1
    %1784 = vsyncpa [#allocation6], 1
    %1785 = vsyncpa [#allocation9], 1
    %1786 = vsyncpa [#allocation4], 1
    %1787 = vsyncpa [#allocation12], 1

// kernel: bottleneck_forward.7
$region0: #{bottleneck_forward.7}
  #allocation0 [shape = 'u32[]', space=smem, size = 0x4, offset = 0x4, fixed_abs, tag = 'smem constant byte address 0x4 - core index']
  #allocation1 [shape = 'u32[144,128]{1,0:T(1,128)}', space=vmem, size = 0x12000, scoped, tag = 'internal scratch']
  %s0 = inlined_call_operand.hbm [shape: bf16[512,256], index: 0, kind: input, shape index: {}]
  %s1 = inlined_call_operand.hbm [shape: f32[1,256], index: 1, kind: input, shape index: {}]
  %s2 = inlined_call_operand.hbm [shape: f32[1,256], index: 2, kind: input, shape index: {}]
  %s3 = inlined_call_operand.hbm [shape: bf16[512,256], index: 3, kind: input, shape index: {}]
  %s4 = inlined_call_operand.hbm [shape: f32[1,256], index: 4, kind: input, shape index: {}]
  %s5 = inlined_call_operand.hbm [shape: f32[1,256], index: 5, kind: input, shape index: {}]
  %s6 = inlined_call_operand.hbm [shape: f32[512,256], index: 6, kind: output, shape index: {}]
  %s7 = sld [smem:[#allocation0]]
  $region58: #{bottleneck_forward.7} parent=0
    _
  %s9 = ssub.s32 1, %s7
  %s10 = scalar_select 0, %s9, %s7
  $region1: #{bottleneck_forward.7} parent=0
    #allocation2 [shape = 'u8[262144]{0}', space=vmem, size = 0x40000, scoped, tag = 'input window, operand 0, single buffered']
    #allocation3 [shape = 's32[1]{0}', space=sflag, size = 0x4, scoped, tag = 'scoped memory for bottleneck_forward.7']
    #allocation4 [shape = 's32[1]{0}', space=sflag, size = 0x4, scoped, tag = 'scoped memory for bottleneck_forward.7']
    #allocation5 [shape = 'u8[1024]{0}', space=vmem, size = 0x400, scoped, tag = 'input window, operand 1, single buffered']
    #allocation6 [shape = 's32[1]{0}', space=sflag, size = 0x4, scoped, tag = 'scoped memory for bottleneck_forward.7']
    #allocation7 [shape = 'u8[1024]{0}', space=vmem, size = 0x400, scoped, tag = 'input window, operand 2, single buffered']
    #allocation8 [shape = 'u8[262144]{0}', space=vmem, size = 0x40000, scoped, tag = 'input window, operand 3, single buffered']
    #allocation9 [shape = 's32[1]{0}', space=sflag, size = 0x4, scoped, tag = 'scoped memory for bottleneck_forward.7']
    #allocation10 [shape = 'u8[1024]{0}', space=vmem, size = 0x400, scoped, tag = 'input window, operand 4, single buffered']
    #allocation11 [shape = 'u8[1024]{0}', space=vmem, size = 0x400, scoped, tag = 'input window, operand 5, single buffered']
    #allocation12 [shape = 's32[1]{0}', space=sflag, size = 0x4, scoped, tag = 'scoped memory for bottleneck_forward.7']
    #allocation13 [shape = 'u8[524288]{0}', space=vmem, size = 0x80000, scoped, tag = 'output window, operand 0, single buffered']
    %11 = vsyncpa [#allocation3], 0
    %12 = vsyncpa [#allocation6], 0
    %13 = vsyncpa [#allocation9], 0
    %14 = vsyncpa [#allocation12], 0
    %15 = vsyncpa [#allocation4], 0
    // Predicated region
    $region2: #{bottleneck_forward.7} parent=1 // pred_check
      _
    $region3: #{bottleneck_forward.7} parent=1 // pred_check_branch
      %17 = sbr.rel (0) target = $region5
    $region4: #{bottleneck_forward.7} parent=1 // pred_region
      %s19 = ssub.s32 8192, 8192
      %20 = vsyncadd [#allocation3], %s19
      %s21 = sshll.u32 [#allocation2], 4
      %s22 = int_to_ptr.vmem [resolvable:$true] %s21
      %27 = dma.hbm_to_vmem [thread:$0]  %s0, 8192, %s22, [#allocation3], 128, 128, 8
    $region5: #{bottleneck_forward.7} parent=1 // pred_fallthru
      _
    // Predicated region
    $region6: #{bottleneck_forward.7} parent=1 // pred_check
      _
    $region7: #{bottleneck_forward.7} parent=1 // pred_check_branch
      %29 = sbr.rel (0) target = $region9
    $region8: #{bottleneck_forward.7} parent=1 // pred_region
      %s31 = ssub.s32 32, 32
      %32 = vsyncadd [#allocation6], %s31
      %s34 = sshll.u32 [#allocation5], 4
      %s35 = int_to_ptr.vmem [resolvable:$true] %s34
      %37 = dma.hbm_to_vmem [thread:$0]  %s1, 32, %s35, [#allocation6]
    $region9: #{bottleneck_forward.7} parent=1 // pred_fallthru
      _
    // Predicated region
    $region10: #{bottleneck_forward.7} parent=1 // pred_check
      _
    $region11: #{bottleneck_forward.7} parent=1 // pred_check_branch
      %39 = sbr.rel (0) target = $region13
    $region12: #{bottleneck_forward.7} parent=1 // pred_region
      %s41 = ssub.s32 32, 32
      %42 = vsyncadd [#allocation6], %s41
      %s44 = sshll.u32 [#allocation7], 4
      %s45 = int_to_ptr.vmem [resolvable:$true] %s44
      %47 = dma.hbm_to_vmem [thread:$0]  %s2, 32, %s45, [#allocation6]
    $region13: #{bottleneck_forward.7} parent=1 // pred_fallthru
      _
    // Predicated region
    $region14: #{bottleneck_forward.7} parent=1 // pred_check
      _
    $region15: #{bottleneck_forward.7} parent=1 // pred_check_branch
      %49 = sbr.rel (0) target = $region17
    $region16: #{bottleneck_forward.7} parent=1 // pred_region
      %s51 = ssub.s32 8192, 8192
      %52 = vsyncadd [#allocation9], %s51
      %s53 = sshll.u32 [#allocation8], 4
      %s54 = int_to_ptr.vmem [resolvable:$true] %s53
      %59 = dma.hbm_to_vmem [thread:$0]  %s3, 8192, %s54, [#allocation9], 128, 128, 8
    $region17: #{bottleneck_forward.7} parent=1 // pred_fallthru
      _
    // Predicated region
    $region18: #{bottleneck_forward.7} parent=1 // pred_check
      _
    $region19: #{bottleneck_forward.7} parent=1 // pred_check_branch
      %61 = sbr.rel (0) target = $region21
    $region20: #{bottleneck_forward.7} parent=1 // pred_region
      %s63 = ssub.s32 32, 32
      %64 = vsyncadd [#allocation9], %s63
      %s66 = sshll.u32 [#allocation10], 4
      %s67 = int_to_ptr.vmem [resolvable:$true] %s66
      %69 = dma.hbm_to_vmem [thread:$0]  %s4, 32, %s67, [#allocation9]
    $region21: #{bottleneck_forward.7} parent=1 // pred_fallthru
      _
    // Predicated region
    $region22: #{bottleneck_forward.7} parent=1 // pred_check
      _
    $region23: #{bottleneck_forward.7} parent=1 // pred_check_branch
      %71 = sbr.rel (0) target = $region25
    $region24: #{bottleneck_forward.7} parent=1 // pred_region
      %s73 = ssub.s32 32, 32
      %74 = vsyncadd [#allocation12], %s73
      %s76 = sshll.u32 [#allocation11], 4
      %s77 = int_to_ptr.vmem [resolvable:$true] %s76
      %79 = dma.hbm_to_vmem [thread:$0]  %s5, 32, %s77, [#allocation12]
    $region25: #{bottleneck_forward.7} parent=1 // pred_fallthru
      _
    // Predicated region
    $region26: #{bottleneck_forward.7} parent=1 // pred_check
      _
    $region27: #{bottleneck_forward.7} parent=1 // pred_check_branch
      %81 = sbr.rel (0) target = $region29
    $region28: #{bottleneck_forward.7} parent=1 // pred_region
      %82 = dma.done [#allocation3], 8192
    $region29: #{bottleneck_forward.7} parent=1 // pred_fallthru
      _
    // Predicated region
    $region30: #{bottleneck_forward.7} parent=1 // pred_check
      _
    $region31: #{bottleneck_forward.7} parent=1 // pred_check_branch
      %84 = sbr.rel (0) target = $region33
    $region32: #{bottleneck_forward.7} parent=1 // pred_region
      %85 = dma.done [#allocation6], 32
    $region33: #{bottleneck_forward.7} parent=1 // pred_fallthru
      _
    // Predicated region
    $region34: #{bottleneck_forward.7} parent=1 // pred_check
      _
    $region35: #{bottleneck_forward.7} parent=1 // pred_check_branch
      %87 = sbr.rel (0) target = $region37
    $region36: #{bottleneck_forward.7} parent=1 // pred_region
      %88 = dma.done [#allocation6], 32
    $region37: #{bottleneck_forward.7} parent=1 // pred_fallthru
      _
    // Predicated region
    $region38: #{bottleneck_forward.7} parent=1 // pred_check
      _
    $region39: #{bottleneck_forward.7} parent=1 // pred_check_branch
      %90 = sbr.rel (0) target = $region41
    $region40: #{bottleneck_forward.7} parent=1 // pred_region
      %91 = dma.done [#allocation9], 8192
    $region41: #{bottleneck_forward.7} parent=1 // pred_fallthru
      _
    // Predicated region
    $region42: #{bottleneck_forward.7} parent=1 // pred_check
      _
    $region43: #{bottleneck_forward.7} parent=1 // pred_check_branch
      %93 = sbr.rel (0) target = $region45
    $region44: #{bottleneck_forward.7} parent=1 // pred_region
      %94 = dma.done [#allocation9], 32
    $region45: #{bottleneck_forward.7} parent=1 // pred_fallthru
      _
    // Predicated region
    $region46: #{bottleneck_forward.7} parent=1 // pred_check
      _
    $region47: #{bottleneck_forward.7} parent=1 // pred_check_branch
      %96 = sbr.rel (0) target = $region49
    $region48: #{bottleneck_forward.7} parent=1 // pred_region
      %97 = dma.done [#allocation12], 32
    $region49: #{bottleneck_forward.7} parent=1 // pred_fallthru
      _
    %v98 = vld [vmem:[#allocation2] sm:$0xff]
    %v99 = vld [vmem:[#allocation2 + $0x8] sm:$0xff]
    %v100 = vld [vmem:[#allocation2 + $0x10] sm:$0xff]
    %v101 = vld [vmem:[#allocation2 + $0x18] sm:$0xff]
    %v102 = vld [vmem:[#allocation2 + $0x20] sm:$0xff]
    %v103 = vld [vmem:[#allocation2 + $0x28] sm:$0xff]
    %v104 = vld [vmem:[#allocation2 + $0x30] sm:$0xff]
    %v105 = vld [vmem:[#allocation2 + $0x38] sm:$0xff]
    %v106 = vld [vmem:[#allocation2 + $0x40] sm:$0xff]
    %v107 = vld [vmem:[#allocation2 + $0x48] sm:$0xff]
    %v108 = vld [vmem:[#allocation2 + $0x50] sm:$0xff]
    %v109 = vld [vmem:[#allocation2 + $0x58] sm:$0xff]
    %v110 = vld [vmem:[#allocation2 + $0x60] sm:$0xff]
    %v111 = vld [vmem:[#allocation2 + $0x68] sm:$0xff]
    %v112 = vld [vmem:[#allocation2 + $0x70] sm:$0xff]
    %v113 = vld [vmem:[#allocation2 + $0x78] sm:$0xff]
    %v114 = vld [vmem:[#allocation2 + $0x80] sm:$0xff]
    %v115 = vld [vmem:[#allocation2 + $0x88] sm:$0xff]
    %v116 = vld [vmem:[#allocation2 + $0x90] sm:$0xff]
    %v117 = vld [vmem:[#allocation2 + $0x98] sm:$0xff]
    %v118 = vld [vmem:[#allocation2 + $0xa0] sm:$0xff]
    %v119 = vld [vmem:[#allocation2 + $0xa8] sm:$0xff]
    %v120 = vld [vmem:[#allocation2 + $0xb0] sm:$0xff]
    %v121 = vld [vmem:[#allocation2 + $0xb8] sm:$0xff]
    %v122 = vld [vmem:[#allocation2 + $0xc0] sm:$0xff]
    %v123 = vld [vmem:[#allocation2 + $0xc8] sm:$0xff]
    %v124 = vld [vmem:[#allocation2 + $0xd0] sm:$0xff]
    %v125 = vld [vmem:[#allocation2 + $0xd8] sm:$0xff]
    %v126 = vld [vmem:[#allocation2 + $0xe0] sm:$0xff]
    %v127 = vld [vmem:[#allocation2 + $0xe8] sm:$0xff]
    %v128 = vld [vmem:[#allocation2 + $0xf0] sm:$0xff]
    %v129 = vld [vmem:[#allocation2 + $0xf8] sm:$0xff]
    %v130 = vld [vmem:[#allocation2 + $0x100] sm:$0xff]
    %v131 = vld [vmem:[#allocation2 + $0x108] sm:$0xff]
    %v132 = vld [vmem:[#allocation2 + $0x110] sm:$0xff]
    %v133 = vld [vmem:[#allocation2 + $0x118] sm:$0xff]
    %v134 = vld [vmem:[#allocation2 + $0x120] sm:$0xff]
    %v135 = vld [vmem:[#allocation2 + $0x128] sm:$0xff]
    %v136 = vld [vmem:[#allocation2 + $0x130] sm:$0xff]
    %v137 = vld [vmem:[#allocation2 + $0x138] sm:$0xff]
    %v138 = vld [vmem:[#allocation2 + $0x140] sm:$0xff]
    %v139 = vld [vmem:[#allocation2 + $0x148] sm:$0xff]
    %v140 = vld [vmem:[#allocation2 + $0x150] sm:$0xff]
    %v141 = vld [vmem:[#allocation2 + $0x158] sm:$0xff]
    %v142 = vld [vmem:[#allocation2 + $0x160] sm:$0xff]
    %v143 = vld [vmem:[#allocation2 + $0x168] sm:$0xff]
    %v144 = vld [vmem:[#allocation2 + $0x170] sm:$0xff]
    %v145 = vld [vmem:[#allocation2 + $0x178] sm:$0xff]
    %v146 = vld [vmem:[#allocation2 + $0x180] sm:$0xff]
    %v147 = vld [vmem:[#allocation2 + $0x188] sm:$0xff]
    %v148 = vld [vmem:[#allocation2 + $0x190] sm:$0xff]
    %v149 = vld [vmem:[#allocation2 + $0x198] sm:$0xff]
    %v150 = vld [vmem:[#allocation2 + $0x1a0] sm:$0xff]
    %v151 = vld [vmem:[#allocation2 + $0x1a8] sm:$0xff]
    %v152 = vld [vmem:[#allocation2 + $0x1b0] sm:$0xff]
    %v153 = vld [vmem:[#allocation2 + $0x1b8] sm:$0xff]
    %v154 = vld [vmem:[#allocation2 + $0x1c0] sm:$0xff]
    %v155 = vld [vmem:[#allocation2 + $0x1c8] sm:$0xff]
    %v156 = vld [vmem:[#allocation2 + $0x1d0] sm:$0xff]
    %v157 = vld [vmem:[#allocation2 + $0x1d8] sm:$0xff]
    %v158 = vld [vmem:[#allocation2 + $0x1e0] sm:$0xff]
    %v159 = vld [vmem:[#allocation2 + $0x1e8] sm:$0xff]
    %v160 = vld [vmem:[#allocation2 + $0x1f0] sm:$0xff]
    %v161 = vld [vmem:[#allocation2 + $0x1f8] sm:$0xff]
    %v162 = vunpack.c.l.bf16 %v98
    %v163 = vunpack.c.h.bf16 %v98
    %v164 = vunpack.c.l.bf16 %v99
    %v165 = vunpack.c.h.bf16 %v99
    %v166 = vunpack.c.l.bf16 %v100
    %v167 = vunpack.c.h.bf16 %v100
    %v168 = vunpack.c.l.bf16 %v101
    %v169 = vunpack.c.h.bf16 %v101
    %v170 = vunpack.c.l.bf16 %v102
    %v171 = vunpack.c.h.bf16 %v102
    %v172 = vunpack.c.l.bf16 %v103
    %v173 = vunpack.c.h.bf16 %v103
    %v174 = vunpack.c.l.bf16 %v104
    %v175 = vunpack.c.h.bf16 %v104
    %v176 = vunpack.c.l.bf16 %v105
    %v177 = vunpack.c.h.bf16 %v105
    %v178 = vunpack.c.l.bf16 %v106
    %v179 = vunpack.c.h.bf16 %v106
    %v180 = vunpack.c.l.bf16 %v107
    %v181 = vunpack.c.h.bf16 %v107
    %v182 = vunpack.c.l.bf16 %v108
    %v183 = vunpack.c.h.bf16 %v108
    %v184 = vunpack.c.l.bf16 %v109
    %v185 = vunpack.c.h.bf16 %v109
    %v186 = vunpack.c.l.bf16 %v110
    %v187 = vunpack.c.h.bf16 %v110
    %v188 = vunpack.c.l.bf16 %v111
    %v189 = vunpack.c.h.bf16 %v111
    %v190 = vunpack.c.l.bf16 %v112
    %v191 = vunpack.c.h.bf16 %v112
    %v192 = vunpack.c.l.bf16 %v113
    %v193 = vunpack.c.h.bf16 %v113
    %v194 = vunpack.c.l.bf16 %v114
    %v195 = vunpack.c.h.bf16 %v114
    %v196 = vunpack.c.l.bf16 %v115
    %v197 = vunpack.c.h.bf16 %v115
    %v198 = vunpack.c.l.bf16 %v116
    %v199 = vunpack.c.h.bf16 %v116
    %v200 = vunpack.c.l.bf16 %v117
    %v201 = vunpack.c.h.bf16 %v117
    %v202 = vunpack.c.l.bf16 %v118
    %v203 = vunpack.c.h.bf16 %v118
    %v204 = vunpack.c.l.bf16 %v119
    %v205 = vunpack.c.h.bf16 %v119
    %v206 = vunpack.c.l.bf16 %v120
    %v207 = vunpack.c.h.bf16 %v120
    %v208 = vunpack.c.l.bf16 %v121
    %v209 = vunpack.c.h.bf16 %v121
    %v210 = vunpack.c.l.bf16 %v122
    %v211 = vunpack.c.h.bf16 %v122
    %v212 = vunpack.c.l.bf16 %v123
    %v213 = vunpack.c.h.bf16 %v123
    %v214 = vunpack.c.l.bf16 %v124
    %v215 = vunpack.c.h.bf16 %v124
    %v216 = vunpack.c.l.bf16 %v125
    %v217 = vunpack.c.h.bf16 %v125
    %v218 = vunpack.c.l.bf16 %v126
    %v219 = vunpack.c.h.bf16 %v126
    %v220 = vunpack.c.l.bf16 %v127
    %v221 = vunpack.c.h.bf16 %v127
    %v222 = vunpack.c.l.bf16 %v128
    %v223 = vunpack.c.h.bf16 %v128
    %v224 = vunpack.c.l.bf16 %v129
    %v225 = vunpack.c.h.bf16 %v129
    %v226 = vunpack.c.l.bf16 %v130
    %v227 = vunpack.c.h.bf16 %v130
    %v228 = vunpack.c.l.bf16 %v131
    %v229 = vunpack.c.h.bf16 %v131
    %v230 = vunpack.c.l.bf16 %v132
    %v231 = vunpack.c.h.bf16 %v132
    %v232 = vunpack.c.l.bf16 %v133
    %v233 = vunpack.c.h.bf16 %v133
    %v234 = vunpack.c.l.bf16 %v134
    %v235 = vunpack.c.h.bf16 %v134
    %v236 = vunpack.c.l.bf16 %v135
    %v237 = vunpack.c.h.bf16 %v135
    %v238 = vunpack.c.l.bf16 %v136
    %v239 = vunpack.c.h.bf16 %v136
    %v240 = vunpack.c.l.bf16 %v137
    %v241 = vunpack.c.h.bf16 %v137
    %v242 = vunpack.c.l.bf16 %v138
    %v243 = vunpack.c.h.bf16 %v138
    %v244 = vunpack.c.l.bf16 %v139
    %v245 = vunpack.c.h.bf16 %v139
    %v246 = vunpack.c.l.bf16 %v140
    %v247 = vunpack.c.h.bf16 %v140
    %v248 = vunpack.c.l.bf16 %v141
    %v249 = vunpack.c.h.bf16 %v141
    %v250 = vunpack.c.l.bf16 %v142
    %v251 = vunpack.c.h.bf16 %v142
    %v252 = vunpack.c.l.bf16 %v143
    %v253 = vunpack.c.h.bf16 %v143
    %v254 = vunpack.c.l.bf16 %v144
    %v255 = vunpack.c.h.bf16 %v144
    %v256 = vunpack.c.l.bf16 %v145
    %v257 = vunpack.c.h.bf16 %v145
    %v258 = vunpack.c.l.bf16 %v146
    %v259 = vunpack.c.h.bf16 %v146
    %v260 = vunpack.c.l.bf16 %v147
    %v261 = vunpack.c.h.bf16 %v147
    %v262 = vunpack.c.l.bf16 %v148
    %v263 = vunpack.c.h.bf16 %v148
    %v264 = vunpack.c.l.bf16 %v149
    %v265 = vunpack.c.h.bf16 %v149
    %v266 = vunpack.c.l.bf16 %v150
    %v267 = vunpack.c.h.bf16 %v150
    %v268 = vunpack.c.l.bf16 %v151
    %v269 = vunpack.c.h.bf16 %v151
    %v270 = vunpack.c.l.bf16 %v152
    %v271 = vunpack.c.h.bf16 %v152
    %v272 = vunpack.c.l.bf16 %v153
    %v273 = vunpack.c.h.bf16 %v153
    %v274 = vunpack.c.l.bf16 %v154
    %v275 = vunpack.c.h.bf16 %v154
    %v276 = vunpack.c.l.bf16 %v155
    %v277 = vunpack.c.h.bf16 %v155
    %v278 = vunpack.c.l.bf16 %v156
    %v279 = vunpack.c.h.bf16 %v156
    %v280 = vunpack.c.l.bf16 %v157
    %v281 = vunpack.c.h.bf16 %v157
    %v282 = vunpack.c.l.bf16 %v158
    %v283 = vunpack.c.h.bf16 %v158
    %v284 = vunpack.c.l.bf16 %v159
    %v285 = vunpack.c.h.bf16 %v159
    %v286 = vunpack.c.l.bf16 %v160
    %v287 = vunpack.c.h.bf16 %v160
    %v288 = vunpack.c.l.bf16 %v161
    %v289 = vunpack.c.h.bf16 %v161
    %v290 = vld [vmem:[#allocation5] sm:$0x3]
    %v292 = vlaneseq
    %v293 = vshrl.u32 %v292, 7
    %v294 = vsub.s32 0, %v293
    %v295 = vrot.slane %v290, %v294
    %v296 = vlaneseq
    %v297 = vshrl.u32 %v296, 7
    %v298 = vsub.s32 1, %v297
    %v299 = vrot.slane %v290, %v298
    %v302 = vmul.f32 %v162, %v295
    %v303 = vmul.f32 %v163, %v299
    %v304 = vmul.f32 %v164, %v295
    %v305 = vmul.f32 %v165, %v299
    %v306 = vmul.f32 %v166, %v295
    %v307 = vmul.f32 %v167, %v299
    %v308 = vmul.f32 %v168, %v295
    %v309 = vmul.f32 %v169, %v299
    %v310 = vmul.f32 %v170, %v295
    %v311 = vmul.f32 %v171, %v299
    %v312 = vmul.f32 %v172, %v295
    %v313 = vmul.f32 %v173, %v299
    %v314 = vmul.f32 %v174, %v295
    %v315 = vmul.f32 %v175, %v299
    %v316 = vmul.f32 %v176, %v295
    %v317 = vmul.f32 %v177, %v299
    %v318 = vmul.f32 %v178, %v295
    %v319 = vmul.f32 %v179, %v299
    %v320 = vmul.f32 %v180, %v295
    %v321 = vmul.f32 %v181, %v299
    %v322 = vmul.f32 %v182, %v295
    %v323 = vmul.f32 %v183, %v299
    %v324 = vmul.f32 %v184, %v295
    %v325 = vmul.f32 %v185, %v299
    %v326 = vmul.f32 %v186, %v295
    %v327 = vmul.f32 %v187, %v299
    %v328 = vmul.f32 %v188, %v295
    %v329 = vmul.f32 %v189, %v299
    %v330 = vmul.f32 %v190, %v295
    %v331 = vmul.f32 %v191, %v299
    %v332 = vmul.f32 %v192, %v295
    %v333 = vmul.f32 %v193, %v299
    %v334 = vmul.f32 %v194, %v295
    %v335 = vmul.f32 %v195, %v299
    %v336 = vmul.f32 %v196, %v295
    %v337 = vmul.f32 %v197, %v299
    %v338 = vmul.f32 %v198, %v295
    %v339 = vmul.f32 %v199, %v299
    %v340 = vmul.f32 %v200, %v295
    %v341 = vmul.f32 %v201, %v299
    %v342 = vmul.f32 %v202, %v295
    %v343 = vmul.f32 %v203, %v299
    %v344 = vmul.f32 %v204, %v295
    %v345 = vmul.f32 %v205, %v299
    %v346 = vmul.f32 %v206, %v295
    %v347 = vmul.f32 %v207, %v299
    %v348 = vmul.f32 %v208, %v295
    %v349 = vmul.f32 %v209, %v299
    %v350 = vmul.f32 %v210, %v295
    %v351 = vmul.f32 %v211, %v299
    %v352 = vmul.f32 %v212, %v295
    %v353 = vmul.f32 %v213, %v299
    %v354 = vmul.f32 %v214, %v295
    %v355 = vmul.f32 %v215, %v299
    %v356 = vmul.f32 %v216, %v295
    %v357 = vmul.f32 %v217, %v299
    %v358 = vmul.f32 %v218, %v295
    %v359 = vmul.f32 %v219, %v299
    %v360 = vmul.f32 %v220, %v295
    %v361 = vmul.f32 %v221, %v299
    %v362 = vmul.f32 %v222, %v295
    %v363 = vmul.f32 %v223, %v299
    %v364 = vmul.f32 %v224, %v295
    %v365 = vmul.f32 %v225, %v299
    %v366 = vmul.f32 %v226, %v295
    %v367 = vmul.f32 %v227, %v299
    %v368 = vmul.f32 %v228, %v295
    %v369 = vmul.f32 %v229, %v299
    %v370 = vmul.f32 %v230, %v295
    %v371 = vmul.f32 %v231, %v299
    %v372 = vmul.f32 %v232, %v295
    %v373 = vmul.f32 %v233, %v299
    %v374 = vmul.f32 %v234, %v295
    %v375 = vmul.f32 %v235, %v299
    %v376 = vmul.f32 %v236, %v295
    %v377 = vmul.f32 %v237, %v299
    %v378 = vmul.f32 %v238, %v295
    %v379 = vmul.f32 %v239, %v299
    %v380 = vmul.f32 %v240, %v295
    %v381 = vmul.f32 %v241, %v299
    %v382 = vmul.f32 %v242, %v295
    %v383 = vmul.f32 %v243, %v299
    %v384 = vmul.f32 %v244, %v295
    %v385 = vmul.f32 %v245, %v299
    %v386 = vmul.f32 %v246, %v295
    %v387 = vmul.f32 %v247, %v299
    %v388 = vmul.f32 %v248, %v295
    %v389 = vmul.f32 %v249, %v299
    %v390 = vmul.f32 %v250, %v295
    %v391 = vmul.f32 %v251, %v299
    %v392 = vmul.f32 %v252, %v295
    %v393 = vmul.f32 %v253, %v299
    %v394 = vmul.f32 %v254, %v295
    %v395 = vmul.f32 %v255, %v299
    %v396 = vmul.f32 %v256, %v295
    %v397 = vmul.f32 %v257, %v299
    %v398 = vmul.f32 %v258, %v295
    %v399 = vmul.f32 %v259, %v299
    %v400 = vmul.f32 %v260, %v295
    %v401 = vmul.f32 %v261, %v299
    %v402 = vmul.f32 %v262, %v295
    %v403 = vmul.f32 %v263, %v299
    %v404 = vmul.f32 %v264, %v295
    %v405 = vmul.f32 %v265, %v299
    %v406 = vmul.f32 %v266, %v295
    %v407 = vmul.f32 %v267, %v299
    %v408 = vmul.f32 %v268, %v295
    %v409 = vmul.f32 %v269, %v299
    %v410 = vmul.f32 %v270, %v295
    %v411 = vmul.f32 %v271, %v299
    %v412 = vmul.f32 %v272, %v295
    %v413 = vmul.f32 %v273, %v299
    %v414 = vmul.f32 %v274, %v295
    %v415 = vmul.f32 %v275, %v299
    %v416 = vmul.f32 %v276, %v295
    %v417 = vmul.f32 %v277, %v299
    %v418 = vmul.f32 %v278, %v295
    %v419 = vmul.f32 %v279, %v299
    %v420 = vmul.f32 %v280, %v295
    %v421 = vmul.f32 %v281, %v299
    %v422 = vmul.f32 %v282, %v295
    %v423 = vmul.f32 %v283, %v299
    %v424 = vmul.f32 %v284, %v295
    %v425 = vmul.f32 %v285, %v299
    %v426 = vmul.f32 %v286, %v295
    %v427 = vmul.f32 %v287, %v299
    %v428 = vmul.f32 %v288, %v295
    %v429 = vmul.f32 %v289, %v299
    %v430 = vld [vmem:[#allocation7] sm:$0x3]
    %v432 = vlaneseq
    %v433 = vshrl.u32 %v432, 7
    %v434 = vsub.s32 0, %v433
    %v435 = vrot.slane %v430, %v434
    %v436 = vlaneseq
    %v437 = vshrl.u32 %v436, 7
    %v438 = vsub.s32 1, %v437
    %v439 = vrot.slane %v430, %v438
    %v442 = vadd.f32 %v302, %v435
    %v443 = vadd.f32 %v303, %v439
    %v444 = vadd.f32 %v304, %v435
    %v445 = vadd.f32 %v305, %v439
    %v446 = vadd.f32 %v306, %v435
    %v447 = vadd.f32 %v307, %v439
    %v448 = vadd.f32 %v308, %v435
    %v449 = vadd.f32 %v309, %v439
    %v450 = vadd.f32 %v310, %v435
    %v451 = vadd.f32 %v311, %v439
    %v452 = vadd.f32 %v312, %v435
    %v453 = vadd.f32 %v313, %v439
    %v454 = vadd.f32 %v314, %v435
    %v455 = vadd.f32 %v315, %v439
    %v456 = vadd.f32 %v316, %v435
    %v457 = vadd.f32 %v317, %v439
    %v458 = vadd.f32 %v318, %v435
    %v459 = vadd.f32 %v319, %v439
    %v460 = vadd.f32 %v320, %v435
    %v461 = vadd.f32 %v321, %v439
    %v462 = vadd.f32 %v322, %v435
    %v463 = vadd.f32 %v323, %v439
    %v464 = vadd.f32 %v324, %v435
    %v465 = vadd.f32 %v325, %v439
    %v466 = vadd.f32 %v326, %v435
    %v467 = vadd.f32 %v327, %v439
    %v468 = vadd.f32 %v328, %v435
    %v469 = vadd.f32 %v329, %v439
    %v470 = vadd.f32 %v330, %v435
    %v471 = vadd.f32 %v331, %v439
    %v472 = vadd.f32 %v332, %v435
    %v473 = vadd.f32 %v333, %v439
    %v474 = vadd.f32 %v334, %v435
    %v475 = vadd.f32 %v335, %v439
    %v476 = vadd.f32 %v336, %v435
    %v477 = vadd.f32 %v337, %v439
    %v478 = vadd.f32 %v338, %v435
    %v479 = vadd.f32 %v339, %v439
    %v480 = vadd.f32 %v340, %v435
    %v481 = vadd.f32 %v341, %v439
    %v482 = vadd.f32 %v342, %v435
    %v483 = vadd.f32 %v343, %v439
    %v484 = vadd.f32 %v344, %v435
    %v485 = vadd.f32 %v345, %v439
    %v486 = vadd.f32 %v346, %v435
    %v487 = vadd.f32 %v347, %v439
    %v488 = vadd.f32 %v348, %v435
    %v489 = vadd.f32 %v349, %v439
    %v490 = vadd.f32 %v350, %v435
    %v491 = vadd.f32 %v351, %v439
    %v492 = vadd.f32 %v352, %v435
    %v493 = vadd.f32 %v353, %v439
    %v494 = vadd.f32 %v354, %v435
    %v495 = vadd.f32 %v355, %v439
    %v496 = vadd.f32 %v356, %v435
    %v497 = vadd.f32 %v357, %v439
    %v498 = vadd.f32 %v358, %v435
    %v499 = vadd.f32 %v359, %v439
    %v500 = vadd.f32 %v360, %v435
    %v501 = vadd.f32 %v361, %v439
    %v502 = vadd.f32 %v362, %v435
    %v503 = vadd.f32 %v363, %v439
    %v504 = vadd.f32 %v364, %v435
    %v505 = vadd.f32 %v365, %v439
    %v506 = vadd.f32 %v366, %v435
    %v507 = vadd.f32 %v367, %v439
    %v508 = vadd.f32 %v368, %v435
    %v509 = vadd.f32 %v369, %v439
    %v510 = vadd.f32 %v370, %v435
    %v511 = vadd.f32 %v371, %v439
    %v512 = vadd.f32 %v372, %v435
    %v513 = vadd.f32 %v373, %v439
    %v514 = vadd.f32 %v374, %v435
    %v515 = vadd.f32 %v375, %v439
    %v516 = vadd.f32 %v376, %v435
    %v517 = vadd.f32 %v377, %v439
    %v518 = vadd.f32 %v378, %v435
    %v519 = vadd.f32 %v379, %v439
    %v520 = vadd.f32 %v380, %v435
    %v521 = vadd.f32 %v381, %v439
    %v522 = vadd.f32 %v382, %v435
    %v523 = vadd.f32 %v383, %v439
    %v524 = vadd.f32 %v384, %v435
    %v525 = vadd.f32 %v385, %v439
    %v526 = vadd.f32 %v386, %v435
    %v527 = vadd.f32 %v387, %v439
    %v528 = vadd.f32 %v388, %v435
    %v529 = vadd.f32 %v389, %v439
    %v530 = vadd.f32 %v390, %v435
    %v531 = vadd.f32 %v391, %v439
    %v532 = vadd.f32 %v392, %v435
    %v533 = vadd.f32 %v393, %v439
    %v534 = vadd.f32 %v394, %v435
    %v535 = vadd.f32 %v395, %v439
    %v536 = vadd.f32 %v396, %v435
    %v537 = vadd.f32 %v397, %v439
    %v538 = vadd.f32 %v398, %v435
    %v539 = vadd.f32 %v399, %v439
    %v540 = vadd.f32 %v400, %v435
    %v541 = vadd.f32 %v401, %v439
    %v542 = vadd.f32 %v402, %v435
    %v543 = vadd.f32 %v403, %v439
    %v544 = vadd.f32 %v404, %v435
    %v545 = vadd.f32 %v405, %v439
    %v546 = vadd.f32 %v406, %v435
    %v547 = vadd.f32 %v407, %v439
    %v548 = vadd.f32 %v408, %v435
    %v549 = vadd.f32 %v409, %v439
    %v550 = vadd.f32 %v410, %v435
    %v551 = vadd.f32 %v411, %v439
    %v552 = vadd.f32 %v412, %v435
    %v553 = vadd.f32 %v413, %v439
    %v554 = vadd.f32 %v414, %v435
    %v555 = vadd.f32 %v415, %v439
    %v556 = vadd.f32 %v416, %v435
    %v557 = vadd.f32 %v417, %v439
    %v558 = vadd.f32 %v418, %v435
    %v559 = vadd.f32 %v419, %v439
    %v560 = vadd.f32 %v420, %v435
    %v561 = vadd.f32 %v421, %v439
    %v562 = vadd.f32 %v422, %v435
    %v563 = vadd.f32 %v423, %v439
    %v564 = vadd.f32 %v424, %v435
    %v565 = vadd.f32 %v425, %v439
    %v566 = vadd.f32 %v426, %v435
    %v567 = vadd.f32 %v427, %v439
    %v568 = vadd.f32 %v428, %v435
    %v569 = vadd.f32 %v429, %v439
    %v570 = vld [vmem:[#allocation8] sm:$0xff]
    %v571 = vld [vmem:[#allocation8 + $0x8] sm:$0xff]
    %v572 = vld [vmem:[#allocation8 + $0x10] sm:$0xff]
    %v573 = vld [vmem:[#allocation8 + $0x18] sm:$0xff]
    %v574 = vld [vmem:[#allocation8 + $0x20] sm:$0xff]
    %v575 = vld [vmem:[#allocation8 + $0x28] sm:$0xff]
    %v576 = vld [vmem:[#allocation8 + $0x30] sm:$0xff]
    %v577 = vld [vmem:[#allocation8 + $0x38] sm:$0xff]
    %v578 = vld [vmem:[#allocation8 + $0x40] sm:$0xff]
    %v579 = vld [vmem:[#allocation8 + $0x48] sm:$0xff]
    %v580 = vld [vmem:[#allocation8 + $0x50] sm:$0xff]
    %v581 = vld [vmem:[#allocation8 + $0x58] sm:$0xff]
    %v582 = vld [vmem:[#allocation8 + $0x60] sm:$0xff]
    %v583 = vld [vmem:[#allocation8 + $0x68] sm:$0xff]
    %v584 = vld [vmem:[#allocation8 + $0x70] sm:$0xff]
    %v585 = vld [vmem:[#allocation8 + $0x78] sm:$0xff]
    %v586 = vld [vmem:[#allocation8 + $0x80] sm:$0xff]
    %v587 = vld [vmem:[#allocation8 + $0x88] sm:$0xff]
    %v588 = vld [vmem:[#allocation8 + $0x90] sm:$0xff]
    %v589 = vld [vmem:[#allocation8 + $0x98] sm:$0xff]
    %v590 = vld [vmem:[#allocation8 + $0xa0] sm:$0xff]
    %v591 = vld [vmem:[#allocation8 + $0xa8] sm:$0xff]
    %v592 = vld [vmem:[#allocation8 + $0xb0] sm:$0xff]
    %v593 = vld [vmem:[#allocation8 + $0xb8] sm:$0xff]
    %v594 = vld [vmem:[#allocation8 + $0xc0] sm:$0xff]
    %v595 = vld [vmem:[#allocation8 + $0xc8] sm:$0xff]
    %v596 = vld [vmem:[#allocation8 + $0xd0] sm:$0xff]
    %v597 = vld [vmem:[#allocation8 + $0xd8] sm:$0xff]
    %v598 = vld [vmem:[#allocation8 + $0xe0] sm:$0xff]
    %v599 = vld [vmem:[#allocation8 + $0xe8] sm:$0xff]
    %v600 = vld [vmem:[#allocation8 + $0xf0] sm:$0xff]
    %v601 = vld [vmem:[#allocation8 + $0xf8] sm:$0xff]
    %v602 = vld [vmem:[#allocation8 + $0x100] sm:$0xff]
    %v603 = vld [vmem:[#allocation8 + $0x108] sm:$0xff]
    %v604 = vld [vmem:[#allocation8 + $0x110] sm:$0xff]
    %v605 = vld [vmem:[#allocation8 + $0x118] sm:$0xff]
    %v606 = vld [vmem:[#allocation8 + $0x120] sm:$0xff]
    %v607 = vld [vmem:[#allocation8 + $0x128] sm:$0xff]
    %v608 = vld [vmem:[#allocation8 + $0x130] sm:$0xff]
    %v609 = vld [vmem:[#allocation8 + $0x138] sm:$0xff]
    %v610 = vld [vmem:[#allocation8 + $0x140] sm:$0xff]
    %v611 = vld [vmem:[#allocation8 + $0x148] sm:$0xff]
    %v612 = vld [vmem:[#allocation8 + $0x150] sm:$0xff]
    %v613 = vld [vmem:[#allocation8 + $0x158] sm:$0xff]
    %v614 = vld [vmem:[#allocation8 + $0x160] sm:$0xff]
    %v615 = vld [vmem:[#allocation8 + $0x168] sm:$0xff]
    %v616 = vld [vmem:[#allocation8 + $0x170] sm:$0xff]
    %v617 = vld [vmem:[#allocation8 + $0x178] sm:$0xff]
    %v618 = vld [vmem:[#allocation8 + $0x180] sm:$0xff]
    %v619 = vld [vmem:[#allocation8 + $0x188] sm:$0xff]
    %v620 = vld [vmem:[#allocation8 + $0x190] sm:$0xff]
    %v621 = vld [vmem:[#allocation8 + $0x198] sm:$0xff]
    %v622 = vld [vmem:[#allocation8 + $0x1a0] sm:$0xff]
    %v623 = vld [vmem:[#allocation8 + $0x1a8] sm:$0xff]
    %v624 = vld [vmem:[#allocation8 + $0x1b0] sm:$0xff]
    %v625 = vld [vmem:[#allocation8 + $0x1b8] sm:$0xff]
    %v626 = vld [vmem:[#allocation8 + $0x1c0] sm:$0xff]
    %v627 = vld [vmem:[#allocation8 + $0x1c8] sm:$0xff]
    %v628 = vld [vmem:[#allocation8 + $0x1d0] sm:$0xff]
    %v629 = vld [vmem:[#allocation8 + $0x1d8] sm:$0xff]
    %v630 = vld [vmem:[#allocation8 + $0x1e0] sm:$0xff]
    %v631 = vld [vmem:[#allocation8 + $0x1e8] sm:$0xff]
    %v632 = vld [vmem:[#allocation8 + $0x1f0] sm:$0xff]
    %v633 = vld [vmem:[#allocation8 + $0x1f8] sm:$0xff]
    %v634 = vunpack.c.l.bf16 %v570
    %v635 = vunpack.c.h.bf16 %v570
    %v636 = vunpack.c.l.bf16 %v571
    %v637 = vunpack.c.h.bf16 %v571
    %v638 = vunpack.c.l.bf16 %v572
    %v639 = vunpack.c.h.bf16 %v572
    %v640 = vunpack.c.l.bf16 %v573
    %v641 = vunpack.c.h.bf16 %v573
    %v642 = vunpack.c.l.bf16 %v574
    %v643 = vunpack.c.h.bf16 %v574
    %v644 = vunpack.c.l.bf16 %v575
    %v645 = vunpack.c.h.bf16 %v575
    %v646 = vunpack.c.l.bf16 %v576
    %v647 = vunpack.c.h.bf16 %v576
    %v648 = vunpack.c.l.bf16 %v577
    %v649 = vunpack.c.h.bf16 %v577
    %v650 = vunpack.c.l.bf16 %v578
    %v651 = vunpack.c.h.bf16 %v578
    %v652 = vunpack.c.l.bf16 %v579
    %v653 = vunpack.c.h.bf16 %v579
    %v654 = vunpack.c.l.bf16 %v580
    %v655 = vunpack.c.h.bf16 %v580
    %v656 = vunpack.c.l.bf16 %v581
    %v657 = vunpack.c.h.bf16 %v581
    %v658 = vunpack.c.l.bf16 %v582
    %v659 = vunpack.c.h.bf16 %v582
    %v660 = vunpack.c.l.bf16 %v583
    %v661 = vunpack.c.h.bf16 %v583
    %v662 = vunpack.c.l.bf16 %v584
    %v663 = vunpack.c.h.bf16 %v584
    %v664 = vunpack.c.l.bf16 %v585
    %v665 = vunpack.c.h.bf16 %v585
    %v666 = vunpack.c.l.bf16 %v586
    %v667 = vunpack.c.h.bf16 %v586
    %v668 = vunpack.c.l.bf16 %v587
    %v669 = vunpack.c.h.bf16 %v587
    %v670 = vunpack.c.l.bf16 %v588
    %v671 = vunpack.c.h.bf16 %v588
    %v672 = vunpack.c.l.bf16 %v589
    %v673 = vunpack.c.h.bf16 %v589
    %v674 = vunpack.c.l.bf16 %v590
    %v675 = vunpack.c.h.bf16 %v590
    %v676 = vunpack.c.l.bf16 %v591
    %v677 = vunpack.c.h.bf16 %v591
    %v678 = vunpack.c.l.bf16 %v592
    %v679 = vunpack.c.h.bf16 %v592
    %v680 = vunpack.c.l.bf16 %v593
    %v681 = vunpack.c.h.bf16 %v593
    %v682 = vunpack.c.l.bf16 %v594
    %v683 = vunpack.c.h.bf16 %v594
    %v684 = vunpack.c.l.bf16 %v595
    %v685 = vunpack.c.h.bf16 %v595
    %v686 = vunpack.c.l.bf16 %v596
    %v687 = vunpack.c.h.bf16 %v596
    %v688 = vunpack.c.l.bf16 %v597
    %v689 = vunpack.c.h.bf16 %v597
    %v690 = vunpack.c.l.bf16 %v598
    %v691 = vunpack.c.h.bf16 %v598
    %v692 = vunpack.c.l.bf16 %v599
    %v693 = vunpack.c.h.bf16 %v599
    %v694 = vunpack.c.l.bf16 %v600
    %v695 = vunpack.c.h.bf16 %v600
    %v696 = vunpack.c.l.bf16 %v601
    %v697 = vunpack.c.h.bf16 %v601
    %v698 = vunpack.c.l.bf16 %v602
    %v699 = vunpack.c.h.bf16 %v602
    %v700 = vunpack.c.l.bf16 %v603
    %v701 = vunpack.c.h.bf16 %v603
    %v702 = vunpack.c.l.bf16 %v604
    %v703 = vunpack.c.h.bf16 %v604
    %v704 = vunpack.c.l.bf16 %v605
    %v705 = vunpack.c.h.bf16 %v605
    %v706 = vunpack.c.l.bf16 %v606
    %v707 = vunpack.c.h.bf16 %v606
    %v708 = vunpack.c.l.bf16 %v607
    %v709 = vunpack.c.h.bf16 %v607
    %v710 = vunpack.c.l.bf16 %v608
    %v711 = vunpack.c.h.bf16 %v608
    %v712 = vunpack.c.l.bf16 %v609
    %v713 = vunpack.c.h.bf16 %v609
    %v714 = vunpack.c.l.bf16 %v610
    %v715 = vunpack.c.h.bf16 %v610
    %v716 = vunpack.c.l.bf16 %v611
    %v717 = vunpack.c.h.bf16 %v611
    %v718 = vunpack.c.l.bf16 %v612
    %v719 = vunpack.c.h.bf16 %v612
    %v720 = vunpack.c.l.bf16 %v613
    %v721 = vunpack.c.h.bf16 %v613
    %v722 = vunpack.c.l.bf16 %v614
    %v723 = vunpack.c.h.bf16 %v614
    %v724 = vunpack.c.l.bf16 %v615
    %v725 = vunpack.c.h.bf16 %v615
    %v726 = vunpack.c.l.bf16 %v616
    %v727 = vunpack.c.h.bf16 %v616
    %v728 = vunpack.c.l.bf16 %v617
    %v729 = vunpack.c.h.bf16 %v617
    %v730 = vunpack.c.l.bf16 %v618
    %v731 = vunpack.c.h.bf16 %v618
    %v732 = vunpack.c.l.bf16 %v619
    %v733 = vunpack.c.h.bf16 %v619
    %v734 = vunpack.c.l.bf16 %v620
    %v735 = vunpack.c.h.bf16 %v620
    %v736 = vunpack.c.l.bf16 %v621
    %v737 = vunpack.c.h.bf16 %v621
    %v738 = vunpack.c.l.bf16 %v622
    %v739 = vunpack.c.h.bf16 %v622
    %v740 = vunpack.c.l.bf16 %v623
    %v741 = vunpack.c.h.bf16 %v623
    %v742 = vunpack.c.l.bf16 %v624
    %v743 = vunpack.c.h.bf16 %v624
    %v744 = vunpack.c.l.bf16 %v625
    %v745 = vunpack.c.h.bf16 %v625
    %v746 = vunpack.c.l.bf16 %v626
    %v747 = vunpack.c.h.bf16 %v626
    %v748 = vunpack.c.l.bf16 %v627
    %v749 = vunpack.c.h.bf16 %v627
    %v750 = vunpack.c.l.bf16 %v628
    %v751 = vunpack.c.h.bf16 %v628
    %v752 = vunpack.c.l.bf16 %v629
    %v753 = vunpack.c.h.bf16 %v629
    %v754 = vunpack.c.l.bf16 %v630
    %v755 = vunpack.c.h.bf16 %v630
    %v756 = vunpack.c.l.bf16 %v631
    %v757 = vunpack.c.h.bf16 %v631
    %v758 = vunpack.c.l.bf16 %v632
    %v759 = vunpack.c.h.bf16 %v632
    %v760 = vunpack.c.l.bf16 %v633
    %v761 = vunpack.c.h.bf16 %v633
    %v762 = vld [vmem:[#allocation10] sm:$0x3]
    %v764 = vlaneseq
    %v765 = vshrl.u32 %v764, 7
    %v766 = vsub.s32 0, %v765
    %v767 = vrot.slane %v762, %v766
    %v768 = vlaneseq
    %v769 = vshrl.u32 %v768, 7
    %v770 = vsub.s32 1, %v769
    %v771 = vrot.slane %v762, %v770
    %v774 = vmul.f32 %v634, %v767
    %v775 = vmul.f32 %v635, %v771
    %v776 = vmul.f32 %v636, %v767
    %v777 = vmul.f32 %v637, %v771
    %v778 = vmul.f32 %v638, %v767
    %v779 = vmul.f32 %v639, %v771
    %v780 = vmul.f32 %v640, %v767
    %v781 = vmul.f32 %v641, %v771
    %v782 = vmul.f32 %v642, %v767
    %v783 = vmul.f32 %v643, %v771
    %v784 = vmul.f32 %v644, %v767
    %v785 = vmul.f32 %v645, %v771
    %v786 = vmul.f32 %v646, %v767
    %v787 = vmul.f32 %v647, %v771
    %v788 = vmul.f32 %v648, %v767
    %v789 = vmul.f32 %v649, %v771
    %v790 = vmul.f32 %v650, %v767
    %v791 = vmul.f32 %v651, %v771
    %v792 = vmul.f32 %v652, %v767
    %v793 = vmul.f32 %v653, %v771
    %v794 = vmul.f32 %v654, %v767
    %v795 = vmul.f32 %v655, %v771
    %v796 = vmul.f32 %v656, %v767
    %v797 = vmul.f32 %v657, %v771
    %v798 = vmul.f32 %v658, %v767
    %v799 = vmul.f32 %v659, %v771
    %v800 = vmul.f32 %v660, %v767
    %v801 = vmul.f32 %v661, %v771
    %v802 = vmul.f32 %v662, %v767
    %v803 = vmul.f32 %v663, %v771
    %v804 = vmul.f32 %v664, %v767
    %v805 = vmul.f32 %v665, %v771
    %v806 = vmul.f32 %v666, %v767
    %v807 = vmul.f32 %v667, %v771
    %v808 = vmul.f32 %v668, %v767
    %v809 = vmul.f32 %v669, %v771
    %v810 = vmul.f32 %v670, %v767
    %v811 = vmul.f32 %v671, %v771
    %v812 = vmul.f32 %v672, %v767
    %v813 = vmul.f32 %v673, %v771
    %v814 = vmul.f32 %v674, %v767
    %v815 = vmul.f32 %v675, %v771
    %v816 = vmul.f32 %v676, %v767
    %v817 = vmul.f32 %v677, %v771
    %v818 = vmul.f32 %v678, %v767
    %v819 = vmul.f32 %v679, %v771
    %v820 = vmul.f32 %v680, %v767
    %v821 = vmul.f32 %v681, %v771
    %v822 = vmul.f32 %v682, %v767
    %v823 = vmul.f32 %v683, %v771
    %v824 = vmul.f32 %v684, %v767
    %v825 = vmul.f32 %v685, %v771
    %v826 = vmul.f32 %v686, %v767
    %v827 = vmul.f32 %v687, %v771
    %v828 = vmul.f32 %v688, %v767
    %v829 = vmul.f32 %v689, %v771
    %v830 = vmul.f32 %v690, %v767
    %v831 = vmul.f32 %v691, %v771
    %v832 = vmul.f32 %v692, %v767
    %v833 = vmul.f32 %v693, %v771
    %v834 = vmul.f32 %v694, %v767
    %v835 = vmul.f32 %v695, %v771
    %v836 = vmul.f32 %v696, %v767
    %v837 = vmul.f32 %v697, %v771
    %v838 = vmul.f32 %v698, %v767
    %v839 = vmul.f32 %v699, %v771
    %v840 = vmul.f32 %v700, %v767
    %v841 = vmul.f32 %v701, %v771
    %v842 = vmul.f32 %v702, %v767
    %v843 = vmul.f32 %v703, %v771
    %v844 = vmul.f32 %v704, %v767
    %v845 = vmul.f32 %v705, %v771
    %v846 = vmul.f32 %v706, %v767
    %v847 = vmul.f32 %v707, %v771
    %v848 = vmul.f32 %v708, %v767
    %v849 = vmul.f32 %v709, %v771
    %v850 = vmul.f32 %v710, %v767
    %v851 = vmul.f32 %v711, %v771
    %v852 = vmul.f32 %v712, %v767
    %v853 = vmul.f32 %v713, %v771
    %v854 = vmul.f32 %v714, %v767
    %v855 = vmul.f32 %v715, %v771
    %v856 = vmul.f32 %v716, %v767
    %v857 = vmul.f32 %v717, %v771
    %v858 = vmul.f32 %v718, %v767
    %v859 = vmul.f32 %v719, %v771
    %v860 = vmul.f32 %v720, %v767
    %v861 = vmul.f32 %v721, %v771
    %v862 = vmul.f32 %v722, %v767
    %v863 = vmul.f32 %v723, %v771
    %v864 = vmul.f32 %v724, %v767
    %v865 = vmul.f32 %v725, %v771
    %v866 = vmul.f32 %v726, %v767
    %v867 = vmul.f32 %v727, %v771
    %v868 = vmul.f32 %v728, %v767
    %v869 = vmul.f32 %v729, %v771
    %v870 = vmul.f32 %v730, %v767
    %v871 = vmul.f32 %v731, %v771
    %v872 = vmul.f32 %v732, %v767
    %v873 = vmul.f32 %v733, %v771
    %v874 = vmul.f32 %v734, %v767
    %v875 = vmul.f32 %v735, %v771
    %v876 = vmul.f32 %v736, %v767
    %v877 = vmul.f32 %v737, %v771
    %v878 = vmul.f32 %v738, %v767
    %v879 = vmul.f32 %v739, %v771
    %v880 = vmul.f32 %v740, %v767
    %v881 = vmul.f32 %v741, %v771
    %v882 = vmul.f32 %v742, %v767
    %v883 = vmul.f32 %v743, %v771
    %v884 = vmul.f32 %v744, %v767
    %v885 = vmul.f32 %v745, %v771
    %v886 = vmul.f32 %v746, %v767
    %v887 = vmul.f32 %v747, %v771
    %v888 = vmul.f32 %v748, %v767
    %v889 = vmul.f32 %v749, %v771
    %v890 = vmul.f32 %v750, %v767
    %v891 = vmul.f32 %v751, %v771
    %v892 = vmul.f32 %v752, %v767
    %v893 = vmul.f32 %v753, %v771
    %v894 = vmul.f32 %v754, %v767
    %v895 = vmul.f32 %v755, %v771
    %v896 = vmul.f32 %v756, %v767
    %v897 = vmul.f32 %v757, %v771
    %v898 = vmul.f32 %v758, %v767
    %v899 = vmul.f32 %v759, %v771
    %v900 = vmul.f32 %v760, %v767
    %v901 = vmul.f32 %v761, %v771
    %v902 = vld [vmem:[#allocation11] sm:$0x3]
    %v904 = vlaneseq
    %v905 = vshrl.u32 %v904, 7
    %v906 = vsub.s32 0, %v905
    %v907 = vrot.slane %v902, %v906
    %v908 = vlaneseq
    %v909 = vshrl.u32 %v908, 7
    %v910 = vsub.s32 1, %v909
    %v911 = vrot.slane %v902, %v910
    %v914 = vadd.f32 %v774, %v907
    %v915 = vadd.f32 %v775, %v911
    %v916 = vadd.f32 %v776, %v907
    %v917 = vadd.f32 %v777, %v911
    %v918 = vadd.f32 %v778, %v907
    %v919 = vadd.f32 %v779, %v911
    %v920 = vadd.f32 %v780, %v907
    %v921 = vadd.f32 %v781, %v911
    %v922 = vadd.f32 %v782, %v907
    %v923 = vadd.f32 %v783, %v911
    %v924 = vadd.f32 %v784, %v907
    %v925 = vadd.f32 %v785, %v911
    %v926 = vadd.f32 %v786, %v907
    %v927 = vadd.f32 %v787, %v911
    %v928 = vadd.f32 %v788, %v907
    %v929 = vadd.f32 %v789, %v911
    %v930 = vadd.f32 %v790, %v907
    %v931 = vadd.f32 %v791, %v911
    %v932 = vadd.f32 %v792, %v907
    %v933 = vadd.f32 %v793, %v911
    %v934 = vadd.f32 %v794, %v907
    %v935 = vadd.f32 %v795, %v911
    %v936 = vadd.f32 %v796, %v907
    %v937 = vadd.f32 %v797, %v911
    %v938 = vadd.f32 %v798, %v907
    %v939 = vadd.f32 %v799, %v911
    %v940 = vadd.f32 %v800, %v907
    %v941 = vadd.f32 %v801, %v911
    %v942 = vadd.f32 %v802, %v907
    %v943 = vadd.f32 %v803, %v911
    %v944 = vadd.f32 %v804, %v907
    %v945 = vadd.f32 %v805, %v911
    %v946 = vadd.f32 %v806, %v907
    %v947 = vadd.f32 %v807, %v911
    %v948 = vadd.f32 %v808, %v907
    %v949 = vadd.f32 %v809, %v911
    %v950 = vadd.f32 %v810, %v907
    %v951 = vadd.f32 %v811, %v911
    %v952 = vadd.f32 %v812, %v907
    %v953 = vadd.f32 %v813, %v911
    %v954 = vadd.f32 %v814, %v907
    %v955 = vadd.f32 %v815, %v911
    %v956 = vadd.f32 %v816, %v907
    %v957 = vadd.f32 %v817, %v911
    %v958 = vadd.f32 %v818, %v907
    %v959 = vadd.f32 %v819, %v911
    %v960 = vadd.f32 %v820, %v907
    %v961 = vadd.f32 %v821, %v911
    %v962 = vadd.f32 %v822, %v907
    %v963 = vadd.f32 %v823, %v911
    %v964 = vadd.f32 %v824, %v907
    %v965 = vadd.f32 %v825, %v911
    %v966 = vadd.f32 %v826, %v907
    %v967 = vadd.f32 %v827, %v911
    %v968 = vadd.f32 %v828, %v907
    %v969 = vadd.f32 %v829, %v911
    %v970 = vadd.f32 %v830, %v907
    %v971 = vadd.f32 %v831, %v911
    %v972 = vadd.f32 %v832, %v907
    %v973 = vadd.f32 %v833, %v911
    %v974 = vadd.f32 %v834, %v907
    %v975 = vadd.f32 %v835, %v911
    %v976 = vadd.f32 %v836, %v907
    %v977 = vadd.f32 %v837, %v911
    %v978 = vadd.f32 %v838, %v907
    %v979 = vadd.f32 %v839, %v911
    %v980 = vadd.f32 %v840, %v907
    %v981 = vadd.f32 %v841, %v911
    %v982 = vadd.f32 %v842, %v907
    %v983 = vadd.f32 %v843, %v911
    %v984 = vadd.f32 %v844, %v907
    %v985 = vadd.f32 %v845, %v911
    %v986 = vadd.f32 %v846, %v907
    %v987 = vadd.f32 %v847, %v911
    %v988 = vadd.f32 %v848, %v907
    %v989 = vadd.f32 %v849, %v911
    %v990 = vadd.f32 %v850, %v907
    %v991 = vadd.f32 %v851, %v911
    %v992 = vadd.f32 %v852, %v907
    %v993 = vadd.f32 %v853, %v911
    %v994 = vadd.f32 %v854, %v907
    %v995 = vadd.f32 %v855, %v911
    %v996 = vadd.f32 %v856, %v907
    %v997 = vadd.f32 %v857, %v911
    %v998 = vadd.f32 %v858, %v907
    %v999 = vadd.f32 %v859, %v911
    %v1000 = vadd.f32 %v860, %v907
    %v1001 = vadd.f32 %v861, %v911
    %v1002 = vadd.f32 %v862, %v907
    %v1003 = vadd.f32 %v863, %v911
    %v1004 = vadd.f32 %v864, %v907
    %v1005 = vadd.f32 %v865, %v911
    %v1006 = vadd.f32 %v866, %v907
    %v1007 = vadd.f32 %v867, %v911
    %v1008 = vadd.f32 %v868, %v907
    %v1009 = vadd.f32 %v869, %v911
    %v1010 = vadd.f32 %v870, %v907
    %v1011 = vadd.f32 %v871, %v911
    %v1012 = vadd.f32 %v872, %v907
    %v1013 = vadd.f32 %v873, %v911
    %v1014 = vadd.f32 %v874, %v907
    %v1015 = vadd.f32 %v875, %v911
    %v1016 = vadd.f32 %v876, %v907
    %v1017 = vadd.f32 %v877, %v911
    %v1018 = vadd.f32 %v878, %v907
    %v1019 = vadd.f32 %v879, %v911
    %v1020 = vadd.f32 %v880, %v907
    %v1021 = vadd.f32 %v881, %v911
    %v1022 = vadd.f32 %v882, %v907
    %v1023 = vadd.f32 %v883, %v911
    %v1024 = vadd.f32 %v884, %v907
    %v1025 = vadd.f32 %v885, %v911
    %v1026 = vadd.f32 %v886, %v907
    %v1027 = vadd.f32 %v887, %v911
    %v1028 = vadd.f32 %v888, %v907
    %v1029 = vadd.f32 %v889, %v911
    %v1030 = vadd.f32 %v890, %v907
    %v1031 = vadd.f32 %v891, %v911
    %v1032 = vadd.f32 %v892, %v907
    %v1033 = vadd.f32 %v893, %v911
    %v1034 = vadd.f32 %v894, %v907
    %v1035 = vadd.f32 %v895, %v911
    %v1036 = vadd.f32 %v896, %v907
    %v1037 = vadd.f32 %v897, %v911
    %v1038 = vadd.f32 %v898, %v907
    %v1039 = vadd.f32 %v899, %v911
    %v1040 = vadd.f32 %v900, %v907
    %v1041 = vadd.f32 %v901, %v911
    %v1042 = vadd.f32 %v442, %v914
    %v1043 = vadd.f32 %v443, %v915
    %v1044 = vadd.f32 %v444, %v916
    %v1045 = vadd.f32 %v445, %v917
    %v1046 = vadd.f32 %v446, %v918
    %v1047 = vadd.f32 %v447, %v919
    %v1048 = vadd.f32 %v448, %v920
    %v1049 = vadd.f32 %v449, %v921
    %v1050 = vadd.f32 %v450, %v922
    %v1051 = vadd.f32 %v451, %v923
    %v1052 = vadd.f32 %v452, %v924
    %v1053 = vadd.f32 %v453, %v925
    %v1054 = vadd.f32 %v454, %v926
    %v1055 = vadd.f32 %v455, %v927
    %v1056 = vadd.f32 %v456, %v928
    %v1057 = vadd.f32 %v457, %v929
    %v1058 = vadd.f32 %v458, %v930
    %v1059 = vadd.f32 %v459, %v931
    %v1060 = vadd.f32 %v460, %v932
    %v1061 = vadd.f32 %v461, %v933
    %v1062 = vadd.f32 %v462, %v934
    %v1063 = vadd.f32 %v463, %v935
    %v1064 = vadd.f32 %v464, %v936
    %v1065 = vadd.f32 %v465, %v937
    %v1066 = vadd.f32 %v466, %v938
    %v1067 = vadd.f32 %v467, %v939
    %v1068 = vadd.f32 %v468, %v940
    %v1069 = vadd.f32 %v469, %v941
    %v1070 = vadd.f32 %v470, %v942
    %v1071 = vadd.f32 %v471, %v943
    %v1072 = vadd.f32 %v472, %v944
    %v1073 = vadd.f32 %v473, %v945
    %v1074 = vadd.f32 %v474, %v946
    %v1075 = vadd.f32 %v475, %v947
    %v1076 = vadd.f32 %v476, %v948
    %v1077 = vadd.f32 %v477, %v949
    %v1078 = vadd.f32 %v478, %v950
    %v1079 = vadd.f32 %v479, %v951
    %v1080 = vadd.f32 %v480, %v952
    %v1081 = vadd.f32 %v481, %v953
    %v1082 = vadd.f32 %v482, %v954
    %v1083 = vadd.f32 %v483, %v955
    %v1084 = vadd.f32 %v484, %v956
    %v1085 = vadd.f32 %v485, %v957
    %v1086 = vadd.f32 %v486, %v958
    %v1087 = vadd.f32 %v487, %v959
    %v1088 = vadd.f32 %v488, %v960
    %v1089 = vadd.f32 %v489, %v961
    %v1090 = vadd.f32 %v490, %v962
    %v1091 = vadd.f32 %v491, %v963
    %v1092 = vadd.f32 %v492, %v964
    %v1093 = vadd.f32 %v493, %v965
    %v1094 = vadd.f32 %v494, %v966
    %v1095 = vadd.f32 %v495, %v967
    %v1096 = vadd.f32 %v496, %v968
    %v1097 = vadd.f32 %v497, %v969
    %v1098 = vadd.f32 %v498, %v970
    %v1099 = vadd.f32 %v499, %v971
    %v1100 = vadd.f32 %v500, %v972
    %v1101 = vadd.f32 %v501, %v973
    %v1102 = vadd.f32 %v502, %v974
    %v1103 = vadd.f32 %v503, %v975
    %v1104 = vadd.f32 %v504, %v976
    %v1105 = vadd.f32 %v505, %v977
    %v1106 = vadd.f32 %v506, %v978
    %v1107 = vadd.f32 %v507, %v979
    %v1108 = vadd.f32 %v508, %v980
    %v1109 = vadd.f32 %v509, %v981
    %v1110 = vadd.f32 %v510, %v982
    %v1111 = vadd.f32 %v511, %v983
    %v1112 = vadd.f32 %v512, %v984
    %v1113 = vadd.f32 %v513, %v985
    %v1114 = vadd.f32 %v514, %v986
    %v1115 = vadd.f32 %v515, %v987
    %v1116 = vadd.f32 %v516, %v988
    %v1117 = vadd.f32 %v517, %v989
    %v1118 = vadd.f32 %v518, %v990
    %v1119 = vadd.f32 %v519, %v991
    %v1120 = vadd.f32 %v520, %v992
    %v1121 = vadd.f32 %v521, %v993
    %v1122 = vadd.f32 %v522, %v994
    %v1123 = vadd.f32 %v523, %v995
    %v1124 = vadd.f32 %v524, %v996
    %v1125 = vadd.f32 %v525, %v997
    %v1126 = vadd.f32 %v526, %v998
    %v1127 = vadd.f32 %v527, %v999
    %v1128 = vadd.f32 %v528, %v1000
    %v1129 = vadd.f32 %v529, %v1001
    %v1130 = vadd.f32 %v530, %v1002
    %v1131 = vadd.f32 %v531, %v1003
    %v1132 = vadd.f32 %v532, %v1004
    %v1133 = vadd.f32 %v533, %v1005
    %v1134 = vadd.f32 %v534, %v1006
    %v1135 = vadd.f32 %v535, %v1007
    %v1136 = vadd.f32 %v536, %v1008
    %v1137 = vadd.f32 %v537, %v1009
    %v1138 = vadd.f32 %v538, %v1010
    %v1139 = vadd.f32 %v539, %v1011
    %v1140 = vadd.f32 %v540, %v1012
    %v1141 = vadd.f32 %v541, %v1013
    %v1142 = vadd.f32 %v542, %v1014
    %v1143 = vadd.f32 %v543, %v1015
    %v1144 = vadd.f32 %v544, %v1016
    %v1145 = vadd.f32 %v545, %v1017
    %v1146 = vadd.f32 %v546, %v1018
    %v1147 = vadd.f32 %v547, %v1019
    %v1148 = vadd.f32 %v548, %v1020
    %v1149 = vadd.f32 %v549, %v1021
    %v1150 = vadd.f32 %v550, %v1022
    %v1151 = vadd.f32 %v551, %v1023
    %v1152 = vadd.f32 %v552, %v1024
    %v1153 = vadd.f32 %v553, %v1025
    %v1154 = vadd.f32 %v554, %v1026
    %v1155 = vadd.f32 %v555, %v1027
    %v1156 = vadd.f32 %v556, %v1028
    %v1157 = vadd.f32 %v557, %v1029
    %v1158 = vadd.f32 %v558, %v1030
    %v1159 = vadd.f32 %v559, %v1031
    %v1160 = vadd.f32 %v560, %v1032
    %v1161 = vadd.f32 %v561, %v1033
    %v1162 = vadd.f32 %v562, %v1034
    %v1163 = vadd.f32 %v563, %v1035
    %v1164 = vadd.f32 %v564, %v1036
    %v1165 = vadd.f32 %v565, %v1037
    %v1166 = vadd.f32 %v566, %v1038
    %v1167 = vadd.f32 %v567, %v1039
    %v1168 = vadd.f32 %v568, %v1040
    %v1169 = vadd.f32 %v569, %v1041
    %v1170 = vmax.f32 %v1042, 0.0
    %v1171 = vmax.f32 %v1043, 0.0
    %v1172 = vmax.f32 %v1044, 0.0
    %v1173 = vmax.f32 %v1045, 0.0
    %v1174 = vmax.f32 %v1046, 0.0
    %v1175 = vmax.f32 %v1047, 0.0
    %v1176 = vmax.f32 %v1048, 0.0
    %v1177 = vmax.f32 %v1049, 0.0
    %v1178 = vmax.f32 %v1050, 0.0
    %v1179 = vmax.f32 %v1051, 0.0
    %v1180 = vmax.f32 %v1052, 0.0
    %v1181 = vmax.f32 %v1053, 0.0
    %v1182 = vmax.f32 %v1054, 0.0
    %v1183 = vmax.f32 %v1055, 0.0
    %v1184 = vmax.f32 %v1056, 0.0
    %v1185 = vmax.f32 %v1057, 0.0
    %v1186 = vmax.f32 %v1058, 0.0
    %v1187 = vmax.f32 %v1059, 0.0
    %v1188 = vmax.f32 %v1060, 0.0
    %v1189 = vmax.f32 %v1061, 0.0
    %v1190 = vmax.f32 %v1062, 0.0
    %v1191 = vmax.f32 %v1063, 0.0
    %v1192 = vmax.f32 %v1064, 0.0
    %v1193 = vmax.f32 %v1065, 0.0
    %v1194 = vmax.f32 %v1066, 0.0
    %v1195 = vmax.f32 %v1067, 0.0
    %v1196 = vmax.f32 %v1068, 0.0
    %v1197 = vmax.f32 %v1069, 0.0
    %v1198 = vmax.f32 %v1070, 0.0
    %v1199 = vmax.f32 %v1071, 0.0
    %v1200 = vmax.f32 %v1072, 0.0
    %v1201 = vmax.f32 %v1073, 0.0
    %v1202 = vmax.f32 %v1074, 0.0
    %v1203 = vmax.f32 %v1075, 0.0
    %v1204 = vmax.f32 %v1076, 0.0
    %v1205 = vmax.f32 %v1077, 0.0
    %v1206 = vmax.f32 %v1078, 0.0
    %v1207 = vmax.f32 %v1079, 0.0
    %v1208 = vmax.f32 %v1080, 0.0
    %v1209 = vmax.f32 %v1081, 0.0
    %v1210 = vmax.f32 %v1082, 0.0
    %v1211 = vmax.f32 %v1083, 0.0
    %v1212 = vmax.f32 %v1084, 0.0
    %v1213 = vmax.f32 %v1085, 0.0
    %v1214 = vmax.f32 %v1086, 0.0
    %v1215 = vmax.f32 %v1087, 0.0
    %v1216 = vmax.f32 %v1088, 0.0
    %v1217 = vmax.f32 %v1089, 0.0
    %v1218 = vmax.f32 %v1090, 0.0
    %v1219 = vmax.f32 %v1091, 0.0
    %v1220 = vmax.f32 %v1092, 0.0
    %v1221 = vmax.f32 %v1093, 0.0
    %v1222 = vmax.f32 %v1094, 0.0
    %v1223 = vmax.f32 %v1095, 0.0
    %v1224 = vmax.f32 %v1096, 0.0
    %v1225 = vmax.f32 %v1097, 0.0
    %v1226 = vmax.f32 %v1098, 0.0
    %v1227 = vmax.f32 %v1099, 0.0
    %v1228 = vmax.f32 %v1100, 0.0
    %v1229 = vmax.f32 %v1101, 0.0
    %v1230 = vmax.f32 %v1102, 0.0
    %v1231 = vmax.f32 %v1103, 0.0
    %v1232 = vmax.f32 %v1104, 0.0
    %v1233 = vmax.f32 %v1105, 0.0
    %v1234 = vmax.f32 %v1106, 0.0
    %v1235 = vmax.f32 %v1107, 0.0
    %v1236 = vmax.f32 %v1108, 0.0
    %v1237 = vmax.f32 %v1109, 0.0
    %v1238 = vmax.f32 %v1110, 0.0
    %v1239 = vmax.f32 %v1111, 0.0
    %v1240 = vmax.f32 %v1112, 0.0
    %v1241 = vmax.f32 %v1113, 0.0
    %v1242 = vmax.f32 %v1114, 0.0
    %v1243 = vmax.f32 %v1115, 0.0
    %v1244 = vmax.f32 %v1116, 0.0
    %v1245 = vmax.f32 %v1117, 0.0
    %v1246 = vmax.f32 %v1118, 0.0
    %v1247 = vmax.f32 %v1119, 0.0
    %v1248 = vmax.f32 %v1120, 0.0
    %v1249 = vmax.f32 %v1121, 0.0
    %v1250 = vmax.f32 %v1122, 0.0
    %v1251 = vmax.f32 %v1123, 0.0
    %v1252 = vmax.f32 %v1124, 0.0
    %v1253 = vmax.f32 %v1125, 0.0
    %v1254 = vmax.f32 %v1126, 0.0
    %v1255 = vmax.f32 %v1127, 0.0
    %v1256 = vmax.f32 %v1128, 0.0
    %v1257 = vmax.f32 %v1129, 0.0
    %v1258 = vmax.f32 %v1130, 0.0
    %v1259 = vmax.f32 %v1131, 0.0
    %v1260 = vmax.f32 %v1132, 0.0
    %v1261 = vmax.f32 %v1133, 0.0
    %v1262 = vmax.f32 %v1134, 0.0
    %v1263 = vmax.f32 %v1135, 0.0
    %v1264 = vmax.f32 %v1136, 0.0
    %v1265 = vmax.f32 %v1137, 0.0
    %v1266 = vmax.f32 %v1138, 0.0
    %v1267 = vmax.f32 %v1139, 0.0
    %v1268 = vmax.f32 %v1140, 0.0
    %v1269 = vmax.f32 %v1141, 0.0
    %v1270 = vmax.f32 %v1142, 0.0
    %v1271 = vmax.f32 %v1143, 0.0
    %v1272 = vmax.f32 %v1144, 0.0
    %v1273 = vmax.f32 %v1145, 0.0
    %v1274 = vmax.f32 %v1146, 0.0
    %v1275 = vmax.f32 %v1147, 0.0
    %v1276 = vmax.f32 %v1148, 0.0
    %v1277 = vmax.f32 %v1149, 0.0
    %v1278 = vmax.f32 %v1150, 0.0
    %v1279 = vmax.f32 %v1151, 0.0
    %v1280 = vmax.f32 %v1152, 0.0
    %v1281 = vmax.f32 %v1153, 0.0
    %v1282 = vmax.f32 %v1154, 0.0
    %v1283 = vmax.f32 %v1155, 0.0
    %v1284 = vmax.f32 %v1156, 0.0
    %v1285 = vmax.f32 %v1157, 0.0
    %v1286 = vmax.f32 %v1158, 0.0
    %v1287 = vmax.f32 %v1159, 0.0
    %v1288 = vmax.f32 %v1160, 0.0
    %v1289 = vmax.f32 %v1161, 0.0
    %v1290 = vmax.f32 %v1162, 0.0
    %v1291 = vmax.f32 %v1163, 0.0
    %v1292 = vmax.f32 %v1164, 0.0
    %v1293 = vmax.f32 %v1165, 0.0
    %v1294 = vmax.f32 %v1166, 0.0
    %v1295 = vmax.f32 %v1167, 0.0
    %v1296 = vmax.f32 %v1168, 0.0
    %v1297 = vmax.f32 %v1169, 0.0
    %1298 = vst [vmem:[#allocation13] sm:$0xff] %v1170
    %1299 = vst [vmem:[#allocation13 + $0x8] sm:$0xff] %v1171
    %1300 = vst [vmem:[#allocation13 + $0x10] sm:$0xff] %v1172
    %1301 = vst [vmem:[#allocation13 + $0x18] sm:$0xff] %v1173
    %1302 = vst [vmem:[#allocation13 + $0x20] sm:$0xff] %v1174
    %1303 = vst [vmem:[#allocation13 + $0x28] sm:$0xff] %v1175
    %1304 = vst [vmem:[#allocation13 + $0x30] sm:$0xff] %v1176
    %1305 = vst [vmem:[#allocation13 + $0x38] sm:$0xff] %v1177
    %1306 = vst [vmem:[#allocation13 + $0x40] sm:$0xff] %v1178
    %1307 = vst [vmem:[#allocation13 + $0x48] sm:$0xff] %v1179
    %1308 = vst [vmem:[#allocation13 + $0x50] sm:$0xff] %v1180
    %1309 = vst [vmem:[#allocation13 + $0x58] sm:$0xff] %v1181
    %1310 = vst [vmem:[#allocation13 + $0x60] sm:$0xff] %v1182
    %1311 = vst [vmem:[#allocation13 + $0x68] sm:$0xff] %v1183
    %1312 = vst [vmem:[#allocation13 + $0x70] sm:$0xff] %v1184
    %1313 = vst [vmem:[#allocation13 + $0x78] sm:$0xff] %v1185
    %1314 = vst [vmem:[#allocation13 + $0x80] sm:$0xff] %v1186
    %1315 = vst [vmem:[#allocation13 + $0x88] sm:$0xff] %v1187
    %1316 = vst [vmem:[#allocation13 + $0x90] sm:$0xff] %v1188
    %1317 = vst [vmem:[#allocation13 + $0x98] sm:$0xff] %v1189
    %1318 = vst [vmem:[#allocation13 + $0xa0] sm:$0xff] %v1190
    %1319 = vst [vmem:[#allocation13 + $0xa8] sm:$0xff] %v1191
    %1320 = vst [vmem:[#allocation13 + $0xb0] sm:$0xff] %v1192
    %1321 = vst [vmem:[#allocation13 + $0xb8] sm:$0xff] %v1193
    %1322 = vst [vmem:[#allocation13 + $0xc0] sm:$0xff] %v1194
    %1323 = vst [vmem:[#allocation13 + $0xc8] sm:$0xff] %v1195
    %1324 = vst [vmem:[#allocation13 + $0xd0] sm:$0xff] %v1196
    %1325 = vst [vmem:[#allocation13 + $0xd8] sm:$0xff] %v1197
    %1326 = vst [vmem:[#allocation13 + $0xe0] sm:$0xff] %v1198
    %1327 = vst [vmem:[#allocation13 + $0xe8] sm:$0xff] %v1199
    %1328 = vst [vmem:[#allocation13 + $0xf0] sm:$0xff] %v1200
    %1329 = vst [vmem:[#allocation13 + $0xf8] sm:$0xff] %v1201
    %1330 = vst [vmem:[#allocation13 + $0x100] sm:$0xff] %v1202
    %1331 = vst [vmem:[#allocation13 + $0x108] sm:$0xff] %v1203
    %1332 = vst [vmem:[#allocation13 + $0x110] sm:$0xff] %v1204
    %1333 = vst [vmem:[#allocation13 + $0x118] sm:$0xff] %v1205
    %1334 = vst [vmem:[#allocation13 + $0x120] sm:$0xff] %v1206
    %1335 = vst [vmem:[#allocation13 + $0x128] sm:$0xff] %v1207
    %1336 = vst [vmem:[#allocation13 + $0x130] sm:$0xff] %v1208
    %1337 = vst [vmem:[#allocation13 + $0x138] sm:$0xff] %v1209
    %1338 = vst [vmem:[#allocation13 + $0x140] sm:$0xff] %v1210
    %1339 = vst [vmem:[#allocation13 + $0x148] sm:$0xff] %v1211
    %1340 = vst [vmem:[#allocation13 + $0x150] sm:$0xff] %v1212
    %1341 = vst [vmem:[#allocation13 + $0x158] sm:$0xff] %v1213
    %1342 = vst [vmem:[#allocation13 + $0x160] sm:$0xff] %v1214
    %1343 = vst [vmem:[#allocation13 + $0x168] sm:$0xff] %v1215
    %1344 = vst [vmem:[#allocation13 + $0x170] sm:$0xff] %v1216
    %1345 = vst [vmem:[#allocation13 + $0x178] sm:$0xff] %v1217
    %1346 = vst [vmem:[#allocation13 + $0x180] sm:$0xff] %v1218
    %1347 = vst [vmem:[#allocation13 + $0x188] sm:$0xff] %v1219
    %1348 = vst [vmem:[#allocation13 + $0x190] sm:$0xff] %v1220
    %1349 = vst [vmem:[#allocation13 + $0x198] sm:$0xff] %v1221
    %1350 = vst [vmem:[#allocation13 + $0x1a0] sm:$0xff] %v1222
    %1351 = vst [vmem:[#allocation13 + $0x1a8] sm:$0xff] %v1223
    %1352 = vst [vmem:[#allocation13 + $0x1b0] sm:$0xff] %v1224
    %1353 = vst [vmem:[#allocation13 + $0x1b8] sm:$0xff] %v1225
    %1354 = vst [vmem:[#allocation13 + $0x1c0] sm:$0xff] %v1226
    %1355 = vst [vmem:[#allocation13 + $0x1c8] sm:$0xff] %v1227
    %1356 = vst [vmem:[#allocation13 + $0x1d0] sm:$0xff] %v1228
    %1357 = vst [vmem:[#allocation13 + $0x1d8] sm:$0xff] %v1229
    %1358 = vst [vmem:[#allocation13 + $0x1e0] sm:$0xff] %v1230
    %1359 = vst [vmem:[#allocation13 + $0x1e8] sm:$0xff] %v1231
    %1360 = vst [vmem:[#allocation13 + $0x1f0] sm:$0xff] %v1232
    %1361 = vst [vmem:[#allocation13 + $0x1f8] sm:$0xff] %v1233
    %1362 = vst [vmem:[#allocation13 + $0x200] sm:$0xff] %v1234
    %1363 = vst [vmem:[#allocation13 + $0x208] sm:$0xff] %v1235
    %1364 = vst [vmem:[#allocation13 + $0x210] sm:$0xff] %v1236
    %1365 = vst [vmem:[#allocation13 + $0x218] sm:$0xff] %v1237
    %1366 = vst [vmem:[#allocation13 + $0x220] sm:$0xff] %v1238
    %1367 = vst [vmem:[#allocation13 + $0x228] sm:$0xff] %v1239
    %1368 = vst [vmem:[#allocation13 + $0x230] sm:$0xff] %v1240
    %1369 = vst [vmem:[#allocation13 + $0x238] sm:$0xff] %v1241
    %1370 = vst [vmem:[#allocation13 + $0x240] sm:$0xff] %v1242
    %1371 = vst [vmem:[#allocation13 + $0x248] sm:$0xff] %v1243
    %1372 = vst [vmem:[#allocation13 + $0x250] sm:$0xff] %v1244
    %1373 = vst [vmem:[#allocation13 + $0x258] sm:$0xff] %v1245
    %1374 = vst [vmem:[#allocation13 + $0x260] sm:$0xff] %v1246
    %1375 = vst [vmem:[#allocation13 + $0x268] sm:$0xff] %v1247
    %1376 = vst [vmem:[#allocation13 + $0x270] sm:$0xff] %v1248
    %1377 = vst [vmem:[#allocation13 + $0x278] sm:$0xff] %v1249
    %1378 = vst [vmem:[#allocation13 + $0x280] sm:$0xff] %v1250
    %1379 = vst [vmem:[#allocation13 + $0x288] sm:$0xff] %v1251
    %1380 = vst [vmem:[#allocation13 + $0x290] sm:$0xff] %v1252
    %1381 = vst [vmem:[#allocation13 + $0x298] sm:$0xff] %v1253
    %1382 = vst [vmem:[#allocation13 + $0x2a0] sm:$0xff] %v1254
    %1383 = vst [vmem:[#allocation13 + $0x2a8] sm:$0xff] %v1255
    %1384 = vst [vmem:[#allocation13 + $0x2b0] sm:$0xff] %v1256
    %1385 = vst [vmem:[#allocation13 + $0x2b8] sm:$0xff] %v1257
    %1386 = vst [vmem:[#allocation13 + $0x2c0] sm:$0xff] %v1258
    %1387 = vst [vmem:[#allocation13 + $0x2c8] sm:$0xff] %v1259
    %1388 = vst [vmem:[#allocation13 + $0x2d0] sm:$0xff] %v1260
    %1389 = vst [vmem:[#allocation13 + $0x2d8] sm:$0xff] %v1261
    %1390 = vst [vmem:[#allocation13 + $0x2e0] sm:$0xff] %v1262
    %1391 = vst [vmem:[#allocation13 + $0x2e8] sm:$0xff] %v1263
    %1392 = vst [vmem:[#allocation13 + $0x2f0] sm:$0xff] %v1264
    %1393 = vst [vmem:[#allocation13 + $0x2f8] sm:$0xff] %v1265
    %1394 = vst [vmem:[#allocation13 + $0x300] sm:$0xff] %v1266
    %1395 = vst [vmem:[#allocation13 + $0x308] sm:$0xff] %v1267
    %1396 = vst [vmem:[#allocation13 + $0x310] sm:$0xff] %v1268
    %1397 = vst [vmem:[#allocation13 + $0x318] sm:$0xff] %v1269
    %1398 = vst [vmem:[#allocation13 + $0x320] sm:$0xff] %v1270
    %1399 = vst [vmem:[#allocation13 + $0x328] sm:$0xff] %v1271
    %1400 = vst [vmem:[#allocation13 + $0x330] sm:$0xff] %v1272
    %1401 = vst [vmem:[#allocation13 + $0x338] sm:$0xff] %v1273
    %1402 = vst [vmem:[#allocation13 + $0x340] sm:$0xff] %v1274
    %1403 = vst [vmem:[#allocation13 + $0x348] sm:$0xff] %v1275
    %1404 = vst [vmem:[#allocation13 + $0x350] sm:$0xff] %v1276
    %1405 = vst [vmem:[#allocation13 + $0x358] sm:$0xff] %v1277
    %1406 = vst [vmem:[#allocation13 + $0x360] sm:$0xff] %v1278
    %1407 = vst [vmem:[#allocation13 + $0x368] sm:$0xff] %v1279
    %1408 = vst [vmem:[#allocation13 + $0x370] sm:$0xff] %v1280
    %1409 = vst [vmem:[#allocation13 + $0x378] sm:$0xff] %v1281
    %1410 = vst [vmem:[#allocation13 + $0x380] sm:$0xff] %v1282
    %1411 = vst [vmem:[#allocation13 + $0x388] sm:$0xff] %v1283
    %1412 = vst [vmem:[#allocation13 + $0x390] sm:$0xff] %v1284
    %1413 = vst [vmem:[#allocation13 + $0x398] sm:$0xff] %v1285
    %1414 = vst [vmem:[#allocation13 + $0x3a0] sm:$0xff] %v1286
    %1415 = vst [vmem:[#allocation13 + $0x3a8] sm:$0xff] %v1287
    %1416 = vst [vmem:[#allocation13 + $0x3b0] sm:$0xff] %v1288
    %1417 = vst [vmem:[#allocation13 + $0x3b8] sm:$0xff] %v1289
    %1418 = vst [vmem:[#allocation13 + $0x3c0] sm:$0xff] %v1290
    %1419 = vst [vmem:[#allocation13 + $0x3c8] sm:$0xff] %v1291
    %1420 = vst [vmem:[#allocation13 + $0x3d0] sm:$0xff] %v1292
    %1421 = vst [vmem:[#allocation13 + $0x3d8] sm:$0xff] %v1293
    %1422 = vst [vmem:[#allocation13 + $0x3e0] sm:$0xff] %v1294
    %1423 = vst [vmem:[#allocation13 + $0x3e8] sm:$0xff] %v1295
    %1424 = vst [vmem:[#allocation13 + $0x3f0] sm:$0xff] %v1296
    %1425 = vst [vmem:[#allocation13 + $0x3f8] sm:$0xff] %v1297
    // Predicated region
    $region50: #{bottleneck_forward.7} parent=1 // pred_check
      _
    $region51: #{bottleneck_forward.7} parent=1 // pred_check_branch
      %1427 = sbr.rel (0) target = $region53
    $region52: #{bottleneck_forward.7} parent=1 // pred_region
      %s1429 = ssub.s32 16384, 16384
      %1430 = vsyncadd [#allocation4], %s1429
      %s1431 = sshll.u32 [#allocation13], 4
      %s1432 = int_to_ptr.vmem [resolvable:$true] %s1431
      %1437 = dma.vmem_to_hbm [thread:$0]  %s1432, 16384, %s6, [#allocation4], 256, 256, 16
    $region53: #{bottleneck_forward.7} parent=1 // pred_fallthru
      _
    // Predicated region
    $region54: #{bottleneck_forward.7} parent=1 // pred_check
      _
    $region55: #{bottleneck_forward.7} parent=1 // pred_check_branch
      %1439 = sbr.rel (0) target = $region57
    $region56: #{bottleneck_forward.7} parent=1 // pred_region
      %1440 = dma.done [#allocation4], 16384
    $region57: #{bottleneck_forward.7} parent=1 // pred_fallthru
      _
    %1441 = vsyncpa [#allocation3], 1
    %1442 = vsyncpa [#allocation6], 1
    %1443 = vsyncpa [#allocation9], 1
    %1444 = vsyncpa [#allocation12], 1
    %1445 = vsyncpa [#allocation4], 1

// kernel: bottleneck_forward.5
$region0: #{bottleneck_forward.5}
  #allocation0 [shape = 'u32[]', space=smem, size = 0x4, offset = 0x4, fixed_abs, tag = 'smem constant byte address 0x4 - core index']
  #allocation1 [shape = 'u32[144,128]{1,0:T(1,128)}', space=vmem, size = 0x12000, scoped, tag = 'internal scratch']
  %s0 = inlined_call_operand.hbm [shape: bf16[2,18,18,128], index: 0, kind: input, shape index: {}]
  %s1 = inlined_call_operand.hbm [shape: bf16[1152,128], index: 1, kind: input, shape index: {}]
  %s2 = inlined_call_operand.hbm [shape: bf16[512,128], index: 2, kind: output, shape index: {0}]
  %s3 = inlined_call_operand.hbm [shape: f32[2,2,128], index: 3, kind: output, shape index: {1}]
  %4 = xla_tuple %s2, %s3
  %s5 = sld [smem:[#allocation0]]
  $region57: #{bottleneck_forward.5} parent=0
    _
  %s7 = ssub.s32 1, %s5
  %s8 = scalar_select 0, %s7, %s5
  $region1: #{bottleneck_forward.5} parent=0
    #allocation2 [shape = 'u8[221184]{0}', space=vmem, size = 0x36000, scoped, tag = 'input window, operand 0']
    #allocation3 [shape = 's32[2]{0}', space=sflag, size = 0x8, scoped, tag = 'scoped memory for bottleneck_forward.5']
    #allocation4 [shape = 's32[2]{0}', space=sflag, size = 0x8, scoped, tag = 'scoped memory for bottleneck_forward.5']
    #allocation5 [shape = 'u8[294912]{0}', space=vmem, size = 0x48000, scoped, tag = 'input window, operand 1, single buffered']
    #allocation6 [shape = 's32[1]{0}', space=sflag, size = 0x4, scoped, tag = 'scoped memory for bottleneck_forward.5']
    #allocation7 [shape = 'u8[131072]{0}', space=vmem, size = 0x20000, scoped, tag = 'output window, operand 0']
    #allocation8 [shape = 'u8[2048]{0}', space=vmem, size = 0x800, scoped, tag = 'output window, operand 1']
    #allocation9 [shape = 's32[2]{0}', space=sflag, size = 0x8, scoped, tag = 'scoped memory for bottleneck_forward.5']
    %9 = vsyncpa [#allocation3], 0
    %s10 = scalar_lea.sflag [#allocation3], 1
    %11 = vsyncpa %s10, 0
    %12 = vsyncpa [#allocation6], 0
    %13 = vsyncpa [#allocation4], 0
    %s14 = scalar_lea.sflag [#allocation4], 1
    %15 = vsyncpa %s14, 0
    %16 = vsyncpa [#allocation9], 0
    %s17 = scalar_lea.sflag [#allocation9], 1
    %18 = vsyncpa %s17, 0
    loop: start=0, step=1, limit=4
    $region2: #{bottleneck_forward.5} parent=1 // loop_pre_header
      _
    $region3: #{bottleneck_forward.5} parent=1 // loop_header
      %s20 = sphi 0, %s24
      %p21 = scmp.ge.s32.totalorder %s20, 4
      %s30 = sphi 0, %s32
      %s33 = sphi 0, %s30
      %s34 = sphi 0, %s33
      %s50 = sphi 0, %s34
      %s54 = sphi 0, %s54
      %s56 = sphi 0, %s54
      %s57 = sphi 0, %s56
      %s71 = sphi 0, %s57
      %s77 = sphi 0, %s79
      %s80 = sphi 0, %s77
      %s81 = sphi 0, %s80
      %s97 = sphi 0, %s81
      %s103 = sphi 0, %s105
      %s106 = sphi 0, %s103
      %s107 = sphi 0, %s106
      %s123 = sphi 0, %s107
    $region4: #{bottleneck_forward.5} parent=1 // loop_header_branch
      %23 = sbr.rel (%p21) target = $region8
    $region5: #{bottleneck_forward.5} parent=1 // loop_body
      %s25 = ssub.s32 %s20, 1
      %s26 = ssub.s32 %s20, 2
      %s27 = sadd.s32 %s20, 1
      %s28 = ssub.s32 %s20, %s27
      %p29 = scmp.eq.s32.totalorder %s28, 0
      %s31 = sadd.s32 %s30, 1
      %s32 = scalar_select %p29, %s30, %s31
      %p35 = pneg %p29
      %p36 = scmp.eq.s32.totalorder %s20, 1
      %p37 = por %p35, %p36
      %p38 = scmp.ne.s32.totalorder %s30, %s33
      %p39 = scmp.eq.s32.totalorder %s20, 0
      %p40 = por %p38, %p39
      %p41 = scmp.ne.s32.totalorder %s30, %s33
      %p42 = scmp.eq.s32.totalorder %s25, 1
      %p43 = por %p41, %p42
      %p44 = scmp.ne.s32.totalorder %s33, %s34
      %p45 = scmp.eq.s32.totalorder %s25, 0
      %p46 = por %p44, %p45
      %p47 = scmp.ne.s32.totalorder %s33, %s34
      %p48 = scmp.eq.s32.totalorder %s26, 1
      %p49 = por %p47, %p48
      %p51 = scmp.ne.s32.totalorder %s34, %s50
      %p52 = scmp.eq.s32.totalorder %s26, 0
      %p53 = por %p51, %p52
      %s55 = sadd.s32 %s54, 1
      %p58 = scmp.eq.s32.totalorder %s20, 1
      %p59 = scmp.ne.s32.totalorder %s54, %s56
      %p60 = scmp.eq.s32.totalorder %s20, 0
      %p61 = por %p59, %p60
      %p62 = scmp.ne.s32.totalorder %s54, %s56
      %p63 = scmp.eq.s32.totalorder %s25, 1
      %p64 = por %p62, %p63
      %p65 = scmp.ne.s32.totalorder %s56, %s57
      %p66 = scmp.eq.s32.totalorder %s25, 0
      %p67 = por %p65, %p66
      %p68 = scmp.ne.s32.totalorder %s56, %s57
      %p69 = scmp.eq.s32.totalorder %s26, 1
      %p70 = por %p68, %p69
      %p72 = scmp.ne.s32.totalorder %s57, %s71
      %p73 = scmp.eq.s32.totalorder %s26, 0
      %p74 = por %p72, %p73
      %s75 = ssub.s32 %s20, %s27
      %p76 = scmp.eq.s32.totalorder %s75, 0
      %s78 = sadd.s32 %s77, 1
      %s79 = scalar_select %p76, %s77, %s78
      %p82 = pneg %p76
      %p83 = scmp.eq.s32.totalorder %s20, 1
      %p84 = por %p82, %p83
      %p85 = scmp.ne.s32.totalorder %s77, %s80
      %p86 = scmp.eq.s32.totalorder %s20, 0
      %p87 = por %p85, %p86
      %p88 = scmp.ne.s32.totalorder %s77, %s80
      %p89 = scmp.eq.s32.totalorder %s25, 1
      %p90 = por %p88, %p89
      %p91 = scmp.ne.s32.totalorder %s80, %s81
      %p92 = scmp.eq.s32.totalorder %s25, 0
      %p93 = por %p91, %p92
      %p94 = scmp.ne.s32.totalorder %s80, %s81
      %p95 = scmp.eq.s32.totalorder %s26, 1
      %p96 = por %p94, %p95
      %p98 = scmp.ne.s32.totalorder %s81, %s97
      %p99 = scmp.eq.s32.totalorder %s26, 0
      %p100 = por %p98, %p99
      %s101 = ssub.s32 %s20, %s27
      %p102 = scmp.eq.s32.totalorder %s101, 0
      %s104 = sadd.s32 %s103, 1
      %s105 = scalar_select %p102, %s103, %s104
      %p108 = pneg %p102
      %p109 = scmp.eq.s32.totalorder %s20, 1
      %p110 = por %p108, %p109
      %p111 = scmp.ne.s32.totalorder %s103, %s106
      %p112 = scmp.eq.s32.totalorder %s20, 0
      %p113 = por %p111, %p112
      %p114 = scmp.ne.s32.totalorder %s103, %s106
      %p115 = scmp.eq.s32.totalorder %s25, 1
      %p116 = por %p114, %p115
      %p117 = scmp.ne.s32.totalorder %s106, %s107
      %p118 = scmp.eq.s32.totalorder %s25, 0
      %p119 = por %p117, %p118
      %p120 = scmp.ne.s32.totalorder %s106, %s107
      %p121 = scmp.eq.s32.totalorder %s26, 1
      %p122 = por %p120, %p121
      %p124 = scmp.ne.s32.totalorder %s107, %s123
      %p125 = scmp.eq.s32.totalorder %s26, 0
      %p126 = por %p124, %p125
      %p127 = scmp.le.s32.totalorder 1, %s20
      %p128 = scmp.lt.s32.totalorder %s20, 3
      %p129 = pnand %p127, %p128
      %p130 = pneg %p129
      // Predicated region
      $region9: #{bottleneck_forward.5} parent=5 // pred_check
        _
      $region10: #{bottleneck_forward.5} parent=5 // pred_check_branch
        %132 = sbr.rel (%p129) target = $region12
      $region11: #{bottleneck_forward.5} parent=5 // pred_region
        %s133 = ssub.s32 %s20, 1
        // Predicated region
        $region13: #{bottleneck_forward.5} parent=11 // pred_check
          %p134 = pneg %p67
        $region14: #{bottleneck_forward.5} parent=11 // pred_check_branch
          %136 = sbr.rel (%p134) target = $region16
        $region15: #{bottleneck_forward.5} parent=11 // pred_region
          %s138 = ssub.s32 9216, 9216
          %139 = vsyncadd [#allocation6], %s138
          %s140 = sshll.u32 [#allocation5], 4
          %s141 = int_to_ptr.vmem [resolvable:$true] %s140
          %146 = dma.hbm_to_vmem [thread:$0]  %s1, 9216, %s141, [#allocation6], 64, 64, 4
        $region16: #{bottleneck_forward.5} parent=11 // pred_fallthru
          _
      $region12: #{bottleneck_forward.5} parent=5 // pred_fallthru
        _
      %p147 = scmp.lt.s32.totalorder %s20, 2
      // Predicated region
      $region17: #{bottleneck_forward.5} parent=5 // pred_check
        %p148 = pneg %p147
      $region18: #{bottleneck_forward.5} parent=5 // pred_check_branch
        %150 = sbr.rel (%p148) target = $region20
      $region19: #{bottleneck_forward.5} parent=5 // pred_region
        // Predicated region
        $region21: #{bottleneck_forward.5} parent=19 // pred_check
          %p151 = pneg %p40
        $region22: #{bottleneck_forward.5} parent=19 // pred_check_branch
          %153 = sbr.rel (%p151) target = $region24
        $region23: #{bottleneck_forward.5} parent=19 // pred_region
          %s154 = sand.u32 %s30, 1
          %s155 = scalar_lea.sflag [#allocation3], %s154
          %s156 = sand.u32 %s30, 1
          %s157 = smul.addr %s156, 216
          %s158 = scalar_lea.vmem [#allocation2], %s157
          %s160 = ssub.s32 3456, 3456
          %161 = vsyncadd %s155, %s160
          %s162 = smul.addr %s20, 54
          %s163 = smul.addr %s162, 64
          %s164 = scalar_lea.hbm %s0, %s163
          %s165 = sshll.u32 %s158, 4
          %s166 = int_to_ptr.vmem [resolvable:$true] %s165
          %171 = dma.hbm_to_vmem [thread:$0]  %s164, 3456, %s166, %s155, 64, 64, 4
        $region24: #{bottleneck_forward.5} parent=19 // pred_fallthru
          _
      $region20: #{bottleneck_forward.5} parent=5 // pred_fallthru
        _
      %p172 = scmp.le.s32.totalorder 1, %s20
      %p173 = scmp.lt.s32.totalorder %s20, 3
      %p174 = pnand %p172, %p173
      %p175 = pneg %p174
      // Predicated region
      $region25: #{bottleneck_forward.5} parent=5 // pred_check
        _
      $region26: #{bottleneck_forward.5} parent=5 // pred_check_branch
        %177 = sbr.rel (%p174) target = $region28
      $region27: #{bottleneck_forward.5} parent=5 // pred_region
        %s178 = ssub.s32 %s20, 1
        %s179 = sand.u32 %s33, 1
        %s180 = scalar_lea.sflag [#allocation3], %s179
        %s181 = sand.u32 %s33, 1
        %s182 = smul.addr %s181, 216
        %s183 = scalar_lea.vmem [#allocation2], %s182
        // Predicated region
        $region29: #{bottleneck_forward.5} parent=27 // pred_check
          %p184 = pneg %p46
        $region30: #{bottleneck_forward.5} parent=27 // pred_check_branch
          %186 = sbr.rel (%p184) target = $region32
        $region31: #{bottleneck_forward.5} parent=27 // pred_region
          %187 = dma.done %s180, 3456
        $region32: #{bottleneck_forward.5} parent=27 // pred_fallthru
          _
        // Predicated region
        $region33: #{bottleneck_forward.5} parent=27 // pred_check
          %p188 = pneg %p67
        $region34: #{bottleneck_forward.5} parent=27 // pred_check_branch
          %190 = sbr.rel (%p188) target = $region36
        $region35: #{bottleneck_forward.5} parent=27 // pred_region
          %191 = dma.done [#allocation6], 9216
        $region36: #{bottleneck_forward.5} parent=27 // pred_fallthru
          _
        %s192 = sand.u32 %s33, 1
        %s193 = scalar_lea.sflag [#allocation3], %s192
        %s194 = sand.u32 %s33, 1
        %s195 = smul.addr %s194, 216
        %s196 = scalar_lea.vmem [#allocation2], %s195
        %p197 = pneg %p46
        %p198 = pneg %p43
        %p199 = pneg %p67
        %p200 = pneg %p64
        %p201 = pneg %p93
        %p202 = pneg %p90
        %s203 = sand.u32 %s80, 1
        %s204 = scalar_lea.sflag [#allocation4], %s203
        %s205 = sand.u32 %s80, 1
        %s206 = smul.addr %s205, 128
        %s207 = scalar_lea.vmem [#allocation7], %s206
        %p208 = pneg %p119
        %p209 = pneg %p116
        %s210 = sand.u32 %s106, 1
        %s211 = scalar_lea.sflag [#allocation9], %s210
        %s212 = sand.u32 %s106, 1
        %s213 = smul.addr %s212, 2
        %s214 = scalar_lea.vmem [#allocation8], %s213
        %s215 = smul.u32 32, %s25
        %v217 = vld [vmem:[%s183] sm:$0xf]
        %v218 = vld [vmem:[%s183 + $0x4] sm:$0xf]
        %v219 = vld [vmem:[%s183 + $0xc] sm:$0xf]
        %v220 = vld [vmem:[%s183 + $0x10] sm:$0xf]
        %v221 = vld [vmem:[%s183 + $0x18] sm:$0xf]
        %v222 = vld [vmem:[%s183 + $0x1c] sm:$0xf]
        %v223 = vld [vmem:[%s183 + $0x24] sm:$0xf]
        %v224 = vld [vmem:[%s183 + $0x28] sm:$0xf]
        %v225 = vld [vmem:[%s183 + $0x30] sm:$0xf]
        %v226 = vld [vmem:[%s183 + $0x34] sm:$0xf]
        %v227 = vld [vmem:[%s183 + $0x3c] sm:$0xf]
        %v228 = vld [vmem:[%s183 + $0x40] sm:$0xf]
        %v229 = vld [vmem:[%s183 + $0x48] sm:$0xf]
        %v230 = vld [vmem:[%s183 + $0x4c] sm:$0xf]
        %v231 = vld [vmem:[%s183 + $0x54] sm:$0xf]
        %v232 = vld [vmem:[%s183 + $0x58] sm:$0xf]
        %v233 = vld [vmem:[%s183 + $0x60] sm:$0xf]
        %v234 = vld [vmem:[%s183 + $0x64] sm:$0xf]
        %v235 = vld [vmem:[%s183 + $0x6c] sm:$0xf]
        %v236 = vld [vmem:[%s183 + $0x70] sm:$0xf]
        %v237 = vld [vmem:[%s183 + $0x78] sm:$0xf]
        %v238 = vld [vmem:[%s183 + $0x7c] sm:$0xf]
        %v239 = vld [vmem:[%s183 + $0x84] sm:$0xf]
        %v240 = vld [vmem:[%s183 + $0x88] sm:$0xf]
        %v241 = vld [vmem:[%s183 + $0x90] sm:$0xf]
        %v242 = vld [vmem:[%s183 + $0x94] sm:$0xf]
        %v243 = vld [vmem:[%s183 + $0x9c] sm:$0xf]
        %v244 = vld [vmem:[%s183 + $0xa0] sm:$0xf]
        %v245 = vld [vmem:[%s183 + $0xa8] sm:$0xf]
        %v246 = vld [vmem:[%s183 + $0xac] sm:$0xf]
        %v247 = vld [vmem:[%s183 + $0xb4] sm:$0xf]
        %v248 = vld [vmem:[%s183 + $0xb8] sm:$0xf]
        %v249 = vld [vmem:[%s183 + $0x8] sm:$0x1]
        %v250 = vld [vmem:[%s183 + $0x14] sm:$0x1]
        %v251 = vld [vmem:[%s183 + $0x20] sm:$0x1]
        %v252 = vld [vmem:[%s183 + $0x2c] sm:$0x1]
        %v253 = vld [vmem:[%s183 + $0x38] sm:$0x1]
        %v254 = vld [vmem:[%s183 + $0x44] sm:$0x1]
        %v255 = vld [vmem:[%s183 + $0x50] sm:$0x1]
        %v256 = vld [vmem:[%s183 + $0x5c] sm:$0x1]
        %v257 = vld [vmem:[%s183 + $0x68] sm:$0x1]
        %v258 = vld [vmem:[%s183 + $0x74] sm:$0x1]
        %v259 = vld [vmem:[%s183 + $0x80] sm:$0x1]
        %v260 = vld [vmem:[%s183 + $0x8c] sm:$0x1]
        %v261 = vld [vmem:[%s183 + $0x98] sm:$0x1]
        %v262 = vld [vmem:[%s183 + $0xa4] sm:$0x1]
        %v263 = vld [vmem:[%s183 + $0xb0] sm:$0x1]
        %v264 = vld [vmem:[%s183 + $0xbc] sm:$0x1]
        %vm265 = vsmask.f32 3328
        %vm266 = vsmask.f32 7440
        %vm267 = vmor %vm265, %vm266
        %v269 = vshrl.u32 %v217, 16
        %v271 = vrot.slane %v269, 4
        %v272 = vshll.u32 %v217, 16
        %v274 = vrot.slane %v272, 5
        %v275 = vor.u32 %v271, %v274
        %v276 = vrot.slane %v275, 4
        %v278 = vshll.u32 %v218, 16
        %v280 = vrot.slane %v278, 5
        %v281 = vsel %vm267, %v276, %v280
        %v282 = vshrl.u32 %v218, 16
        %v284 = vrot.slane %v282, 4
        %v285 = vor.u32 %v284, %v280
        %v286 = vrot.slane %v285, 4
        %v288 = vshll.u32 %v249, 16
        %v290 = vrot.slane %v288, 5
        %v291 = vsel %vm267, %v286, %v290
        %v293 = vshrl.u32 %v219, 16
        %v295 = vrot.slane %v293, 4
        %v296 = vshll.u32 %v219, 16
        %v298 = vrot.slane %v296, 5
        %v299 = vor.u32 %v295, %v298
        %v300 = vrot.slane %v299, 4
        %v302 = vshll.u32 %v220, 16
        %v304 = vrot.slane %v302, 5
        %v305 = vsel %vm267, %v300, %v304
        %v306 = vshrl.u32 %v220, 16
        %v308 = vrot.slane %v306, 4
        %v309 = vor.u32 %v308, %v304
        %v310 = vrot.slane %v309, 4
        %v312 = vshll.u32 %v250, 16
        %v314 = vrot.slane %v312, 5
        %v315 = vsel %vm267, %v310, %v314
        %v317 = vshrl.u32 %v221, 16
        %v319 = vrot.slane %v317, 4
        %v320 = vshll.u32 %v221, 16
        %v322 = vrot.slane %v320, 5
        %v323 = vor.u32 %v319, %v322
        %v324 = vrot.slane %v323, 4
        %v326 = vshll.u32 %v222, 16
        %v328 = vrot.slane %v326, 5
        %v329 = vsel %vm267, %v324, %v328
        %v330 = vshrl.u32 %v222, 16
        %v332 = vrot.slane %v330, 4
        %v333 = vor.u32 %v332, %v328
        %v334 = vrot.slane %v333, 4
        %v336 = vshll.u32 %v251, 16
        %v338 = vrot.slane %v336, 5
        %v339 = vsel %vm267, %v334, %v338
        %v341 = vshrl.u32 %v223, 16
        %v343 = vrot.slane %v341, 4
        %v344 = vshll.u32 %v223, 16
        %v346 = vrot.slane %v344, 5
        %v347 = vor.u32 %v343, %v346
        %v348 = vrot.slane %v347, 4
        %v350 = vshll.u32 %v224, 16
        %v352 = vrot.slane %v350, 5
        %v353 = vsel %vm267, %v348, %v352
        %v354 = vshrl.u32 %v224, 16
        %v356 = vrot.slane %v354, 4
        %v357 = vor.u32 %v356, %v352
        %v358 = vrot.slane %v357, 4
        %v360 = vshll.u32 %v252, 16
        %v362 = vrot.slane %v360, 5
        %v363 = vsel %vm267, %v358, %v362
        %v365 = vshrl.u32 %v225, 16
        %v367 = vrot.slane %v365, 4
        %v368 = vshll.u32 %v225, 16
        %v370 = vrot.slane %v368, 5
        %v371 = vor.u32 %v367, %v370
        %v372 = vrot.slane %v371, 4
        %v374 = vshll.u32 %v226, 16
        %v376 = vrot.slane %v374, 5
        %v377 = vsel %vm267, %v372, %v376
        %v378 = vshrl.u32 %v226, 16
        %v380 = vrot.slane %v378, 4
        %v381 = vor.u32 %v380, %v376
        %v382 = vrot.slane %v381, 4
        %v384 = vshll.u32 %v253, 16
        %v386 = vrot.slane %v384, 5
        %v387 = vsel %vm267, %v382, %v386
        %v389 = vshrl.u32 %v227, 16
        %v391 = vrot.slane %v389, 4
        %v392 = vshll.u32 %v227, 16
        %v394 = vrot.slane %v392, 5
        %v395 = vor.u32 %v391, %v394
        %v396 = vrot.slane %v395, 4
        %v398 = vshll.u32 %v228, 16
        %v400 = vrot.slane %v398, 5
        %v401 = vsel %vm267, %v396, %v400
        %v402 = vshrl.u32 %v228, 16
        %v404 = vrot.slane %v402, 4
        %v405 = vor.u32 %v404, %v400
        %v406 = vrot.slane %v405, 4
        %v408 = vshll.u32 %v254, 16
        %v410 = vrot.slane %v408, 5
        %v411 = vsel %vm267, %v406, %v410
        %v413 = vshrl.u32 %v229, 16
        %v415 = vrot.slane %v413, 4
        %v416 = vshll.u32 %v229, 16
        %v418 = vrot.slane %v416, 5
        %v419 = vor.u32 %v415, %v418
        %v420 = vrot.slane %v419, 4
        %v422 = vshll.u32 %v230, 16
        %v424 = vrot.slane %v422, 5
        %v425 = vsel %vm267, %v420, %v424
        %v426 = vshrl.u32 %v230, 16
        %v428 = vrot.slane %v426, 4
        %v429 = vor.u32 %v428, %v424
        %v430 = vrot.slane %v429, 4
        %v432 = vshll.u32 %v255, 16
        %v434 = vrot.slane %v432, 5
        %v435 = vsel %vm267, %v430, %v434
        %v437 = vshrl.u32 %v231, 16
        %v439 = vrot.slane %v437, 4
        %v440 = vshll.u32 %v231, 16
        %v442 = vrot.slane %v440, 5
        %v443 = vor.u32 %v439, %v442
        %v444 = vrot.slane %v443, 4
        %v446 = vshll.u32 %v232, 16
        %v448 = vrot.slane %v446, 5
        %v449 = vsel %vm267, %v444, %v448
        %v450 = vshrl.u32 %v232, 16
        %v452 = vrot.slane %v450, 4
        %v453 = vor.u32 %v452, %v448
        %v454 = vrot.slane %v453, 4
        %v456 = vshll.u32 %v256, 16
        %v458 = vrot.slane %v456, 5
        %v459 = vsel %vm267, %v454, %v458
        %v461 = vshrl.u32 %v233, 16
        %v463 = vrot.slane %v461, 4
        %v464 = vshll.u32 %v233, 16
        %v466 = vrot.slane %v464, 5
        %v467 = vor.u32 %v463, %v466
        %v468 = vrot.slane %v467, 4
        %v470 = vshll.u32 %v234, 16
        %v472 = vrot.slane %v470, 5
        %v473 = vsel %vm267, %v468, %v472
        %v474 = vshrl.u32 %v234, 16
        %v476 = vrot.slane %v474, 4
        %v477 = vor.u32 %v476, %v472
        %v478 = vrot.slane %v477, 4
        %v480 = vshll.u32 %v257, 16
        %v482 = vrot.slane %v480, 5
        %v483 = vsel %vm267, %v478, %v482
        %v485 = vshrl.u32 %v235, 16
        %v487 = vrot.slane %v485, 4
        %v488 = vshll.u32 %v235, 16
        %v490 = vrot.slane %v488, 5
        %v491 = vor.u32 %v487, %v490
        %v492 = vrot.slane %v491, 4
        %v494 = vshll.u32 %v236, 16
        %v496 = vrot.slane %v494, 5
        %v497 = vsel %vm267, %v492, %v496
        %v498 = vshrl.u32 %v236, 16
        %v500 = vrot.slane %v498, 4
        %v501 = vor.u32 %v500, %v496
        %v502 = vrot.slane %v501, 4
        %v504 = vshll.u32 %v258, 16
        %v506 = vrot.slane %v504, 5
        %v507 = vsel %vm267, %v502, %v506
        %v509 = vshrl.u32 %v237, 16
        %v511 = vrot.slane %v509, 4
        %v512 = vshll.u32 %v237, 16
        %v514 = vrot.slane %v512, 5
        %v515 = vor.u32 %v511, %v514
        %v516 = vrot.slane %v515, 4
        %v518 = vshll.u32 %v238, 16
        %v520 = vrot.slane %v518, 5
        %v521 = vsel %vm267, %v516, %v520
        %v522 = vshrl.u32 %v238, 16
        %v524 = vrot.slane %v522, 4
        %v525 = vor.u32 %v524, %v520
        %v526 = vrot.slane %v525, 4
        %v528 = vshll.u32 %v259, 16
        %v530 = vrot.slane %v528, 5
        %v531 = vsel %vm267, %v526, %v530
        %v533 = vshrl.u32 %v239, 16
        %v535 = vrot.slane %v533, 4
        %v536 = vshll.u32 %v239, 16
        %v538 = vrot.slane %v536, 5
        %v539 = vor.u32 %v535, %v538
        %v540 = vrot.slane %v539, 4
        %v542 = vshll.u32 %v240, 16
        %v544 = vrot.slane %v542, 5
        %v545 = vsel %vm267, %v540, %v544
        %v546 = vshrl.u32 %v240, 16
        %v548 = vrot.slane %v546, 4
        %v549 = vor.u32 %v548, %v544
        %v550 = vrot.slane %v549, 4
        %v552 = vshll.u32 %v260, 16
        %v554 = vrot.slane %v552, 5
        %v555 = vsel %vm267, %v550, %v554
        %v557 = vshrl.u32 %v241, 16
        %v559 = vrot.slane %v557, 4
        %v560 = vshll.u32 %v241, 16
        %v562 = vrot.slane %v560, 5
        %v563 = vor.u32 %v559, %v562
        %v564 = vrot.slane %v563, 4
        %v566 = vshll.u32 %v242, 16
        %v568 = vrot.slane %v566, 5
        %v569 = vsel %vm267, %v564, %v568
        %v570 = vshrl.u32 %v242, 16
        %v572 = vrot.slane %v570, 4
        %v573 = vor.u32 %v572, %v568
        %v574 = vrot.slane %v573, 4
        %v576 = vshll.u32 %v261, 16
        %v578 = vrot.slane %v576, 5
        %v579 = vsel %vm267, %v574, %v578
        %v581 = vshrl.u32 %v243, 16
        %v583 = vrot.slane %v581, 4
        %v584 = vshll.u32 %v243, 16
        %v586 = vrot.slane %v584, 5
        %v587 = vor.u32 %v583, %v586
        %v588 = vrot.slane %v587, 4
        %v590 = vshll.u32 %v244, 16
        %v592 = vrot.slane %v590, 5
        %v593 = vsel %vm267, %v588, %v592
        %v594 = vshrl.u32 %v244, 16
        %v596 = vrot.slane %v594, 4
        %v597 = vor.u32 %v596, %v592
        %v598 = vrot.slane %v597, 4
        %v600 = vshll.u32 %v262, 16
        %v602 = vrot.slane %v600, 5
        %v603 = vsel %vm267, %v598, %v602
        %v605 = vshrl.u32 %v245, 16
        %v607 = vrot.slane %v605, 4
        %v608 = vshll.u32 %v245, 16
        %v610 = vrot.slane %v608, 5
        %v611 = vor.u32 %v607, %v610
        %v612 = vrot.slane %v611, 4
        %v614 = vshll.u32 %v246, 16
        %v616 = vrot.slane %v614, 5
        %v617 = vsel %vm267, %v612, %v616
        %v618 = vshrl.u32 %v246, 16
        %v620 = vrot.slane %v618, 4
        %v621 = vor.u32 %v620, %v616
        %v622 = vrot.slane %v621, 4
        %v624 = vshll.u32 %v263, 16
        %v626 = vrot.slane %v624, 5
        %v627 = vsel %vm267, %v622, %v626
        %v629 = vshrl.u32 %v247, 16
        %v631 = vrot.slane %v629, 4
        %v632 = vshll.u32 %v247, 16
        %v634 = vrot.slane %v632, 5
        %v635 = vor.u32 %v631, %v634
        %v636 = vrot.slane %v635, 4
        %v638 = vshll.u32 %v248, 16
        %v640 = vrot.slane %v638, 5
        %v641 = vsel %vm267, %v636, %v640
        %v642 = vshrl.u32 %v248, 16
        %v644 = vrot.slane %v642, 4
        %v645 = vor.u32 %v644, %v640
        %v646 = vrot.slane %v645, 4
        %v648 = vshll.u32 %v264, 16
        %v650 = vrot.slane %v648, 5
        %v651 = vsel %vm267, %v646, %v650
        %v652 = vld [vmem:[%s183] sm:$0xe]
        %v653 = vld [vmem:[%s183 + $0xc] sm:$0xe]
        %v654 = vld [vmem:[%s183 + $0x18] sm:$0xe]
        %v655 = vld [vmem:[%s183 + $0x24] sm:$0xe]
        %v656 = vld [vmem:[%s183 + $0x30] sm:$0xe]
        %v657 = vld [vmem:[%s183 + $0x3c] sm:$0xe]
        %v658 = vld [vmem:[%s183 + $0x48] sm:$0xe]
        %v659 = vld [vmem:[%s183 + $0x54] sm:$0xe]
        %v660 = vld [vmem:[%s183 + $0x60] sm:$0xe]
        %v661 = vld [vmem:[%s183 + $0x6c] sm:$0xe]
        %v662 = vld [vmem:[%s183 + $0x78] sm:$0xe]
        %v663 = vld [vmem:[%s183 + $0x84] sm:$0xe]
        %v664 = vld [vmem:[%s183 + $0x90] sm:$0xe]
        %v665 = vld [vmem:[%s183 + $0x9c] sm:$0xe]
        %v666 = vld [vmem:[%s183 + $0xa8] sm:$0xe]
        %v667 = vld [vmem:[%s183 + $0xb4] sm:$0xe]
        %vm716 = vcmask 1042432
        %vm717 = vcmask 1046532
        %vm718 = vmor %vm716, %vm717
        %v719 = vrot.slane %v652, 5
        %v720 = vrot.slane %v719, 4
        %v721 = vrot.slane %v218, 5
        %v722 = vsel %vm718, %v720, %v721
        %v723 = vrot.slane %v721, 4
        %v724 = vrot.slane %v249, 5
        %v725 = vsel %vm718, %v723, %v724
        %v726 = vrot.slane %v653, 5
        %v727 = vrot.slane %v726, 4
        %v728 = vrot.slane %v220, 5
        %v729 = vsel %vm718, %v727, %v728
        %v730 = vrot.slane %v728, 4
        %v731 = vrot.slane %v250, 5
        %v732 = vsel %vm718, %v730, %v731
        %v733 = vrot.slane %v654, 5
        %v734 = vrot.slane %v733, 4
        %v735 = vrot.slane %v222, 5
        %v736 = vsel %vm718, %v734, %v735
        %v737 = vrot.slane %v735, 4
        %v738 = vrot.slane %v251, 5
        %v739 = vsel %vm718, %v737, %v738
        %v740 = vrot.slane %v655, 5
        %v741 = vrot.slane %v740, 4
        %v742 = vrot.slane %v224, 5
        %v743 = vsel %vm718, %v741, %v742
        %v744 = vrot.slane %v742, 4
        %v745 = vrot.slane %v252, 5
        %v746 = vsel %vm718, %v744, %v745
        %v747 = vrot.slane %v656, 5
        %v748 = vrot.slane %v747, 4
        %v749 = vrot.slane %v226, 5
        %v750 = vsel %vm718, %v748, %v749
        %v751 = vrot.slane %v749, 4
        %v752 = vrot.slane %v253, 5
        %v753 = vsel %vm718, %v751, %v752
        %v754 = vrot.slane %v657, 5
        %v755 = vrot.slane %v754, 4
        %v756 = vrot.slane %v228, 5
        %v757 = vsel %vm718, %v755, %v756
        %v758 = vrot.slane %v756, 4
        %v759 = vrot.slane %v254, 5
        %v760 = vsel %vm718, %v758, %v759
        %v761 = vrot.slane %v658, 5
        %v762 = vrot.slane %v761, 4
        %v763 = vrot.slane %v230, 5
        %v764 = vsel %vm718, %v762, %v763
        %v765 = vrot.slane %v763, 4
        %v766 = vrot.slane %v255, 5
        %v767 = vsel %vm718, %v765, %v766
        %v768 = vrot.slane %v659, 5
        %v769 = vrot.slane %v768, 4
        %v770 = vrot.slane %v232, 5
        %v771 = vsel %vm718, %v769, %v770
        %v772 = vrot.slane %v770, 4
        %v773 = vrot.slane %v256, 5
        %v774 = vsel %vm718, %v772, %v773
        %v775 = vrot.slane %v660, 5
        %v776 = vrot.slane %v775, 4
        %v777 = vrot.slane %v234, 5
        %v778 = vsel %vm718, %v776, %v777
        %v779 = vrot.slane %v777, 4
        %v780 = vrot.slane %v257, 5
        %v781 = vsel %vm718, %v779, %v780
        %v782 = vrot.slane %v661, 5
        %v783 = vrot.slane %v782, 4
        %v784 = vrot.slane %v236, 5
        %v785 = vsel %vm718, %v783, %v784
        %v786 = vrot.slane %v784, 4
        %v787 = vrot.slane %v258, 5
        %v788 = vsel %vm718, %v786, %v787
        %v789 = vrot.slane %v662, 5
        %v790 = vrot.slane %v789, 4
        %v791 = vrot.slane %v238, 5
        %v792 = vsel %vm718, %v790, %v791
        %v793 = vrot.slane %v791, 4
        %v794 = vrot.slane %v259, 5
        %v795 = vsel %vm718, %v793, %v794
        %v796 = vrot.slane %v663, 5
        %v797 = vrot.slane %v796, 4
        %v798 = vrot.slane %v240, 5
        %v799 = vsel %vm718, %v797, %v798
        %v800 = vrot.slane %v798, 4
        %v801 = vrot.slane %v260, 5
        %v802 = vsel %vm718, %v800, %v801
        %v803 = vrot.slane %v664, 5
        %v804 = vrot.slane %v803, 4
        %v805 = vrot.slane %v242, 5
        %v806 = vsel %vm718, %v804, %v805
        %v807 = vrot.slane %v805, 4
        %v808 = vrot.slane %v261, 5
        %v809 = vsel %vm718, %v807, %v808
        %v810 = vrot.slane %v665, 5
        %v811 = vrot.slane %v810, 4
        %v812 = vrot.slane %v244, 5
        %v813 = vsel %vm718, %v811, %v812
        %v814 = vrot.slane %v812, 4
        %v815 = vrot.slane %v262, 5
        %v816 = vsel %vm718, %v814, %v815
        %v817 = vrot.slane %v666, 5
        %v818 = vrot.slane %v817, 4
        %v819 = vrot.slane %v246, 5
        %v820 = vsel %vm718, %v818, %v819
        %v821 = vrot.slane %v819, 4
        %v822 = vrot.slane %v263, 5
        %v823 = vsel %vm718, %v821, %v822
        %v824 = vrot.slane %v667, 5
        %v825 = vrot.slane %v824, 4
        %v826 = vrot.slane %v248, 5
        %v827 = vsel %vm718, %v825, %v826
        %v828 = vrot.slane %v826, 4
        %v829 = vrot.slane %v264, 5
        %v830 = vsel %vm718, %v828, %v829
        %s831 = scalar_lea.vmem %s183, 12 [#allocation2]
        %v832 = vld [vmem:[%s831] sm:$0xf]
        %v833 = vld [vmem:[%s831 + $0x4] sm:$0xf]
        %v834 = vld [vmem:[%s831 + $0xc] sm:$0xf]
        %v835 = vld [vmem:[%s831 + $0x10] sm:$0xf]
        %v836 = vld [vmem:[%s831 + $0x18] sm:$0xf]
        %v837 = vld [vmem:[%s831 + $0x1c] sm:$0xf]
        %v838 = vld [vmem:[%s831 + $0x24] sm:$0xf]
        %v839 = vld [vmem:[%s831 + $0x28] sm:$0xf]
        %v840 = vld [vmem:[%s831 + $0x30] sm:$0xf]
        %v841 = vld [vmem:[%s831 + $0x34] sm:$0xf]
        %v842 = vld [vmem:[%s831 + $0x3c] sm:$0xf]
        %v843 = vld [vmem:[%s831 + $0x40] sm:$0xf]
        %v844 = vld [vmem:[%s831 + $0x48] sm:$0xf]
        %v845 = vld [vmem:[%s831 + $0x4c] sm:$0xf]
        %v846 = vld [vmem:[%s831 + $0x54] sm:$0xf]
        %v847 = vld [vmem:[%s831 + $0x58] sm:$0xf]
        %v848 = vld [vmem:[%s831 + $0x60] sm:$0xf]
        %v849 = vld [vmem:[%s831 + $0x64] sm:$0xf]
        %v850 = vld [vmem:[%s831 + $0x6c] sm:$0xf]
        %v851 = vld [vmem:[%s831 + $0x70] sm:$0xf]
        %v852 = vld [vmem:[%s831 + $0x78] sm:$0xf]
        %v853 = vld [vmem:[%s831 + $0x7c] sm:$0xf]
        %v854 = vld [vmem:[%s831 + $0x84] sm:$0xf]
        %v855 = vld [vmem:[%s831 + $0x88] sm:$0xf]
        %v856 = vld [vmem:[%s831 + $0x90] sm:$0xf]
        %v857 = vld [vmem:[%s831 + $0x94] sm:$0xf]
        %v858 = vld [vmem:[%s831 + $0x9c] sm:$0xf]
        %v859 = vld [vmem:[%s831 + $0xa0] sm:$0xf]
        %v860 = vld [vmem:[%s831 + $0xa8] sm:$0xf]
        %v861 = vld [vmem:[%s831 + $0xac] sm:$0xf]
        %v862 = vld [vmem:[%s831 + $0xb4] sm:$0xf]
        %v863 = vld [vmem:[%s831 + $0xb8] sm:$0xf]
        %v864 = vld [vmem:[%s831 + $0x8] sm:$0x1]
        %v865 = vld [vmem:[%s831 + $0x14] sm:$0x1]
        %v866 = vld [vmem:[%s831 + $0x20] sm:$0x1]
        %v867 = vld [vmem:[%s831 + $0x2c] sm:$0x1]
        %v868 = vld [vmem:[%s831 + $0x38] sm:$0x1]
        %v869 = vld [vmem:[%s831 + $0x44] sm:$0x1]
        %v870 = vld [vmem:[%s831 + $0x50] sm:$0x1]
        %v871 = vld [vmem:[%s831 + $0x5c] sm:$0x1]
        %v872 = vld [vmem:[%s831 + $0x68] sm:$0x1]
        %v873 = vld [vmem:[%s831 + $0x74] sm:$0x1]
        %v874 = vld [vmem:[%s831 + $0x80] sm:$0x1]
        %v875 = vld [vmem:[%s831 + $0x8c] sm:$0x1]
        %v876 = vld [vmem:[%s831 + $0x98] sm:$0x1]
        %v877 = vld [vmem:[%s831 + $0xa4] sm:$0x1]
        %v878 = vld [vmem:[%s831 + $0xb0] sm:$0x1]
        %v879 = vld [vmem:[%s831 + $0xbc] sm:$0x1]
        %v881 = vshrl.u32 %v832, 16
        %v883 = vrot.slane %v881, 4
        %v884 = vshll.u32 %v832, 16
        %v886 = vrot.slane %v884, 5
        %v887 = vor.u32 %v883, %v886
        %v888 = vrot.slane %v887, 4
        %v890 = vshll.u32 %v833, 16
        %v892 = vrot.slane %v890, 5
        %v893 = vsel %vm267, %v888, %v892
        %v894 = vshrl.u32 %v833, 16
        %v896 = vrot.slane %v894, 4
        %v897 = vor.u32 %v896, %v892
        %v898 = vrot.slane %v897, 4
        %v900 = vshll.u32 %v864, 16
        %v902 = vrot.slane %v900, 5
        %v903 = vsel %vm267, %v898, %v902
        %v905 = vshrl.u32 %v834, 16
        %v907 = vrot.slane %v905, 4
        %v908 = vshll.u32 %v834, 16
        %v910 = vrot.slane %v908, 5
        %v911 = vor.u32 %v907, %v910
        %v912 = vrot.slane %v911, 4
        %v914 = vshll.u32 %v835, 16
        %v916 = vrot.slane %v914, 5
        %v917 = vsel %vm267, %v912, %v916
        %v918 = vshrl.u32 %v835, 16
        %v920 = vrot.slane %v918, 4
        %v921 = vor.u32 %v920, %v916
        %v922 = vrot.slane %v921, 4
        %v924 = vshll.u32 %v865, 16
        %v926 = vrot.slane %v924, 5
        %v927 = vsel %vm267, %v922, %v926
        %v929 = vshrl.u32 %v836, 16
        %v931 = vrot.slane %v929, 4
        %v932 = vshll.u32 %v836, 16
        %v934 = vrot.slane %v932, 5
        %v935 = vor.u32 %v931, %v934
        %v936 = vrot.slane %v935, 4
        %v938 = vshll.u32 %v837, 16
        %v940 = vrot.slane %v938, 5
        %v941 = vsel %vm267, %v936, %v940
        %v942 = vshrl.u32 %v837, 16
        %v944 = vrot.slane %v942, 4
        %v945 = vor.u32 %v944, %v940
        %v946 = vrot.slane %v945, 4
        %v948 = vshll.u32 %v866, 16
        %v950 = vrot.slane %v948, 5
        %v951 = vsel %vm267, %v946, %v950
        %v953 = vshrl.u32 %v838, 16
        %v955 = vrot.slane %v953, 4
        %v956 = vshll.u32 %v838, 16
        %v958 = vrot.slane %v956, 5
        %v959 = vor.u32 %v955, %v958
        %v960 = vrot.slane %v959, 4
        %v962 = vshll.u32 %v839, 16
        %v964 = vrot.slane %v962, 5
        %v965 = vsel %vm267, %v960, %v964
        %v966 = vshrl.u32 %v839, 16
        %v968 = vrot.slane %v966, 4
        %v969 = vor.u32 %v968, %v964
        %v970 = vrot.slane %v969, 4
        %v972 = vshll.u32 %v867, 16
        %v974 = vrot.slane %v972, 5
        %v975 = vsel %vm267, %v970, %v974
        %v977 = vshrl.u32 %v840, 16
        %v979 = vrot.slane %v977, 4
        %v980 = vshll.u32 %v840, 16
        %v982 = vrot.slane %v980, 5
        %v983 = vor.u32 %v979, %v982
        %v984 = vrot.slane %v983, 4
        %v986 = vshll.u32 %v841, 16
        %v988 = vrot.slane %v986, 5
        %v989 = vsel %vm267, %v984, %v988
        %v990 = vshrl.u32 %v841, 16
        %v992 = vrot.slane %v990, 4
        %v993 = vor.u32 %v992, %v988
        %v994 = vrot.slane %v993, 4
        %v996 = vshll.u32 %v868, 16
        %v998 = vrot.slane %v996, 5
        %v999 = vsel %vm267, %v994, %v998
        %v1001 = vshrl.u32 %v842, 16
        %v1003 = vrot.slane %v1001, 4
        %v1004 = vshll.u32 %v842, 16
        %v1006 = vrot.slane %v1004, 5
        %v1007 = vor.u32 %v1003, %v1006
        %v1008 = vrot.slane %v1007, 4
        %v1010 = vshll.u32 %v843, 16
        %v1012 = vrot.slane %v1010, 5
        %v1013 = vsel %vm267, %v1008, %v1012
        %v1014 = vshrl.u32 %v843, 16
        %v1016 = vrot.slane %v1014, 4
        %v1017 = vor.u32 %v1016, %v1012
        %v1018 = vrot.slane %v1017, 4
        %v1020 = vshll.u32 %v869, 16
        %v1022 = vrot.slane %v1020, 5
        %v1023 = vsel %vm267, %v1018, %v1022
        %v1025 = vshrl.u32 %v844, 16
        %v1027 = vrot.slane %v1025, 4
        %v1028 = vshll.u32 %v844, 16
        %v1030 = vrot.slane %v1028, 5
        %v1031 = vor.u32 %v1027, %v1030
        %v1032 = vrot.slane %v1031, 4
        %v1034 = vshll.u32 %v845, 16
        %v1036 = vrot.slane %v1034, 5
        %v1037 = vsel %vm267, %v1032, %v1036
        %v1038 = vshrl.u32 %v845, 16
        %v1040 = vrot.slane %v1038, 4
        %v1041 = vor.u32 %v1040, %v1036
        %v1042 = vrot.slane %v1041, 4
        %v1044 = vshll.u32 %v870, 16
        %v1046 = vrot.slane %v1044, 5
        %v1047 = vsel %vm267, %v1042, %v1046
        %v1049 = vshrl.u32 %v846, 16
        %v1051 = vrot.slane %v1049, 4
        %v1052 = vshll.u32 %v846, 16
        %v1054 = vrot.slane %v1052, 5
        %v1055 = vor.u32 %v1051, %v1054
        %v1056 = vrot.slane %v1055, 4
        %v1058 = vshll.u32 %v847, 16
        %v1060 = vrot.slane %v1058, 5
        %v1061 = vsel %vm267, %v1056, %v1060
        %v1062 = vshrl.u32 %v847, 16
        %v1064 = vrot.slane %v1062, 4
        %v1065 = vor.u32 %v1064, %v1060
        %v1066 = vrot.slane %v1065, 4
        %v1068 = vshll.u32 %v871, 16
        %v1070 = vrot.slane %v1068, 5
        %v1071 = vsel %vm267, %v1066, %v1070
        %v1073 = vshrl.u32 %v848, 16
        %v1075 = vrot.slane %v1073, 4
        %v1076 = vshll.u32 %v848, 16
        %v1078 = vrot.slane %v1076, 5
        %v1079 = vor.u32 %v1075, %v1078
        %v1080 = vrot.slane %v1079, 4
        %v1082 = vshll.u32 %v849, 16
        %v1084 = vrot.slane %v1082, 5
        %v1085 = vsel %vm267, %v1080, %v1084
        %v1086 = vshrl.u32 %v849, 16
        %v1088 = vrot.slane %v1086, 4
        %v1089 = vor.u32 %v1088, %v1084
        %v1090 = vrot.slane %v1089, 4
        %v1092 = vshll.u32 %v872, 16
        %v1094 = vrot.slane %v1092, 5
        %v1095 = vsel %vm267, %v1090, %v1094
        %v1097 = vshrl.u32 %v850, 16
        %v1099 = vrot.slane %v1097, 4
        %v1100 = vshll.u32 %v850, 16
        %v1102 = vrot.slane %v1100, 5
        %v1103 = vor.u32 %v1099, %v1102
        %v1104 = vrot.slane %v1103, 4
        %v1106 = vshll.u32 %v851, 16
        %v1108 = vrot.slane %v1106, 5
        %v1109 = vsel %vm267, %v1104, %v1108
        %v1110 = vshrl.u32 %v851, 16
        %v1112 = vrot.slane %v1110, 4
        %v1113 = vor.u32 %v1112, %v1108
        %v1114 = vrot.slane %v1113, 4
        %v1116 = vshll.u32 %v873, 16
        %v1118 = vrot.slane %v1116, 5
        %v1119 = vsel %vm267, %v1114, %v1118
        %v1121 = vshrl.u32 %v852, 16
        %v1123 = vrot.slane %v1121, 4
        %v1124 = vshll.u32 %v852, 16
        %v1126 = vrot.slane %v1124, 5
        %v1127 = vor.u32 %v1123, %v1126
        %v1128 = vrot.slane %v1127, 4
        %v1130 = vshll.u32 %v853, 16
        %v1132 = vrot.slane %v1130, 5
        %v1133 = vsel %vm267, %v1128, %v1132
        %v1134 = vshrl.u32 %v853, 16
        %v1136 = vrot.slane %v1134, 4
        %v1137 = vor.u32 %v1136, %v1132
        %v1138 = vrot.slane %v1137, 4
        %v1140 = vshll.u32 %v874, 16
        %v1142 = vrot.slane %v1140, 5
        %v1143 = vsel %vm267, %v1138, %v1142
        %v1145 = vshrl.u32 %v854, 16
        %v1147 = vrot.slane %v1145, 4
        %v1148 = vshll.u32 %v854, 16
        %v1150 = vrot.slane %v1148, 5
        %v1151 = vor.u32 %v1147, %v1150
        %v1152 = vrot.slane %v1151, 4
        %v1154 = vshll.u32 %v855, 16
        %v1156 = vrot.slane %v1154, 5
        %v1157 = vsel %vm267, %v1152, %v1156
        %v1158 = vshrl.u32 %v855, 16
        %v1160 = vrot.slane %v1158, 4
        %v1161 = vor.u32 %v1160, %v1156
        %v1162 = vrot.slane %v1161, 4
        %v1164 = vshll.u32 %v875, 16
        %v1166 = vrot.slane %v1164, 5
        %v1167 = vsel %vm267, %v1162, %v1166
        %v1169 = vshrl.u32 %v856, 16
        %v1171 = vrot.slane %v1169, 4
        %v1172 = vshll.u32 %v856, 16
        %v1174 = vrot.slane %v1172, 5
        %v1175 = vor.u32 %v1171, %v1174
        %v1176 = vrot.slane %v1175, 4
        %v1178 = vshll.u32 %v857, 16
        %v1180 = vrot.slane %v1178, 5
        %v1181 = vsel %vm267, %v1176, %v1180
        %v1182 = vshrl.u32 %v857, 16
        %v1184 = vrot.slane %v1182, 4
        %v1185 = vor.u32 %v1184, %v1180
        %v1186 = vrot.slane %v1185, 4
        %v1188 = vshll.u32 %v876, 16
        %v1190 = vrot.slane %v1188, 5
        %v1191 = vsel %vm267, %v1186, %v1190
        %v1193 = vshrl.u32 %v858, 16
        %v1195 = vrot.slane %v1193, 4
        %v1196 = vshll.u32 %v858, 16
        %v1198 = vrot.slane %v1196, 5
        %v1199 = vor.u32 %v1195, %v1198
        %v1200 = vrot.slane %v1199, 4
        %v1202 = vshll.u32 %v859, 16
        %v1204 = vrot.slane %v1202, 5
        %v1205 = vsel %vm267, %v1200, %v1204
        %v1206 = vshrl.u32 %v859, 16
        %v1208 = vrot.slane %v1206, 4
        %v1209 = vor.u32 %v1208, %v1204
        %v1210 = vrot.slane %v1209, 4
        %v1212 = vshll.u32 %v877, 16
        %v1214 = vrot.slane %v1212, 5
        %v1215 = vsel %vm267, %v1210, %v1214
        %v1217 = vshrl.u32 %v860, 16
        %v1219 = vrot.slane %v1217, 4
        %v1220 = vshll.u32 %v860, 16
        %v1222 = vrot.slane %v1220, 5
        %v1223 = vor.u32 %v1219, %v1222
        %v1224 = vrot.slane %v1223, 4
        %v1226 = vshll.u32 %v861, 16
        %v1228 = vrot.slane %v1226, 5
        %v1229 = vsel %vm267, %v1224, %v1228
        %v1230 = vshrl.u32 %v861, 16
        %v1232 = vrot.slane %v1230, 4
        %v1233 = vor.u32 %v1232, %v1228
        %v1234 = vrot.slane %v1233, 4
        %v1236 = vshll.u32 %v878, 16
        %v1238 = vrot.slane %v1236, 5
        %v1239 = vsel %vm267, %v1234, %v1238
        %v1241 = vshrl.u32 %v862, 16
        %v1243 = vrot.slane %v1241, 4
        %v1244 = vshll.u32 %v862, 16
        %v1246 = vrot.slane %v1244, 5
        %v1247 = vor.u32 %v1243, %v1246
        %v1248 = vrot.slane %v1247, 4
        %v1250 = vshll.u32 %v863, 16
        %v1252 = vrot.slane %v1250, 5
        %v1253 = vsel %vm267, %v1248, %v1252
        %v1254 = vshrl.u32 %v863, 16
        %v1256 = vrot.slane %v1254, 4
        %v1257 = vor.u32 %v1256, %v1252
        %v1258 = vrot.slane %v1257, 4
        %v1260 = vshll.u32 %v879, 16
        %v1262 = vrot.slane %v1260, 5
        %v1263 = vsel %vm267, %v1258, %v1262
        %v1264 = vld [vmem:[%s831] sm:$0xe]
        %v1265 = vld [vmem:[%s831 + $0xc] sm:$0xe]
        %v1266 = vld [vmem:[%s831 + $0x18] sm:$0xe]
        %v1267 = vld [vmem:[%s831 + $0x24] sm:$0xe]
        %v1268 = vld [vmem:[%s831 + $0x30] sm:$0xe]
        %v1269 = vld [vmem:[%s831 + $0x3c] sm:$0xe]
        %v1270 = vld [vmem:[%s831 + $0x48] sm:$0xe]
        %v1271 = vld [vmem:[%s831 + $0x54] sm:$0xe]
        %v1272 = vld [vmem:[%s831 + $0x60] sm:$0xe]
        %v1273 = vld [vmem:[%s831 + $0x6c] sm:$0xe]
        %v1274 = vld [vmem:[%s831 + $0x78] sm:$0xe]
        %v1275 = vld [vmem:[%s831 + $0x84] sm:$0xe]
        %v1276 = vld [vmem:[%s831 + $0x90] sm:$0xe]
        %v1277 = vld [vmem:[%s831 + $0x9c] sm:$0xe]
        %v1278 = vld [vmem:[%s831 + $0xa8] sm:$0xe]
        %v1279 = vld [vmem:[%s831 + $0xb4] sm:$0xe]
        %v1328 = vrot.slane %v1264, 5
        %v1329 = vrot.slane %v1328, 4
        %v1330 = vrot.slane %v833, 5
        %v1331 = vsel %vm718, %v1329, %v1330
        %v1332 = vrot.slane %v1330, 4
        %v1333 = vrot.slane %v864, 5
        %v1334 = vsel %vm718, %v1332, %v1333
        %v1335 = vrot.slane %v1265, 5
        %v1336 = vrot.slane %v1335, 4
        %v1337 = vrot.slane %v835, 5
        %v1338 = vsel %vm718, %v1336, %v1337
        %v1339 = vrot.slane %v1337, 4
        %v1340 = vrot.slane %v865, 5
        %v1341 = vsel %vm718, %v1339, %v1340
        %v1342 = vrot.slane %v1266, 5
        %v1343 = vrot.slane %v1342, 4
        %v1344 = vrot.slane %v837, 5
        %v1345 = vsel %vm718, %v1343, %v1344
        %v1346 = vrot.slane %v1344, 4
        %v1347 = vrot.slane %v866, 5
        %v1348 = vsel %vm718, %v1346, %v1347
        %v1349 = vrot.slane %v1267, 5
        %v1350 = vrot.slane %v1349, 4
        %v1351 = vrot.slane %v839, 5
        %v1352 = vsel %vm718, %v1350, %v1351
        %v1353 = vrot.slane %v1351, 4
        %v1354 = vrot.slane %v867, 5
        %v1355 = vsel %vm718, %v1353, %v1354
        %v1356 = vrot.slane %v1268, 5
        %v1357 = vrot.slane %v1356, 4
        %v1358 = vrot.slane %v841, 5
        %v1359 = vsel %vm718, %v1357, %v1358
        %v1360 = vrot.slane %v1358, 4
        %v1361 = vrot.slane %v868, 5
        %v1362 = vsel %vm718, %v1360, %v1361
        %v1363 = vrot.slane %v1269, 5
        %v1364 = vrot.slane %v1363, 4
        %v1365 = vrot.slane %v843, 5
        %v1366 = vsel %vm718, %v1364, %v1365
        %v1367 = vrot.slane %v1365, 4
        %v1368 = vrot.slane %v869, 5
        %v1369 = vsel %vm718, %v1367, %v1368
        %v1370 = vrot.slane %v1270, 5
        %v1371 = vrot.slane %v1370, 4
        %v1372 = vrot.slane %v845, 5
        %v1373 = vsel %vm718, %v1371, %v1372
        %v1374 = vrot.slane %v1372, 4
        %v1375 = vrot.slane %v870, 5
        %v1376 = vsel %vm718, %v1374, %v1375
        %v1377 = vrot.slane %v1271, 5
        %v1378 = vrot.slane %v1377, 4
        %v1379 = vrot.slane %v847, 5
        %v1380 = vsel %vm718, %v1378, %v1379
        %v1381 = vrot.slane %v1379, 4
        %v1382 = vrot.slane %v871, 5
        %v1383 = vsel %vm718, %v1381, %v1382
        %v1384 = vrot.slane %v1272, 5
        %v1385 = vrot.slane %v1384, 4
        %v1386 = vrot.slane %v849, 5
        %v1387 = vsel %vm718, %v1385, %v1386
        %v1388 = vrot.slane %v1386, 4
        %v1389 = vrot.slane %v872, 5
        %v1390 = vsel %vm718, %v1388, %v1389
        %v1391 = vrot.slane %v1273, 5
        %v1392 = vrot.slane %v1391, 4
        %v1393 = vrot.slane %v851, 5
        %v1394 = vsel %vm718, %v1392, %v1393
        %v1395 = vrot.slane %v1393, 4
        %v1396 = vrot.slane %v873, 5
        %v1397 = vsel %vm718, %v1395, %v1396
        %v1398 = vrot.slane %v1274, 5
        %v1399 = vrot.slane %v1398, 4
        %v1400 = vrot.slane %v853, 5
        %v1401 = vsel %vm718, %v1399, %v1400
        %v1402 = vrot.slane %v1400, 4
        %v1403 = vrot.slane %v874, 5
        %v1404 = vsel %vm718, %v1402, %v1403
        %v1405 = vrot.slane %v1275, 5
        %v1406 = vrot.slane %v1405, 4
        %v1407 = vrot.slane %v855, 5
        %v1408 = vsel %vm718, %v1406, %v1407
        %v1409 = vrot.slane %v1407, 4
        %v1410 = vrot.slane %v875, 5
        %v1411 = vsel %vm718, %v1409, %v1410
        %v1412 = vrot.slane %v1276, 5
        %v1413 = vrot.slane %v1412, 4
        %v1414 = vrot.slane %v857, 5
        %v1415 = vsel %vm718, %v1413, %v1414
        %v1416 = vrot.slane %v1414, 4
        %v1417 = vrot.slane %v876, 5
        %v1418 = vsel %vm718, %v1416, %v1417
        %v1419 = vrot.slane %v1277, 5
        %v1420 = vrot.slane %v1419, 4
        %v1421 = vrot.slane %v859, 5
        %v1422 = vsel %vm718, %v1420, %v1421
        %v1423 = vrot.slane %v1421, 4
        %v1424 = vrot.slane %v877, 5
        %v1425 = vsel %vm718, %v1423, %v1424
        %v1426 = vrot.slane %v1278, 5
        %v1427 = vrot.slane %v1426, 4
        %v1428 = vrot.slane %v861, 5
        %v1429 = vsel %vm718, %v1427, %v1428
        %v1430 = vrot.slane %v1428, 4
        %v1431 = vrot.slane %v878, 5
        %v1432 = vsel %vm718, %v1430, %v1431
        %v1433 = vrot.slane %v1279, 5
        %v1434 = vrot.slane %v1433, 4
        %v1435 = vrot.slane %v863, 5
        %v1436 = vsel %vm718, %v1434, %v1435
        %v1437 = vrot.slane %v1435, 4
        %v1438 = vrot.slane %v879, 5
        %v1439 = vsel %vm718, %v1437, %v1438
        %s1440 = scalar_lea.vmem %s183, 24 [#allocation2]
        %v1441 = vld [vmem:[%s1440] sm:$0xf]
        %v1442 = vld [vmem:[%s1440 + $0x4] sm:$0xf]
        %v1443 = vld [vmem:[%s1440 + $0xc] sm:$0xf]
        %v1444 = vld [vmem:[%s1440 + $0x10] sm:$0xf]
        %v1445 = vld [vmem:[%s1440 + $0x18] sm:$0xf]
        %v1446 = vld [vmem:[%s1440 + $0x1c] sm:$0xf]
        %v1447 = vld [vmem:[%s1440 + $0x24] sm:$0xf]
        %v1448 = vld [vmem:[%s1440 + $0x28] sm:$0xf]
        %v1449 = vld [vmem:[%s1440 + $0x30] sm:$0xf]
        %v1450 = vld [vmem:[%s1440 + $0x34] sm:$0xf]
        %v1451 = vld [vmem:[%s1440 + $0x3c] sm:$0xf]
        %v1452 = vld [vmem:[%s1440 + $0x40] sm:$0xf]
        %v1453 = vld [vmem:[%s1440 + $0x48] sm:$0xf]
        %v1454 = vld [vmem:[%s1440 + $0x4c] sm:$0xf]
        %v1455 = vld [vmem:[%s1440 + $0x54] sm:$0xf]
        %v1456 = vld [vmem:[%s1440 + $0x58] sm:$0xf]
        %v1457 = vld [vmem:[%s1440 + $0x60] sm:$0xf]
        %v1458 = vld [vmem:[%s1440 + $0x64] sm:$0xf]
        %v1459 = vld [vmem:[%s1440 + $0x6c] sm:$0xf]
        %v1460 = vld [vmem:[%s1440 + $0x70] sm:$0xf]
        %v1461 = vld [vmem:[%s1440 + $0x78] sm:$0xf]
        %v1462 = vld [vmem:[%s1440 + $0x7c] sm:$0xf]
        %v1463 = vld [vmem:[%s1440 + $0x84] sm:$0xf]
        %v1464 = vld [vmem:[%s1440 + $0x88] sm:$0xf]
        %v1465 = vld [vmem:[%s1440 + $0x90] sm:$0xf]
        %v1466 = vld [vmem:[%s1440 + $0x94] sm:$0xf]
        %v1467 = vld [vmem:[%s1440 + $0x9c] sm:$0xf]
        %v1468 = vld [vmem:[%s1440 + $0xa0] sm:$0xf]
        %v1469 = vld [vmem:[%s1440 + $0xa8] sm:$0xf]
        %v1470 = vld [vmem:[%s1440 + $0xac] sm:$0xf]
        %v1471 = vld [vmem:[%s1440 + $0xb4] sm:$0xf]
        %v1472 = vld [vmem:[%s1440 + $0xb8] sm:$0xf]
        %v1473 = vld [vmem:[%s1440 + $0x8] sm:$0x1]
        %v1474 = vld [vmem:[%s1440 + $0x14] sm:$0x1]
        %v1475 = vld [vmem:[%s1440 + $0x20] sm:$0x1]
        %v1476 = vld [vmem:[%s1440 + $0x2c] sm:$0x1]
        %v1477 = vld [vmem:[%s1440 + $0x38] sm:$0x1]
        %v1478 = vld [vmem:[%s1440 + $0x44] sm:$0x1]
        %v1479 = vld [vmem:[%s1440 + $0x50] sm:$0x1]
        %v1480 = vld [vmem:[%s1440 + $0x5c] sm:$0x1]
        %v1481 = vld [vmem:[%s1440 + $0x68] sm:$0x1]
        %v1482 = vld [vmem:[%s1440 + $0x74] sm:$0x1]
        %v1483 = vld [vmem:[%s1440 + $0x80] sm:$0x1]
        %v1484 = vld [vmem:[%s1440 + $0x8c] sm:$0x1]
        %v1485 = vld [vmem:[%s1440 + $0x98] sm:$0x1]
        %v1486 = vld [vmem:[%s1440 + $0xa4] sm:$0x1]
        %v1487 = vld [vmem:[%s1440 + $0xb0] sm:$0x1]
        %v1488 = vld [vmem:[%s1440 + $0xbc] sm:$0x1]
        %v1490 = vshrl.u32 %v1441, 16
        %v1492 = vrot.slane %v1490, 4
        %v1493 = vshll.u32 %v1441, 16
        %v1495 = vrot.slane %v1493, 5
        %v1496 = vor.u32 %v1492, %v1495
        %v1497 = vrot.slane %v1496, 4
        %v1499 = vshll.u32 %v1442, 16
        %v1501 = vrot.slane %v1499, 5
        %v1502 = vsel %vm267, %v1497, %v1501
        %v1503 = vshrl.u32 %v1442, 16
        %v1505 = vrot.slane %v1503, 4
        %v1506 = vor.u32 %v1505, %v1501
        %v1507 = vrot.slane %v1506, 4
        %v1509 = vshll.u32 %v1473, 16
        %v1511 = vrot.slane %v1509, 5
        %v1512 = vsel %vm267, %v1507, %v1511
        %v1514 = vshrl.u32 %v1443, 16
        %v1516 = vrot.slane %v1514, 4
        %v1517 = vshll.u32 %v1443, 16
        %v1519 = vrot.slane %v1517, 5
        %v1520 = vor.u32 %v1516, %v1519
        %v1521 = vrot.slane %v1520, 4
        %v1523 = vshll.u32 %v1444, 16
        %v1525 = vrot.slane %v1523, 5
        %v1526 = vsel %vm267, %v1521, %v1525
        %v1527 = vshrl.u32 %v1444, 16
        %v1529 = vrot.slane %v1527, 4
        %v1530 = vor.u32 %v1529, %v1525
        %v1531 = vrot.slane %v1530, 4
        %v1533 = vshll.u32 %v1474, 16
        %v1535 = vrot.slane %v1533, 5
        %v1536 = vsel %vm267, %v1531, %v1535
        %v1538 = vshrl.u32 %v1445, 16
        %v1540 = vrot.slane %v1538, 4
        %v1541 = vshll.u32 %v1445, 16
        %v1543 = vrot.slane %v1541, 5
        %v1544 = vor.u32 %v1540, %v1543
        %v1545 = vrot.slane %v1544, 4
        %v1547 = vshll.u32 %v1446, 16
        %v1549 = vrot.slane %v1547, 5
        %v1550 = vsel %vm267, %v1545, %v1549
        %v1551 = vshrl.u32 %v1446, 16
        %v1553 = vrot.slane %v1551, 4
        %v1554 = vor.u32 %v1553, %v1549
        %v1555 = vrot.slane %v1554, 4
        %v1557 = vshll.u32 %v1475, 16
        %v1559 = vrot.slane %v1557, 5
        %v1560 = vsel %vm267, %v1555, %v1559
        %v1562 = vshrl.u32 %v1447, 16
        %v1564 = vrot.slane %v1562, 4
        %v1565 = vshll.u32 %v1447, 16
        %v1567 = vrot.slane %v1565, 5
        %v1568 = vor.u32 %v1564, %v1567
        %v1569 = vrot.slane %v1568, 4
        %v1571 = vshll.u32 %v1448, 16
        %v1573 = vrot.slane %v1571, 5
        %v1574 = vsel %vm267, %v1569, %v1573
        %v1575 = vshrl.u32 %v1448, 16
        %v1577 = vrot.slane %v1575, 4
        %v1578 = vor.u32 %v1577, %v1573
        %v1579 = vrot.slane %v1578, 4
        %v1581 = vshll.u32 %v1476, 16
        %v1583 = vrot.slane %v1581, 5
        %v1584 = vsel %vm267, %v1579, %v1583
        %v1586 = vshrl.u32 %v1449, 16
        %v1588 = vrot.slane %v1586, 4
        %v1589 = vshll.u32 %v1449, 16
        %v1591 = vrot.slane %v1589, 5
        %v1592 = vor.u32 %v1588, %v1591
        %v1593 = vrot.slane %v1592, 4
        %v1595 = vshll.u32 %v1450, 16
        %v1597 = vrot.slane %v1595, 5
        %v1598 = vsel %vm267, %v1593, %v1597
        %v1599 = vshrl.u32 %v1450, 16
        %v1601 = vrot.slane %v1599, 4
        %v1602 = vor.u32 %v1601, %v1597
        %v1603 = vrot.slane %v1602, 4
        %v1605 = vshll.u32 %v1477, 16
        %v1607 = vrot.slane %v1605, 5
        %v1608 = vsel %vm267, %v1603, %v1607
        %v1610 = vshrl.u32 %v1451, 16
        %v1612 = vrot.slane %v1610, 4
        %v1613 = vshll.u32 %v1451, 16
        %v1615 = vrot.slane %v1613, 5
        %v1616 = vor.u32 %v1612, %v1615
        %v1617 = vrot.slane %v1616, 4
        %v1619 = vshll.u32 %v1452, 16
        %v1621 = vrot.slane %v1619, 5
        %v1622 = vsel %vm267, %v1617, %v1621
        %v1623 = vshrl.u32 %v1452, 16
        %v1625 = vrot.slane %v1623, 4
        %v1626 = vor.u32 %v1625, %v1621
        %v1627 = vrot.slane %v1626, 4
        %v1629 = vshll.u32 %v1478, 16
        %v1631 = vrot.slane %v1629, 5
        %v1632 = vsel %vm267, %v1627, %v1631
        %v1634 = vshrl.u32 %v1453, 16
        %v1636 = vrot.slane %v1634, 4
        %v1637 = vshll.u32 %v1453, 16
        %v1639 = vrot.slane %v1637, 5
        %v1640 = vor.u32 %v1636, %v1639
        %v1641 = vrot.slane %v1640, 4
        %v1643 = vshll.u32 %v1454, 16
        %v1645 = vrot.slane %v1643, 5
        %v1646 = vsel %vm267, %v1641, %v1645
        %v1647 = vshrl.u32 %v1454, 16
        %v1649 = vrot.slane %v1647, 4
        %v1650 = vor.u32 %v1649, %v1645
        %v1651 = vrot.slane %v1650, 4
        %v1653 = vshll.u32 %v1479, 16
        %v1655 = vrot.slane %v1653, 5
        %v1656 = vsel %vm267, %v1651, %v1655
        %v1658 = vshrl.u32 %v1455, 16
        %v1660 = vrot.slane %v1658, 4
        %v1661 = vshll.u32 %v1455, 16
        %v1663 = vrot.slane %v1661, 5
        %v1664 = vor.u32 %v1660, %v1663
        %v1665 = vrot.slane %v1664, 4
        %v1667 = vshll.u32 %v1456, 16
        %v1669 = vrot.slane %v1667, 5
        %v1670 = vsel %vm267, %v1665, %v1669
        %v1671 = vshrl.u32 %v1456, 16
        %v1673 = vrot.slane %v1671, 4
        %v1674 = vor.u32 %v1673, %v1669
        %v1675 = vrot.slane %v1674, 4
        %v1677 = vshll.u32 %v1480, 16
        %v1679 = vrot.slane %v1677, 5
        %v1680 = vsel %vm267, %v1675, %v1679
        %v1682 = vshrl.u32 %v1457, 16
        %v1684 = vrot.slane %v1682, 4
        %v1685 = vshll.u32 %v1457, 16
        %v1687 = vrot.slane %v1685, 5
        %v1688 = vor.u32 %v1684, %v1687
        %v1689 = vrot.slane %v1688, 4
        %v1691 = vshll.u32 %v1458, 16
        %v1693 = vrot.slane %v1691, 5
        %v1694 = vsel %vm267, %v1689, %v1693
        %v1695 = vshrl.u32 %v1458, 16
        %v1697 = vrot.slane %v1695, 4
        %v1698 = vor.u32 %v1697, %v1693
        %v1699 = vrot.slane %v1698, 4
        %v1701 = vshll.u32 %v1481, 16
        %v1703 = vrot.slane %v1701, 5
        %v1704 = vsel %vm267, %v1699, %v1703
        %v1706 = vshrl.u32 %v1459, 16
        %v1708 = vrot.slane %v1706, 4
        %v1709 = vshll.u32 %v1459, 16
        %v1711 = vrot.slane %v1709, 5
        %v1712 = vor.u32 %v1708, %v1711
        %v1713 = vrot.slane %v1712, 4
        %v1715 = vshll.u32 %v1460, 16
        %v1717 = vrot.slane %v1715, 5
        %v1718 = vsel %vm267, %v1713, %v1717
        %v1719 = vshrl.u32 %v1460, 16
        %v1721 = vrot.slane %v1719, 4
        %v1722 = vor.u32 %v1721, %v1717
        %v1723 = vrot.slane %v1722, 4
        %v1725 = vshll.u32 %v1482, 16
        %v1727 = vrot.slane %v1725, 5
        %v1728 = vsel %vm267, %v1723, %v1727
        %v1730 = vshrl.u32 %v1461, 16
        %v1732 = vrot.slane %v1730, 4
        %v1733 = vshll.u32 %v1461, 16
        %v1735 = vrot.slane %v1733, 5
        %v1736 = vor.u32 %v1732, %v1735
        %v1737 = vrot.slane %v1736, 4
        %v1739 = vshll.u32 %v1462, 16
        %v1741 = vrot.slane %v1739, 5
        %v1742 = vsel %vm267, %v1737, %v1741
        %v1743 = vshrl.u32 %v1462, 16
        %v1745 = vrot.slane %v1743, 4
        %v1746 = vor.u32 %v1745, %v1741
        %v1747 = vrot.slane %v1746, 4
        %v1749 = vshll.u32 %v1483, 16
        %v1751 = vrot.slane %v1749, 5
        %v1752 = vsel %vm267, %v1747, %v1751
        %v1754 = vshrl.u32 %v1463, 16
        %v1756 = vrot.slane %v1754, 4
        %v1757 = vshll.u32 %v1463, 16
        %v1759 = vrot.slane %v1757, 5
        %v1760 = vor.u32 %v1756, %v1759
        %v1761 = vrot.slane %v1760, 4
        %v1763 = vshll.u32 %v1464, 16
        %v1765 = vrot.slane %v1763, 5
        %v1766 = vsel %vm267, %v1761, %v1765
        %v1767 = vshrl.u32 %v1464, 16
        %v1769 = vrot.slane %v1767, 4
        %v1770 = vor.u32 %v1769, %v1765
        %v1771 = vrot.slane %v1770, 4
        %v1773 = vshll.u32 %v1484, 16
        %v1775 = vrot.slane %v1773, 5
        %v1776 = vsel %vm267, %v1771, %v1775
        %v1778 = vshrl.u32 %v1465, 16
        %v1780 = vrot.slane %v1778, 4
        %v1781 = vshll.u32 %v1465, 16
        %v1783 = vrot.slane %v1781, 5
        %v1784 = vor.u32 %v1780, %v1783
        %v1785 = vrot.slane %v1784, 4
        %v1787 = vshll.u32 %v1466, 16
        %v1789 = vrot.slane %v1787, 5
        %v1790 = vsel %vm267, %v1785, %v1789
        %v1791 = vshrl.u32 %v1466, 16
        %v1793 = vrot.slane %v1791, 4
        %v1794 = vor.u32 %v1793, %v1789
        %v1795 = vrot.slane %v1794, 4
        %v1797 = vshll.u32 %v1485, 16
        %v1799 = vrot.slane %v1797, 5
        %v1800 = vsel %vm267, %v1795, %v1799
        %v1802 = vshrl.u32 %v1467, 16
        %v1804 = vrot.slane %v1802, 4
        %v1805 = vshll.u32 %v1467, 16
        %v1807 = vrot.slane %v1805, 5
        %v1808 = vor.u32 %v1804, %v1807
        %v1809 = vrot.slane %v1808, 4
        %v1811 = vshll.u32 %v1468, 16
        %v1813 = vrot.slane %v1811, 5
        %v1814 = vsel %vm267, %v1809, %v1813
        %v1815 = vshrl.u32 %v1468, 16
        %v1817 = vrot.slane %v1815, 4
        %v1818 = vor.u32 %v1817, %v1813
        %v1819 = vrot.slane %v1818, 4
        %v1821 = vshll.u32 %v1486, 16
        %v1823 = vrot.slane %v1821, 5
        %v1824 = vsel %vm267, %v1819, %v1823
        %v1826 = vshrl.u32 %v1469, 16
        %v1828 = vrot.slane %v1826, 4
        %v1829 = vshll.u32 %v1469, 16
        %v1831 = vrot.slane %v1829, 5
        %v1832 = vor.u32 %v1828, %v1831
        %v1833 = vrot.slane %v1832, 4
        %v1835 = vshll.u32 %v1470, 16
        %v1837 = vrot.slane %v1835, 5
        %v1838 = vsel %vm267, %v1833, %v1837
        %v1839 = vshrl.u32 %v1470, 16
        %v1841 = vrot.slane %v1839, 4
        %v1842 = vor.u32 %v1841, %v1837
        %v1843 = vrot.slane %v1842, 4
        %v1845 = vshll.u32 %v1487, 16
        %v1847 = vrot.slane %v1845, 5
        %v1848 = vsel %vm267, %v1843, %v1847
        %v1850 = vshrl.u32 %v1471, 16
        %v1852 = vrot.slane %v1850, 4
        %v1853 = vshll.u32 %v1471, 16
        %v1855 = vrot.slane %v1853, 5
        %v1856 = vor.u32 %v1852, %v1855
        %v1857 = vrot.slane %v1856, 4
        %v1859 = vshll.u32 %v1472, 16
        %v1861 = vrot.slane %v1859, 5
        %v1862 = vsel %vm267, %v1857, %v1861
        %v1863 = vshrl.u32 %v1472, 16
        %v1865 = vrot.slane %v1863, 4
        %v1866 = vor.u32 %v1865, %v1861
        %v1867 = vrot.slane %v1866, 4
        %v1869 = vshll.u32 %v1488, 16
        %v1871 = vrot.slane %v1869, 5
        %v1872 = vsel %vm267, %v1867, %v1871
        %v1873 = vld [vmem:[%s1440] sm:$0xe]
        %v1874 = vld [vmem:[%s1440 + $0xc] sm:$0xe]
        %v1875 = vld [vmem:[%s1440 + $0x18] sm:$0xe]
        %v1876 = vld [vmem:[%s1440 + $0x24] sm:$0xe]
        %v1877 = vld [vmem:[%s1440 + $0x30] sm:$0xe]
        %v1878 = vld [vmem:[%s1440 + $0x3c] sm:$0xe]
        %v1879 = vld [vmem:[%s1440 + $0x48] sm:$0xe]
        %v1880 = vld [vmem:[%s1440 + $0x54] sm:$0xe]
        %v1881 = vld [vmem:[%s1440 + $0x60] sm:$0xe]
        %v1882 = vld [vmem:[%s1440 + $0x6c] sm:$0xe]
        %v1883 = vld [vmem:[%s1440 + $0x78] sm:$0xe]
        %v1884 = vld [vmem:[%s1440 + $0x84] sm:$0xe]
        %v1885 = vld [vmem:[%s1440 + $0x90] sm:$0xe]
        %v1886 = vld [vmem:[%s1440 + $0x9c] sm:$0xe]
        %v1887 = vld [vmem:[%s1440 + $0xa8] sm:$0xe]
        %v1888 = vld [vmem:[%s1440 + $0xb4] sm:$0xe]
        %v1937 = vrot.slane %v1873, 5
        %v1938 = vrot.slane %v1937, 4
        %v1939 = vrot.slane %v1442, 5
        %v1940 = vsel %vm718, %v1938, %v1939
        %v1941 = vrot.slane %v1939, 4
        %v1942 = vrot.slane %v1473, 5
        %v1943 = vsel %vm718, %v1941, %v1942
        %v1944 = vrot.slane %v1874, 5
        %v1945 = vrot.slane %v1944, 4
        %v1946 = vrot.slane %v1444, 5
        %v1947 = vsel %vm718, %v1945, %v1946
        %v1948 = vrot.slane %v1946, 4
        %v1949 = vrot.slane %v1474, 5
        %v1950 = vsel %vm718, %v1948, %v1949
        %v1951 = vrot.slane %v1875, 5
        %v1952 = vrot.slane %v1951, 4
        %v1953 = vrot.slane %v1446, 5
        %v1954 = vsel %vm718, %v1952, %v1953
        %v1955 = vrot.slane %v1953, 4
        %v1956 = vrot.slane %v1475, 5
        %v1957 = vsel %vm718, %v1955, %v1956
        %v1958 = vrot.slane %v1876, 5
        %v1959 = vrot.slane %v1958, 4
        %v1960 = vrot.slane %v1448, 5
        %v1961 = vsel %vm718, %v1959, %v1960
        %v1962 = vrot.slane %v1960, 4
        %v1963 = vrot.slane %v1476, 5
        %v1964 = vsel %vm718, %v1962, %v1963
        %v1965 = vrot.slane %v1877, 5
        %v1966 = vrot.slane %v1965, 4
        %v1967 = vrot.slane %v1450, 5
        %v1968 = vsel %vm718, %v1966, %v1967
        %v1969 = vrot.slane %v1967, 4
        %v1970 = vrot.slane %v1477, 5
        %v1971 = vsel %vm718, %v1969, %v1970
        %v1972 = vrot.slane %v1878, 5
        %v1973 = vrot.slane %v1972, 4
        %v1974 = vrot.slane %v1452, 5
        %v1975 = vsel %vm718, %v1973, %v1974
        %v1976 = vrot.slane %v1974, 4
        %v1977 = vrot.slane %v1478, 5
        %v1978 = vsel %vm718, %v1976, %v1977
        %v1979 = vrot.slane %v1879, 5
        %v1980 = vrot.slane %v1979, 4
        %v1981 = vrot.slane %v1454, 5
        %v1982 = vsel %vm718, %v1980, %v1981
        %v1983 = vrot.slane %v1981, 4
        %v1984 = vrot.slane %v1479, 5
        %v1985 = vsel %vm718, %v1983, %v1984
        %v1986 = vrot.slane %v1880, 5
        %v1987 = vrot.slane %v1986, 4
        %v1988 = vrot.slane %v1456, 5
        %v1989 = vsel %vm718, %v1987, %v1988
        %v1990 = vrot.slane %v1988, 4
        %v1991 = vrot.slane %v1480, 5
        %v1992 = vsel %vm718, %v1990, %v1991
        %v1993 = vrot.slane %v1881, 5
        %v1994 = vrot.slane %v1993, 4
        %v1995 = vrot.slane %v1458, 5
        %v1996 = vsel %vm718, %v1994, %v1995
        %v1997 = vrot.slane %v1995, 4
        %v1998 = vrot.slane %v1481, 5
        %v1999 = vsel %vm718, %v1997, %v1998
        %v2000 = vrot.slane %v1882, 5
        %v2001 = vrot.slane %v2000, 4
        %v2002 = vrot.slane %v1460, 5
        %v2003 = vsel %vm718, %v2001, %v2002
        %v2004 = vrot.slane %v2002, 4
        %v2005 = vrot.slane %v1482, 5
        %v2006 = vsel %vm718, %v2004, %v2005
        %v2007 = vrot.slane %v1883, 5
        %v2008 = vrot.slane %v2007, 4
        %v2009 = vrot.slane %v1462, 5
        %v2010 = vsel %vm718, %v2008, %v2009
        %v2011 = vrot.slane %v2009, 4
        %v2012 = vrot.slane %v1483, 5
        %v2013 = vsel %vm718, %v2011, %v2012
        %v2014 = vrot.slane %v1884, 5
        %v2015 = vrot.slane %v2014, 4
        %v2016 = vrot.slane %v1464, 5
        %v2017 = vsel %vm718, %v2015, %v2016
        %v2018 = vrot.slane %v2016, 4
        %v2019 = vrot.slane %v1484, 5
        %v2020 = vsel %vm718, %v2018, %v2019
        %v2021 = vrot.slane %v1885, 5
        %v2022 = vrot.slane %v2021, 4
        %v2023 = vrot.slane %v1466, 5
        %v2024 = vsel %vm718, %v2022, %v2023
        %v2025 = vrot.slane %v2023, 4
        %v2026 = vrot.slane %v1485, 5
        %v2027 = vsel %vm718, %v2025, %v2026
        %v2028 = vrot.slane %v1886, 5
        %v2029 = vrot.slane %v2028, 4
        %v2030 = vrot.slane %v1468, 5
        %v2031 = vsel %vm718, %v2029, %v2030
        %v2032 = vrot.slane %v2030, 4
        %v2033 = vrot.slane %v1486, 5
        %v2034 = vsel %vm718, %v2032, %v2033
        %v2035 = vrot.slane %v1887, 5
        %v2036 = vrot.slane %v2035, 4
        %v2037 = vrot.slane %v1470, 5
        %v2038 = vsel %vm718, %v2036, %v2037
        %v2039 = vrot.slane %v2037, 4
        %v2040 = vrot.slane %v1487, 5
        %v2041 = vsel %vm718, %v2039, %v2040
        %v2042 = vrot.slane %v1888, 5
        %v2043 = vrot.slane %v2042, 4
        %v2044 = vrot.slane %v1472, 5
        %v2045 = vsel %vm718, %v2043, %v2044
        %v2046 = vrot.slane %v2044, 4
        %v2047 = vrot.slane %v1488, 5
        %v2048 = vsel %vm718, %v2046, %v2047
        %v2065 = vunpack.c.l.b16 %v217
        %v2066 = vunpack.c.l.b16 %v218
        %v2067 = vunpack.c.l.b16 %v219
        %v2068 = vunpack.c.l.b16 %v220
        %v2069 = vunpack.c.l.b16 %v221
        %v2070 = vunpack.c.l.b16 %v222
        %v2071 = vunpack.c.l.b16 %v223
        %v2072 = vunpack.c.l.b16 %v224
        %v2073 = vunpack.c.l.b16 %v225
        %v2074 = vunpack.c.l.b16 %v226
        %v2075 = vunpack.c.l.b16 %v227
        %v2076 = vunpack.c.l.b16 %v228
        %v2077 = vunpack.c.l.b16 %v229
        %v2078 = vunpack.c.l.b16 %v230
        %v2079 = vunpack.c.l.b16 %v231
        %v2080 = vunpack.c.l.b16 %v232
        %v2081 = vunpack.c.l.b16 %v233
        %v2082 = vunpack.c.l.b16 %v234
        %v2083 = vunpack.c.l.b16 %v235
        %v2084 = vunpack.c.l.b16 %v236
        %v2085 = vunpack.c.l.b16 %v237
        %v2086 = vunpack.c.l.b16 %v238
        %v2087 = vunpack.c.l.b16 %v239
        %v2088 = vunpack.c.l.b16 %v240
        %v2089 = vunpack.c.l.b16 %v241
        %v2090 = vunpack.c.l.b16 %v242
        %v2091 = vunpack.c.l.b16 %v243
        %v2092 = vunpack.c.l.b16 %v244
        %v2093 = vunpack.c.l.b16 %v245
        %v2094 = vunpack.c.l.b16 %v246
        %v2095 = vunpack.c.l.b16 %v247
        %v2096 = vunpack.c.l.b16 %v248
        %v2097 = vpack.c.b16 %v2066, %v2065
        %v2098 = vpack.c.b16 %v2068, %v2067
        %v2099 = vpack.c.b16 %v2070, %v2069
        %v2100 = vpack.c.b16 %v2072, %v2071
        %v2101 = vpack.c.b16 %v2074, %v2073
        %v2102 = vpack.c.b16 %v2076, %v2075
        %v2103 = vpack.c.b16 %v2078, %v2077
        %v2104 = vpack.c.b16 %v2080, %v2079
        %v2105 = vpack.c.b16 %v2082, %v2081
        %v2106 = vpack.c.b16 %v2084, %v2083
        %v2107 = vpack.c.b16 %v2086, %v2085
        %v2108 = vpack.c.b16 %v2088, %v2087
        %v2109 = vpack.c.b16 %v2090, %v2089
        %v2110 = vpack.c.b16 %v2092, %v2091
        %v2111 = vpack.c.b16 %v2094, %v2093
        %v2112 = vpack.c.b16 %v2096, %v2095
        %v2129 = vunpack.c.l.b16 %v281
        %v2130 = vunpack.c.l.b16 %v291
        %v2131 = vunpack.c.l.b16 %v305
        %v2132 = vunpack.c.l.b16 %v315
        %v2133 = vunpack.c.l.b16 %v329
        %v2134 = vunpack.c.l.b16 %v339
        %v2135 = vunpack.c.l.b16 %v353
        %v2136 = vunpack.c.l.b16 %v363
        %v2137 = vunpack.c.l.b16 %v377
        %v2138 = vunpack.c.l.b16 %v387
        %v2139 = vunpack.c.l.b16 %v401
        %v2140 = vunpack.c.l.b16 %v411
        %v2141 = vunpack.c.l.b16 %v425
        %v2142 = vunpack.c.l.b16 %v435
        %v2143 = vunpack.c.l.b16 %v449
        %v2144 = vunpack.c.l.b16 %v459
        %v2145 = vunpack.c.l.b16 %v473
        %v2146 = vunpack.c.l.b16 %v483
        %v2147 = vunpack.c.l.b16 %v497
        %v2148 = vunpack.c.l.b16 %v507
        %v2149 = vunpack.c.l.b16 %v521
        %v2150 = vunpack.c.l.b16 %v531
        %v2151 = vunpack.c.l.b16 %v545
        %v2152 = vunpack.c.l.b16 %v555
        %v2153 = vunpack.c.l.b16 %v569
        %v2154 = vunpack.c.l.b16 %v579
        %v2155 = vunpack.c.l.b16 %v593
        %v2156 = vunpack.c.l.b16 %v603
        %v2157 = vunpack.c.l.b16 %v617
        %v2158 = vunpack.c.l.b16 %v627
        %v2159 = vunpack.c.l.b16 %v641
        %v2160 = vunpack.c.l.b16 %v651
        %v2161 = vpack.c.b16 %v2130, %v2129
        %v2162 = vpack.c.b16 %v2132, %v2131
        %v2163 = vpack.c.b16 %v2134, %v2133
        %v2164 = vpack.c.b16 %v2136, %v2135
        %v2165 = vpack.c.b16 %v2138, %v2137
        %v2166 = vpack.c.b16 %v2140, %v2139
        %v2167 = vpack.c.b16 %v2142, %v2141
        %v2168 = vpack.c.b16 %v2144, %v2143
        %v2169 = vpack.c.b16 %v2146, %v2145
        %v2170 = vpack.c.b16 %v2148, %v2147
        %v2171 = vpack.c.b16 %v2150, %v2149
        %v2172 = vpack.c.b16 %v2152, %v2151
        %v2173 = vpack.c.b16 %v2154, %v2153
        %v2174 = vpack.c.b16 %v2156, %v2155
        %v2175 = vpack.c.b16 %v2158, %v2157
        %v2176 = vpack.c.b16 %v2160, %v2159
        %v2193 = vunpack.c.l.b16 %v722
        %v2194 = vunpack.c.l.b16 %v725
        %v2195 = vunpack.c.l.b16 %v729
        %v2196 = vunpack.c.l.b16 %v732
        %v2197 = vunpack.c.l.b16 %v736
        %v2198 = vunpack.c.l.b16 %v739
        %v2199 = vunpack.c.l.b16 %v743
        %v2200 = vunpack.c.l.b16 %v746
        %v2201 = vunpack.c.l.b16 %v750
        %v2202 = vunpack.c.l.b16 %v753
        %v2203 = vunpack.c.l.b16 %v757
        %v2204 = vunpack.c.l.b16 %v760
        %v2205 = vunpack.c.l.b16 %v764
        %v2206 = vunpack.c.l.b16 %v767
        %v2207 = vunpack.c.l.b16 %v771
        %v2208 = vunpack.c.l.b16 %v774
        %v2209 = vunpack.c.l.b16 %v778
        %v2210 = vunpack.c.l.b16 %v781
        %v2211 = vunpack.c.l.b16 %v785
        %v2212 = vunpack.c.l.b16 %v788
        %v2213 = vunpack.c.l.b16 %v792
        %v2214 = vunpack.c.l.b16 %v795
        %v2215 = vunpack.c.l.b16 %v799
        %v2216 = vunpack.c.l.b16 %v802
        %v2217 = vunpack.c.l.b16 %v806
        %v2218 = vunpack.c.l.b16 %v809
        %v2219 = vunpack.c.l.b16 %v813
        %v2220 = vunpack.c.l.b16 %v816
        %v2221 = vunpack.c.l.b16 %v820
        %v2222 = vunpack.c.l.b16 %v823
        %v2223 = vunpack.c.l.b16 %v827
        %v2224 = vunpack.c.l.b16 %v830
        %v2225 = vpack.c.b16 %v2194, %v2193
        %v2226 = vpack.c.b16 %v2196, %v2195
        %v2227 = vpack.c.b16 %v2198, %v2197
        %v2228 = vpack.c.b16 %v2200, %v2199
        %v2229 = vpack.c.b16 %v2202, %v2201
        %v2230 = vpack.c.b16 %v2204, %v2203
        %v2231 = vpack.c.b16 %v2206, %v2205
        %v2232 = vpack.c.b16 %v2208, %v2207
        %v2233 = vpack.c.b16 %v2210, %v2209
        %v2234 = vpack.c.b16 %v2212, %v2211
        %v2235 = vpack.c.b16 %v2214, %v2213
        %v2236 = vpack.c.b16 %v2216, %v2215
        %v2237 = vpack.c.b16 %v2218, %v2217
        %v2238 = vpack.c.b16 %v2220, %v2219
        %v2239 = vpack.c.b16 %v2222, %v2221
        %v2240 = vpack.c.b16 %v2224, %v2223
        %v2273 = vunpack.c.l.b16 %v832
        %v2274 = vunpack.c.l.b16 %v833
        %v2275 = vunpack.c.l.b16 %v834
        %v2276 = vunpack.c.l.b16 %v835
        %v2277 = vunpack.c.l.b16 %v836
        %v2278 = vunpack.c.l.b16 %v837
        %v2279 = vunpack.c.l.b16 %v838
        %v2280 = vunpack.c.l.b16 %v839
        %v2281 = vunpack.c.l.b16 %v840
        %v2282 = vunpack.c.l.b16 %v841
        %v2283 = vunpack.c.l.b16 %v842
        %v2284 = vunpack.c.l.b16 %v843
        %v2285 = vunpack.c.l.b16 %v844
        %v2286 = vunpack.c.l.b16 %v845
        %v2287 = vunpack.c.l.b16 %v846
        %v2288 = vunpack.c.l.b16 %v847
        %v2289 = vunpack.c.l.b16 %v848
        %v2290 = vunpack.c.l.b16 %v849
        %v2291 = vunpack.c.l.b16 %v850
        %v2292 = vunpack.c.l.b16 %v851
        %v2293 = vunpack.c.l.b16 %v852
        %v2294 = vunpack.c.l.b16 %v853
        %v2295 = vunpack.c.l.b16 %v854
        %v2296 = vunpack.c.l.b16 %v855
        %v2297 = vunpack.c.l.b16 %v856
        %v2298 = vunpack.c.l.b16 %v857
        %v2299 = vunpack.c.l.b16 %v858
        %v2300 = vunpack.c.l.b16 %v859
        %v2301 = vunpack.c.l.b16 %v860
        %v2302 = vunpack.c.l.b16 %v861
        %v2303 = vunpack.c.l.b16 %v862
        %v2304 = vunpack.c.l.b16 %v863
        %v2305 = vpack.c.b16 %v2274, %v2273
        %v2306 = vpack.c.b16 %v2276, %v2275
        %v2307 = vpack.c.b16 %v2278, %v2277
        %v2308 = vpack.c.b16 %v2280, %v2279
        %v2309 = vpack.c.b16 %v2282, %v2281
        %v2310 = vpack.c.b16 %v2284, %v2283
        %v2311 = vpack.c.b16 %v2286, %v2285
        %v2312 = vpack.c.b16 %v2288, %v2287
        %v2313 = vpack.c.b16 %v2290, %v2289
        %v2314 = vpack.c.b16 %v2292, %v2291
        %v2315 = vpack.c.b16 %v2294, %v2293
        %v2316 = vpack.c.b16 %v2296, %v2295
        %v2317 = vpack.c.b16 %v2298, %v2297
        %v2318 = vpack.c.b16 %v2300, %v2299
        %v2319 = vpack.c.b16 %v2302, %v2301
        %v2320 = vpack.c.b16 %v2304, %v2303
        %v2337 = vunpack.c.l.b16 %v893
        %v2338 = vunpack.c.l.b16 %v903
        %v2339 = vunpack.c.l.b16 %v917
        %v2340 = vunpack.c.l.b16 %v927
        %v2341 = vunpack.c.l.b16 %v941
        %v2342 = vunpack.c.l.b16 %v951
        %v2343 = vunpack.c.l.b16 %v965
        %v2344 = vunpack.c.l.b16 %v975
        %v2345 = vunpack.c.l.b16 %v989
        %v2346 = vunpack.c.l.b16 %v999
        %v2347 = vunpack.c.l.b16 %v1013
        %v2348 = vunpack.c.l.b16 %v1023
        %v2349 = vunpack.c.l.b16 %v1037
        %v2350 = vunpack.c.l.b16 %v1047
        %v2351 = vunpack.c.l.b16 %v1061
        %v2352 = vunpack.c.l.b16 %v1071
        %v2353 = vunpack.c.l.b16 %v1085
        %v2354 = vunpack.c.l.b16 %v1095
        %v2355 = vunpack.c.l.b16 %v1109
        %v2356 = vunpack.c.l.b16 %v1119
        %v2357 = vunpack.c.l.b16 %v1133
        %v2358 = vunpack.c.l.b16 %v1143
        %v2359 = vunpack.c.l.b16 %v1157
        %v2360 = vunpack.c.l.b16 %v1167
        %v2361 = vunpack.c.l.b16 %v1181
        %v2362 = vunpack.c.l.b16 %v1191
        %v2363 = vunpack.c.l.b16 %v1205
        %v2364 = vunpack.c.l.b16 %v1215
        %v2365 = vunpack.c.l.b16 %v1229
        %v2366 = vunpack.c.l.b16 %v1239
        %v2367 = vunpack.c.l.b16 %v1253
        %v2368 = vunpack.c.l.b16 %v1263
        %v2369 = vpack.c.b16 %v2338, %v2337
        %v2370 = vpack.c.b16 %v2340, %v2339
        %v2371 = vpack.c.b16 %v2342, %v2341
        %v2372 = vpack.c.b16 %v2344, %v2343
        %v2373 = vpack.c.b16 %v2346, %v2345
        %v2374 = vpack.c.b16 %v2348, %v2347
        %v2375 = vpack.c.b16 %v2350, %v2349
        %v2376 = vpack.c.b16 %v2352, %v2351
        %v2377 = vpack.c.b16 %v2354, %v2353
        %v2378 = vpack.c.b16 %v2356, %v2355
        %v2379 = vpack.c.b16 %v2358, %v2357
        %v2380 = vpack.c.b16 %v2360, %v2359
        %v2381 = vpack.c.b16 %v2362, %v2361
        %v2382 = vpack.c.b16 %v2364, %v2363
        %v2383 = vpack.c.b16 %v2366, %v2365
        %v2384 = vpack.c.b16 %v2368, %v2367
        %v2401 = vunpack.c.l.b16 %v1331
        %v2402 = vunpack.c.l.b16 %v1334
        %v2403 = vunpack.c.l.b16 %v1338
        %v2404 = vunpack.c.l.b16 %v1341
        %v2405 = vunpack.c.l.b16 %v1345
        %v2406 = vunpack.c.l.b16 %v1348
        %v2407 = vunpack.c.l.b16 %v1352
        %v2408 = vunpack.c.l.b16 %v1355
        %v2409 = vunpack.c.l.b16 %v1359
        %v2410 = vunpack.c.l.b16 %v1362
        %v2411 = vunpack.c.l.b16 %v1366
        %v2412 = vunpack.c.l.b16 %v1369
        %v2413 = vunpack.c.l.b16 %v1373
        %v2414 = vunpack.c.l.b16 %v1376
        %v2415 = vunpack.c.l.b16 %v1380
        %v2416 = vunpack.c.l.b16 %v1383
        %v2417 = vunpack.c.l.b16 %v1387
        %v2418 = vunpack.c.l.b16 %v1390
        %v2419 = vunpack.c.l.b16 %v1394
        %v2420 = vunpack.c.l.b16 %v1397
        %v2421 = vunpack.c.l.b16 %v1401
        %v2422 = vunpack.c.l.b16 %v1404
        %v2423 = vunpack.c.l.b16 %v1408
        %v2424 = vunpack.c.l.b16 %v1411
        %v2425 = vunpack.c.l.b16 %v1415
        %v2426 = vunpack.c.l.b16 %v1418
        %v2427 = vunpack.c.l.b16 %v1422
        %v2428 = vunpack.c.l.b16 %v1425
        %v2429 = vunpack.c.l.b16 %v1429
        %v2430 = vunpack.c.l.b16 %v1432
        %v2431 = vunpack.c.l.b16 %v1436
        %v2432 = vunpack.c.l.b16 %v1439
        %v2433 = vpack.c.b16 %v2402, %v2401
        %v2434 = vpack.c.b16 %v2404, %v2403
        %v2435 = vpack.c.b16 %v2406, %v2405
        %v2436 = vpack.c.b16 %v2408, %v2407
        %v2437 = vpack.c.b16 %v2410, %v2409
        %v2438 = vpack.c.b16 %v2412, %v2411
        %v2439 = vpack.c.b16 %v2414, %v2413
        %v2440 = vpack.c.b16 %v2416, %v2415
        %v2441 = vpack.c.b16 %v2418, %v2417
        %v2442 = vpack.c.b16 %v2420, %v2419
        %v2443 = vpack.c.b16 %v2422, %v2421
        %v2444 = vpack.c.b16 %v2424, %v2423
        %v2445 = vpack.c.b16 %v2426, %v2425
        %v2446 = vpack.c.b16 %v2428, %v2427
        %v2447 = vpack.c.b16 %v2430, %v2429
        %v2448 = vpack.c.b16 %v2432, %v2431
        %v2481 = vunpack.c.l.b16 %v1441
        %v2482 = vunpack.c.l.b16 %v1442
        %v2483 = vunpack.c.l.b16 %v1443
        %v2484 = vunpack.c.l.b16 %v1444
        %v2485 = vunpack.c.l.b16 %v1445
        %v2486 = vunpack.c.l.b16 %v1446
        %v2487 = vunpack.c.l.b16 %v1447
        %v2488 = vunpack.c.l.b16 %v1448
        %v2489 = vunpack.c.l.b16 %v1449
        %v2490 = vunpack.c.l.b16 %v1450
        %v2491 = vunpack.c.l.b16 %v1451
        %v2492 = vunpack.c.l.b16 %v1452
        %v2493 = vunpack.c.l.b16 %v1453
        %v2494 = vunpack.c.l.b16 %v1454
        %v2495 = vunpack.c.l.b16 %v1455
        %v2496 = vunpack.c.l.b16 %v1456
        %v2497 = vunpack.c.l.b16 %v1457
        %v2498 = vunpack.c.l.b16 %v1458
        %v2499 = vunpack.c.l.b16 %v1459
        %v2500 = vunpack.c.l.b16 %v1460
        %v2501 = vunpack.c.l.b16 %v1461
        %v2502 = vunpack.c.l.b16 %v1462
        %v2503 = vunpack.c.l.b16 %v1463
        %v2504 = vunpack.c.l.b16 %v1464
        %v2505 = vunpack.c.l.b16 %v1465
        %v2506 = vunpack.c.l.b16 %v1466
        %v2507 = vunpack.c.l.b16 %v1467
        %v2508 = vunpack.c.l.b16 %v1468
        %v2509 = vunpack.c.l.b16 %v1469
        %v2510 = vunpack.c.l.b16 %v1470
        %v2511 = vunpack.c.l.b16 %v1471
        %v2512 = vunpack.c.l.b16 %v1472
        %v2513 = vpack.c.b16 %v2482, %v2481
        %v2514 = vpack.c.b16 %v2484, %v2483
        %v2515 = vpack.c.b16 %v2486, %v2485
        %v2516 = vpack.c.b16 %v2488, %v2487
        %v2517 = vpack.c.b16 %v2490, %v2489
        %v2518 = vpack.c.b16 %v2492, %v2491
        %v2519 = vpack.c.b16 %v2494, %v2493
        %v2520 = vpack.c.b16 %v2496, %v2495
        %v2521 = vpack.c.b16 %v2498, %v2497
        %v2522 = vpack.c.b16 %v2500, %v2499
        %v2523 = vpack.c.b16 %v2502, %v2501
        %v2524 = vpack.c.b16 %v2504, %v2503
        %v2525 = vpack.c.b16 %v2506, %v2505
        %v2526 = vpack.c.b16 %v2508, %v2507
        %v2527 = vpack.c.b16 %v2510, %v2509
        %v2528 = vpack.c.b16 %v2512, %v2511
        %v2545 = vunpack.c.l.b16 %v1502
        %v2546 = vunpack.c.l.b16 %v1512
        %v2547 = vunpack.c.l.b16 %v1526
        %v2548 = vunpack.c.l.b16 %v1536
        %v2549 = vunpack.c.l.b16 %v1550
        %v2550 = vunpack.c.l.b16 %v1560
        %v2551 = vunpack.c.l.b16 %v1574
        %v2552 = vunpack.c.l.b16 %v1584
        %v2553 = vunpack.c.l.b16 %v1598
        %v2554 = vunpack.c.l.b16 %v1608
        %v2555 = vunpack.c.l.b16 %v1622
        %v2556 = vunpack.c.l.b16 %v1632
        %v2557 = vunpack.c.l.b16 %v1646
        %v2558 = vunpack.c.l.b16 %v1656
        %v2559 = vunpack.c.l.b16 %v1670
        %v2560 = vunpack.c.l.b16 %v1680
        %v2561 = vunpack.c.l.b16 %v1694
        %v2562 = vunpack.c.l.b16 %v1704
        %v2563 = vunpack.c.l.b16 %v1718
        %v2564 = vunpack.c.l.b16 %v1728
        %v2565 = vunpack.c.l.b16 %v1742
        %v2566 = vunpack.c.l.b16 %v1752
        %v2567 = vunpack.c.l.b16 %v1766
        %v2568 = vunpack.c.l.b16 %v1776
        %v2569 = vunpack.c.l.b16 %v1790
        %v2570 = vunpack.c.l.b16 %v1800
        %v2571 = vunpack.c.l.b16 %v1814
        %v2572 = vunpack.c.l.b16 %v1824
        %v2573 = vunpack.c.l.b16 %v1838
        %v2574 = vunpack.c.l.b16 %v1848
        %v2575 = vunpack.c.l.b16 %v1862
        %v2576 = vunpack.c.l.b16 %v1872
        %v2577 = vpack.c.b16 %v2546, %v2545
        %v2578 = vpack.c.b16 %v2548, %v2547
        %v2579 = vpack.c.b16 %v2550, %v2549
        %v2580 = vpack.c.b16 %v2552, %v2551
        %v2581 = vpack.c.b16 %v2554, %v2553
        %v2582 = vpack.c.b16 %v2556, %v2555
        %v2583 = vpack.c.b16 %v2558, %v2557
        %v2584 = vpack.c.b16 %v2560, %v2559
        %v2585 = vpack.c.b16 %v2562, %v2561
        %v2586 = vpack.c.b16 %v2564, %v2563
        %v2587 = vpack.c.b16 %v2566, %v2565
        %v2588 = vpack.c.b16 %v2568, %v2567
        %v2589 = vpack.c.b16 %v2570, %v2569
        %v2590 = vpack.c.b16 %v2572, %v2571
        %v2591 = vpack.c.b16 %v2574, %v2573
        %v2592 = vpack.c.b16 %v2576, %v2575
        %v2609 = vunpack.c.l.b16 %v1940
        %v2610 = vunpack.c.l.b16 %v1943
        %v2611 = vunpack.c.l.b16 %v1947
        %v2612 = vunpack.c.l.b16 %v1950
        %v2613 = vunpack.c.l.b16 %v1954
        %v2614 = vunpack.c.l.b16 %v1957
        %v2615 = vunpack.c.l.b16 %v1961
        %v2616 = vunpack.c.l.b16 %v1964
        %v2617 = vunpack.c.l.b16 %v1968
        %v2618 = vunpack.c.l.b16 %v1971
        %v2619 = vunpack.c.l.b16 %v1975
        %v2620 = vunpack.c.l.b16 %v1978
        %v2621 = vunpack.c.l.b16 %v1982
        %v2622 = vunpack.c.l.b16 %v1985
        %v2623 = vunpack.c.l.b16 %v1989
        %v2624 = vunpack.c.l.b16 %v1992
        %v2625 = vunpack.c.l.b16 %v1996
        %v2626 = vunpack.c.l.b16 %v1999
        %v2627 = vunpack.c.l.b16 %v2003
        %v2628 = vunpack.c.l.b16 %v2006
        %v2629 = vunpack.c.l.b16 %v2010
        %v2630 = vunpack.c.l.b16 %v2013
        %v2631 = vunpack.c.l.b16 %v2017
        %v2632 = vunpack.c.l.b16 %v2020
        %v2633 = vunpack.c.l.b16 %v2024
        %v2634 = vunpack.c.l.b16 %v2027
        %v2635 = vunpack.c.l.b16 %v2031
        %v2636 = vunpack.c.l.b16 %v2034
        %v2637 = vunpack.c.l.b16 %v2038
        %v2638 = vunpack.c.l.b16 %v2041
        %v2639 = vunpack.c.l.b16 %v2045
        %v2640 = vunpack.c.l.b16 %v2048
        %v2641 = vpack.c.b16 %v2610, %v2609
        %v2642 = vpack.c.b16 %v2612, %v2611
        %v2643 = vpack.c.b16 %v2614, %v2613
        %v2644 = vpack.c.b16 %v2616, %v2615
        %v2645 = vpack.c.b16 %v2618, %v2617
        %v2646 = vpack.c.b16 %v2620, %v2619
        %v2647 = vpack.c.b16 %v2622, %v2621
        %v2648 = vpack.c.b16 %v2624, %v2623
        %v2649 = vpack.c.b16 %v2626, %v2625
        %v2650 = vpack.c.b16 %v2628, %v2627
        %v2651 = vpack.c.b16 %v2630, %v2629
        %v2652 = vpack.c.b16 %v2632, %v2631
        %v2653 = vpack.c.b16 %v2634, %v2633
        %v2654 = vpack.c.b16 %v2636, %v2635
        %v2655 = vpack.c.b16 %v2638, %v2637
        %v2656 = vpack.c.b16 %v2640, %v2639
        %v2673 = vld [vmem:[#allocation5] sm:$0xf]
        %v2674 = vld [vmem:[#allocation5 + $0x4] sm:$0xf]
        %v2675 = vld [vmem:[#allocation5 + $0x8] sm:$0xf]
        %v2676 = vld [vmem:[#allocation5 + $0xc] sm:$0xf]
        %v2677 = vld [vmem:[#allocation5 + $0x10] sm:$0xf]
        %v2678 = vld [vmem:[#allocation5 + $0x14] sm:$0xf]
        %v2679 = vld [vmem:[#allocation5 + $0x18] sm:$0xf]
        %v2680 = vld [vmem:[#allocation5 + $0x1c] sm:$0xf]
        %v2681 = vld [vmem:[#allocation5 + $0x20] sm:$0xf]
        %v2682 = vld [vmem:[#allocation5 + $0x24] sm:$0xf]
        %v2683 = vld [vmem:[#allocation5 + $0x28] sm:$0xf]
        %v2684 = vld [vmem:[#allocation5 + $0x2c] sm:$0xf]
        %v2685 = vld [vmem:[#allocation5 + $0x30] sm:$0xf]
        %v2686 = vld [vmem:[#allocation5 + $0x34] sm:$0xf]
        %v2687 = vld [vmem:[#allocation5 + $0x38] sm:$0xf]
        %v2688 = vld [vmem:[#allocation5 + $0x3c] sm:$0xf]
        %v2689 = vld [vmem:[#allocation5 + $0x40] sm:$0xf]
        %v2690 = vld [vmem:[#allocation5 + $0x44] sm:$0xf]
        %v2691 = vld [vmem:[#allocation5 + $0x48] sm:$0xf]
        %v2692 = vld [vmem:[#allocation5 + $0x4c] sm:$0xf]
        %v2693 = vld [vmem:[#allocation5 + $0x50] sm:$0xf]
        %v2694 = vld [vmem:[#allocation5 + $0x54] sm:$0xf]
        %v2695 = vld [vmem:[#allocation5 + $0x58] sm:$0xf]
        %v2696 = vld [vmem:[#allocation5 + $0x5c] sm:$0xf]
        %v2697 = vld [vmem:[#allocation5 + $0x60] sm:$0xf]
        %v2698 = vld [vmem:[#allocation5 + $0x64] sm:$0xf]
        %v2699 = vld [vmem:[#allocation5 + $0x68] sm:$0xf]
        %v2700 = vld [vmem:[#allocation5 + $0x6c] sm:$0xf]
        %v2701 = vld [vmem:[#allocation5 + $0x70] sm:$0xf]
        %v2702 = vld [vmem:[#allocation5 + $0x74] sm:$0xf]
        %v2703 = vld [vmem:[#allocation5 + $0x78] sm:$0xf]
        %v2704 = vld [vmem:[#allocation5 + $0x7c] sm:$0xf]
        %v2705 = vld [vmem:[#allocation5 + $0x80] sm:$0xf]
        %v2706 = vld [vmem:[#allocation5 + $0x84] sm:$0xf]
        %v2707 = vld [vmem:[#allocation5 + $0x88] sm:$0xf]
        %v2708 = vld [vmem:[#allocation5 + $0x8c] sm:$0xf]
        %v2709 = vld [vmem:[#allocation5 + $0x90] sm:$0xf]
        %v2710 = vld [vmem:[#allocation5 + $0x94] sm:$0xf]
        %v2711 = vld [vmem:[#allocation5 + $0x98] sm:$0xf]
        %v2712 = vld [vmem:[#allocation5 + $0x9c] sm:$0xf]
        %v2713 = vld [vmem:[#allocation5 + $0xa0] sm:$0xf]
        %v2714 = vld [vmem:[#allocation5 + $0xa4] sm:$0xf]
        %v2715 = vld [vmem:[#allocation5 + $0xa8] sm:$0xf]
        %v2716 = vld [vmem:[#allocation5 + $0xac] sm:$0xf]
        %v2717 = vld [vmem:[#allocation5 + $0xb0] sm:$0xf]
        %v2718 = vld [vmem:[#allocation5 + $0xb4] sm:$0xf]
        %v2719 = vld [vmem:[#allocation5 + $0xb8] sm:$0xf]
        %v2720 = vld [vmem:[#allocation5 + $0xbc] sm:$0xf]
        %v2721 = vld [vmem:[#allocation5 + $0xc0] sm:$0xf]
        %v2722 = vld [vmem:[#allocation5 + $0xc4] sm:$0xf]
        %v2723 = vld [vmem:[#allocation5 + $0xc8] sm:$0xf]
        %v2724 = vld [vmem:[#allocation5 + $0xcc] sm:$0xf]
        %v2725 = vld [vmem:[#allocation5 + $0xd0] sm:$0xf]
        %v2726 = vld [vmem:[#allocation5 + $0xd4] sm:$0xf]
        %v2727 = vld [vmem:[#allocation5 + $0xd8] sm:$0xf]
        %v2728 = vld [vmem:[#allocation5 + $0xdc] sm:$0xf]
        %v2729 = vld [vmem:[#allocation5 + $0xe0] sm:$0xf]
        %v2730 = vld [vmem:[#allocation5 + $0xe4] sm:$0xf]
        %v2731 = vld [vmem:[#allocation5 + $0xe8] sm:$0xf]
        %v2732 = vld [vmem:[#allocation5 + $0xec] sm:$0xf]
        %v2733 = vld [vmem:[#allocation5 + $0xf0] sm:$0xf]
        %v2734 = vld [vmem:[#allocation5 + $0xf4] sm:$0xf]
        %v2735 = vld [vmem:[#allocation5 + $0xf8] sm:$0xf]
        %v2736 = vld [vmem:[#allocation5 + $0xfc] sm:$0xf]
        %v2737 = vld [vmem:[#allocation5 + $0x100] sm:$0xf]
        %v2738 = vld [vmem:[#allocation5 + $0x104] sm:$0xf]
        %v2739 = vld [vmem:[#allocation5 + $0x108] sm:$0xf]
        %v2740 = vld [vmem:[#allocation5 + $0x10c] sm:$0xf]
        %v2741 = vld [vmem:[#allocation5 + $0x110] sm:$0xf]
        %v2742 = vld [vmem:[#allocation5 + $0x114] sm:$0xf]
        %v2743 = vld [vmem:[#allocation5 + $0x118] sm:$0xf]
        %v2744 = vld [vmem:[#allocation5 + $0x11c] sm:$0xf]
        %v2745 = vld [vmem:[#allocation5 + $0x120] sm:$0xf]
        %v2746 = vld [vmem:[#allocation5 + $0x124] sm:$0xf]
        %v2747 = vld [vmem:[#allocation5 + $0x128] sm:$0xf]
        %v2748 = vld [vmem:[#allocation5 + $0x12c] sm:$0xf]
        %v2749 = vld [vmem:[#allocation5 + $0x130] sm:$0xf]
        %v2750 = vld [vmem:[#allocation5 + $0x134] sm:$0xf]
        %v2751 = vld [vmem:[#allocation5 + $0x138] sm:$0xf]
        %v2752 = vld [vmem:[#allocation5 + $0x13c] sm:$0xf]
        %v2753 = vld [vmem:[#allocation5 + $0x140] sm:$0xf]
        %v2754 = vld [vmem:[#allocation5 + $0x144] sm:$0xf]
        %v2755 = vld [vmem:[#allocation5 + $0x148] sm:$0xf]
        %v2756 = vld [vmem:[#allocation5 + $0x14c] sm:$0xf]
        %v2757 = vld [vmem:[#allocation5 + $0x150] sm:$0xf]
        %v2758 = vld [vmem:[#allocation5 + $0x154] sm:$0xf]
        %v2759 = vld [vmem:[#allocation5 + $0x158] sm:$0xf]
        %v2760 = vld [vmem:[#allocation5 + $0x15c] sm:$0xf]
        %v2761 = vld [vmem:[#allocation5 + $0x160] sm:$0xf]
        %v2762 = vld [vmem:[#allocation5 + $0x164] sm:$0xf]
        %v2763 = vld [vmem:[#allocation5 + $0x168] sm:$0xf]
        %v2764 = vld [vmem:[#allocation5 + $0x16c] sm:$0xf]
        %v2765 = vld [vmem:[#allocation5 + $0x170] sm:$0xf]
        %v2766 = vld [vmem:[#allocation5 + $0x174] sm:$0xf]
        %v2767 = vld [vmem:[#allocation5 + $0x178] sm:$0xf]
        %v2768 = vld [vmem:[#allocation5 + $0x17c] sm:$0xf]
        %v2769 = vld [vmem:[#allocation5 + $0x180] sm:$0xf]
        %v2770 = vld [vmem:[#allocation5 + $0x184] sm:$0xf]
        %v2771 = vld [vmem:[#allocation5 + $0x188] sm:$0xf]
        %v2772 = vld [vmem:[#allocation5 + $0x18c] sm:$0xf]
        %v2773 = vld [vmem:[#allocation5 + $0x190] sm:$0xf]
        %v2774 = vld [vmem:[#allocation5 + $0x194] sm:$0xf]
        %v2775 = vld [vmem:[#allocation5 + $0x198] sm:$0xf]
        %v2776 = vld [vmem:[#allocation5 + $0x19c] sm:$0xf]
        %v2777 = vld [vmem:[#allocation5 + $0x1a0] sm:$0xf]
        %v2778 = vld [vmem:[#allocation5 + $0x1a4] sm:$0xf]
        %v2779 = vld [vmem:[#allocation5 + $0x1a8] sm:$0xf]
        %v2780 = vld [vmem:[#allocation5 + $0x1ac] sm:$0xf]
        %v2781 = vld [vmem:[#allocation5 + $0x1b0] sm:$0xf]
        %v2782 = vld [vmem:[#allocation5 + $0x1b4] sm:$0xf]
        %v2783 = vld [vmem:[#allocation5 + $0x1b8] sm:$0xf]
        %v2784 = vld [vmem:[#allocation5 + $0x1bc] sm:$0xf]
        %v2785 = vld [vmem:[#allocation5 + $0x1c0] sm:$0xf]
        %v2786 = vld [vmem:[#allocation5 + $0x1c4] sm:$0xf]
        %v2787 = vld [vmem:[#allocation5 + $0x1c8] sm:$0xf]
        %v2788 = vld [vmem:[#allocation5 + $0x1cc] sm:$0xf]
        %v2789 = vld [vmem:[#allocation5 + $0x1d0] sm:$0xf]
        %v2790 = vld [vmem:[#allocation5 + $0x1d4] sm:$0xf]
        %v2791 = vld [vmem:[#allocation5 + $0x1d8] sm:$0xf]
        %v2792 = vld [vmem:[#allocation5 + $0x1dc] sm:$0xf]
        %v2793 = vld [vmem:[#allocation5 + $0x1e0] sm:$0xf]
        %v2794 = vld [vmem:[#allocation5 + $0x1e4] sm:$0xf]
        %v2795 = vld [vmem:[#allocation5 + $0x1e8] sm:$0xf]
        %v2796 = vld [vmem:[#allocation5 + $0x1ec] sm:$0xf]
        %v2797 = vld [vmem:[#allocation5 + $0x1f0] sm:$0xf]
        %v2798 = vld [vmem:[#allocation5 + $0x1f4] sm:$0xf]
        %v2799 = vld [vmem:[#allocation5 + $0x1f8] sm:$0xf]
        %v2800 = vld [vmem:[#allocation5 + $0x1fc] sm:$0xf]
        %v2801 = vld [vmem:[#allocation5 + $0x200] sm:$0xf]
        %v2802 = vld [vmem:[#allocation5 + $0x204] sm:$0xf]
        %v2803 = vld [vmem:[#allocation5 + $0x208] sm:$0xf]
        %v2804 = vld [vmem:[#allocation5 + $0x20c] sm:$0xf]
        %v2805 = vld [vmem:[#allocation5 + $0x210] sm:$0xf]
        %v2806 = vld [vmem:[#allocation5 + $0x214] sm:$0xf]
        %v2807 = vld [vmem:[#allocation5 + $0x218] sm:$0xf]
        %v2808 = vld [vmem:[#allocation5 + $0x21c] sm:$0xf]
        %v2809 = vld [vmem:[#allocation5 + $0x220] sm:$0xf]
        %v2810 = vld [vmem:[#allocation5 + $0x224] sm:$0xf]
        %v2811 = vld [vmem:[#allocation5 + $0x228] sm:$0xf]
        %v2812 = vld [vmem:[#allocation5 + $0x22c] sm:$0xf]
        %v2813 = vld [vmem:[#allocation5 + $0x230] sm:$0xf]
        %v2814 = vld [vmem:[#allocation5 + $0x234] sm:$0xf]
        %v2815 = vld [vmem:[#allocation5 + $0x238] sm:$0xf]
        %v2816 = vld [vmem:[#allocation5 + $0x23c] sm:$0xf]
        %v2961 = vunpack.c.l.b16 %v2673
        %v2962 = vunpack.c.l.b16 %v2674
        %v2963 = vunpack.c.l.b16 %v2675
        %v2964 = vunpack.c.l.b16 %v2676
        %v2965 = vunpack.c.l.b16 %v2677
        %v2966 = vunpack.c.l.b16 %v2678
        %v2967 = vunpack.c.l.b16 %v2679
        %v2968 = vunpack.c.l.b16 %v2680
        %v2969 = vunpack.c.l.b16 %v2681
        %v2970 = vunpack.c.l.b16 %v2682
        %v2971 = vunpack.c.l.b16 %v2683
        %v2972 = vunpack.c.l.b16 %v2684
        %v2973 = vunpack.c.l.b16 %v2685
        %v2974 = vunpack.c.l.b16 %v2686
        %v2975 = vunpack.c.l.b16 %v2687
        %v2976 = vunpack.c.l.b16 %v2688
        %v2977 = vunpack.c.l.b16 %v2689
        %v2978 = vunpack.c.l.b16 %v2690
        %v2979 = vunpack.c.l.b16 %v2691
        %v2980 = vunpack.c.l.b16 %v2692
        %v2981 = vunpack.c.l.b16 %v2693
        %v2982 = vunpack.c.l.b16 %v2694
        %v2983 = vunpack.c.l.b16 %v2695
        %v2984 = vunpack.c.l.b16 %v2696
        %v2985 = vunpack.c.l.b16 %v2697
        %v2986 = vunpack.c.l.b16 %v2698
        %v2987 = vunpack.c.l.b16 %v2699
        %v2988 = vunpack.c.l.b16 %v2700
        %v2989 = vunpack.c.l.b16 %v2701
        %v2990 = vunpack.c.l.b16 %v2702
        %v2991 = vunpack.c.l.b16 %v2703
        %v2992 = vunpack.c.l.b16 %v2704
        %v2993 = vunpack.c.l.b16 %v2705
        %v2994 = vunpack.c.l.b16 %v2706
        %v2995 = vunpack.c.l.b16 %v2707
        %v2996 = vunpack.c.l.b16 %v2708
        %v2997 = vunpack.c.l.b16 %v2709
        %v2998 = vunpack.c.l.b16 %v2710
        %v2999 = vunpack.c.l.b16 %v2711
        %v3000 = vunpack.c.l.b16 %v2712
        %v3001 = vunpack.c.l.b16 %v2713
        %v3002 = vunpack.c.l.b16 %v2714
        %v3003 = vunpack.c.l.b16 %v2715
        %v3004 = vunpack.c.l.b16 %v2716
        %v3005 = vunpack.c.l.b16 %v2717
        %v3006 = vunpack.c.l.b16 %v2718
        %v3007 = vunpack.c.l.b16 %v2719
        %v3008 = vunpack.c.l.b16 %v2720
        %v3009 = vunpack.c.l.b16 %v2721
        %v3010 = vunpack.c.l.b16 %v2722
        %v3011 = vunpack.c.l.b16 %v2723
        %v3012 = vunpack.c.l.b16 %v2724
        %v3013 = vunpack.c.l.b16 %v2725
        %v3014 = vunpack.c.l.b16 %v2726
        %v3015 = vunpack.c.l.b16 %v2727
        %v3016 = vunpack.c.l.b16 %v2728
        %v3017 = vunpack.c.l.b16 %v2729
        %v3018 = vunpack.c.l.b16 %v2730
        %v3019 = vunpack.c.l.b16 %v2731
        %v3020 = vunpack.c.l.b16 %v2732
        %v3021 = vunpack.c.l.b16 %v2733
        %v3022 = vunpack.c.l.b16 %v2734
        %v3023 = vunpack.c.l.b16 %v2735
        %v3024 = vunpack.c.l.b16 %v2736
        %v3025 = vunpack.c.l.b16 %v2737
        %v3026 = vunpack.c.l.b16 %v2738
        %v3027 = vunpack.c.l.b16 %v2739
        %v3028 = vunpack.c.l.b16 %v2740
        %v3029 = vunpack.c.l.b16 %v2741
        %v3030 = vunpack.c.l.b16 %v2742
        %v3031 = vunpack.c.l.b16 %v2743
        %v3032 = vunpack.c.l.b16 %v2744
        %v3033 = vunpack.c.l.b16 %v2745
        %v3034 = vunpack.c.l.b16 %v2746
        %v3035 = vunpack.c.l.b16 %v2747
        %v3036 = vunpack.c.l.b16 %v2748
        %v3037 = vunpack.c.l.b16 %v2749
        %v3038 = vunpack.c.l.b16 %v2750
        %v3039 = vunpack.c.l.b16 %v2751
        %v3040 = vunpack.c.l.b16 %v2752
        %v3041 = vunpack.c.l.b16 %v2753
        %v3042 = vunpack.c.l.b16 %v2754
        %v3043 = vunpack.c.l.b16 %v2755
        %v3044 = vunpack.c.l.b16 %v2756
        %v3045 = vunpack.c.l.b16 %v2757
        %v3046 = vunpack.c.l.b16 %v2758
        %v3047 = vunpack.c.l.b16 %v2759
        %v3048 = vunpack.c.l.b16 %v2760
        %v3049 = vunpack.c.l.b16 %v2761
        %v3050 = vunpack.c.l.b16 %v2762
        %v3051 = vunpack.c.l.b16 %v2763
        %v3052 = vunpack.c.l.b16 %v2764
        %v3053 = vunpack.c.l.b16 %v2765
        %v3054 = vunpack.c.l.b16 %v2766
        %v3055 = vunpack.c.l.b16 %v2767
        %v3056 = vunpack.c.l.b16 %v2768
        %v3057 = vunpack.c.l.b16 %v2769
        %v3058 = vunpack.c.l.b16 %v2770
        %v3059 = vunpack.c.l.b16 %v2771
        %v3060 = vunpack.c.l.b16 %v2772
        %v3061 = vunpack.c.l.b16 %v2773
        %v3062 = vunpack.c.l.b16 %v2774
        %v3063 = vunpack.c.l.b16 %v2775
        %v3064 = vunpack.c.l.b16 %v2776
        %v3065 = vunpack.c.l.b16 %v2777
        %v3066 = vunpack.c.l.b16 %v2778
        %v3067 = vunpack.c.l.b16 %v2779
        %v3068 = vunpack.c.l.b16 %v2780
        %v3069 = vunpack.c.l.b16 %v2781
        %v3070 = vunpack.c.l.b16 %v2782
        %v3071 = vunpack.c.l.b16 %v2783
        %v3072 = vunpack.c.l.b16 %v2784
        %v3073 = vunpack.c.l.b16 %v2785
        %v3074 = vunpack.c.l.b16 %v2786
        %v3075 = vunpack.c.l.b16 %v2787
        %v3076 = vunpack.c.l.b16 %v2788
        %v3077 = vunpack.c.l.b16 %v2789
        %v3078 = vunpack.c.l.b16 %v2790
        %v3079 = vunpack.c.l.b16 %v2791
        %v3080 = vunpack.c.l.b16 %v2792
        %v3081 = vunpack.c.l.b16 %v2793
        %v3082 = vunpack.c.l.b16 %v2794
        %v3083 = vunpack.c.l.b16 %v2795
        %v3084 = vunpack.c.l.b16 %v2796
        %v3085 = vunpack.c.l.b16 %v2797
        %v3086 = vunpack.c.l.b16 %v2798
        %v3087 = vunpack.c.l.b16 %v2799
        %v3088 = vunpack.c.l.b16 %v2800
        %v3089 = vunpack.c.l.b16 %v2801
        %v3090 = vunpack.c.l.b16 %v2802
        %v3091 = vunpack.c.l.b16 %v2803
        %v3092 = vunpack.c.l.b16 %v2804
        %v3093 = vunpack.c.l.b16 %v2805
        %v3094 = vunpack.c.l.b16 %v2806
        %v3095 = vunpack.c.l.b16 %v2807
        %v3096 = vunpack.c.l.b16 %v2808
        %v3097 = vunpack.c.l.b16 %v2809
        %v3098 = vunpack.c.l.b16 %v2810
        %v3099 = vunpack.c.l.b16 %v2811
        %v3100 = vunpack.c.l.b16 %v2812
        %v3101 = vunpack.c.l.b16 %v2813
        %v3102 = vunpack.c.l.b16 %v2814
        %v3103 = vunpack.c.l.b16 %v2815
        %v3104 = vunpack.c.l.b16 %v2816
        %v3105 = vpack.c.b16 %v2962, %v2961
        %v3106 = vpack.c.b16 %v2964, %v2963
        %v3107 = vpack.c.b16 %v2966, %v2965
        %v3108 = vpack.c.b16 %v2968, %v2967
        %v3109 = vpack.c.b16 %v2970, %v2969
        %v3110 = vpack.c.b16 %v2972, %v2971
        %v3111 = vpack.c.b16 %v2974, %v2973
        %v3112 = vpack.c.b16 %v2976, %v2975
        %v3113 = vpack.c.b16 %v2978, %v2977
        %v3114 = vpack.c.b16 %v2980, %v2979
        %v3115 = vpack.c.b16 %v2982, %v2981
        %v3116 = vpack.c.b16 %v2984, %v2983
        %v3117 = vpack.c.b16 %v2986, %v2985
        %v3118 = vpack.c.b16 %v2988, %v2987
        %v3119 = vpack.c.b16 %v2990, %v2989
        %v3120 = vpack.c.b16 %v2992, %v2991
        %v3121 = vpack.c.b16 %v2994, %v2993
        %v3122 = vpack.c.b16 %v2996, %v2995
        %v3123 = vpack.c.b16 %v2998, %v2997
        %v3124 = vpack.c.b16 %v3000, %v2999
        %v3125 = vpack.c.b16 %v3002, %v3001
        %v3126 = vpack.c.b16 %v3004, %v3003
        %v3127 = vpack.c.b16 %v3006, %v3005
        %v3128 = vpack.c.b16 %v3008, %v3007
        %v3129 = vpack.c.b16 %v3010, %v3009
        %v3130 = vpack.c.b16 %v3012, %v3011
        %v3131 = vpack.c.b16 %v3014, %v3013
        %v3132 = vpack.c.b16 %v3016, %v3015
        %v3133 = vpack.c.b16 %v3018, %v3017
        %v3134 = vpack.c.b16 %v3020, %v3019
        %v3135 = vpack.c.b16 %v3022, %v3021
        %v3136 = vpack.c.b16 %v3024, %v3023
        %v3137 = vpack.c.b16 %v3026, %v3025
        %v3138 = vpack.c.b16 %v3028, %v3027
        %v3139 = vpack.c.b16 %v3030, %v3029
        %v3140 = vpack.c.b16 %v3032, %v3031
        %v3141 = vpack.c.b16 %v3034, %v3033
        %v3142 = vpack.c.b16 %v3036, %v3035
        %v3143 = vpack.c.b16 %v3038, %v3037
        %v3144 = vpack.c.b16 %v3040, %v3039
        %v3145 = vpack.c.b16 %v3042, %v3041
        %v3146 = vpack.c.b16 %v3044, %v3043
        %v3147 = vpack.c.b16 %v3046, %v3045
        %v3148 = vpack.c.b16 %v3048, %v3047
        %v3149 = vpack.c.b16 %v3050, %v3049
        %v3150 = vpack.c.b16 %v3052, %v3051
        %v3151 = vpack.c.b16 %v3054, %v3053
        %v3152 = vpack.c.b16 %v3056, %v3055
        %v3153 = vpack.c.b16 %v3058, %v3057
        %v3154 = vpack.c.b16 %v3060, %v3059
        %v3155 = vpack.c.b16 %v3062, %v3061
        %v3156 = vpack.c.b16 %v3064, %v3063
        %v3157 = vpack.c.b16 %v3066, %v3065
        %v3158 = vpack.c.b16 %v3068, %v3067
        %v3159 = vpack.c.b16 %v3070, %v3069
        %v3160 = vpack.c.b16 %v3072, %v3071
        %v3161 = vpack.c.b16 %v3074, %v3073
        %v3162 = vpack.c.b16 %v3076, %v3075
        %v3163 = vpack.c.b16 %v3078, %v3077
        %v3164 = vpack.c.b16 %v3080, %v3079
        %v3165 = vpack.c.b16 %v3082, %v3081
        %v3166 = vpack.c.b16 %v3084, %v3083
        %v3167 = vpack.c.b16 %v3086, %v3085
        %v3168 = vpack.c.b16 %v3088, %v3087
        %v3169 = vpack.c.b16 %v3090, %v3089
        %v3170 = vpack.c.b16 %v3092, %v3091
        %v3171 = vpack.c.b16 %v3094, %v3093
        %v3172 = vpack.c.b16 %v3096, %v3095
        %v3173 = vpack.c.b16 %v3098, %v3097
        %v3174 = vpack.c.b16 %v3100, %v3099
        %v3175 = vpack.c.b16 %v3102, %v3101
        %v3176 = vpack.c.b16 %v3104, %v3103
        %3249 = vmatprep.subr.bf16.mxu0 0
        %3250 = vmatpush1.bf16.msra.mxu0 %v3105
        %3251 = vmatprep.subr.bf16.mxu0 0
        %3252 = vmatpush1.bf16.msra.mxu0 %v3106
        %3253 = vmatprep.subr.bf16.mxu0 0
        %3254 = vmatpush1.bf16.msra.mxu0 %v3107
        %3255 = vmatprep.subr.bf16.mxu0 0
        %3256 = vmatpush1.bf16.msra.mxu0 %v3108
        %3257 = vmatprep.subr.bf16.mxu0 0
        %3258 = vmatpush1.bf16.msra.mxu0 %v3109
        %3259 = vmatprep.subr.bf16.mxu0 0
        %3260 = vmatpush1.bf16.msra.mxu0 %v3110
        %3261 = vmatprep.subr.bf16.mxu0 0
        %3262 = vmatpush1.bf16.msra.mxu0 %v3111
        %3263 = vmatprep.subr.bf16.mxu0 0
        %3264 = vmatpush1.bf16.msra.mxu0 %v3112
        %3265 = vmatprep.subr.bf16.mxu0 0
        %3266 = vmatpush1.bf16.msra.mxu0 %v3113
        %3267 = vmatprep.subr.bf16.mxu0 0
        %3268 = vmatpush1.bf16.msra.mxu0 %v3114
        %3269 = vmatprep.subr.bf16.mxu0 0
        %3270 = vmatpush1.bf16.msra.mxu0 %v3115
        %3271 = vmatprep.subr.bf16.mxu0 0
        %3272 = vmatpush1.bf16.msra.mxu0 %v3116
        %3273 = vmatprep.subr.bf16.mxu0 0
        %3274 = vmatpush1.bf16.msra.mxu0 %v3117
        %3275 = vmatprep.subr.bf16.mxu0 0
        %3276 = vmatpush1.bf16.msra.mxu0 %v3118
        %3277 = vmatprep.subr.bf16.mxu0 0
        %3278 = vmatpush1.bf16.msra.mxu0 %v3119
        %3279 = vmatprep.subr.bf16.mxu0 0
        %3280 = vmatpush1.bf16.msra.mxu0 %v3120
        %3281 = vmatprep.mubr.bf16.mxu0 %v2161
        %3282 = vmatmul.mubr.bf16.gmra.mrb[0].mxu0 %v2097
        %v3283 = vpop.f32.mrb[0].mxu0
        %v3284 = vadd.f32 0.0, %v3283
        %v3285 = vpop.f32.mrb[0].mxu0
        %v3286 = vpop.f32.mrb[0].mxu0
        %v3287 = vadd.f32 0.0, %v3286
        %v3288 = vpop.f32.mrb[0].mxu0
        %3289 = vmatprep.mubr.bf16.mxu0 %v2162
        %3290 = vmatmul.mubr.bf16.gmra.mrb[0].mxu0 %v2098
        %v3291 = vpop.f32.mrb[0].mxu0
        %v3292 = vadd.f32 0.0, %v3291
        %v3293 = vpop.f32.mrb[0].mxu0
        %v3294 = vpop.f32.mrb[0].mxu0
        %v3295 = vadd.f32 0.0, %v3294
        %v3296 = vpop.f32.mrb[0].mxu0
        %3297 = vmatprep.mubr.bf16.mxu0 %v2163
        %3298 = vmatmul.mubr.bf16.gmra.mrb[0].mxu0 %v2099
        %v3299 = vpop.f32.mrb[0].mxu0
        %v3300 = vadd.f32 0.0, %v3299
        %v3301 = vpop.f32.mrb[0].mxu0
        %v3302 = vpop.f32.mrb[0].mxu0
        %v3303 = vadd.f32 0.0, %v3302
        %v3304 = vpop.f32.mrb[0].mxu0
        %3305 = vmatprep.mubr.bf16.mxu0 %v2164
        %3306 = vmatmul.mubr.bf16.gmra.mrb[0].mxu0 %v2100
        %v3307 = vpop.f32.mrb[0].mxu0
        %v3308 = vadd.f32 0.0, %v3307
        %v3309 = vpop.f32.mrb[0].mxu0
        %v3310 = vpop.f32.mrb[0].mxu0
        %v3311 = vadd.f32 0.0, %v3310
        %v3312 = vpop.f32.mrb[0].mxu0
        %3313 = vmatprep.mubr.bf16.mxu0 %v2165
        %3314 = vmatmul.mubr.bf16.gmra.mrb[0].mxu0 %v2101
        %v3315 = vpop.f32.mrb[0].mxu0
        %v3316 = vadd.f32 0.0, %v3315
        %v3317 = vpop.f32.mrb[0].mxu0
        %v3318 = vpop.f32.mrb[0].mxu0
        %v3319 = vadd.f32 0.0, %v3318
        %v3320 = vpop.f32.mrb[0].mxu0
        %3321 = vmatprep.mubr.bf16.mxu0 %v2166
        %3322 = vmatmul.mubr.bf16.gmra.mrb[0].mxu0 %v2102
        %v3323 = vpop.f32.mrb[0].mxu0
        %v3324 = vadd.f32 0.0, %v3323
        %v3325 = vpop.f32.mrb[0].mxu0
        %v3326 = vpop.f32.mrb[0].mxu0
        %v3327 = vadd.f32 0.0, %v3326
        %v3328 = vpop.f32.mrb[0].mxu0
        %3329 = vmatprep.mubr.bf16.mxu0 %v2167
        %3330 = vmatmul.mubr.bf16.gmra.mrb[0].mxu0 %v2103
        %v3331 = vpop.f32.mrb[0].mxu0
        %v3332 = vadd.f32 0.0, %v3331
        %v3333 = vpop.f32.mrb[0].mxu0
        %v3334 = vpop.f32.mrb[0].mxu0
        %v3335 = vadd.f32 0.0, %v3334
        %v3336 = vpop.f32.mrb[0].mxu0
        %3337 = vmatprep.mubr.bf16.mxu0 %v2168
        %3338 = vmatmul.mubr.bf16.gmra.mrb[0].mxu0 %v2104
        %v3339 = vpop.f32.mrb[0].mxu0
        %v3340 = vadd.f32 0.0, %v3339
        %v3341 = vpop.f32.mrb[0].mxu0
        %v3342 = vpop.f32.mrb[0].mxu0
        %v3343 = vadd.f32 0.0, %v3342
        %v3344 = vpop.f32.mrb[0].mxu0
        %3345 = vmatprep.mubr.bf16.mxu0 %v2169
        %3346 = vmatmul.mubr.bf16.gmra.mrb[0].mxu0 %v2105
        %v3347 = vpop.f32.mrb[0].mxu0
        %v3348 = vadd.f32 0.0, %v3347
        %v3349 = vpop.f32.mrb[0].mxu0
        %v3350 = vpop.f32.mrb[0].mxu0
        %v3351 = vadd.f32 0.0, %v3350
        %v3352 = vpop.f32.mrb[0].mxu0
        %3353 = vmatprep.mubr.bf16.mxu0 %v2170
        %3354 = vmatmul.mubr.bf16.gmra.mrb[0].mxu0 %v2106
        %v3355 = vpop.f32.mrb[0].mxu0
        %v3356 = vadd.f32 0.0, %v3355
        %v3357 = vpop.f32.mrb[0].mxu0
        %v3358 = vpop.f32.mrb[0].mxu0
        %v3359 = vadd.f32 0.0, %v3358
        %v3360 = vpop.f32.mrb[0].mxu0
        %3361 = vmatprep.mubr.bf16.mxu0 %v2171
        %3362 = vmatmul.mubr.bf16.gmra.mrb[0].mxu0 %v2107
        %v3363 = vpop.f32.mrb[0].mxu0
        %v3364 = vadd.f32 0.0, %v3363
        %v3365 = vpop.f32.mrb[0].mxu0
        %v3366 = vpop.f32.mrb[0].mxu0
        %v3367 = vadd.f32 0.0, %v3366
        %v3368 = vpop.f32.mrb[0].mxu0
        %3369 = vmatprep.mubr.bf16.mxu0 %v2172
        %3370 = vmatmul.mubr.bf16.gmra.mrb[0].mxu0 %v2108
        %v3371 = vpop.f32.mrb[0].mxu0
        %v3372 = vadd.f32 0.0, %v3371
        %v3373 = vpop.f32.mrb[0].mxu0
        %v3374 = vpop.f32.mrb[0].mxu0
        %v3375 = vadd.f32 0.0, %v3374
        %v3376 = vpop.f32.mrb[0].mxu0
        %3377 = vmatprep.mubr.bf16.mxu0 %v2173
        %3378 = vmatmul.mubr.bf16.gmra.mrb[0].mxu0 %v2109
        %v3379 = vpop.f32.mrb[0].mxu0
        %v3380 = vadd.f32 0.0, %v3379
        %v3381 = vpop.f32.mrb[0].mxu0
        %v3382 = vpop.f32.mrb[0].mxu0
        %v3383 = vadd.f32 0.0, %v3382
        %v3384 = vpop.f32.mrb[0].mxu0
        %3385 = vmatprep.mubr.bf16.mxu0 %v2174
        %3386 = vmatmul.mubr.bf16.gmra.mrb[0].mxu0 %v2110
        %v3387 = vpop.f32.mrb[0].mxu0
        %v3388 = vadd.f32 0.0, %v3387
        %v3389 = vpop.f32.mrb[0].mxu0
        %v3390 = vpop.f32.mrb[0].mxu0
        %v3391 = vadd.f32 0.0, %v3390
        %v3392 = vpop.f32.mrb[0].mxu0
        %3393 = vmatprep.mubr.bf16.mxu0 %v2175
        %3394 = vmatmul.mubr.bf16.gmra.mrb[0].mxu0 %v2111
        %v3395 = vpop.f32.mrb[0].mxu0
        %v3396 = vadd.f32 0.0, %v3395
        %v3397 = vpop.f32.mrb[0].mxu0
        %v3398 = vpop.f32.mrb[0].mxu0
        %v3399 = vadd.f32 0.0, %v3398
        %v3400 = vpop.f32.mrb[0].mxu0
        %3401 = vmatprep.mubr.bf16.mxu0 %v2176
        %3402 = vmatmul.mubr.bf16.gmra.mrb[0].mxu0 %v2112
        %v3403 = vpop.f32.mrb[0].mxu0
        %v3404 = vadd.f32 0.0, %v3403
        %v3405 = vpop.f32.mrb[0].mxu0
        %v3406 = vpop.f32.mrb[0].mxu0
        %v3407 = vadd.f32 0.0, %v3406
        %v3408 = vpop.f32.mrb[0].mxu0
        %3409 = vdwg.mxu0
        %3410 = vmatprep.subr.bf16.mxu0 0
        %3411 = vmatpush1.bf16.msra.mxu0 %v3121
        %3412 = vmatprep.subr.bf16.mxu0 0
        %3413 = vmatpush1.bf16.msra.mxu0 %v3122
        %3414 = vmatprep.subr.bf16.mxu0 0
        %3415 = vmatpush1.bf16.msra.mxu0 %v3123
        %3416 = vmatprep.subr.bf16.mxu0 0
        %3417 = vmatpush1.bf16.msra.mxu0 %v3124
        %3418 = vmatprep.subr.bf16.mxu0 0
        %3419 = vmatpush1.bf16.msra.mxu0 %v3125
        %3420 = vmatprep.subr.bf16.mxu0 0
        %3421 = vmatpush1.bf16.msra.mxu0 %v3126
        %3422 = vmatprep.subr.bf16.mxu0 0
        %3423 = vmatpush1.bf16.msra.mxu0 %v3127
        %3424 = vmatprep.subr.bf16.mxu0 0
        %3425 = vmatpush1.bf16.msra.mxu0 %v3128
        %3426 = vmatprep.subr.bf16.mxu0 0
        %3427 = vmatpush1.bf16.msra.mxu0 %v3129
        %3428 = vmatprep.subr.bf16.mxu0 0
        %3429 = vmatpush1.bf16.msra.mxu0 %v3130
        %3430 = vmatprep.subr.bf16.mxu0 0
        %3431 = vmatpush1.bf16.msra.mxu0 %v3131
        %3432 = vmatprep.subr.bf16.mxu0 0
        %3433 = vmatpush1.bf16.msra.mxu0 %v3132
        %3434 = vmatprep.subr.bf16.mxu0 0
        %3435 = vmatpush1.bf16.msra.mxu0 %v3133
        %3436 = vmatprep.subr.bf16.mxu0 0
        %3437 = vmatpush1.bf16.msra.mxu0 %v3134
        %3438 = vmatprep.subr.bf16.mxu0 0
        %3439 = vmatpush1.bf16.msra.mxu0 %v3135
        %3440 = vmatprep.subr.bf16.mxu0 0
        %3441 = vmatpush1.bf16.msra.mxu0 %v3136
        %3442 = vmatprep.mubr.bf16.mxu0 %v2305
        %3443 = vmatmul.mubr.bf16.gmra.mrb[0].mxu0 %v2225
        %v3444 = vpop.f32.mrb[0].mxu0
        %v3445 = vadd.f32 %v3284, %v3444
        %v3446 = vpop.f32.mrb[0].mxu0
        %v3447 = vpop.f32.mrb[0].mxu0
        %v3448 = vadd.f32 %v3287, %v3447
        %v3449 = vpop.f32.mrb[0].mxu0
        %3450 = vmatprep.mubr.bf16.mxu0 %v2306
        %3451 = vmatmul.mubr.bf16.gmra.mrb[0].mxu0 %v2226
        %v3452 = vpop.f32.mrb[0].mxu0
        %v3453 = vadd.f32 %v3292, %v3452
        %v3454 = vpop.f32.mrb[0].mxu0
        %v3455 = vpop.f32.mrb[0].mxu0
        %v3456 = vadd.f32 %v3295, %v3455
        %v3457 = vpop.f32.mrb[0].mxu0
        %3458 = vmatprep.mubr.bf16.mxu0 %v2307
        %3459 = vmatmul.mubr.bf16.gmra.mrb[0].mxu0 %v2227
        %v3460 = vpop.f32.mrb[0].mxu0
        %v3461 = vadd.f32 %v3300, %v3460
        %v3462 = vpop.f32.mrb[0].mxu0
        %v3463 = vpop.f32.mrb[0].mxu0
        %v3464 = vadd.f32 %v3303, %v3463
        %v3465 = vpop.f32.mrb[0].mxu0
        %3466 = vmatprep.mubr.bf16.mxu0 %v2308
        %3467 = vmatmul.mubr.bf16.gmra.mrb[0].mxu0 %v2228
        %v3468 = vpop.f32.mrb[0].mxu0
        %v3469 = vadd.f32 %v3308, %v3468
        %v3470 = vpop.f32.mrb[0].mxu0
        %v3471 = vpop.f32.mrb[0].mxu0
        %v3472 = vadd.f32 %v3311, %v3471
        %v3473 = vpop.f32.mrb[0].mxu0
        %3474 = vmatprep.mubr.bf16.mxu0 %v2309
        %3475 = vmatmul.mubr.bf16.gmra.mrb[0].mxu0 %v2229
        %v3476 = vpop.f32.mrb[0].mxu0
        %v3477 = vadd.f32 %v3316, %v3476
        %v3478 = vpop.f32.mrb[0].mxu0
        %v3479 = vpop.f32.mrb[0].mxu0
        %v3480 = vadd.f32 %v3319, %v3479
        %v3481 = vpop.f32.mrb[0].mxu0
        %3482 = vmatprep.mubr.bf16.mxu0 %v2310
        %3483 = vmatmul.mubr.bf16.gmra.mrb[0].mxu0 %v2230
        %v3484 = vpop.f32.mrb[0].mxu0
        %v3485 = vadd.f32 %v3324, %v3484
        %v3486 = vpop.f32.mrb[0].mxu0
        %v3487 = vpop.f32.mrb[0].mxu0
        %v3488 = vadd.f32 %v3327, %v3487
        %v3489 = vpop.f32.mrb[0].mxu0
        %3490 = vmatprep.mubr.bf16.mxu0 %v2311
        %3491 = vmatmul.mubr.bf16.gmra.mrb[0].mxu0 %v2231
        %v3492 = vpop.f32.mrb[0].mxu0
        %v3493 = vadd.f32 %v3332, %v3492
        %v3494 = vpop.f32.mrb[0].mxu0
        %v3495 = vpop.f32.mrb[0].mxu0
        %v3496 = vadd.f32 %v3335, %v3495
        %v3497 = vpop.f32.mrb[0].mxu0
        %3498 = vmatprep.mubr.bf16.mxu0 %v2312
        %3499 = vmatmul.mubr.bf16.gmra.mrb[0].mxu0 %v2232
        %v3500 = vpop.f32.mrb[0].mxu0
        %v3501 = vadd.f32 %v3340, %v3500
        %v3502 = vpop.f32.mrb[0].mxu0
        %v3503 = vpop.f32.mrb[0].mxu0
        %v3504 = vadd.f32 %v3343, %v3503
        %v3505 = vpop.f32.mrb[0].mxu0
        %3506 = vmatprep.mubr.bf16.mxu0 %v2313
        %3507 = vmatmul.mubr.bf16.gmra.mrb[0].mxu0 %v2233
        %v3508 = vpop.f32.mrb[0].mxu0
        %v3509 = vadd.f32 %v3348, %v3508
        %v3510 = vpop.f32.mrb[0].mxu0
        %v3511 = vpop.f32.mrb[0].mxu0
        %v3512 = vadd.f32 %v3351, %v3511
        %v3513 = vpop.f32.mrb[0].mxu0
        %3514 = vmatprep.mubr.bf16.mxu0 %v2314
        %3515 = vmatmul.mubr.bf16.gmra.mrb[0].mxu0 %v2234
        %v3516 = vpop.f32.mrb[0].mxu0
        %v3517 = vadd.f32 %v3356, %v3516
        %v3518 = vpop.f32.mrb[0].mxu0
        %v3519 = vpop.f32.mrb[0].mxu0
        %v3520 = vadd.f32 %v3359, %v3519
        %v3521 = vpop.f32.mrb[0].mxu0
        %3522 = vmatprep.mubr.bf16.mxu0 %v2315
        %3523 = vmatmul.mubr.bf16.gmra.mrb[0].mxu0 %v2235
        %v3524 = vpop.f32.mrb[0].mxu0
        %v3525 = vadd.f32 %v3364, %v3524
        %v3526 = vpop.f32.mrb[0].mxu0
        %v3527 = vpop.f32.mrb[0].mxu0
        %v3528 = vadd.f32 %v3367, %v3527
        %v3529 = vpop.f32.mrb[0].mxu0
        %3530 = vmatprep.mubr.bf16.mxu0 %v2316
        %3531 = vmatmul.mubr.bf16.gmra.mrb[0].mxu0 %v2236
        %v3532 = vpop.f32.mrb[0].mxu0
        %v3533 = vadd.f32 %v3372, %v3532
        %v3534 = vpop.f32.mrb[0].mxu0
        %v3535 = vpop.f32.mrb[0].mxu0
        %v3536 = vadd.f32 %v3375, %v3535
        %v3537 = vpop.f32.mrb[0].mxu0
        %3538 = vmatprep.mubr.bf16.mxu0 %v2317
        %3539 = vmatmul.mubr.bf16.gmra.mrb[0].mxu0 %v2237
        %v3540 = vpop.f32.mrb[0].mxu0
        %v3541 = vadd.f32 %v3380, %v3540
        %v3542 = vpop.f32.mrb[0].mxu0
        %v3543 = vpop.f32.mrb[0].mxu0
        %v3544 = vadd.f32 %v3383, %v3543
        %v3545 = vpop.f32.mrb[0].mxu0
        %3546 = vmatprep.mubr.bf16.mxu0 %v2318
        %3547 = vmatmul.mubr.bf16.gmra.mrb[0].mxu0 %v2238
        %v3548 = vpop.f32.mrb[0].mxu0
        %v3549 = vadd.f32 %v3388, %v3548
        %v3550 = vpop.f32.mrb[0].mxu0
        %v3551 = vpop.f32.mrb[0].mxu0
        %v3552 = vadd.f32 %v3391, %v3551
        %v3553 = vpop.f32.mrb[0].mxu0
        %3554 = vmatprep.mubr.bf16.mxu0 %v2319
        %3555 = vmatmul.mubr.bf16.gmra.mrb[0].mxu0 %v2239
        %v3556 = vpop.f32.mrb[0].mxu0
        %v3557 = vadd.f32 %v3396, %v3556
        %v3558 = vpop.f32.mrb[0].mxu0
        %v3559 = vpop.f32.mrb[0].mxu0
        %v3560 = vadd.f32 %v3399, %v3559
        %v3561 = vpop.f32.mrb[0].mxu0
        %3562 = vmatprep.mubr.bf16.mxu0 %v2320
        %3563 = vmatmul.mubr.bf16.gmra.mrb[0].mxu0 %v2240
        %v3564 = vpop.f32.mrb[0].mxu0
        %v3565 = vadd.f32 %v3404, %v3564
        %v3566 = vpop.f32.mrb[0].mxu0
        %v3567 = vpop.f32.mrb[0].mxu0
        %v3568 = vadd.f32 %v3407, %v3567
        %v3569 = vpop.f32.mrb[0].mxu0
        %3570 = vdwg.mxu0
        %3571 = vmatprep.subr.bf16.mxu0 0
        %3572 = vmatpush1.bf16.msra.mxu0 %v3137
        %3573 = vmatprep.subr.bf16.mxu0 0
        %3574 = vmatpush1.bf16.msra.mxu0 %v3138
        %3575 = vmatprep.subr.bf16.mxu0 0
        %3576 = vmatpush1.bf16.msra.mxu0 %v3139
        %3577 = vmatprep.subr.bf16.mxu0 0
        %3578 = vmatpush1.bf16.msra.mxu0 %v3140
        %3579 = vmatprep.subr.bf16.mxu0 0
        %3580 = vmatpush1.bf16.msra.mxu0 %v3141
        %3581 = vmatprep.subr.bf16.mxu0 0
        %3582 = vmatpush1.bf16.msra.mxu0 %v3142
        %3583 = vmatprep.subr.bf16.mxu0 0
        %3584 = vmatpush1.bf16.msra.mxu0 %v3143
        %3585 = vmatprep.subr.bf16.mxu0 0
        %3586 = vmatpush1.bf16.msra.mxu0 %v3144
        %3587 = vmatprep.subr.bf16.mxu0 0
        %3588 = vmatpush1.bf16.msra.mxu0 %v3145
        %3589 = vmatprep.subr.bf16.mxu0 0
        %3590 = vmatpush1.bf16.msra.mxu0 %v3146
        %3591 = vmatprep.subr.bf16.mxu0 0
        %3592 = vmatpush1.bf16.msra.mxu0 %v3147
        %3593 = vmatprep.subr.bf16.mxu0 0
        %3594 = vmatpush1.bf16.msra.mxu0 %v3148
        %3595 = vmatprep.subr.bf16.mxu0 0
        %3596 = vmatpush1.bf16.msra.mxu0 %v3149
        %3597 = vmatprep.subr.bf16.mxu0 0
        %3598 = vmatpush1.bf16.msra.mxu0 %v3150
        %3599 = vmatprep.subr.bf16.mxu0 0
        %3600 = vmatpush1.bf16.msra.mxu0 %v3151
        %3601 = vmatprep.subr.bf16.mxu0 0
        %3602 = vmatpush1.bf16.msra.mxu0 %v3152
        %3603 = vmatprep.mubr.bf16.mxu0 %v2433
        %3604 = vmatmul.mubr.bf16.gmra.mrb[0].mxu0 %v2369
        %v3605 = vpop.f32.mrb[0].mxu0
        %v3606 = vadd.f32 %v3445, %v3605
        %v3607 = vpop.f32.mrb[0].mxu0
        %v3608 = vpop.f32.mrb[0].mxu0
        %v3609 = vadd.f32 %v3448, %v3608
        %v3610 = vpop.f32.mrb[0].mxu0
        %3611 = vmatprep.mubr.bf16.mxu0 %v2434
        %3612 = vmatmul.mubr.bf16.gmra.mrb[0].mxu0 %v2370
        %v3613 = vpop.f32.mrb[0].mxu0
        %v3614 = vadd.f32 %v3453, %v3613
        %v3615 = vpop.f32.mrb[0].mxu0
        %v3616 = vpop.f32.mrb[0].mxu0
        %v3617 = vadd.f32 %v3456, %v3616
        %v3618 = vpop.f32.mrb[0].mxu0
        %3619 = vmatprep.mubr.bf16.mxu0 %v2435
        %3620 = vmatmul.mubr.bf16.gmra.mrb[0].mxu0 %v2371
        %v3621 = vpop.f32.mrb[0].mxu0
        %v3622 = vadd.f32 %v3461, %v3621
        %v3623 = vpop.f32.mrb[0].mxu0
        %v3624 = vpop.f32.mrb[0].mxu0
        %v3625 = vadd.f32 %v3464, %v3624
        %v3626 = vpop.f32.mrb[0].mxu0
        %3627 = vmatprep.mubr.bf16.mxu0 %v2436
        %3628 = vmatmul.mubr.bf16.gmra.mrb[0].mxu0 %v2372
        %v3629 = vpop.f32.mrb[0].mxu0
        %v3630 = vadd.f32 %v3469, %v3629
        %v3631 = vpop.f32.mrb[0].mxu0
        %v3632 = vpop.f32.mrb[0].mxu0
        %v3633 = vadd.f32 %v3472, %v3632
        %v3634 = vpop.f32.mrb[0].mxu0
        %3635 = vmatprep.mubr.bf16.mxu0 %v2437
        %3636 = vmatmul.mubr.bf16.gmra.mrb[0].mxu0 %v2373
        %v3637 = vpop.f32.mrb[0].mxu0
        %v3638 = vadd.f32 %v3477, %v3637
        %v3639 = vpop.f32.mrb[0].mxu0
        %v3640 = vpop.f32.mrb[0].mxu0
        %v3641 = vadd.f32 %v3480, %v3640
        %v3642 = vpop.f32.mrb[0].mxu0
        %3643 = vmatprep.mubr.bf16.mxu0 %v2438
        %3644 = vmatmul.mubr.bf16.gmra.mrb[0].mxu0 %v2374
        %v3645 = vpop.f32.mrb[0].mxu0
        %v3646 = vadd.f32 %v3485, %v3645
        %v3647 = vpop.f32.mrb[0].mxu0
        %v3648 = vpop.f32.mrb[0].mxu0
        %v3649 = vadd.f32 %v3488, %v3648
        %v3650 = vpop.f32.mrb[0].mxu0
        %3651 = vmatprep.mubr.bf16.mxu0 %v2439
        %3652 = vmatmul.mubr.bf16.gmra.mrb[0].mxu0 %v2375
        %v3653 = vpop.f32.mrb[0].mxu0
        %v3654 = vadd.f32 %v3493, %v3653
        %v3655 = vpop.f32.mrb[0].mxu0
        %v3656 = vpop.f32.mrb[0].mxu0
        %v3657 = vadd.f32 %v3496, %v3656
        %v3658 = vpop.f32.mrb[0].mxu0
        %3659 = vmatprep.mubr.bf16.mxu0 %v2440
        %3660 = vmatmul.mubr.bf16.gmra.mrb[0].mxu0 %v2376
        %v3661 = vpop.f32.mrb[0].mxu0
        %v3662 = vadd.f32 %v3501, %v3661
        %v3663 = vpop.f32.mrb[0].mxu0
        %v3664 = vpop.f32.mrb[0].mxu0
        %v3665 = vadd.f32 %v3504, %v3664
        %v3666 = vpop.f32.mrb[0].mxu0
        %3667 = vmatprep.mubr.bf16.mxu0 %v2441
        %3668 = vmatmul.mubr.bf16.gmra.mrb[0].mxu0 %v2377
        %v3669 = vpop.f32.mrb[0].mxu0
        %v3670 = vadd.f32 %v3509, %v3669
        %v3671 = vpop.f32.mrb[0].mxu0
        %v3672 = vpop.f32.mrb[0].mxu0
        %v3673 = vadd.f32 %v3512, %v3672
        %v3674 = vpop.f32.mrb[0].mxu0
        %3675 = vmatprep.mubr.bf16.mxu0 %v2442
        %3676 = vmatmul.mubr.bf16.gmra.mrb[0].mxu0 %v2378
        %v3677 = vpop.f32.mrb[0].mxu0
        %v3678 = vadd.f32 %v3517, %v3677
        %v3679 = vpop.f32.mrb[0].mxu0
        %v3680 = vpop.f32.mrb[0].mxu0
        %v3681 = vadd.f32 %v3520, %v3680
        %v3682 = vpop.f32.mrb[0].mxu0
        %3683 = vmatprep.mubr.bf16.mxu0 %v2443
        %3684 = vmatmul.mubr.bf16.gmra.mrb[0].mxu0 %v2379
        %v3685 = vpop.f32.mrb[0].mxu0
        %v3686 = vadd.f32 %v3525, %v3685
        %v3687 = vpop.f32.mrb[0].mxu0
        %v3688 = vpop.f32.mrb[0].mxu0
        %v3689 = vadd.f32 %v3528, %v3688
        %v3690 = vpop.f32.mrb[0].mxu0
        %3691 = vmatprep.mubr.bf16.mxu0 %v2444
        %3692 = vmatmul.mubr.bf16.gmra.mrb[0].mxu0 %v2380
        %v3693 = vpop.f32.mrb[0].mxu0
        %v3694 = vadd.f32 %v3533, %v3693
        %v3695 = vpop.f32.mrb[0].mxu0
        %v3696 = vpop.f32.mrb[0].mxu0
        %v3697 = vadd.f32 %v3536, %v3696
        %v3698 = vpop.f32.mrb[0].mxu0
        %3699 = vmatprep.mubr.bf16.mxu0 %v2445
        %3700 = vmatmul.mubr.bf16.gmra.mrb[0].mxu0 %v2381
        %v3701 = vpop.f32.mrb[0].mxu0
        %v3702 = vadd.f32 %v3541, %v3701
        %v3703 = vpop.f32.mrb[0].mxu0
        %v3704 = vpop.f32.mrb[0].mxu0
        %v3705 = vadd.f32 %v3544, %v3704
        %v3706 = vpop.f32.mrb[0].mxu0
        %3707 = vmatprep.mubr.bf16.mxu0 %v2446
        %3708 = vmatmul.mubr.bf16.gmra.mrb[0].mxu0 %v2382
        %v3709 = vpop.f32.mrb[0].mxu0
        %v3710 = vadd.f32 %v3549, %v3709
        %v3711 = vpop.f32.mrb[0].mxu0
        %v3712 = vpop.f32.mrb[0].mxu0
        %v3713 = vadd.f32 %v3552, %v3712
        %v3714 = vpop.f32.mrb[0].mxu0
        %3715 = vmatprep.mubr.bf16.mxu0 %v2447
        %3716 = vmatmul.mubr.bf16.gmra.mrb[0].mxu0 %v2383
        %v3717 = vpop.f32.mrb[0].mxu0
        %v3718 = vadd.f32 %v3557, %v3717
        %v3719 = vpop.f32.mrb[0].mxu0
        %v3720 = vpop.f32.mrb[0].mxu0
        %v3721 = vadd.f32 %v3560, %v3720
        %v3722 = vpop.f32.mrb[0].mxu0
        %3723 = vmatprep.mubr.bf16.mxu0 %v2448
        %3724 = vmatmul.mubr.bf16.gmra.mrb[0].mxu0 %v2384
        %v3725 = vpop.f32.mrb[0].mxu0
        %v3726 = vadd.f32 %v3565, %v3725
        %v3727 = vpop.f32.mrb[0].mxu0
        %v3728 = vpop.f32.mrb[0].mxu0
        %v3729 = vadd.f32 %v3568, %v3728
        %v3730 = vpop.f32.mrb[0].mxu0
        %3731 = vdwg.mxu0
        %3732 = vmatprep.subr.bf16.mxu0 0
        %3733 = vmatpush1.bf16.msra.mxu0 %v3153
        %3734 = vmatprep.subr.bf16.mxu0 0
        %3735 = vmatpush1.bf16.msra.mxu0 %v3154
        %3736 = vmatprep.subr.bf16.mxu0 0
        %3737 = vmatpush1.bf16.msra.mxu0 %v3155
        %3738 = vmatprep.subr.bf16.mxu0 0
        %3739 = vmatpush1.bf16.msra.mxu0 %v3156
        %3740 = vmatprep.subr.bf16.mxu0 0
        %3741 = vmatpush1.bf16.msra.mxu0 %v3157
        %3742 = vmatprep.subr.bf16.mxu0 0
        %3743 = vmatpush1.bf16.msra.mxu0 %v3158
        %3744 = vmatprep.subr.bf16.mxu0 0
        %3745 = vmatpush1.bf16.msra.mxu0 %v3159
        %3746 = vmatprep.subr.bf16.mxu0 0
        %3747 = vmatpush1.bf16.msra.mxu0 %v3160
        %3748 = vmatprep.subr.bf16.mxu0 0
        %3749 = vmatpush1.bf16.msra.mxu0 %v3161
        %3750 = vmatprep.subr.bf16.mxu0 0
        %3751 = vmatpush1.bf16.msra.mxu0 %v3162
        %3752 = vmatprep.subr.bf16.mxu0 0
        %3753 = vmatpush1.bf16.msra.mxu0 %v3163
        %3754 = vmatprep.subr.bf16.mxu0 0
        %3755 = vmatpush1.bf16.msra.mxu0 %v3164
        %3756 = vmatprep.subr.bf16.mxu0 0
        %3757 = vmatpush1.bf16.msra.mxu0 %v3165
        %3758 = vmatprep.subr.bf16.mxu0 0
        %3759 = vmatpush1.bf16.msra.mxu0 %v3166
        %3760 = vmatprep.subr.bf16.mxu0 0
        %3761 = vmatpush1.bf16.msra.mxu0 %v3167
        %3762 = vmatprep.subr.bf16.mxu0 0
        %3763 = vmatpush1.bf16.msra.mxu0 %v3168
        %3764 = vmatprep.mubr.bf16.mxu0 %v2577
        %3765 = vmatmul.mubr.bf16.gmra.mrb[0].mxu0 %v2513
        %v3766 = vpop.f32.mrb[0].mxu0
        %v3767 = vadd.f32 %v3606, %v3766
        %v3768 = vpop.f32.mrb[0].mxu0
        %v3769 = vpop.f32.mrb[0].mxu0
        %v3770 = vadd.f32 %v3609, %v3769
        %v3771 = vpop.f32.mrb[0].mxu0
        %3772 = vmatprep.mubr.bf16.mxu0 %v2578
        %3773 = vmatmul.mubr.bf16.gmra.mrb[0].mxu0 %v2514
        %v3774 = vpop.f32.mrb[0].mxu0
        %v3775 = vadd.f32 %v3614, %v3774
        %v3776 = vpop.f32.mrb[0].mxu0
        %v3777 = vpop.f32.mrb[0].mxu0
        %v3778 = vadd.f32 %v3617, %v3777
        %v3779 = vpop.f32.mrb[0].mxu0
        %3780 = vmatprep.mubr.bf16.mxu0 %v2579
        %3781 = vmatmul.mubr.bf16.gmra.mrb[0].mxu0 %v2515
        %v3782 = vpop.f32.mrb[0].mxu0
        %v3783 = vadd.f32 %v3622, %v3782
        %v3784 = vpop.f32.mrb[0].mxu0
        %v3785 = vpop.f32.mrb[0].mxu0
        %v3786 = vadd.f32 %v3625, %v3785
        %v3787 = vpop.f32.mrb[0].mxu0
        %3788 = vmatprep.mubr.bf16.mxu0 %v2580
        %3789 = vmatmul.mubr.bf16.gmra.mrb[0].mxu0 %v2516
        %v3790 = vpop.f32.mrb[0].mxu0
        %v3791 = vadd.f32 %v3630, %v3790
        %v3792 = vpop.f32.mrb[0].mxu0
        %v3793 = vpop.f32.mrb[0].mxu0
        %v3794 = vadd.f32 %v3633, %v3793
        %v3795 = vpop.f32.mrb[0].mxu0
        %3796 = vmatprep.mubr.bf16.mxu0 %v2581
        %3797 = vmatmul.mubr.bf16.gmra.mrb[0].mxu0 %v2517
        %v3798 = vpop.f32.mrb[0].mxu0
        %v3799 = vadd.f32 %v3638, %v3798
        %v3800 = vpop.f32.mrb[0].mxu0
        %v3801 = vpop.f32.mrb[0].mxu0
        %v3802 = vadd.f32 %v3641, %v3801
        %v3803 = vpop.f32.mrb[0].mxu0
        %3804 = vmatprep.mubr.bf16.mxu0 %v2582
        %3805 = vmatmul.mubr.bf16.gmra.mrb[0].mxu0 %v2518
        %v3806 = vpop.f32.mrb[0].mxu0
        %v3807 = vadd.f32 %v3646, %v3806
        %v3808 = vpop.f32.mrb[0].mxu0
        %v3809 = vpop.f32.mrb[0].mxu0
        %v3810 = vadd.f32 %v3649, %v3809
        %v3811 = vpop.f32.mrb[0].mxu0
        %3812 = vmatprep.mubr.bf16.mxu0 %v2583
        %3813 = vmatmul.mubr.bf16.gmra.mrb[0].mxu0 %v2519
        %v3814 = vpop.f32.mrb[0].mxu0
        %v3815 = vadd.f32 %v3654, %v3814
        %v3816 = vpop.f32.mrb[0].mxu0
        %v3817 = vpop.f32.mrb[0].mxu0
        %v3818 = vadd.f32 %v3657, %v3817
        %v3819 = vpop.f32.mrb[0].mxu0
        %3820 = vmatprep.mubr.bf16.mxu0 %v2584
        %3821 = vmatmul.mubr.bf16.gmra.mrb[0].mxu0 %v2520
        %v3822 = vpop.f32.mrb[0].mxu0
        %v3823 = vadd.f32 %v3662, %v3822
        %v3824 = vpop.f32.mrb[0].mxu0
        %v3825 = vpop.f32.mrb[0].mxu0
        %v3826 = vadd.f32 %v3665, %v3825
        %v3827 = vpop.f32.mrb[0].mxu0
        %3828 = vmatprep.mubr.bf16.mxu0 %v2585
        %3829 = vmatmul.mubr.bf16.gmra.mrb[0].mxu0 %v2521
        %v3830 = vpop.f32.mrb[0].mxu0
        %v3831 = vadd.f32 %v3670, %v3830
        %v3832 = vpop.f32.mrb[0].mxu0
        %v3833 = vpop.f32.mrb[0].mxu0
        %v3834 = vadd.f32 %v3673, %v3833
        %v3835 = vpop.f32.mrb[0].mxu0
        %3836 = vmatprep.mubr.bf16.mxu0 %v2586
        %3837 = vmatmul.mubr.bf16.gmra.mrb[0].mxu0 %v2522
        %v3838 = vpop.f32.mrb[0].mxu0
        %v3839 = vadd.f32 %v3678, %v3838
        %v3840 = vpop.f32.mrb[0].mxu0
        %v3841 = vpop.f32.mrb[0].mxu0
        %v3842 = vadd.f32 %v3681, %v3841
        %v3843 = vpop.f32.mrb[0].mxu0
        %3844 = vmatprep.mubr.bf16.mxu0 %v2587
        %3845 = vmatmul.mubr.bf16.gmra.mrb[0].mxu0 %v2523
        %v3846 = vpop.f32.mrb[0].mxu0
        %v3847 = vadd.f32 %v3686, %v3846
        %v3848 = vpop.f32.mrb[0].mxu0
        %v3849 = vpop.f32.mrb[0].mxu0
        %v3850 = vadd.f32 %v3689, %v3849
        %v3851 = vpop.f32.mrb[0].mxu0
        %3852 = vmatprep.mubr.bf16.mxu0 %v2588
        %3853 = vmatmul.mubr.bf16.gmra.mrb[0].mxu0 %v2524
        %v3854 = vpop.f32.mrb[0].mxu0
        %v3855 = vadd.f32 %v3694, %v3854
        %v3856 = vpop.f32.mrb[0].mxu0
        %v3857 = vpop.f32.mrb[0].mxu0
        %v3858 = vadd.f32 %v3697, %v3857
        %v3859 = vpop.f32.mrb[0].mxu0
        %3860 = vmatprep.mubr.bf16.mxu0 %v2589
        %3861 = vmatmul.mubr.bf16.gmra.mrb[0].mxu0 %v2525
        %v3862 = vpop.f32.mrb[0].mxu0
        %v3863 = vadd.f32 %v3702, %v3862
        %v3864 = vpop.f32.mrb[0].mxu0
        %v3865 = vpop.f32.mrb[0].mxu0
        %v3866 = vadd.f32 %v3705, %v3865
        %v3867 = vpop.f32.mrb[0].mxu0
        %3868 = vmatprep.mubr.bf16.mxu0 %v2590
        %3869 = vmatmul.mubr.bf16.gmra.mrb[0].mxu0 %v2526
        %v3870 = vpop.f32.mrb[0].mxu0
        %v3871 = vadd.f32 %v3710, %v3870
        %v3872 = vpop.f32.mrb[0].mxu0
        %v3873 = vpop.f32.mrb[0].mxu0
        %v3874 = vadd.f32 %v3713, %v3873
        %v3875 = vpop.f32.mrb[0].mxu0
        %3876 = vmatprep.mubr.bf16.mxu0 %v2591
        %3877 = vmatmul.mubr.bf16.gmra.mrb[0].mxu0 %v2527
        %v3878 = vpop.f32.mrb[0].mxu0
        %v3879 = vadd.f32 %v3718, %v3878
        %v3880 = vpop.f32.mrb[0].mxu0
        %v3881 = vpop.f32.mrb[0].mxu0
        %v3882 = vadd.f32 %v3721, %v3881
        %v3883 = vpop.f32.mrb[0].mxu0
        %3884 = vmatprep.mubr.bf16.mxu0 %v2592
        %3885 = vmatmul.mubr.bf16.gmra.mrb[0].mxu0 %v2528
        %v3886 = vpop.f32.mrb[0].mxu0
        %v3887 = vadd.f32 %v3726, %v3886
        %v3888 = vpop.f32.mrb[0].mxu0
        %v3889 = vpop.f32.mrb[0].mxu0
        %v3890 = vadd.f32 %v3729, %v3889
        %v3891 = vpop.f32.mrb[0].mxu0
        %3892 = vdwg.mxu0
        %3893 = vmatprep.subr.bf16.mxu0 0
        %3894 = vmatpush1.bf16.msra.mxu0 %v3169
        %3895 = vmatprep.subr.bf16.mxu0 0
        %3896 = vmatpush1.bf16.msra.mxu0 %v3170
        %3897 = vmatprep.subr.bf16.mxu0 0
        %3898 = vmatpush1.bf16.msra.mxu0 %v3171
        %3899 = vmatprep.subr.bf16.mxu0 0
        %3900 = vmatpush1.bf16.msra.mxu0 %v3172
        %3901 = vmatprep.subr.bf16.mxu0 0
        %3902 = vmatpush1.bf16.msra.mxu0 %v3173
        %3903 = vmatprep.subr.bf16.mxu0 0
        %3904 = vmatpush1.bf16.msra.mxu0 %v3174
        %3905 = vmatprep.subr.bf16.mxu0 0
        %3906 = vmatpush1.bf16.msra.mxu0 %v3175
        %3907 = vmatprep.subr.bf16.mxu0 0
        %3908 = vmatpush1.bf16.msra.mxu0 %v3176
        %3909 = vmatprep.subr.bf16.mxu0 0
        %3910 = vmatpush1.bf16.msra.mxu0 0
        %3911 = vmatprep.subr.bf16.mxu0 0
        %3912 = vmatpush1.bf16.msra.mxu0 0
        %3913 = vmatprep.subr.bf16.mxu0 0
        %3914 = vmatpush1.bf16.msra.mxu0 0
        %3915 = vmatprep.subr.bf16.mxu0 0
        %3916 = vmatpush1.bf16.msra.mxu0 0
        %3917 = vmatprep.subr.bf16.mxu0 0
        %3918 = vmatpush1.bf16.msra.mxu0 0
        %3919 = vmatprep.subr.bf16.mxu0 0
        %3920 = vmatpush1.bf16.msra.mxu0 0
        %3921 = vmatprep.subr.bf16.mxu0 0
        %3922 = vmatpush1.bf16.msra.mxu0 0
        %3923 = vmatprep.subr.bf16.mxu0 0
        %3924 = vmatpush1.bf16.msra.mxu0 0
        %3925 = vmatprep.mubr.bf16.mxu0 0
        %3926 = vmatmul.mubr.bf16.gmra.mrb[0].mxu0 %v2641
        %v3927 = vpop.f32.mrb[0].mxu0
        %v3928 = vadd.f32 %v3767, %v3927
        %v3929 = vpop.f32.mrb[0].mxu0
        %v3930 = vpop.f32.mrb[0].mxu0
        %v3931 = vadd.f32 %v3770, %v3930
        %v3932 = vpop.f32.mrb[0].mxu0
        %3933 = vmatprep.mubr.bf16.mxu0 0
        %3934 = vmatmul.mubr.bf16.gmra.mrb[0].mxu0 %v2642
        %v3935 = vpop.f32.mrb[0].mxu0
        %v3936 = vadd.f32 %v3775, %v3935
        %v3937 = vpop.f32.mrb[0].mxu0
        %v3938 = vpop.f32.mrb[0].mxu0
        %v3939 = vadd.f32 %v3778, %v3938
        %v3940 = vpop.f32.mrb[0].mxu0
        %3941 = vmatprep.mubr.bf16.mxu0 0
        %3942 = vmatmul.mubr.bf16.gmra.mrb[0].mxu0 %v2643
        %v3943 = vpop.f32.mrb[0].mxu0
        %v3944 = vadd.f32 %v3783, %v3943
        %v3945 = vpop.f32.mrb[0].mxu0
        %v3946 = vpop.f32.mrb[0].mxu0
        %v3947 = vadd.f32 %v3786, %v3946
        %v3948 = vpop.f32.mrb[0].mxu0
        %3949 = vmatprep.mubr.bf16.mxu0 0
        %3950 = vmatmul.mubr.bf16.gmra.mrb[0].mxu0 %v2644
        %v3951 = vpop.f32.mrb[0].mxu0
        %v3952 = vadd.f32 %v3791, %v3951
        %v3953 = vpop.f32.mrb[0].mxu0
        %v3954 = vpop.f32.mrb[0].mxu0
        %v3955 = vadd.f32 %v3794, %v3954
        %v3956 = vpop.f32.mrb[0].mxu0
        %3957 = vmatprep.mubr.bf16.mxu0 0
        %3958 = vmatmul.mubr.bf16.gmra.mrb[0].mxu0 %v2645
        %v3959 = vpop.f32.mrb[0].mxu0
        %v3960 = vadd.f32 %v3799, %v3959
        %v3961 = vpop.f32.mrb[0].mxu0
        %v3962 = vpop.f32.mrb[0].mxu0
        %v3963 = vadd.f32 %v3802, %v3962
        %v3964 = vpop.f32.mrb[0].mxu0
        %3965 = vmatprep.mubr.bf16.mxu0 0
        %3966 = vmatmul.mubr.bf16.gmra.mrb[0].mxu0 %v2646
        %v3967 = vpop.f32.mrb[0].mxu0
        %v3968 = vadd.f32 %v3807, %v3967
        %v3969 = vpop.f32.mrb[0].mxu0
        %v3970 = vpop.f32.mrb[0].mxu0
        %v3971 = vadd.f32 %v3810, %v3970
        %v3972 = vpop.f32.mrb[0].mxu0
        %3973 = vmatprep.mubr.bf16.mxu0 0
        %3974 = vmatmul.mubr.bf16.gmra.mrb[0].mxu0 %v2647
        %v3975 = vpop.f32.mrb[0].mxu0
        %v3976 = vadd.f32 %v3815, %v3975
        %v3977 = vpop.f32.mrb[0].mxu0
        %v3978 = vpop.f32.mrb[0].mxu0
        %v3979 = vadd.f32 %v3818, %v3978
        %v3980 = vpop.f32.mrb[0].mxu0
        %3981 = vmatprep.mubr.bf16.mxu0 0
        %3982 = vmatmul.mubr.bf16.gmra.mrb[0].mxu0 %v2648
        %v3983 = vpop.f32.mrb[0].mxu0
        %v3984 = vadd.f32 %v3823, %v3983
        %v3985 = vpop.f32.mrb[0].mxu0
        %v3986 = vpop.f32.mrb[0].mxu0
        %v3987 = vadd.f32 %v3826, %v3986
        %v3988 = vpop.f32.mrb[0].mxu0
        %3989 = vmatprep.mubr.bf16.mxu0 0
        %3990 = vmatmul.mubr.bf16.gmra.mrb[0].mxu0 %v2649
        %v3991 = vpop.f32.mrb[0].mxu0
        %v3992 = vadd.f32 %v3831, %v3991
        %v3993 = vpop.f32.mrb[0].mxu0
        %v3994 = vpop.f32.mrb[0].mxu0
        %v3995 = vadd.f32 %v3834, %v3994
        %v3996 = vpop.f32.mrb[0].mxu0
        %3997 = vmatprep.mubr.bf16.mxu0 0
        %3998 = vmatmul.mubr.bf16.gmra.mrb[0].mxu0 %v2650
        %v3999 = vpop.f32.mrb[0].mxu0
        %v4000 = vadd.f32 %v3839, %v3999
        %v4001 = vpop.f32.mrb[0].mxu0
        %v4002 = vpop.f32.mrb[0].mxu0
        %v4003 = vadd.f32 %v3842, %v4002
        %v4004 = vpop.f32.mrb[0].mxu0
        %4005 = vmatprep.mubr.bf16.mxu0 0
        %4006 = vmatmul.mubr.bf16.gmra.mrb[0].mxu0 %v2651
        %v4007 = vpop.f32.mrb[0].mxu0
        %v4008 = vadd.f32 %v3847, %v4007
        %v4009 = vpop.f32.mrb[0].mxu0
        %v4010 = vpop.f32.mrb[0].mxu0
        %v4011 = vadd.f32 %v3850, %v4010
        %v4012 = vpop.f32.mrb[0].mxu0
        %4013 = vmatprep.mubr.bf16.mxu0 0
        %4014 = vmatmul.mubr.bf16.gmra.mrb[0].mxu0 %v2652
        %v4015 = vpop.f32.mrb[0].mxu0
        %v4016 = vadd.f32 %v3855, %v4015
        %v4017 = vpop.f32.mrb[0].mxu0
        %v4018 = vpop.f32.mrb[0].mxu0
        %v4019 = vadd.f32 %v3858, %v4018
        %v4020 = vpop.f32.mrb[0].mxu0
        %4021 = vmatprep.mubr.bf16.mxu0 0
        %4022 = vmatmul.mubr.bf16.gmra.mrb[0].mxu0 %v2653
        %v4023 = vpop.f32.mrb[0].mxu0
        %v4024 = vadd.f32 %v3863, %v4023
        %v4025 = vpop.f32.mrb[0].mxu0
        %v4026 = vpop.f32.mrb[0].mxu0
        %v4027 = vadd.f32 %v3866, %v4026
        %v4028 = vpop.f32.mrb[0].mxu0
        %4029 = vmatprep.mubr.bf16.mxu0 0
        %4030 = vmatmul.mubr.bf16.gmra.mrb[0].mxu0 %v2654
        %v4031 = vpop.f32.mrb[0].mxu0
        %v4032 = vadd.f32 %v3871, %v4031
        %v4033 = vpop.f32.mrb[0].mxu0
        %v4034 = vpop.f32.mrb[0].mxu0
        %v4035 = vadd.f32 %v3874, %v4034
        %v4036 = vpop.f32.mrb[0].mxu0
        %4037 = vmatprep.mubr.bf16.mxu0 0
        %4038 = vmatmul.mubr.bf16.gmra.mrb[0].mxu0 %v2655
        %v4039 = vpop.f32.mrb[0].mxu0
        %v4040 = vadd.f32 %v3879, %v4039
        %v4041 = vpop.f32.mrb[0].mxu0
        %v4042 = vpop.f32.mrb[0].mxu0
        %v4043 = vadd.f32 %v3882, %v4042
        %v4044 = vpop.f32.mrb[0].mxu0
        %4045 = vmatprep.mubr.bf16.mxu0 0
        %4046 = vmatmul.mubr.bf16.gmra.mrb[0].mxu0 %v2656
        %v4047 = vpop.f32.mrb[0].mxu0
        %v4048 = vadd.f32 %v3887, %v4047
        %v4049 = vpop.f32.mrb[0].mxu0
        %v4050 = vpop.f32.mrb[0].mxu0
        %v4051 = vadd.f32 %v3890, %v4050
        %v4052 = vpop.f32.mrb[0].mxu0
        %4053 = vdwg.mxu0
        %v4054 = vpack.c.bf16 %v3931, %v3928
        %v4055 = vpack.c.bf16 %v3939, %v3936
        %v4056 = vpack.c.bf16 %v3947, %v3944
        %v4057 = vpack.c.bf16 %v3955, %v3952
        %v4058 = vpack.c.bf16 %v3963, %v3960
        %v4059 = vpack.c.bf16 %v3971, %v3968
        %v4060 = vpack.c.bf16 %v3979, %v3976
        %v4061 = vpack.c.bf16 %v3987, %v3984
        %v4062 = vpack.c.bf16 %v3995, %v3992
        %v4063 = vpack.c.bf16 %v4003, %v4000
        %v4064 = vpack.c.bf16 %v4011, %v4008
        %v4065 = vpack.c.bf16 %v4019, %v4016
        %v4066 = vpack.c.bf16 %v4027, %v4024
        %v4067 = vpack.c.bf16 %v4035, %v4032
        %v4068 = vpack.c.bf16 %v4043, %v4040
        %v4069 = vpack.c.bf16 %v4051, %v4048
        %v4086 = vunpack.c.l.b16 %v4054
        %v4087 = vunpack.c.h.b16 %v4054
        %v4088 = vunpack.c.l.b16 %v4055
        %v4089 = vunpack.c.h.b16 %v4055
        %v4090 = vunpack.c.l.b16 %v4056
        %v4091 = vunpack.c.h.b16 %v4056
        %v4092 = vunpack.c.l.b16 %v4057
        %v4093 = vunpack.c.h.b16 %v4057
        %v4094 = vunpack.c.l.b16 %v4058
        %v4095 = vunpack.c.h.b16 %v4058
        %v4096 = vunpack.c.l.b16 %v4059
        %v4097 = vunpack.c.h.b16 %v4059
        %v4098 = vunpack.c.l.b16 %v4060
        %v4099 = vunpack.c.h.b16 %v4060
        %v4100 = vunpack.c.l.b16 %v4061
        %v4101 = vunpack.c.h.b16 %v4061
        %v4102 = vunpack.c.l.b16 %v4062
        %v4103 = vunpack.c.h.b16 %v4062
        %v4104 = vunpack.c.l.b16 %v4063
        %v4105 = vunpack.c.h.b16 %v4063
        %v4106 = vunpack.c.l.b16 %v4064
        %v4107 = vunpack.c.h.b16 %v4064
        %v4108 = vunpack.c.l.b16 %v4065
        %v4109 = vunpack.c.h.b16 %v4065
        %v4110 = vunpack.c.l.b16 %v4066
        %v4111 = vunpack.c.h.b16 %v4066
        %v4112 = vunpack.c.l.b16 %v4067
        %v4113 = vunpack.c.h.b16 %v4067
        %v4114 = vunpack.c.l.b16 %v4068
        %v4115 = vunpack.c.h.b16 %v4068
        %v4116 = vunpack.c.l.b16 %v4069
        %v4117 = vunpack.c.h.b16 %v4069
        %v4118 = vpack.c.b16 %v4086, %v4086
        %v4119 = vpack.c.b16 %v4087, %v4087
        %v4120 = vpack.c.b16 %v4088, %v4088
        %v4121 = vpack.c.b16 %v4089, %v4089
        %v4122 = vpack.c.b16 %v4090, %v4090
        %v4123 = vpack.c.b16 %v4091, %v4091
        %v4124 = vpack.c.b16 %v4092, %v4092
        %v4125 = vpack.c.b16 %v4093, %v4093
        %v4126 = vpack.c.b16 %v4094, %v4094
        %v4127 = vpack.c.b16 %v4095, %v4095
        %v4128 = vpack.c.b16 %v4096, %v4096
        %v4129 = vpack.c.b16 %v4097, %v4097
        %v4130 = vpack.c.b16 %v4098, %v4098
        %v4131 = vpack.c.b16 %v4099, %v4099
        %v4132 = vpack.c.b16 %v4100, %v4100
        %v4133 = vpack.c.b16 %v4101, %v4101
        %v4134 = vpack.c.b16 %v4102, %v4102
        %v4135 = vpack.c.b16 %v4103, %v4103
        %v4136 = vpack.c.b16 %v4104, %v4104
        %v4137 = vpack.c.b16 %v4105, %v4105
        %v4138 = vpack.c.b16 %v4106, %v4106
        %v4139 = vpack.c.b16 %v4107, %v4107
        %v4140 = vpack.c.b16 %v4108, %v4108
        %v4141 = vpack.c.b16 %v4109, %v4109
        %v4142 = vpack.c.b16 %v4110, %v4110
        %v4143 = vpack.c.b16 %v4111, %v4111
        %v4144 = vpack.c.b16 %v4112, %v4112
        %v4145 = vpack.c.b16 %v4113, %v4113
        %v4146 = vpack.c.b16 %v4114, %v4114
        %v4147 = vpack.c.b16 %v4115, %v4115
        %v4148 = vpack.c.b16 %v4116, %v4116
        %v4149 = vpack.c.b16 %v4117, %v4117
        %4182 = vst [vmem:[%s207] sm:$0xf] %v4118
        %4183 = vst [vmem:[%s207 + $0x4] sm:$0xf] %v4119
        %4184 = vst [vmem:[%s207 + $0x8] sm:$0xf] %v4120
        %4185 = vst [vmem:[%s207 + $0xc] sm:$0xf] %v4121
        %4186 = vst [vmem:[%s207 + $0x10] sm:$0xf] %v4122
        %4187 = vst [vmem:[%s207 + $0x14] sm:$0xf] %v4123
        %4188 = vst [vmem:[%s207 + $0x18] sm:$0xf] %v4124
        %4189 = vst [vmem:[%s207 + $0x1c] sm:$0xf] %v4125
        %4190 = vst [vmem:[%s207 + $0x20] sm:$0xf] %v4126
        %4191 = vst [vmem:[%s207 + $0x24] sm:$0xf] %v4127
        %4192 = vst [vmem:[%s207 + $0x28] sm:$0xf] %v4128
        %4193 = vst [vmem:[%s207 + $0x2c] sm:$0xf] %v4129
        %4194 = vst [vmem:[%s207 + $0x30] sm:$0xf] %v4130
        %4195 = vst [vmem:[%s207 + $0x34] sm:$0xf] %v4131
        %4196 = vst [vmem:[%s207 + $0x38] sm:$0xf] %v4132
        %4197 = vst [vmem:[%s207 + $0x3c] sm:$0xf] %v4133
        %4198 = vst [vmem:[%s207 + $0x40] sm:$0xf] %v4134
        %4199 = vst [vmem:[%s207 + $0x44] sm:$0xf] %v4135
        %4200 = vst [vmem:[%s207 + $0x48] sm:$0xf] %v4136
        %4201 = vst [vmem:[%s207 + $0x4c] sm:$0xf] %v4137
        %4202 = vst [vmem:[%s207 + $0x50] sm:$0xf] %v4138
        %4203 = vst [vmem:[%s207 + $0x54] sm:$0xf] %v4139
        %4204 = vst [vmem:[%s207 + $0x58] sm:$0xf] %v4140
        %4205 = vst [vmem:[%s207 + $0x5c] sm:$0xf] %v4141
        %4206 = vst [vmem:[%s207 + $0x60] sm:$0xf] %v4142
        %4207 = vst [vmem:[%s207 + $0x64] sm:$0xf] %v4143
        %4208 = vst [vmem:[%s207 + $0x68] sm:$0xf] %v4144
        %4209 = vst [vmem:[%s207 + $0x6c] sm:$0xf] %v4145
        %4210 = vst [vmem:[%s207 + $0x70] sm:$0xf] %v4146
        %4211 = vst [vmem:[%s207 + $0x74] sm:$0xf] %v4147
        %4212 = vst [vmem:[%s207 + $0x78] sm:$0xf] %v4148
        %4213 = vst [vmem:[%s207 + $0x7c] sm:$0xf] %v4149
        %v4214 = vadd.f32 %v3928, %v3931
        %v4215 = vadd.f32 %v4214, %v3936
        %v4216 = vadd.f32 %v4215, %v3939
        %v4217 = vadd.f32 %v4216, %v3944
        %v4218 = vadd.f32 %v4217, %v3947
        %v4219 = vadd.f32 %v4218, %v3952
        %v4220 = vadd.f32 %v4219, %v3955
        %v4221 = vadd.f32 %v4220, %v3960
        %v4222 = vadd.f32 %v4221, %v3963
        %v4223 = vadd.f32 %v4222, %v3968
        %v4224 = vadd.f32 %v4223, %v3971
        %v4225 = vadd.f32 %v4224, %v3976
        %v4226 = vadd.f32 %v4225, %v3979
        %v4227 = vadd.f32 %v4226, %v3984
        %v4228 = vadd.f32 %v4227, %v3987
        %v4229 = vadd.f32 %v4228, %v3992
        %v4230 = vadd.f32 %v4229, %v3995
        %v4231 = vadd.f32 %v4230, %v4000
        %v4232 = vadd.f32 %v4231, %v4003
        %v4233 = vadd.f32 %v4232, %v4008
        %v4234 = vadd.f32 %v4233, %v4011
        %v4235 = vadd.f32 %v4234, %v4016
        %v4236 = vadd.f32 %v4235, %v4019
        %v4237 = vadd.f32 %v4236, %v4024
        %v4238 = vadd.f32 %v4237, %v4027
        %v4239 = vadd.f32 %v4238, %v4032
        %v4240 = vadd.f32 %v4239, %v4035
        %v4241 = vadd.f32 %v4240, %v4040
        %v4242 = vadd.f32 %v4241, %v4043
        %v4243 = vadd.f32 %v4242, %v4048
        %v4244 = vadd.f32 %v4243, %v4051
        %v4245 = vrot.slane %v4244, 4
        %v4246 = vadd.f32 %v4244, %v4245
        %v4247 = vrot.slane %v4246, 2
        %v4248 = vadd.f32 %v4246, %v4247
        %v4249 = vrot.slane %v4248, 1
        %v4250 = vadd.f32 %v4248, %v4249
        %v4251 = vmul.f32 %v3928, %v3928
        %v4252 = vmul.f32 %v3931, %v3931
        %v4253 = vmul.f32 %v3936, %v3936
        %v4254 = vmul.f32 %v3939, %v3939
        %v4255 = vmul.f32 %v3944, %v3944
        %v4256 = vmul.f32 %v3947, %v3947
        %v4257 = vmul.f32 %v3952, %v3952
        %v4258 = vmul.f32 %v3955, %v3955
        %v4259 = vmul.f32 %v3960, %v3960
        %v4260 = vmul.f32 %v3963, %v3963
        %v4261 = vmul.f32 %v3968, %v3968
        %v4262 = vmul.f32 %v3971, %v3971
        %v4263 = vmul.f32 %v3976, %v3976
        %v4264 = vmul.f32 %v3979, %v3979
        %v4265 = vmul.f32 %v3984, %v3984
        %v4266 = vmul.f32 %v3987, %v3987
        %v4267 = vmul.f32 %v3992, %v3992
        %v4268 = vmul.f32 %v3995, %v3995
        %v4269 = vmul.f32 %v4000, %v4000
        %v4270 = vmul.f32 %v4003, %v4003
        %v4271 = vmul.f32 %v4008, %v4008
        %v4272 = vmul.f32 %v4011, %v4011
        %v4273 = vmul.f32 %v4016, %v4016
        %v4274 = vmul.f32 %v4019, %v4019
        %v4275 = vmul.f32 %v4024, %v4024
        %v4276 = vmul.f32 %v4027, %v4027
        %v4277 = vmul.f32 %v4032, %v4032
        %v4278 = vmul.f32 %v4035, %v4035
        %v4279 = vmul.f32 %v4040, %v4040
        %v4280 = vmul.f32 %v4043, %v4043
        %v4281 = vmul.f32 %v4048, %v4048
        %v4282 = vmul.f32 %v4051, %v4051
        %v4283 = vadd.f32 %v4251, %v4252
        %v4284 = vadd.f32 %v4283, %v4253
        %v4285 = vadd.f32 %v4284, %v4254
        %v4286 = vadd.f32 %v4285, %v4255
        %v4287 = vadd.f32 %v4286, %v4256
        %v4288 = vadd.f32 %v4287, %v4257
        %v4289 = vadd.f32 %v4288, %v4258
        %v4290 = vadd.f32 %v4289, %v4259
        %v4291 = vadd.f32 %v4290, %v4260
        %v4292 = vadd.f32 %v4291, %v4261
        %v4293 = vadd.f32 %v4292, %v4262
        %v4294 = vadd.f32 %v4293, %v4263
        %v4295 = vadd.f32 %v4294, %v4264
        %v4296 = vadd.f32 %v4295, %v4265
        %v4297 = vadd.f32 %v4296, %v4266
        %v4298 = vadd.f32 %v4297, %v4267
        %v4299 = vadd.f32 %v4298, %v4268
        %v4300 = vadd.f32 %v4299, %v4269
        %v4301 = vadd.f32 %v4300, %v4270
        %v4302 = vadd.f32 %v4301, %v4271
        %v4303 = vadd.f32 %v4302, %v4272
        %v4304 = vadd.f32 %v4303, %v4273
        %v4305 = vadd.f32 %v4304, %v4274
        %v4306 = vadd.f32 %v4305, %v4275
        %v4307 = vadd.f32 %v4306, %v4276
        %v4308 = vadd.f32 %v4307, %v4277
        %v4309 = vadd.f32 %v4308, %v4278
        %v4310 = vadd.f32 %v4309, %v4279
        %v4311 = vadd.f32 %v4310, %v4280
        %v4312 = vadd.f32 %v4311, %v4281
        %v4313 = vadd.f32 %v4312, %v4282
        %v4314 = vrot.slane %v4313, 4
        %v4315 = vadd.f32 %v4313, %v4314
        %v4316 = vrot.slane %v4315, 2
        %v4317 = vadd.f32 %v4315, %v4316
        %v4318 = vrot.slane %v4317, 1
        %v4319 = vadd.f32 %v4317, %v4318
        %vm4320 = vcmask 1040384
        %v4321 = vsel %vm4320, %v4250, %v4319
        %4322 = vst [vmem:[%s214] sm:$0x3] %v4321
        %s4323 = sand.u32 %s80, 1
        %s4324 = scalar_lea.sflag [#allocation4], %s4323
        %s4325 = sand.u32 %s80, 1
        %s4326 = smul.addr %s4325, 128
        %s4327 = scalar_lea.vmem [#allocation7], %s4326
        %s4328 = sand.u32 %s106, 1
        %s4329 = scalar_lea.sflag [#allocation9], %s4328
        %s4330 = sand.u32 %s106, 1
        %s4331 = smul.addr %s4330, 2
        %s4332 = scalar_lea.vmem [#allocation8], %s4331
        // Predicated region
        $region37: #{bottleneck_forward.5} parent=27 // pred_check
          %p4333 = pneg %p90
        $region38: #{bottleneck_forward.5} parent=27 // pred_check_branch
          %4335 = sbr.rel (%p4333) target = $region40
        $region39: #{bottleneck_forward.5} parent=27 // pred_region
          %s4336 = smul.u32 32, %s25
          %s4338 = ssub.s32 2048, 2048
          %4339 = vsyncadd %s4324, %s4338
          %s4340 = smul.addr %s4336, 64
          %s4341 = scalar_lea.hbm %s2, %s4340
          %s4342 = sshll.u32 %s4327, 4
          %s4343 = int_to_ptr.vmem [resolvable:$true] %s4342
          %4348 = dma.vmem_to_hbm [thread:$0]  %s4343, 2048, %s4341, %s4324, 64, 64, 4
        $region40: #{bottleneck_forward.5} parent=27 // pred_fallthru
          _
        // Predicated region
        $region41: #{bottleneck_forward.5} parent=27 // pred_check
          %p4349 = pneg %p116
        $region42: #{bottleneck_forward.5} parent=27 // pred_check_branch
          %4351 = sbr.rel (%p4349) target = $region44
        $region43: #{bottleneck_forward.5} parent=27 // pred_region
          %s4353 = ssub.s32 32, 32
          %4354 = vsyncadd %s4329, %s4353
          %s4355 = smul.addr %s25, 32
          %s4356 = scalar_lea.hbm %s3, %s4355
          %s4358 = sshll.u32 %s4332, 4
          %s4359 = int_to_ptr.vmem [resolvable:$true] %s4358
          %4361 = dma.vmem_to_hbm [thread:$0]  %s4359, 32, %s4356, %s4329
        $region44: #{bottleneck_forward.5} parent=27 // pred_fallthru
          _
      $region28: #{bottleneck_forward.5} parent=5 // pred_fallthru
        _
      %p4362 = scmp.le.s32.totalorder 2, %s20
      // Predicated region
      $region45: #{bottleneck_forward.5} parent=5 // pred_check
        %p4363 = pneg %p4362
      $region46: #{bottleneck_forward.5} parent=5 // pred_check_branch
        %4365 = sbr.rel (%p4363) target = $region48
      $region47: #{bottleneck_forward.5} parent=5 // pred_region
        %s4366 = ssub.s32 %s20, 2
        // Predicated region
        $region49: #{bottleneck_forward.5} parent=47 // pred_check
          %p4367 = pneg %p96
        $region50: #{bottleneck_forward.5} parent=47 // pred_check_branch
          %4369 = sbr.rel (%p4367) target = $region52
        $region51: #{bottleneck_forward.5} parent=47 // pred_region
          %s4370 = sand.u32 %s81, 1
          %s4371 = scalar_lea.sflag [#allocation4], %s4370
          %s4372 = sand.u32 %s81, 1
          %s4373 = smul.addr %s4372, 128
          %s4374 = scalar_lea.vmem [#allocation7], %s4373
          %4375 = dma.done %s4371, 2048
        $region52: #{bottleneck_forward.5} parent=47 // pred_fallthru
          _
        // Predicated region
        $region53: #{bottleneck_forward.5} parent=47 // pred_check
          %p4376 = pneg %p122
        $region54: #{bottleneck_forward.5} parent=47 // pred_check_branch
          %4378 = sbr.rel (%p4376) target = $region56
        $region55: #{bottleneck_forward.5} parent=47 // pred_region
          %s4379 = sand.u32 %s107, 1
          %s4380 = scalar_lea.sflag [#allocation9], %s4379
          %s4381 = sand.u32 %s107, 1
          %s4382 = smul.addr %s4381, 2
          %s4383 = scalar_lea.vmem [#allocation8], %s4382
          %4384 = dma.done %s4380, 32
        $region56: #{bottleneck_forward.5} parent=47 // pred_fallthru
          _
      $region48: #{bottleneck_forward.5} parent=5 // pred_fallthru
        _
    $region6: #{bottleneck_forward.5} parent=1 // loop_footer
      %s24 = sadd.s32 1, %s20
    $region7: #{bottleneck_forward.5} parent=1 // loop_footer_branch
      %19 = sbr.rel target = $region3
    $region8: #{bottleneck_forward.5} parent=1 // loop_exit
      _
    %4385 = vsyncpa [#allocation3], 1
    %s4386 = scalar_lea.sflag [#allocation3], 1
    %4387 = vsyncpa %s4386, 1
    %4388 = vsyncpa [#allocation6], 1
    %4389 = vsyncpa [#allocation4], 1
    %s4390 = scalar_lea.sflag [#allocation4], 1
    %4391 = vsyncpa %s4390, 1
    %4392 = vsyncpa [#allocation9], 1
    %s4393 = scalar_lea.sflag [#allocation9], 1
    %4394 = vsyncpa %s4393, 1

</llo_original>
